<compile_context>
chip_gen: v5e
topology: v5e:2x2
jax: 0.10.0
libtpu: 0.0.40
codegen_flags: <defaults>
</compile_context>

<pallas_src>
import functools

import jax
import jax.numpy as jnp
from jax.experimental import pallas as pl
from jax.experimental.pallas import tpu as pltpu

EPS = 1e-5            # nn.BatchNorm2d default eps
LEAKY_SLOPE = 0.2     # nn.LeakyReLU(0.2)

# Matmul tile caps (sweepable).  bf16 A/B + f32 acc/out at these sizes is
# ~2-4 MiB double-buffered, comfortably inside v7x's 64 MiB VMEM per core.
TM_CAP = 512
TK_CAP = 512
TN_CAP = 256


# ----------------------------- small helpers -----------------------------

def _round_up(x, m):
    return (x + m - 1) // m * m


def _pick_tile(size, cap, align):
    """Tile (multiple of `align`, <= cap) and the padded size (multiple of tile)."""
    tile = min(cap, _round_up(size, align))
    return tile, _round_up(size, tile)


def _row_tile(mp):
    for t in (512, 256, 128, 64, 32, 16, 8):
        if mp % t == 0:
            return t
    return mp


# ----------------------------- Pallas kernels -----------------------------

def _conv_matmul_kernel(a_ref, b_ref, o_ref, acc_ref, *, pre_leaky, epilogue):
    """Tiled (M,K)@(K,N) with K-axis accumulation.

    pre_leaky: apply LeakyReLU(0.2) to the A tile (the EncoderBlock applies the
               activation BEFORE the conv; it commutes with im2col/zero-pad).
    epilogue : None | "sigmoid" applied only at the final K step.
    """
    k = pl.program_id(2)

    @pl.when(k == 0)
    def _init():
        acc_ref[...] = jnp.zeros_like(acc_ref)

    a = a_ref[...]                                     # bf16 (tm, tk)
    if pre_leaky:
        af = a.astype(jnp.float32)
        a = jnp.where(af > 0.0, af, LEAKY_SLOPE * af).astype(jnp.bfloat16)
    acc_ref[...] += jnp.dot(a, b_ref[...], preferred_element_type=jnp.float32)

    @pl.when(k == pl.num_programs(2) - 1)
    def _finalize():
        out = acc_ref[...]
        if epilogue == "sigmoid":
            out = jax.nn.sigmoid(out)
        o_ref[...] = out


def _bn_stats_kernel(x_ref, stat_ref):
    """Accumulate per-channel sum (row 0) and sum-of-squares (row 1) over row tiles."""
    @pl.when(pl.program_id(0) == 0)
    def _init():
        stat_ref[...] = jnp.zeros_like(stat_ref)

    x = x_ref[...]                                     # (tr, Cp) f32
    s = jnp.sum(x, axis=0, keepdims=True)
    sq = jnp.sum(x * x, axis=0, keepdims=True)
    pad = jnp.zeros((6, x.shape[1]), jnp.float32)
    stat_ref[...] += jnp.concatenate([s, sq, pad], axis=0)


def _bn_apply_kernel(x_ref, stat_ref, gamma_ref, beta_ref, o_ref, *, count, apply_leaky):
    """Normalize with batch stats, affine, and (optionally) fuse the NEXT block's LeakyReLU."""
    x = x_ref[...]                                     # (tr, Cp)
    inv_n = 1.0 / count
    mean = stat_ref[0:1, :] * inv_n
    ex2 = stat_ref[1:2, :] * inv_n
    var = ex2 - mean * mean                            # biased variance (BN training mode)
    inv = jax.lax.rsqrt(var + EPS)
    y = (x - mean) * inv * gamma_ref[...] + beta_ref[...]
    if apply_leaky:
        y = jnp.where(y > 0.0, y, LEAKY_SLOPE * y)
    o_ref[...] = y


# ----------------------------- Pallas wrappers -----------------------------

def _matmul_pallas(a, b, *, tm, tk, tn, pre_leaky, epilogue):
    Mp, Kp = a.shape
    _, Np = b.shape
    grid = (Mp // tm, Np // tn, Kp // tk)
    kern = functools.partial(_conv_matmul_kernel, pre_leaky=pre_leaky, epilogue=epilogue)
    n_trans = Mp * Np if epilogue == "sigmoid" else 0
    return pl.pallas_call(
        kern,
        out_shape=jax.ShapeDtypeStruct((Mp, Np), jnp.float32),
        grid=grid,
        in_specs=[pl.BlockSpec((tm, tk), lambda i, j, k: (i, k)),
                  pl.BlockSpec((tk, tn), lambda i, j, k: (k, j))],
        out_specs=pl.BlockSpec((tm, tn), lambda i, j, k: (i, j)),
        scratch_shapes=[pltpu.VMEM((tm, tn), jnp.float32)],
        compiler_params=pltpu.CompilerParams(
            dimension_semantics=("parallel", "parallel", "arbitrary")),
        cost_estimate=pl.CostEstimate(
            flops=2 * Mp * Kp * Np,
            transcendentals=n_trans,
            bytes_accessed=Mp * Kp * 2 + Kp * Np * 2 + Mp * Np * 4),
    )(a, b)


def batch_norm_leaky(slab, m_true, gamma, beta, apply_leaky=True):
    """BatchNorm2d (training-mode batch stats) on a (Mp, Cp) slab, tiled over rows.

    Zero-padded rows/lanes contribute zero to the sums; the true count `m_true`
    is used for the mean/var so padding never skews the statistics.
    """
    Mp, Cp = slab.shape
    tr = _row_tile(Mp)

    stats = pl.pallas_call(
        _bn_stats_kernel,
        out_shape=jax.ShapeDtypeStruct((8, Cp), jnp.float32),
        grid=(Mp // tr,),
        in_specs=[pl.BlockSpec((tr, Cp), lambda i: (i, 0))],
        out_specs=pl.BlockSpec((8, Cp), lambda i: (0, 0)),   # resident accumulator
        compiler_params=pltpu.CompilerParams(dimension_semantics=("arbitrary",)),
    )(slab)

    kern = functools.partial(_bn_apply_kernel, count=float(m_true), apply_leaky=apply_leaky)
    return pl.pallas_call(
        kern,
        out_shape=jax.ShapeDtypeStruct((Mp, Cp), jnp.float32),
        grid=(Mp // tr,),
        in_specs=[pl.BlockSpec((tr, Cp), lambda i: (i, 0)),
                  pl.BlockSpec((8, Cp), lambda i: (0, 0)),
                  pl.BlockSpec((1, Cp), lambda i: (0, 0)),
                  pl.BlockSpec((1, Cp), lambda i: (0, 0))],
        out_specs=pl.BlockSpec((tr, Cp), lambda i: (i, 0)),
        compiler_params=pltpu.CompilerParams(dimension_semantics=("parallel",)),
    )(slab, stats, gamma, beta)


# ----------------------------- conv plumbing (glue) -----------------------------

def _im2col_nhwc(x, K, stride, pad):
    """x: (N, H, W, C) -> patches (N*Ho*Wo, K*K*C), column order (kh, kw, c)."""
    if pad:
        x = jnp.pad(x, ((0, 0), (pad, pad), (pad, pad), (0, 0)))
    n, hp, wp, c = x.shape
    ho = (hp - K) // stride + 1
    wo = (wp - K) // stride + 1
    slices = []
    for kh in range(K):
        for kw in range(K):
            slices.append(x[:, kh:kh + stride * ho:stride, kw:kw + stride * wo:stride, :])
    p = jnp.stack(slices, axis=3)                      # (N, ho, wo, K*K, C)
    return p.reshape(n * ho * wo, K * K * c), ho, wo


def conv_layer(x_nhwc, wmat, layer):
    """PyTorch Conv2d(k=4, p=1, bias=False, given stride) as a tiled Pallas matmul."""
    K, stride, pad = layer["K"], layer["stride"], layer["pad"]
    patches, ho, wo = _im2col_nhwc(x_nhwc, K, stride, pad)
    M, k_dim = patches.shape
    tm, Mp = _pick_tile(M, TM_CAP, 16)                 # 16-row alignment for bf16 A tiles
    a = jnp.pad(patches, ((0, Mp - M), (0, layer["Kp"] - k_dim))).astype(jnp.bfloat16)
    out = _matmul_pallas(a, wmat, tm=tm, tk=layer["tk"], tn=layer["tn"],
                         pre_leaky=layer["pre_leaky"], epilogue=layer["epilogue"])
    return out, M, ho, wo                              # (Mp, Np) f32 slab


# ----------------------------- architecture & params -----------------------------

def build_arch(in_channels=3, out_channels=1):
    """Static per-layer config (channel padding, MXU tile sizes, fusion flags)."""
    specs = [
        # disc1: no pre-activation, no norm
        dict(name="disc1", cout=64,           stride=2, bn=False, pre_leaky=False, epilogue=None),
        # disc2: LeakyReLU fused into its matmul A read; its BN also fuses disc3's LeakyReLU
        dict(name="disc2", cout=128,          stride=2, bn=True,  pre_leaky=True,  epilogue=None),
        dict(name="disc3", cout=256,          stride=2, bn=True,  pre_leaky=False, epilogue=None),
        dict(name="disc4", cout=512,          stride=1, bn=True,  pre_leaky=False, epilogue=None),
        # disc5: pre-LeakyReLU already fused into disc4's BN; Sigmoid fused in epilogue
        dict(name="disc5", cout=out_channels, stride=1, bn=False, pre_leaky=False, epilogue="sigmoid"),
    ]
    arch = []
    cin_true = in_channels * 2      # torch.cat([x, ref], 1)
    cin_slab = in_channels * 2      # first layer consumes the un-padded input channels
    for s in specs:
        K = 4
        k_dim = K * K * cin_slab
        tk, Kp = _pick_tile(k_dim, TK_CAP, 128)
        tn, Np = _pick_tile(s["cout"], TN_CAP, 128)
        arch.append(dict(s, K=K, pad=1, cin=cin_true, cin_slab=cin_slab,
                         k_dim=k_dim, tk=tk, Kp=Kp, tn=tn, Np=Np))
        cin_true = s["cout"]
        cin_slab = Np               # next layer consumes the lane-padded slab directly
    return arch


def init_params(key, arch):
    """Random conv weights (PyTorch layout), pre-reshaped/padded ONCE to bf16 MXU matrices."""
    params = {}
    keys = jax.random.split(key, len(arch))
    for k, layer in zip(keys, arch):
        cout, cin, K = layer["cout"], layer["cin"], layer["K"]
        fan_in = cin * K * K
        w = jax.random.normal(k, (cout, cin, K, K), jnp.float32) / jnp.sqrt(float(fan_in))
        # rows ordered (kh, kw, cin) to match the im2col column order; zero rows for the
        # padded input channels so the lane-padded activation slab multiplies to zero.
        wt = jnp.transpose(w, (2, 3, 1, 0))                          # (K, K, Cin, Cout)
        wt = jnp.pad(wt, ((0, 0), (0, 0), (0, layer["cin_slab"] - cin), (0, 0)))
        wmat = wt.reshape(layer["k_dim"], cout)
        wmat = jnp.pad(wmat, ((0, layer["Kp"] - layer["k_dim"]),
                              (0, layer["Np"] - cout)))
        entry = {"wmat": wmat.astype(jnp.bfloat16)}
        if layer["bn"]:
            entry["gamma"] = jnp.ones((1, layer["Np"]), jnp.float32)   # BN affine init
            entry["beta"] = jnp.zeros((1, layer["Np"]), jnp.float32)
        params[layer["name"]] = entry
    return params


# ----------------------------- forward pass -----------------------------

def discriminator_forward(arch, params, x, ref):
    """x, ref: NCHW (N, C, H, W).  Returns sigmoid patch map, NCHW (N, 1, H', W')."""
    n = x.shape[0]
    # Layout conversion only at the model boundary: NCHW -> NHWC.
    h = jnp.transpose(jnp.concatenate([x, ref], axis=1), (0, 2, 3, 1))

    for layer in arch:
        p = params[layer["name"]]
        slab, M, ho, wo = conv_layer(h, p["wmat"], layer)
        if layer["bn"]:
            # TODO(synk): training-mode BatchNorm2d (batch statistics); eval-mode
            # running statistics are not modeled (a fresh module has none anyway).
            slab = batch_norm_leaky(slab, M, p["gamma"], p["beta"], apply_leaky=True)
        h = slab[:M].reshape(n, ho, wo, layer["Np"])   # keep lane-padded channel slab

    out = h[..., : arch[-1]["cout"]]                   # drop channel padding at the end
    return jnp.transpose(out, (0, 3, 1, 2))            # back to NCHW


if __name__ == "__main__":
    key = jax.random.PRNGKey(0)
    k_param, k_x, k_ref = jax.random.split(key, 3)

    # Smallest "nice" spatial size for which all 5 convs give a non-empty patch map:
    # 32 -> 16 -> 8 -> 4 -> 3 -> 2.
    N, C, H, W = 2, 3, 32, 32
    arch = build_arch(in_channels=C, out_channels=1)
    params = init_params(k_param, arch)

    x = jax.random.uniform(k_x, (N, C, H, W), jnp.float32, minval=-1.0, maxval=1.0)
    ref = jax.random.uniform(k_ref, (N, C, H, W), jnp.float32, minval=-1.0, maxval=1.0)

    fwd = jax.jit(functools.partial(discriminator_forward, arch))
    out = jax.block_until_ready(fwd(params, x, ref))

    assert out.shape == (N, 1, 2, 2), out.shape
    assert out.dtype == jnp.float32
    assert bool(jnp.all(jnp.isfinite(out)))
    assert bool(jnp.all((out >= 0.0) & (out <= 1.0)))   # sigmoid output range
    print("KERNEL_OK")
</pallas_src>

<mosaic_0001>
module attributes {stable_mosaic.version = 11 : i64} {
  func.func @_conv_matmul_kernel(%arg0: i32, %arg1: i32, %arg2: i32, %arg3: memref<512x128xbf16, #tpu.memory_space<vmem>>, %arg4: memref<128x128xbf16, #tpu.memory_space<vmem>>, %arg5: memref<512x128xf32, #tpu.memory_space<vmem>>, %arg6: memref<512x128xf32, #tpu.memory_space<vmem>>) attributes {dimension_semantics = [#tpu.dimension_semantics<parallel>, #tpu.dimension_semantics<parallel>, #tpu.dimension_semantics<arbitrary>], iteration_bounds = array<i64: 1, 1, 1>, scalar_prefetch = 0 : i64, scratch_operands = 1 : i64, tpu.core_type = #tpu.core_type<tc>, window_params = [{transform_indices = @transform_0, window_bounds = array<i64: 512, 128>}, {transform_indices = @transform_1, window_bounds = array<i64: 128, 128>}, {transform_indices = @transform_2, window_bounds = array<i64: 512, 128>}]} {
    %c0_i32 = arith.constant 0 : i32
    %0 = arith.cmpi eq, %arg2, %c0_i32 : i32
    %1 = arith.extui %0 : i1 to i32
    %c0_i32_0 = arith.constant 0 : i32
    %2 = arith.cmpi ne, %1, %c0_i32_0 : i32
    scf.if %2 {
      %cst_10 = arith.constant 0.000000e+00 : f32
      %12 = vector.broadcast %cst_10 : f32 to vector<512x128xf32>
      %c0_11 = arith.constant 0 : index
      %c0_12 = arith.constant 0 : index
      %13 = vector.load %arg6[%c0_11, %c0_12] : memref<512x128xf32, #tpu.memory_space<vmem>>, vector<512x128xf32>
      tpu.vector_store %arg6[%c0_11, %c0_12], %12 {strides = array<i32>} : memref<512x128xf32, #tpu.memory_space<vmem>>, vector<512x128xf32>,
    } else {
    }
    %c0 = arith.constant 0 : index
    %c0_1 = arith.constant 0 : index
    %3 = vector.load %arg3[%c0, %c0_1] : memref<512x128xbf16, #tpu.memory_space<vmem>>, vector<512x128xbf16>
    %c0_2 = arith.constant 0 : index
    %c0_3 = arith.constant 0 : index
    %4 = vector.load %arg6[%c0_2, %c0_3] : memref<512x128xf32, #tpu.memory_space<vmem>>, vector<512x128xf32>
    %c0_4 = arith.constant 0 : index
    %c0_5 = arith.constant 0 : index
    %5 = vector.load %arg4[%c0_4, %c0_5] : memref<128x128xbf16, #tpu.memory_space<vmem>>, vector<128x128xbf16>
    %cst = arith.constant dense<0.000000e+00> : vector<512x128xf32>
    %6 = tpu.matmul %3, %5, %cst {dimension_numbers = #tpu.dot_dimension_numbers<[1], [0], [0], [1], [0, 0, 1, 1], [], []>} : vector<512x128xbf16>, vector<128x128xbf16>, vector<512x128xf32> -> vector<512x128xf32>
    %7 = arith.addf %4, %6 : vector<512x128xf32>
    %c0_6 = arith.constant 0 : index
    %c0_7 = arith.constant 0 : index
    %8 = vector.load %arg6[%c0_6, %c0_7] : memref<512x128xf32, #tpu.memory_space<vmem>>, vector<512x128xf32>
    tpu.vector_store %arg6[%c0_6, %c0_7], %7 {strides = array<i32>} : memref<512x128xf32, #tpu.memory_space<vmem>>, vector<512x128xf32>,
    %c0_i32_8 = arith.constant 0 : i32
    %9 = arith.cmpi eq, %arg2, %c0_i32_8 : i32
    %10 = arith.extui %9 : i1 to i32
    %c0_i32_9 = arith.constant 0 : i32
    %11 = arith.cmpi ne, %10, %c0_i32_9 : i32
    scf.if %11 {
      %c0_10 = arith.constant 0 : index
      %c0_11 = arith.constant 0 : index
      %12 = vector.load %arg6[%c0_10, %c0_11] : memref<512x128xf32, #tpu.memory_space<vmem>>, vector<512x128xf32>
      %c0_12 = arith.constant 0 : index
      %c0_13 = arith.constant 0 : index
      %13 = vector.load %arg5[%c0_12, %c0_13] : memref<512x128xf32, #tpu.memory_space<vmem>>, vector<512x128xf32>
      tpu.vector_store %arg5[%c0_12, %c0_13], %12 {strides = array<i32>} : memref<512x128xf32, #tpu.memory_space<vmem>>, vector<512x128xf32>,
    } else {
    }
    return
  }
  func.func @transform_0(%arg0: i32, %arg1: i32, %arg2: i32) -> (i32, i32) {
    %c0_i32 = arith.constant 0 : i32
    return %arg0, %arg2 : i32, i32
  }
  func.func @transform_1(%arg0: i32, %arg1: i32, %arg2: i32) -> (i32, i32) {
    %c0_i32 = arith.constant 0 : i32
    return %arg2, %arg1 : i32, i32
  }
  func.func @transform_2(%arg0: i32, %arg1: i32, %arg2: i32) -> (i32, i32) {
    %c0_i32 = arith.constant 0 : i32
    return %arg0, %arg1 : i32, i32
  }
}

module attributes {stable_mosaic.version = 11 : i64} {
  func.func @_bn_stats_kernel(%arg0: i32, %arg1: memref<128x128xf32, #tpu.memory_space<vmem>>, %arg2: memref<8x128xf32, #tpu.memory_space<vmem>>) attributes {dimension_semantics = [#tpu.dimension_semantics<arbitrary>], iteration_bounds = array<i64: 1>, scalar_prefetch = 0 : i64, scratch_operands = 0 : i64, tpu.core_type = #tpu.core_type<tc>, window_params = [{transform_indices = @transform_0, window_bounds = array<i64: 128, 128>}, {pipeline_mode = #tpu.pipeline_mode<synchronous>, transform_indices = @transform_1, window_bounds = array<i64: 8, 128>}]} {
    %c0_i32 = arith.constant 0 : i32
    %0 = arith.cmpi eq, %arg0, %c0_i32 : i32
    %1 = arith.extui %0 : i1 to i32
    %c0_i32_0 = arith.constant 0 : i32
    %2 = arith.cmpi ne, %1, %c0_i32_0 : i32
    scf.if %2 {
      %cst_8 = arith.constant 0.000000e+00 : f32
      %14 = vector.broadcast %cst_8 : f32 to vector<8x128xf32>
      %c0_9 = arith.constant 0 : index
      %c0_10 = arith.constant 0 : index
      %15 = vector.load %arg2[%c0_9, %c0_10] : memref<8x128xf32, #tpu.memory_space<vmem>>, vector<8x128xf32>
      tpu.vector_store %arg2[%c0_9, %c0_10], %14 {strides = array<i32>} : memref<8x128xf32, #tpu.memory_space<vmem>>, vector<8x128xf32>,
    } else {
    }
    %c0 = arith.constant 0 : index
    %c0_1 = arith.constant 0 : index
    %3 = vector.load %arg1[%c0, %c0_1] : memref<128x128xf32, #tpu.memory_space<vmem>>, vector<128x128xf32>
    %cst = arith.constant dense<0.000000e+00> : vector<128xf32>
    %4 = vector.multi_reduction <add>, %3, %cst [0] : vector<128x128xf32> to vector<128xf32>
    %5 = vector.shape_cast %4 : vector<128xf32> to vector<1x128xf32>
    %6 = arith.mulf %3, %3 : vector<128x128xf32>
    %cst_2 = arith.constant dense<0.000000e+00> : vector<128xf32>
    %7 = vector.multi_reduction <add>, %6, %cst_2 [0] : vector<128x128xf32> to vector<128xf32>
    %8 = vector.shape_cast %7 : vector<128xf32> to vector<1x128xf32>
    %cst_3 = arith.constant 0.000000e+00 : f32
    %9 = vector.broadcast %cst_3 : f32 to vector<6x128xf32>
    %c0_4 = arith.constant 0 : index
    %c0_5 = arith.constant 0 : index
    %10 = vector.load %arg2[%c0_4, %c0_5] : memref<8x128xf32, #tpu.memory_space<vmem>>, vector<8x128xf32>
    %11 = tpu.concatenate %5, %8, %9 in 0 : vector<1x128xf32>, vector<1x128xf32>, vector<6x128xf32> -> vector<8x128xf32>
    %12 = arith.addf %10, %11 : vector<8x128xf32>
    %c0_6 = arith.constant 0 : index
    %c0_7 = arith.constant 0 : index
    %13 = vector.load %arg2[%c0_6, %c0_7] : memref<8x128xf32, #tpu.memory_space<vmem>>, vector<8x128xf32>
    tpu.vector_store %arg2[%c0_6, %c0_7], %12 {strides = array<i32>} : memref<8x128xf32, #tpu.memory_space<vmem>>, vector<8x128xf32>,
    return
  }
  func.func @transform_0(%arg0: i32) -> (i32, i32) {
    %c0_i32 = arith.constant 0 : i32
    %c0_i32_0 = arith.constant 0 : i32
    return %arg0, %c0_i32 : i32, i32
  }
  func.func @transform_1(%arg0: i32) -> (i32, i32) {
    %c0_i32 = arith.constant 0 : i32
    %c0_i32_0 = arith.constant 0 : i32
    %c0_i32_1 = arith.constant 0 : i32
    return %c0_i32, %c0_i32_0 : i32, i32
  }
}

module attributes {stable_mosaic.version = 11 : i64} {
  func.func @_conv_matmul_kernel(%arg0: i32, %arg1: i32, %arg2: i32, %arg3: memref<128x512xbf16, #tpu.memory_space<vmem>>, %arg4: memref<512x128xbf16, #tpu.memory_space<vmem>>, %arg5: memref<128x128xf32, #tpu.memory_space<vmem>>, %arg6: memref<128x128xf32, #tpu.memory_space<vmem>>) attributes {dimension_semantics = [#tpu.dimension_semantics<parallel>, #tpu.dimension_semantics<parallel>, #tpu.dimension_semantics<arbitrary>], iteration_bounds = array<i64: 1, 1, 4>, scalar_prefetch = 0 : i64, scratch_operands = 1 : i64, tpu.core_type = #tpu.core_type<tc>, window_params = [{transform_indices = @transform_0, window_bounds = array<i64: 128, 512>}, {transform_indices = @transform_1, window_bounds = array<i64: 512, 128>}, {transform_indices = @transform_2, window_bounds = array<i64: 128, 128>}]} {
    %c0_i32 = arith.constant 0 : i32
    %0 = arith.cmpi eq, %arg2, %c0_i32 : i32
    %1 = arith.extui %0 : i1 to i32
    %c0_i32_0 = arith.constant 0 : i32
    %2 = arith.cmpi ne, %1, %c0_i32_0 : i32
    scf.if %2 {
      %cst_11 = arith.constant 0.000000e+00 : f32
      %19 = vector.broadcast %cst_11 : f32 to vector<128x128xf32>
      %c0_12 = arith.constant 0 : index
      %c0_13 = arith.constant 0 : index
      %20 = vector.load %arg6[%c0_12, %c0_13] : memref<128x128xf32, #tpu.memory_space<vmem>>, vector<128x128xf32>
      tpu.vector_store %arg6[%c0_12, %c0_13], %19 {strides = array<i32>} : memref<128x128xf32, #tpu.memory_space<vmem>>, vector<128x128xf32>,
    } else {
    }
    %c0 = arith.constant 0 : index
    %c0_1 = arith.constant 0 : index
    %3 = vector.load %arg3[%c0, %c0_1] : memref<128x512xbf16, #tpu.memory_space<vmem>>, vector<128x512xbf16>
    %4 = arith.extf %3 : vector<128x512xbf16> to vector<128x512xf32>
    %cst = arith.constant 0.000000e+00 : f32
    %5 = vector.broadcast %cst : f32 to vector<128x512xf32>
    %6 = arith.cmpf ogt, %4, %5 : vector<128x512xf32>
    %cst_2 = arith.constant 2.000000e-01 : f32
    %7 = vector.broadcast %cst_2 : f32 to vector<128x512xf32>
    %8 = arith.mulf %7, %4 : vector<128x512xf32>
    %9 = arith.select %6, %4, %8 : vector<128x512xi1>, vector<128x512xf32>
    %10 = arith.truncf %9 : vector<128x512xf32> to vector<128x512xbf16>
    %c0_3 = arith.constant 0 : index
    %c0_4 = arith.constant 0 : index
    %11 = vector.load %arg6[%c0_3, %c0_4] : memref<128x128xf32, #tpu.memory_space<vmem>>, vector<128x128xf32>
    %c0_5 = arith.constant 0 : index
    %c0_6 = arith.constant 0 : index
    %12 = vector.load %arg4[%c0_5, %c0_6] : memref<512x128xbf16, #tpu.memory_space<vmem>>, vector<512x128xbf16>
    %cst_7 = arith.constant dense<0.000000e+00> : vector<128x128xf32>
    %13 = tpu.matmul %10, %12, %cst_7 {dimension_numbers = #tpu.dot_dimension_numbers<[1], [0], [0], [1], [0, 0, 1, 1], [], []>} : vector<128x512xbf16>, vector<512x128xbf16>, vector<128x128xf32> -> vector<128x128xf32>
    %14 = arith.addf %11, %13 : vector<128x128xf32>
    %c0_8 = arith.constant 0 : index
    %c0_9 = arith.constant 0 : index
    %15 = vector.load %arg6[%c0_8, %c0_9] : memref<128x128xf32, #tpu.memory_space<vmem>>, vector<128x128xf32>
    tpu.vector_store %arg6[%c0_8, %c0_9], %14 {strides = array<i32>} : memref<128x128xf32, #tpu.memory_space<vmem>>, vector<128x128xf32>,
    %c3_i32 = arith.constant 3 : i32
    %16 = arith.cmpi eq, %arg2, %c3_i32 : i32
    %17 = arith.extui %16 : i1 to i32
    %c0_i32_10 = arith.constant 0 : i32
    %18 = arith.cmpi ne, %17, %c0_i32_10 : i32
    scf.if %18 {
      %c0_11 = arith.constant 0 : index
      %c0_12 = arith.constant 0 : index
      %19 = vector.load %arg6[%c0_11, %c0_12] : memref<128x128xf32, #tpu.memory_space<vmem>>, vector<128x128xf32>
      %c0_13 = arith.constant 0 : index
      %c0_14 = arith.constant 0 : index
      %20 = vector.load %arg5[%c0_13, %c0_14] : memref<128x128xf32, #tpu.memory_space<vmem>>, vector<128x128xf32>
      tpu.vector_store %arg5[%c0_13, %c0_14], %19 {strides = array<i32>} : memref<128x128xf32, #tpu.memory_space<vmem>>, vector<128x128xf32>,
    } else {
    }
    return
  }
  func.func @transform_0(%arg0: i32, %arg1: i32, %arg2: i32) -> (i32, i32) {
    %c0_i32 = arith.constant 0 : i32
    return %arg0, %arg2 : i32, i32
  }
  func.func @transform_1(%arg0: i32, %arg1: i32, %arg2: i32) -> (i32, i32) {
    %c0_i32 = arith.constant 0 : i32
    return %arg2, %arg1 : i32, i32
  }
  func.func @transform_2(%arg0: i32, %arg1: i32, %arg2: i32) -> (i32, i32) {
    %c0_i32 = arith.constant 0 : i32
    return %arg0, %arg1 : i32, i32
  }
}

module attributes {stable_mosaic.version = 11 : i64} {
  func.func @_bn_apply_kernel(%arg0: i32, %arg1: memref<128x128xf32, #tpu.memory_space<vmem>>, %arg2: memref<8x128xf32, #tpu.memory_space<vmem>>, %arg3: memref<1x128xf32, #tpu.memory_space<vmem>>, %arg4: memref<1x128xf32, #tpu.memory_space<vmem>>, %arg5: memref<128x128xf32, #tpu.memory_space<vmem>>) attributes {dimension_semantics = [#tpu.dimension_semantics<parallel>], iteration_bounds = array<i64: 1>, scalar_prefetch = 0 : i64, scratch_operands = 0 : i64, tpu.core_type = #tpu.core_type<tc>, window_params = [{transform_indices = @transform_0, window_bounds = array<i64: 128, 128>}, {pipeline_mode = #tpu.pipeline_mode<synchronous>, transform_indices = @transform_1, window_bounds = array<i64: 8, 128>}, {pipeline_mode = #tpu.pipeline_mode<synchronous>, transform_indices = @transform_2, window_bounds = array<i64: 1, 128>}, {pipeline_mode = #tpu.pipeline_mode<synchronous>, transform_indices = @transform_3, window_bounds = array<i64: 1, 128>}, {transform_indices = @transform_4, window_bounds = array<i64: 128, 128>}]} {
    %c0 = arith.constant 0 : index
    %c0_0 = arith.constant 0 : index
    %0 = vector.load %arg1[%c0, %c0_0] : memref<128x128xf32, #tpu.memory_space<vmem>>, vector<128x128xf32>
    %c0_1 = arith.constant 0 : index
    %c0_2 = arith.constant 0 : index
    %1 = vector.load %arg2[%c0_1, %c0_2] : memref<8x128xf32, #tpu.memory_space<vmem>>, vector<1x128xf32>
    %cst = arith.constant 7.812500e-03 : f32
    %2 = vector.broadcast %cst : f32 to vector<1x128xf32>
    %3 = arith.mulf %1, %2 : vector<1x128xf32>
    %c1 = arith.constant 1 : index
    %c0_3 = arith.constant 0 : index
    %4 = vector.load %arg2[%c1, %c0_3] : memref<8x128xf32, #tpu.memory_space<vmem>>, vector<1x128xf32>
    %cst_4 = arith.constant 7.812500e-03 : f32
    %5 = vector.broadcast %cst_4 : f32 to vector<1x128xf32>
    %6 = arith.mulf %4, %5 : vector<1x128xf32>
    %7 = arith.mulf %3, %3 : vector<1x128xf32>
    %8 = arith.subf %6, %7 : vector<1x128xf32>
    %cst_5 = arith.constant 9.99999974E-6 : f32
    %9 = vector.broadcast %cst_5 : f32 to vector<1x128xf32>
    %10 = arith.addf %8, %9 : vector<1x128xf32>
    %11 = math.rsqrt %10 : vector<1x128xf32>
    %12 = vector.broadcast %3 : vector<1x128xf32> to vector<128x128xf32>
    %13 = arith.subf %0, %12 : vector<128x128xf32>
    %14 = vector.broadcast %11 : vector<1x128xf32> to vector<128x128xf32>
    %15 = arith.mulf %13, %14 : vector<128x128xf32>
    %c0_6 = arith.constant 0 : index
    %c0_7 = arith.constant 0 : index
    %16 = vector.load %arg3[%c0_6, %c0_7] : memref<1x128xf32, #tpu.memory_space<vmem>>, vector<1x128xf32>
    %17 = vector.broadcast %16 : vector<1x128xf32> to vector<128x128xf32>
    %18 = arith.mulf %15, %17 : vector<128x128xf32>
    %c0_8 = arith.constant 0 : index
    %c0_9 = arith.constant 0 : index
    %19 = vector.load %arg4[%c0_8, %c0_9] : memref<1x128xf32, #tpu.memory_space<vmem>>, vector<1x128xf32>
    %20 = vector.broadcast %19 : vector<1x128xf32> to vector<128x128xf32>
    %21 = arith.addf %18, %20 : vector<128x128xf32>
    %cst_10 = arith.constant 0.000000e+00 : f32
    %22 = vector.broadcast %cst_10 : f32 to vector<128x128xf32>
    %23 = arith.cmpf ogt, %21, %22 : vector<128x128xf32>
    %cst_11 = arith.constant 2.000000e-01 : f32
    %24 = vector.broadcast %cst_11 : f32 to vector<128x128xf32>
    %25 = arith.mulf %24, %21 : vector<128x128xf32>
    %26 = arith.select %23, %21, %25 : vector<128x128xi1>, vector<128x128xf32>
    %c0_12 = arith.constant 0 : index
    %c0_13 = arith.constant 0 : index
    %27 = vector.load %arg5[%c0_12, %c0_13] : memref<128x128xf32, #tpu.memory_space<vmem>>, vector<128x128xf32>
    tpu.vector_store %arg5[%c0_12, %c0_13], %26 {strides = array<i32>} : memref<128x128xf32, #tpu.memory_space<vmem>>, vector<128x128xf32>,
    return
  }
  func.func @transform_0(%arg0: i32) -> (i32, i32) {
    %c0_i32 = arith.constant 0 : i32
    %c0_i32_0 = arith.constant 0 : i32
    return %arg0, %c0_i32 : i32, i32
  }
  func.func @transform_1(%arg0: i32) -> (i32, i32) {
    %c0_i32 = arith.constant 0 : i32
    %c0_i32_0 = arith.constant 0 : i32
    %c0_i32_1 = arith.constant 0 : i32
    return %c0_i32, %c0_i32_0 : i32, i32
  }
  func.func @transform_2(%arg0: i32) -> (i32, i32) {
    %c0_i32 = arith.constant 0 : i32
    %c0_i32_0 = arith.constant 0 : i32
    %c0_i32_1 = arith.constant 0 : i32
    return %c0_i32, %c0_i32_0 : i32, i32
  }
  func.func @transform_3(%arg0: i32) -> (i32, i32) {
    %c0_i32 = arith.constant 0 : i32
    %c0_i32_0 = arith.constant 0 : i32
    %c0_i32_1 = arith.constant 0 : i32
    return %c0_i32, %c0_i32_0 : i32, i32
  }
  func.func @transform_4(%arg0: i32) -> (i32, i32) {
    %c0_i32 = arith.constant 0 : i32
    %c0_i32_0 = arith.constant 0 : i32
    return %arg0, %c0_i32 : i32, i32
  }
}

module attributes {stable_mosaic.version = 11 : i64} {
  func.func @_bn_apply_kernel(%arg0: i32, %arg1: memref<32x256xf32, #tpu.memory_space<vmem>>, %arg2: memref<8x256xf32, #tpu.memory_space<vmem>>, %arg3: memref<1x256xf32, #tpu.memory_space<vmem>>, %arg4: memref<1x256xf32, #tpu.memory_space<vmem>>, %arg5: memref<32x256xf32, #tpu.memory_space<vmem>>) attributes {dimension_semantics = [#tpu.dimension_semantics<parallel>], iteration_bounds = array<i64: 1>, scalar_prefetch = 0 : i64, scratch_operands = 0 : i64, tpu.core_type = #tpu.core_type<tc>, window_params = [{transform_indices = @transform_0, window_bounds = array<i64: 32, 256>}, {pipeline_mode = #tpu.pipeline_mode<synchronous>, transform_indices = @transform_1, window_bounds = array<i64: 8, 256>}, {pipeline_mode = #tpu.pipeline_mode<synchronous>, transform_indices = @transform_2, window_bounds = array<i64: 1, 256>}, {pipeline_mode = #tpu.pipeline_mode<synchronous>, transform_indices = @transform_3, window_bounds = array<i64: 1, 256>}, {transform_indices = @transform_4, window_bounds = array<i64: 32, 256>}]} {
    %c0 = arith.constant 0 : index
    %c0_0 = arith.constant 0 : index
    %0 = vector.load %arg1[%c0, %c0_0] : memref<32x256xf32, #tpu.memory_space<vmem>>, vector<32x256xf32>
    %c0_1 = arith.constant 0 : index
    %c0_2 = arith.constant 0 : index
    %1 = vector.load %arg2[%c0_1, %c0_2] : memref<8x256xf32, #tpu.memory_space<vmem>>, vector<1x256xf32>
    %cst = arith.constant 3.125000e-02 : f32
    %2 = vector.broadcast %cst : f32 to vector<1x256xf32>
    %3 = arith.mulf %1, %2 : vector<1x256xf32>
    %c1 = arith.constant 1 : index
    %c0_3 = arith.constant 0 : index
    %4 = vector.load %arg2[%c1, %c0_3] : memref<8x256xf32, #tpu.memory_space<vmem>>, vector<1x256xf32>
    %cst_4 = arith.constant 3.125000e-02 : f32
    %5 = vector.broadcast %cst_4 : f32 to vector<1x256xf32>
    %6 = arith.mulf %4, %5 : vector<1x256xf32>
    %7 = arith.mulf %3, %3 : vector<1x256xf32>
    %8 = arith.subf %6, %7 : vector<1x256xf32>
    %cst_5 = arith.constant 9.99999974E-6 : f32
    %9 = vector.broadcast %cst_5 : f32 to vector<1x256xf32>
    %10 = arith.addf %8, %9 : vector<1x256xf32>
    %11 = math.rsqrt %10 : vector<1x256xf32>
    %12 = vector.broadcast %3 : vector<1x256xf32> to vector<32x256xf32>
    %13 = arith.subf %0, %12 : vector<32x256xf32>
    %14 = vector.broadcast %11 : vector<1x256xf32> to vector<32x256xf32>
    %15 = arith.mulf %13, %14 : vector<32x256xf32>
    %c0_6 = arith.constant 0 : index
    %c0_7 = arith.constant 0 : index
    %16 = vector.load %arg3[%c0_6, %c0_7] : memref<1x256xf32, #tpu.memory_space<vmem>>, vector<1x256xf32>
    %17 = vector.broadcast %16 : vector<1x256xf32> to vector<32x256xf32>
    %18 = arith.mulf %15, %17 : vector<32x256xf32>
    %c0_8 = arith.constant 0 : index
    %c0_9 = arith.constant 0 : index
    %19 = vector.load %arg4[%c0_8, %c0_9] : memref<1x256xf32, #tpu.memory_space<vmem>>, vector<1x256xf32>
    %20 = vector.broadcast %19 : vector<1x256xf32> to vector<32x256xf32>
    %21 = arith.addf %18, %20 : vector<32x256xf32>
    %cst_10 = arith.constant 0.000000e+00 : f32
    %22 = vector.broadcast %cst_10 : f32 to vector<32x256xf32>
    %23 = arith.cmpf ogt, %21, %22 : vector<32x256xf32>
    %cst_11 = arith.constant 2.000000e-01 : f32
    %24 = vector.broadcast %cst_11 : f32 to vector<32x256xf32>
    %25 = arith.mulf %24, %21 : vector<32x256xf32>
    %26 = arith.select %23, %21, %25 : vector<32x256xi1>, vector<32x256xf32>
    %c0_12 = arith.constant 0 : index
    %c0_13 = arith.constant 0 : index
    %27 = vector.load %arg5[%c0_12, %c0_13] : memref<32x256xf32, #tpu.memory_space<vmem>>, vector<32x256xf32>
    tpu.vector_store %arg5[%c0_12, %c0_13], %26 {strides = array<i32>} : memref<32x256xf32, #tpu.memory_space<vmem>>, vector<32x256xf32>,
    return
  }
  func.func @transform_0(%arg0: i32) -> (i32, i32) {
    %c0_i32 = arith.constant 0 : i32
    %c0_i32_0 = arith.constant 0 : i32
    return %arg0, %c0_i32 : i32, i32
  }
  func.func @transform_1(%arg0: i32) -> (i32, i32) {
    %c0_i32 = arith.constant 0 : i32
    %c0_i32_0 = arith.constant 0 : i32
    %c0_i32_1 = arith.constant 0 : i32
    return %c0_i32, %c0_i32_0 : i32, i32
  }
  func.func @transform_2(%arg0: i32) -> (i32, i32) {
    %c0_i32 = arith.constant 0 : i32
    %c0_i32_0 = arith.constant 0 : i32
    %c0_i32_1 = arith.constant 0 : i32
    return %c0_i32, %c0_i32_0 : i32, i32
  }
  func.func @transform_3(%arg0: i32) -> (i32, i32) {
    %c0_i32 = arith.constant 0 : i32
    %c0_i32_0 = arith.constant 0 : i32
    %c0_i32_1 = arith.constant 0 : i32
    return %c0_i32, %c0_i32_0 : i32, i32
  }
  func.func @transform_4(%arg0: i32) -> (i32, i32) {
    %c0_i32 = arith.constant 0 : i32
    %c0_i32_0 = arith.constant 0 : i32
    return %arg0, %c0_i32 : i32, i32
  }
}

module attributes {stable_mosaic.version = 11 : i64} {
  func.func @_conv_matmul_kernel(%arg0: i32, %arg1: i32, %arg2: i32, %arg3: memref<32x512xbf16, #tpu.memory_space<vmem>>, %arg4: memref<512x256xbf16, #tpu.memory_space<vmem>>, %arg5: memref<32x256xf32, #tpu.memory_space<vmem>>, %arg6: memref<32x256xf32, #tpu.memory_space<vmem>>) attributes {dimension_semantics = [#tpu.dimension_semantics<parallel>, #tpu.dimension_semantics<parallel>, #tpu.dimension_semantics<arbitrary>], iteration_bounds = array<i64: 1, 1, 4>, scalar_prefetch = 0 : i64, scratch_operands = 1 : i64, tpu.core_type = #tpu.core_type<tc>, window_params = [{transform_indices = @transform_0, window_bounds = array<i64: 32, 512>}, {transform_indices = @transform_1, window_bounds = array<i64: 512, 256>}, {transform_indices = @transform_2, window_bounds = array<i64: 32, 256>}]} {
    %c0_i32 = arith.constant 0 : i32
    %0 = arith.cmpi eq, %arg2, %c0_i32 : i32
    %1 = arith.extui %0 : i1 to i32
    %c0_i32_0 = arith.constant 0 : i32
    %2 = arith.cmpi ne, %1, %c0_i32_0 : i32
    scf.if %2 {
      %cst_9 = arith.constant 0.000000e+00 : f32
      %12 = vector.broadcast %cst_9 : f32 to vector<32x256xf32>
      %c0_10 = arith.constant 0 : index
      %c0_11 = arith.constant 0 : index
      %13 = vector.load %arg6[%c0_10, %c0_11] : memref<32x256xf32, #tpu.memory_space<vmem>>, vector<32x256xf32>
      tpu.vector_store %arg6[%c0_10, %c0_11], %12 {strides = array<i32>} : memref<32x256xf32, #tpu.memory_space<vmem>>, vector<32x256xf32>,
    } else {
    }
    %c0 = arith.constant 0 : index
    %c0_1 = arith.constant 0 : index
    %3 = vector.load %arg3[%c0, %c0_1] : memref<32x512xbf16, #tpu.memory_space<vmem>>, vector<32x512xbf16>
    %c0_2 = arith.constant 0 : index
    %c0_3 = arith.constant 0 : index
    %4 = vector.load %arg6[%c0_2, %c0_3] : memref<32x256xf32, #tpu.memory_space<vmem>>, vector<32x256xf32>
    %c0_4 = arith.constant 0 : index
    %c0_5 = arith.constant 0 : index
    %5 = vector.load %arg4[%c0_4, %c0_5] : memref<512x256xbf16, #tpu.memory_space<vmem>>, vector<512x256xbf16>
    %cst = arith.constant dense<0.000000e+00> : vector<32x256xf32>
    %6 = tpu.matmul %3, %5, %cst {dimension_numbers = #tpu.dot_dimension_numbers<[1], [0], [0], [1], [0, 0, 1, 1], [], []>} : vector<32x512xbf16>, vector<512x256xbf16>, vector<32x256xf32> -> vector<32x256xf32>
    %7 = arith.addf %4, %6 : vector<32x256xf32>
    %c0_6 = arith.constant 0 : index
    %c0_7 = arith.constant 0 : index
    %8 = vector.load %arg6[%c0_6, %c0_7] : memref<32x256xf32, #tpu.memory_space<vmem>>, vector<32x256xf32>
    tpu.vector_store %arg6[%c0_6, %c0_7], %7 {strides = array<i32>} : memref<32x256xf32, #tpu.memory_space<vmem>>, vector<32x256xf32>,
    %c3_i32 = arith.constant 3 : i32
    %9 = arith.cmpi eq, %arg2, %c3_i32 : i32
    %10 = arith.extui %9 : i1 to i32
    %c0_i32_8 = arith.constant 0 : i32
    %11 = arith.cmpi ne, %10, %c0_i32_8 : i32
    scf.if %11 {
      %c0_9 = arith.constant 0 : index
      %c0_10 = arith.constant 0 : index
      %12 = vector.load %arg6[%c0_9, %c0_10] : memref<32x256xf32, #tpu.memory_space<vmem>>, vector<32x256xf32>
      %c0_11 = arith.constant 0 : index
      %c0_12 = arith.constant 0 : index
      %13 = vector.load %arg5[%c0_11, %c0_12] : memref<32x256xf32, #tpu.memory_space<vmem>>, vector<32x256xf32>
      tpu.vector_store %arg5[%c0_11, %c0_12], %12 {strides = array<i32>} : memref<32x256xf32, #tpu.memory_space<vmem>>, vector<32x256xf32>,
    } else {
    }
    return
  }
  func.func @transform_0(%arg0: i32, %arg1: i32, %arg2: i32) -> (i32, i32) {
    %c0_i32 = arith.constant 0 : i32
    return %arg0, %arg2 : i32, i32
  }
  func.func @transform_1(%arg0: i32, %arg1: i32, %arg2: i32) -> (i32, i32) {
    %c0_i32 = arith.constant 0 : i32
    return %arg2, %arg1 : i32, i32
  }
  func.func @transform_2(%arg0: i32, %arg1: i32, %arg2: i32) -> (i32, i32) {
    %c0_i32 = arith.constant 0 : i32
    return %arg0, %arg1 : i32, i32
  }
}

module attributes {stable_mosaic.version = 11 : i64} {
  func.func @_bn_stats_kernel(%arg0: i32, %arg1: memref<32x256xf32, #tpu.memory_space<vmem>>, %arg2: memref<8x256xf32, #tpu.memory_space<vmem>>) attributes {dimension_semantics = [#tpu.dimension_semantics<arbitrary>], iteration_bounds = array<i64: 1>, scalar_prefetch = 0 : i64, scratch_operands = 0 : i64, tpu.core_type = #tpu.core_type<tc>, window_params = [{transform_indices = @transform_0, window_bounds = array<i64: 32, 256>}, {pipeline_mode = #tpu.pipeline_mode<synchronous>, transform_indices = @transform_1, window_bounds = array<i64: 8, 256>}]} {
    %c0_i32 = arith.constant 0 : i32
    %0 = arith.cmpi eq, %arg0, %c0_i32 : i32
    %1 = arith.extui %0 : i1 to i32
    %c0_i32_0 = arith.constant 0 : i32
    %2 = arith.cmpi ne, %1, %c0_i32_0 : i32
    scf.if %2 {
      %cst_8 = arith.constant 0.000000e+00 : f32
      %14 = vector.broadcast %cst_8 : f32 to vector<8x256xf32>
      %c0_9 = arith.constant 0 : index
      %c0_10 = arith.constant 0 : index
      %15 = vector.load %arg2[%c0_9, %c0_10] : memref<8x256xf32, #tpu.memory_space<vmem>>, vector<8x256xf32>
      tpu.vector_store %arg2[%c0_9, %c0_10], %14 {strides = array<i32>} : memref<8x256xf32, #tpu.memory_space<vmem>>, vector<8x256xf32>,
    } else {
    }
    %c0 = arith.constant 0 : index
    %c0_1 = arith.constant 0 : index
    %3 = vector.load %arg1[%c0, %c0_1] : memref<32x256xf32, #tpu.memory_space<vmem>>, vector<32x256xf32>
    %cst = arith.constant dense<0.000000e+00> : vector<256xf32>
    %4 = vector.multi_reduction <add>, %3, %cst [0] : vector<32x256xf32> to vector<256xf32>
    %5 = vector.shape_cast %4 : vector<256xf32> to vector<1x256xf32>
    %6 = arith.mulf %3, %3 : vector<32x256xf32>
    %cst_2 = arith.constant dense<0.000000e+00> : vector<256xf32>
    %7 = vector.multi_reduction <add>, %6, %cst_2 [0] : vector<32x256xf32> to vector<256xf32>
    %8 = vector.shape_cast %7 : vector<256xf32> to vector<1x256xf32>
    %cst_3 = arith.constant 0.000000e+00 : f32
    %9 = vector.broadcast %cst_3 : f32 to vector<6x256xf32>
    %c0_4 = arith.constant 0 : index
    %c0_5 = arith.constant 0 : index
    %10 = vector.load %arg2[%c0_4, %c0_5] : memref<8x256xf32, #tpu.memory_space<vmem>>, vector<8x256xf32>
    %11 = tpu.concatenate %5, %8, %9 in 0 : vector<1x256xf32>, vector<1x256xf32>, vector<6x256xf32> -> vector<8x256xf32>
    %12 = arith.addf %10, %11 : vector<8x256xf32>
    %c0_6 = arith.constant 0 : index
    %c0_7 = arith.constant 0 : index
    %13 = vector.load %arg2[%c0_6, %c0_7] : memref<8x256xf32, #tpu.memory_space<vmem>>, vector<8x256xf32>
    tpu.vector_store %arg2[%c0_6, %c0_7], %12 {strides = array<i32>} : memref<8x256xf32, #tpu.memory_space<vmem>>, vector<8x256xf32>,
    return
  }
  func.func @transform_0(%arg0: i32) -> (i32, i32) {
    %c0_i32 = arith.constant 0 : i32
    %c0_i32_0 = arith.constant 0 : i32
    return %arg0, %c0_i32 : i32, i32
  }
  func.func @transform_1(%arg0: i32) -> (i32, i32) {
    %c0_i32 = arith.constant 0 : i32
    %c0_i32_0 = arith.constant 0 : i32
    %c0_i32_1 = arith.constant 0 : i32
    return %c0_i32, %c0_i32_0 : i32, i32
  }
}

module attributes {stable_mosaic.version = 11 : i64} {
  func.func @_conv_matmul_kernel(%arg0: i32, %arg1: i32, %arg2: i32, %arg3: memref<32x512xbf16, #tpu.memory_space<vmem>>, %arg4: memref<512x256xbf16, #tpu.memory_space<vmem>>, %arg5: memref<32x256xf32, #tpu.memory_space<vmem>>, %arg6: memref<32x256xf32, #tpu.memory_space<vmem>>) attributes {dimension_semantics = [#tpu.dimension_semantics<parallel>, #tpu.dimension_semantics<parallel>, #tpu.dimension_semantics<arbitrary>], iteration_bounds = array<i64: 1, 2, 8>, scalar_prefetch = 0 : i64, scratch_operands = 1 : i64, tpu.core_type = #tpu.core_type<tc>, window_params = [{transform_indices = @transform_0, window_bounds = array<i64: 32, 512>}, {transform_indices = @transform_1, window_bounds = array<i64: 512, 256>}, {transform_indices = @transform_2, window_bounds = array<i64: 32, 256>}]} {
    %c0_i32 = arith.constant 0 : i32
    %0 = arith.cmpi eq, %arg2, %c0_i32 : i32
    %1 = arith.extui %0 : i1 to i32
    %c0_i32_0 = arith.constant 0 : i32
    %2 = arith.cmpi ne, %1, %c0_i32_0 : i32
    scf.if %2 {
      %cst_9 = arith.constant 0.000000e+00 : f32
      %12 = vector.broadcast %cst_9 : f32 to vector<32x256xf32>
      %c0_10 = arith.constant 0 : index
      %c0_11 = arith.constant 0 : index
      %13 = vector.load %arg6[%c0_10, %c0_11] : memref<32x256xf32, #tpu.memory_space<vmem>>, vector<32x256xf32>
      tpu.vector_store %arg6[%c0_10, %c0_11], %12 {strides = array<i32>} : memref<32x256xf32, #tpu.memory_space<vmem>>, vector<32x256xf32>,
    } else {
    }
    %c0 = arith.constant 0 : index
    %c0_1 = arith.constant 0 : index
    %3 = vector.load %arg3[%c0, %c0_1] : memref<32x512xbf16, #tpu.memory_space<vmem>>, vector<32x512xbf16>
    %c0_2 = arith.constant 0 : index
    %c0_3 = arith.constant 0 : index
    %4 = vector.load %arg6[%c0_2, %c0_3] : memref<32x256xf32, #tpu.memory_space<vmem>>, vector<32x256xf32>
    %c0_4 = arith.constant 0 : index
    %c0_5 = arith.constant 0 : index
    %5 = vector.load %arg4[%c0_4, %c0_5] : memref<512x256xbf16, #tpu.memory_space<vmem>>, vector<512x256xbf16>
    %cst = arith.constant dense<0.000000e+00> : vector<32x256xf32>
    %6 = tpu.matmul %3, %5, %cst {dimension_numbers = #tpu.dot_dimension_numbers<[1], [0], [0], [1], [0, 0, 1, 1], [], []>} : vector<32x512xbf16>, vector<512x256xbf16>, vector<32x256xf32> -> vector<32x256xf32>
    %7 = arith.addf %4, %6 : vector<32x256xf32>
    %c0_6 = arith.constant 0 : index
    %c0_7 = arith.constant 0 : index
    %8 = vector.load %arg6[%c0_6, %c0_7] : memref<32x256xf32, #tpu.memory_space<vmem>>, vector<32x256xf32>
    tpu.vector_store %arg6[%c0_6, %c0_7], %7 {strides = array<i32>} : memref<32x256xf32, #tpu.memory_space<vmem>>, vector<32x256xf32>,
    %c7_i32 = arith.constant 7 : i32
    %9 = arith.cmpi eq, %arg2, %c7_i32 : i32
    %10 = arith.extui %9 : i1 to i32
    %c0_i32_8 = arith.constant 0 : i32
    %11 = arith.cmpi ne, %10, %c0_i32_8 : i32
    scf.if %11 {
      %c0_9 = arith.constant 0 : index
      %c0_10 = arith.constant 0 : index
      %12 = vector.load %arg6[%c0_9, %c0_10] : memref<32x256xf32, #tpu.memory_space<vmem>>, vector<32x256xf32>
      %c0_11 = arith.constant 0 : index
      %c0_12 = arith.constant 0 : index
      %13 = vector.load %arg5[%c0_11, %c0_12] : memref<32x256xf32, #tpu.memory_space<vmem>>, vector<32x256xf32>
      tpu.vector_store %arg5[%c0_11, %c0_12], %12 {strides = array<i32>} : memref<32x256xf32, #tpu.memory_space<vmem>>, vector<32x256xf32>,
    } else {
    }
    return
  }
  func.func @transform_0(%arg0: i32, %arg1: i32, %arg2: i32) -> (i32, i32) {
    %c0_i32 = arith.constant 0 : i32
    return %arg0, %arg2 : i32, i32
  }
  func.func @transform_1(%arg0: i32, %arg1: i32, %arg2: i32) -> (i32, i32) {
    %c0_i32 = arith.constant 0 : i32
    return %arg2, %arg1 : i32, i32
  }
  func.func @transform_2(%arg0: i32, %arg1: i32, %arg2: i32) -> (i32, i32) {
    %c0_i32 = arith.constant 0 : i32
    return %arg0, %arg1 : i32, i32
  }
}

module attributes {stable_mosaic.version = 11 : i64} {
  func.func @_bn_stats_kernel(%arg0: i32, %arg1: memref<32x512xf32, #tpu.memory_space<vmem>>, %arg2: memref<8x512xf32, #tpu.memory_space<vmem>>) attributes {dimension_semantics = [#tpu.dimension_semantics<arbitrary>], iteration_bounds = array<i64: 1>, scalar_prefetch = 0 : i64, scratch_operands = 0 : i64, tpu.core_type = #tpu.core_type<tc>, window_params = [{transform_indices = @transform_0, window_bounds = array<i64: 32, 512>}, {pipeline_mode = #tpu.pipeline_mode<synchronous>, transform_indices = @transform_1, window_bounds = array<i64: 8, 512>}]} {
    %c0_i32 = arith.constant 0 : i32
    %0 = arith.cmpi eq, %arg0, %c0_i32 : i32
    %1 = arith.extui %0 : i1 to i32
    %c0_i32_0 = arith.constant 0 : i32
    %2 = arith.cmpi ne, %1, %c0_i32_0 : i32
    scf.if %2 {
      %cst_8 = arith.constant 0.000000e+00 : f32
      %14 = vector.broadcast %cst_8 : f32 to vector<8x512xf32>
      %c0_9 = arith.constant 0 : index
      %c0_10 = arith.constant 0 : index
      %15 = vector.load %arg2[%c0_9, %c0_10] : memref<8x512xf32, #tpu.memory_space<vmem>>, vector<8x512xf32>
      tpu.vector_store %arg2[%c0_9, %c0_10], %14 {strides = array<i32>} : memref<8x512xf32, #tpu.memory_space<vmem>>, vector<8x512xf32>,
    } else {
    }
    %c0 = arith.constant 0 : index
    %c0_1 = arith.constant 0 : index
    %3 = vector.load %arg1[%c0, %c0_1] : memref<32x512xf32, #tpu.memory_space<vmem>>, vector<32x512xf32>
    %cst = arith.constant dense<0.000000e+00> : vector<512xf32>
    %4 = vector.multi_reduction <add>, %3, %cst [0] : vector<32x512xf32> to vector<512xf32>
    %5 = vector.shape_cast %4 : vector<512xf32> to vector<1x512xf32>
    %6 = arith.mulf %3, %3 : vector<32x512xf32>
    %cst_2 = arith.constant dense<0.000000e+00> : vector<512xf32>
    %7 = vector.multi_reduction <add>, %6, %cst_2 [0] : vector<32x512xf32> to vector<512xf32>
    %8 = vector.shape_cast %7 : vector<512xf32> to vector<1x512xf32>
    %cst_3 = arith.constant 0.000000e+00 : f32
    %9 = vector.broadcast %cst_3 : f32 to vector<6x512xf32>
    %c0_4 = arith.constant 0 : index
    %c0_5 = arith.constant 0 : index
    %10 = vector.load %arg2[%c0_4, %c0_5] : memref<8x512xf32, #tpu.memory_space<vmem>>, vector<8x512xf32>
    %11 = tpu.concatenate %5, %8, %9 in 0 : vector<1x512xf32>, vector<1x512xf32>, vector<6x512xf32> -> vector<8x512xf32>
    %12 = arith.addf %10, %11 : vector<8x512xf32>
    %c0_6 = arith.constant 0 : index
    %c0_7 = arith.constant 0 : index
    %13 = vector.load %arg2[%c0_6, %c0_7] : memref<8x512xf32, #tpu.memory_space<vmem>>, vector<8x512xf32>
    tpu.vector_store %arg2[%c0_6, %c0_7], %12 {strides = array<i32>} : memref<8x512xf32, #tpu.memory_space<vmem>>, vector<8x512xf32>,
    return
  }
  func.func @transform_0(%arg0: i32) -> (i32, i32) {
    %c0_i32 = arith.constant 0 : i32
    %c0_i32_0 = arith.constant 0 : i32
    return %arg0, %c0_i32 : i32, i32
  }
  func.func @transform_1(%arg0: i32) -> (i32, i32) {
    %c0_i32 = arith.constant 0 : i32
    %c0_i32_0 = arith.constant 0 : i32
    %c0_i32_1 = arith.constant 0 : i32
    return %c0_i32, %c0_i32_0 : i32, i32
  }
}

module attributes {stable_mosaic.version = 11 : i64} {
  func.func @_bn_apply_kernel(%arg0: i32, %arg1: memref<32x512xf32, #tpu.memory_space<vmem>>, %arg2: memref<8x512xf32, #tpu.memory_space<vmem>>, %arg3: memref<1x512xf32, #tpu.memory_space<vmem>>, %arg4: memref<1x512xf32, #tpu.memory_space<vmem>>, %arg5: memref<32x512xf32, #tpu.memory_space<vmem>>) attributes {dimension_semantics = [#tpu.dimension_semantics<parallel>], iteration_bounds = array<i64: 1>, scalar_prefetch = 0 : i64, scratch_operands = 0 : i64, tpu.core_type = #tpu.core_type<tc>, window_params = [{transform_indices = @transform_0, window_bounds = array<i64: 32, 512>}, {pipeline_mode = #tpu.pipeline_mode<synchronous>, transform_indices = @transform_1, window_bounds = array<i64: 8, 512>}, {pipeline_mode = #tpu.pipeline_mode<synchronous>, transform_indices = @transform_2, window_bounds = array<i64: 1, 512>}, {pipeline_mode = #tpu.pipeline_mode<synchronous>, transform_indices = @transform_3, window_bounds = array<i64: 1, 512>}, {transform_indices = @transform_4, window_bounds = array<i64: 32, 512>}]} {
    %c0 = arith.constant 0 : index
    %c0_0 = arith.constant 0 : index
    %0 = vector.load %arg1[%c0, %c0_0] : memref<32x512xf32, #tpu.memory_space<vmem>>, vector<32x512xf32>
    %c0_1 = arith.constant 0 : index
    %c0_2 = arith.constant 0 : index
    %1 = vector.load %arg2[%c0_1, %c0_2] : memref<8x512xf32, #tpu.memory_space<vmem>>, vector<1x512xf32>
    %cst = arith.constant 0.055555556 : f32
    %2 = vector.broadcast %cst : f32 to vector<1x512xf32>
    %3 = arith.mulf %1, %2 : vector<1x512xf32>
    %c1 = arith.constant 1 : index
    %c0_3 = arith.constant 0 : index
    %4 = vector.load %arg2[%c1, %c0_3] : memref<8x512xf32, #tpu.memory_space<vmem>>, vector<1x512xf32>
    %cst_4 = arith.constant 0.055555556 : f32
    %5 = vector.broadcast %cst_4 : f32 to vector<1x512xf32>
    %6 = arith.mulf %4, %5 : vector<1x512xf32>
    %7 = arith.mulf %3, %3 : vector<1x512xf32>
    %8 = arith.subf %6, %7 : vector<1x512xf32>
    %cst_5 = arith.constant 9.99999974E-6 : f32
    %9 = vector.broadcast %cst_5 : f32 to vector<1x512xf32>
    %10 = arith.addf %8, %9 : vector<1x512xf32>
    %11 = math.rsqrt %10 : vector<1x512xf32>
    %12 = vector.broadcast %3 : vector<1x512xf32> to vector<32x512xf32>
    %13 = arith.subf %0, %12 : vector<32x512xf32>
    %14 = vector.broadcast %11 : vector<1x512xf32> to vector<32x512xf32>
    %15 = arith.mulf %13, %14 : vector<32x512xf32>
    %c0_6 = arith.constant 0 : index
    %c0_7 = arith.constant 0 : index
    %16 = vector.load %arg3[%c0_6, %c0_7] : memref<1x512xf32, #tpu.memory_space<vmem>>, vector<1x512xf32>
    %17 = vector.broadcast %16 : vector<1x512xf32> to vector<32x512xf32>
    %18 = arith.mulf %15, %17 : vector<32x512xf32>
    %c0_8 = arith.constant 0 : index
    %c0_9 = arith.constant 0 : index
    %19 = vector.load %arg4[%c0_8, %c0_9] : memref<1x512xf32, #tpu.memory_space<vmem>>, vector<1x512xf32>
    %20 = vector.broadcast %19 : vector<1x512xf32> to vector<32x512xf32>
    %21 = arith.addf %18, %20 : vector<32x512xf32>
    %cst_10 = arith.constant 0.000000e+00 : f32
    %22 = vector.broadcast %cst_10 : f32 to vector<32x512xf32>
    %23 = arith.cmpf ogt, %21, %22 : vector<32x512xf32>
    %cst_11 = arith.constant 2.000000e-01 : f32
    %24 = vector.broadcast %cst_11 : f32 to vector<32x512xf32>
    %25 = arith.mulf %24, %21 : vector<32x512xf32>
    %26 = arith.select %23, %21, %25 : vector<32x512xi1>, vector<32x512xf32>
    %c0_12 = arith.constant 0 : index
    %c0_13 = arith.constant 0 : index
    %27 = vector.load %arg5[%c0_12, %c0_13] : memref<32x512xf32, #tpu.memory_space<vmem>>, vector<32x512xf32>
    tpu.vector_store %arg5[%c0_12, %c0_13], %26 {strides = array<i32>} : memref<32x512xf32, #tpu.memory_space<vmem>>, vector<32x512xf32>,
    return
  }
  func.func @transform_0(%arg0: i32) -> (i32, i32) {
    %c0_i32 = arith.constant 0 : i32
    %c0_i32_0 = arith.constant 0 : i32
    return %arg0, %c0_i32 : i32, i32
  }
  func.func @transform_1(%arg0: i32) -> (i32, i32) {
    %c0_i32 = arith.constant 0 : i32
    %c0_i32_0 = arith.constant 0 : i32
    %c0_i32_1 = arith.constant 0 : i32
    return %c0_i32, %c0_i32_0 : i32, i32
  }
  func.func @transform_2(%arg0: i32) -> (i32, i32) {
    %c0_i32 = arith.constant 0 : i32
    %c0_i32_0 = arith.constant 0 : i32
    %c0_i32_1 = arith.constant 0 : i32
    return %c0_i32, %c0_i32_0 : i32, i32
  }
  func.func @transform_3(%arg0: i32) -> (i32, i32) {
    %c0_i32 = arith.constant 0 : i32
    %c0_i32_0 = arith.constant 0 : i32
    %c0_i32_1 = arith.constant 0 : i32
    return %c0_i32, %c0_i32_0 : i32, i32
  }
  func.func @transform_4(%arg0: i32) -> (i32, i32) {
    %c0_i32 = arith.constant 0 : i32
    %c0_i32_0 = arith.constant 0 : i32
    return %arg0, %c0_i32 : i32, i32
  }
}

module attributes {stable_mosaic.version = 11 : i64} {
  func.func @_conv_matmul_kernel(%arg0: i32, %arg1: i32, %arg2: i32, %arg3: memref<16x512xbf16, #tpu.memory_space<vmem>>, %arg4: memref<512x128xbf16, #tpu.memory_space<vmem>>, %arg5: memref<16x128xf32, #tpu.memory_space<vmem>>, %arg6: memref<16x128xf32, #tpu.memory_space<vmem>>) attributes {dimension_semantics = [#tpu.dimension_semantics<parallel>, #tpu.dimension_semantics<parallel>, #tpu.dimension_semantics<arbitrary>], iteration_bounds = array<i64: 1, 1, 16>, scalar_prefetch = 0 : i64, scratch_operands = 1 : i64, tpu.core_type = #tpu.core_type<tc>, window_params = [{transform_indices = @transform_0, window_bounds = array<i64: 16, 512>}, {transform_indices = @transform_1, window_bounds = array<i64: 512, 128>}, {transform_indices = @transform_2, window_bounds = array<i64: 16, 128>}]} {
    %c0_i32 = arith.constant 0 : i32
    %0 = arith.cmpi eq, %arg2, %c0_i32 : i32
    %1 = arith.extui %0 : i1 to i32
    %c0_i32_0 = arith.constant 0 : i32
    %2 = arith.cmpi ne, %1, %c0_i32_0 : i32
    scf.if %2 {
      %cst_9 = arith.constant 0.000000e+00 : f32
      %12 = vector.broadcast %cst_9 : f32 to vector<16x128xf32>
      %c0_10 = arith.constant 0 : index
      %c0_11 = arith.constant 0 : index
      %13 = vector.load %arg6[%c0_10, %c0_11] : memref<16x128xf32, #tpu.memory_space<vmem>>, vector<16x128xf32>
      tpu.vector_store %arg6[%c0_10, %c0_11], %12 {strides = array<i32>} : memref<16x128xf32, #tpu.memory_space<vmem>>, vector<16x128xf32>,
    } else {
    }
    %c0 = arith.constant 0 : index
    %c0_1 = arith.constant 0 : index
    %3 = vector.load %arg3[%c0, %c0_1] : memref<16x512xbf16, #tpu.memory_space<vmem>>, vector<16x512xbf16>
    %c0_2 = arith.constant 0 : index
    %c0_3 = arith.constant 0 : index
    %4 = vector.load %arg6[%c0_2, %c0_3] : memref<16x128xf32, #tpu.memory_space<vmem>>, vector<16x128xf32>
    %c0_4 = arith.constant 0 : index
    %c0_5 = arith.constant 0 : index
    %5 = vector.load %arg4[%c0_4, %c0_5] : memref<512x128xbf16, #tpu.memory_space<vmem>>, vector<512x128xbf16>
    %cst = arith.constant dense<0.000000e+00> : vector<16x128xf32>
    %6 = tpu.matmul %3, %5, %cst {dimension_numbers = #tpu.dot_dimension_numbers<[1], [0], [0], [1], [0, 0, 1, 1], [], []>} : vector<16x512xbf16>, vector<512x128xbf16>, vector<16x128xf32> -> vector<16x128xf32>
    %7 = arith.addf %4, %6 : vector<16x128xf32>
    %c0_6 = arith.constant 0 : index
    %c0_7 = arith.constant 0 : index
    %8 = vector.load %arg6[%c0_6, %c0_7] : memref<16x128xf32, #tpu.memory_space<vmem>>, vector<16x128xf32>
    tpu.vector_store %arg6[%c0_6, %c0_7], %7 {strides = array<i32>} : memref<16x128xf32, #tpu.memory_space<vmem>>, vector<16x128xf32>,
    %c15_i32 = arith.constant 15 : i32
    %9 = arith.cmpi eq, %arg2, %c15_i32 : i32
    %10 = arith.extui %9 : i1 to i32
    %c0_i32_8 = arith.constant 0 : i32
    %11 = arith.cmpi ne, %10, %c0_i32_8 : i32
    scf.if %11 {
      %c0_9 = arith.constant 0 : index
      %c0_10 = arith.constant 0 : index
      %12 = vector.load %arg6[%c0_9, %c0_10] : memref<16x128xf32, #tpu.memory_space<vmem>>, vector<16x128xf32>
      %13 = arith.negf %12 : vector<16x128xf32>
      %14 = math.exp %13 : vector<16x128xf32>
      %cst_11 = arith.constant 1.000000e+00 : f32
      %15 = vector.broadcast %cst_11 : f32 to vector<16x128xf32>
      %16 = arith.addf %15, %14 : vector<16x128xf32>
      %17 = arith.divf %15, %16 : vector<16x128xf32>
      %c0_12 = arith.constant 0 : index
      %c0_13 = arith.constant 0 : index
      %18 = vector.load %arg5[%c0_12, %c0_13] : memref<16x128xf32, #tpu.memory_space<vmem>>, vector<16x128xf32>
      tpu.vector_store %arg5[%c0_12, %c0_13], %17 {strides = array<i32>} : memref<16x128xf32, #tpu.memory_space<vmem>>, vector<16x128xf32>,
    } else {
    }
    return
  }
  func.func @transform_0(%arg0: i32, %arg1: i32, %arg2: i32) -> (i32, i32) {
    %c0_i32 = arith.constant 0 : i32
    return %arg0, %arg2 : i32, i32
  }
  func.func @transform_1(%arg0: i32, %arg1: i32, %arg2: i32) -> (i32, i32) {
    %c0_i32 = arith.constant 0 : i32
    return %arg2, %arg1 : i32, i32
  }
  func.func @transform_2(%arg0: i32, %arg1: i32, %arg2: i32) -> (i32, i32) {
    %c0_i32 = arith.constant 0 : i32
    return %arg0, %arg1 : i32, i32
  }
}

</mosaic_0001>

<llo_original>
// kernel: discriminator_forward.11
$region0: #{discriminator_forward.11}
  #allocation0 [shape = 'u32[]', space=smem, size = 0x4, offset = 0x4, fixed_abs, tag = 'smem constant byte address 0x4 - core index']
  #allocation1 [shape = 'u32[72,128]{1,0:T(1,128)}', space=vmem, size = 0x9000, scoped, tag = 'internal scratch']
  #allocation2 [shape = 'f32[512,128]{1,0:T(8,128)}', space=vmem, size = 0x40000, scoped, tag = 'scratch operand']
  %s0 = inlined_call_operand.vmem [shape: bf16[512,128], index: 0, kind: input, shape index: {}]
  %s1 = inlined_call_operand.vmem [shape: bf16[128,128], index: 1, kind: input, shape index: {}]
  %s2 = inlined_call_operand.vmem [shape: f32[512,128], index: 2, kind: output, shape index: {}]
  %s3 = sld [smem:[#allocation0]]
  $region26: #{discriminator_forward.11} parent=0
    _
  %s5 = ssub.s32 1, %s3
  %s6 = scalar_select 0, %s5, %s3
  // Predicated region
  $region2: #{discriminator_forward.11} parent=0 // pred_check
    _
  $region3: #{discriminator_forward.11} parent=0 // pred_check_branch
    %8 = sbr.rel (0) target = $region5
  $region4: #{discriminator_forward.11} parent=0 // pred_region
    _
  $region5: #{discriminator_forward.11} parent=0 // pred_fallthru
    _
  // Predicated region
  $region6: #{discriminator_forward.11} parent=0 // pred_check
    _
  $region7: #{discriminator_forward.11} parent=0 // pred_check_branch
    %10 = sbr.rel (0) target = $region9
  $region8: #{discriminator_forward.11} parent=0 // pred_region
    _
  $region9: #{discriminator_forward.11} parent=0 // pred_fallthru
    _
  %p11 = scmp.eq.s32.totalorder 0, 0
  // Predicated region
  $region10: #{discriminator_forward.11} parent=0 // pred_check
    %p12 = pneg %p11
  $region11: #{discriminator_forward.11} parent=0 // pred_check_branch
    %14 = sbr.rel (%p12) target = $region13
  $region12: #{discriminator_forward.11} parent=0 // pred_region
    %15 = vst [vmem:[#allocation2] sm:$0xff] 0.0
    %16 = vst [vmem:[#allocation2 + $0x8] sm:$0xff] 0.0
    %17 = vst [vmem:[#allocation2 + $0x10] sm:$0xff] 0.0
    %18 = vst [vmem:[#allocation2 + $0x18] sm:$0xff] 0.0
    %19 = vst [vmem:[#allocation2 + $0x20] sm:$0xff] 0.0
    %20 = vst [vmem:[#allocation2 + $0x28] sm:$0xff] 0.0
    %21 = vst [vmem:[#allocation2 + $0x30] sm:$0xff] 0.0
    %22 = vst [vmem:[#allocation2 + $0x38] sm:$0xff] 0.0
    %23 = vst [vmem:[#allocation2 + $0x40] sm:$0xff] 0.0
    %24 = vst [vmem:[#allocation2 + $0x48] sm:$0xff] 0.0
    %25 = vst [vmem:[#allocation2 + $0x50] sm:$0xff] 0.0
    %26 = vst [vmem:[#allocation2 + $0x58] sm:$0xff] 0.0
    %27 = vst [vmem:[#allocation2 + $0x60] sm:$0xff] 0.0
    %28 = vst [vmem:[#allocation2 + $0x68] sm:$0xff] 0.0
    %29 = vst [vmem:[#allocation2 + $0x70] sm:$0xff] 0.0
    %30 = vst [vmem:[#allocation2 + $0x78] sm:$0xff] 0.0
    %31 = vst [vmem:[#allocation2 + $0x80] sm:$0xff] 0.0
    %32 = vst [vmem:[#allocation2 + $0x88] sm:$0xff] 0.0
    %33 = vst [vmem:[#allocation2 + $0x90] sm:$0xff] 0.0
    %34 = vst [vmem:[#allocation2 + $0x98] sm:$0xff] 0.0
    %35 = vst [vmem:[#allocation2 + $0xa0] sm:$0xff] 0.0
    %36 = vst [vmem:[#allocation2 + $0xa8] sm:$0xff] 0.0
    %37 = vst [vmem:[#allocation2 + $0xb0] sm:$0xff] 0.0
    %38 = vst [vmem:[#allocation2 + $0xb8] sm:$0xff] 0.0
    %39 = vst [vmem:[#allocation2 + $0xc0] sm:$0xff] 0.0
    %40 = vst [vmem:[#allocation2 + $0xc8] sm:$0xff] 0.0
    %41 = vst [vmem:[#allocation2 + $0xd0] sm:$0xff] 0.0
    %42 = vst [vmem:[#allocation2 + $0xd8] sm:$0xff] 0.0
    %43 = vst [vmem:[#allocation2 + $0xe0] sm:$0xff] 0.0
    %44 = vst [vmem:[#allocation2 + $0xe8] sm:$0xff] 0.0
    %45 = vst [vmem:[#allocation2 + $0xf0] sm:$0xff] 0.0
    %46 = vst [vmem:[#allocation2 + $0xf8] sm:$0xff] 0.0
    %47 = vst [vmem:[#allocation2 + $0x100] sm:$0xff] 0.0
    %48 = vst [vmem:[#allocation2 + $0x108] sm:$0xff] 0.0
    %49 = vst [vmem:[#allocation2 + $0x110] sm:$0xff] 0.0
    %50 = vst [vmem:[#allocation2 + $0x118] sm:$0xff] 0.0
    %51 = vst [vmem:[#allocation2 + $0x120] sm:$0xff] 0.0
    %52 = vst [vmem:[#allocation2 + $0x128] sm:$0xff] 0.0
    %53 = vst [vmem:[#allocation2 + $0x130] sm:$0xff] 0.0
    %54 = vst [vmem:[#allocation2 + $0x138] sm:$0xff] 0.0
    %55 = vst [vmem:[#allocation2 + $0x140] sm:$0xff] 0.0
    %56 = vst [vmem:[#allocation2 + $0x148] sm:$0xff] 0.0
    %57 = vst [vmem:[#allocation2 + $0x150] sm:$0xff] 0.0
    %58 = vst [vmem:[#allocation2 + $0x158] sm:$0xff] 0.0
    %59 = vst [vmem:[#allocation2 + $0x160] sm:$0xff] 0.0
    %60 = vst [vmem:[#allocation2 + $0x168] sm:$0xff] 0.0
    %61 = vst [vmem:[#allocation2 + $0x170] sm:$0xff] 0.0
    %62 = vst [vmem:[#allocation2 + $0x178] sm:$0xff] 0.0
    %63 = vst [vmem:[#allocation2 + $0x180] sm:$0xff] 0.0
    %64 = vst [vmem:[#allocation2 + $0x188] sm:$0xff] 0.0
    %65 = vst [vmem:[#allocation2 + $0x190] sm:$0xff] 0.0
    %66 = vst [vmem:[#allocation2 + $0x198] sm:$0xff] 0.0
    %67 = vst [vmem:[#allocation2 + $0x1a0] sm:$0xff] 0.0
    %68 = vst [vmem:[#allocation2 + $0x1a8] sm:$0xff] 0.0
    %69 = vst [vmem:[#allocation2 + $0x1b0] sm:$0xff] 0.0
    %70 = vst [vmem:[#allocation2 + $0x1b8] sm:$0xff] 0.0
    %71 = vst [vmem:[#allocation2 + $0x1c0] sm:$0xff] 0.0
    %72 = vst [vmem:[#allocation2 + $0x1c8] sm:$0xff] 0.0
    %73 = vst [vmem:[#allocation2 + $0x1d0] sm:$0xff] 0.0
    %74 = vst [vmem:[#allocation2 + $0x1d8] sm:$0xff] 0.0
    %75 = vst [vmem:[#allocation2 + $0x1e0] sm:$0xff] 0.0
    %76 = vst [vmem:[#allocation2 + $0x1e8] sm:$0xff] 0.0
    %77 = vst [vmem:[#allocation2 + $0x1f0] sm:$0xff] 0.0
    %78 = vst [vmem:[#allocation2 + $0x1f8] sm:$0xff] 0.0
  $region13: #{discriminator_forward.11} parent=0 // pred_fallthru
    _
  %v79 = vld [vmem:[%s0] sm:$0xf]
  %v80 = vld [vmem:[%s0 + $0x4] sm:$0xf]
  %v81 = vld [vmem:[%s0 + $0x8] sm:$0xf]
  %v82 = vld [vmem:[%s0 + $0xc] sm:$0xf]
  %v83 = vld [vmem:[%s0 + $0x10] sm:$0xf]
  %v84 = vld [vmem:[%s0 + $0x14] sm:$0xf]
  %v85 = vld [vmem:[%s0 + $0x18] sm:$0xf]
  %v86 = vld [vmem:[%s0 + $0x1c] sm:$0xf]
  %v87 = vld [vmem:[%s0 + $0x20] sm:$0xf]
  %v88 = vld [vmem:[%s0 + $0x24] sm:$0xf]
  %v89 = vld [vmem:[%s0 + $0x28] sm:$0xf]
  %v90 = vld [vmem:[%s0 + $0x2c] sm:$0xf]
  %v91 = vld [vmem:[%s0 + $0x30] sm:$0xf]
  %v92 = vld [vmem:[%s0 + $0x34] sm:$0xf]
  %v93 = vld [vmem:[%s0 + $0x38] sm:$0xf]
  %v94 = vld [vmem:[%s0 + $0x3c] sm:$0xf]
  %v95 = vld [vmem:[%s0 + $0x40] sm:$0xf]
  %v96 = vld [vmem:[%s0 + $0x44] sm:$0xf]
  %v97 = vld [vmem:[%s0 + $0x48] sm:$0xf]
  %v98 = vld [vmem:[%s0 + $0x4c] sm:$0xf]
  %v99 = vld [vmem:[%s0 + $0x50] sm:$0xf]
  %v100 = vld [vmem:[%s0 + $0x54] sm:$0xf]
  %v101 = vld [vmem:[%s0 + $0x58] sm:$0xf]
  %v102 = vld [vmem:[%s0 + $0x5c] sm:$0xf]
  %v103 = vld [vmem:[%s0 + $0x60] sm:$0xf]
  %v104 = vld [vmem:[%s0 + $0x64] sm:$0xf]
  %v105 = vld [vmem:[%s0 + $0x68] sm:$0xf]
  %v106 = vld [vmem:[%s0 + $0x6c] sm:$0xf]
  %v107 = vld [vmem:[%s0 + $0x70] sm:$0xf]
  %v108 = vld [vmem:[%s0 + $0x74] sm:$0xf]
  %v109 = vld [vmem:[%s0 + $0x78] sm:$0xf]
  %v110 = vld [vmem:[%s0 + $0x7c] sm:$0xf]
  %v111 = vld [vmem:[%s0 + $0x80] sm:$0xf]
  %v112 = vld [vmem:[%s0 + $0x84] sm:$0xf]
  %v113 = vld [vmem:[%s0 + $0x88] sm:$0xf]
  %v114 = vld [vmem:[%s0 + $0x8c] sm:$0xf]
  %v115 = vld [vmem:[%s0 + $0x90] sm:$0xf]
  %v116 = vld [vmem:[%s0 + $0x94] sm:$0xf]
  %v117 = vld [vmem:[%s0 + $0x98] sm:$0xf]
  %v118 = vld [vmem:[%s0 + $0x9c] sm:$0xf]
  %v119 = vld [vmem:[%s0 + $0xa0] sm:$0xf]
  %v120 = vld [vmem:[%s0 + $0xa4] sm:$0xf]
  %v121 = vld [vmem:[%s0 + $0xa8] sm:$0xf]
  %v122 = vld [vmem:[%s0 + $0xac] sm:$0xf]
  %v123 = vld [vmem:[%s0 + $0xb0] sm:$0xf]
  %v124 = vld [vmem:[%s0 + $0xb4] sm:$0xf]
  %v125 = vld [vmem:[%s0 + $0xb8] sm:$0xf]
  %v126 = vld [vmem:[%s0 + $0xbc] sm:$0xf]
  %v127 = vld [vmem:[%s0 + $0xc0] sm:$0xf]
  %v128 = vld [vmem:[%s0 + $0xc4] sm:$0xf]
  %v129 = vld [vmem:[%s0 + $0xc8] sm:$0xf]
  %v130 = vld [vmem:[%s0 + $0xcc] sm:$0xf]
  %v131 = vld [vmem:[%s0 + $0xd0] sm:$0xf]
  %v132 = vld [vmem:[%s0 + $0xd4] sm:$0xf]
  %v133 = vld [vmem:[%s0 + $0xd8] sm:$0xf]
  %v134 = vld [vmem:[%s0 + $0xdc] sm:$0xf]
  %v135 = vld [vmem:[%s0 + $0xe0] sm:$0xf]
  %v136 = vld [vmem:[%s0 + $0xe4] sm:$0xf]
  %v137 = vld [vmem:[%s0 + $0xe8] sm:$0xf]
  %v138 = vld [vmem:[%s0 + $0xec] sm:$0xf]
  %v139 = vld [vmem:[%s0 + $0xf0] sm:$0xf]
  %v140 = vld [vmem:[%s0 + $0xf4] sm:$0xf]
  %v141 = vld [vmem:[%s0 + $0xf8] sm:$0xf]
  %v142 = vld [vmem:[%s0 + $0xfc] sm:$0xf]
  %v143 = vld [vmem:[#allocation2] sm:$0xff]
  %v144 = vld [vmem:[#allocation2 + $0x8] sm:$0xff]
  %v145 = vld [vmem:[#allocation2 + $0x10] sm:$0xff]
  %v146 = vld [vmem:[#allocation2 + $0x18] sm:$0xff]
  %v147 = vld [vmem:[#allocation2 + $0x20] sm:$0xff]
  %v148 = vld [vmem:[#allocation2 + $0x28] sm:$0xff]
  %v149 = vld [vmem:[#allocation2 + $0x30] sm:$0xff]
  %v150 = vld [vmem:[#allocation2 + $0x38] sm:$0xff]
  %v151 = vld [vmem:[#allocation2 + $0x40] sm:$0xff]
  %v152 = vld [vmem:[#allocation2 + $0x48] sm:$0xff]
  %v153 = vld [vmem:[#allocation2 + $0x50] sm:$0xff]
  %v154 = vld [vmem:[#allocation2 + $0x58] sm:$0xff]
  %v155 = vld [vmem:[#allocation2 + $0x60] sm:$0xff]
  %v156 = vld [vmem:[#allocation2 + $0x68] sm:$0xff]
  %v157 = vld [vmem:[#allocation2 + $0x70] sm:$0xff]
  %v158 = vld [vmem:[#allocation2 + $0x78] sm:$0xff]
  %v159 = vld [vmem:[#allocation2 + $0x80] sm:$0xff]
  %v160 = vld [vmem:[#allocation2 + $0x88] sm:$0xff]
  %v161 = vld [vmem:[#allocation2 + $0x90] sm:$0xff]
  %v162 = vld [vmem:[#allocation2 + $0x98] sm:$0xff]
  %v163 = vld [vmem:[#allocation2 + $0xa0] sm:$0xff]
  %v164 = vld [vmem:[#allocation2 + $0xa8] sm:$0xff]
  %v165 = vld [vmem:[#allocation2 + $0xb0] sm:$0xff]
  %v166 = vld [vmem:[#allocation2 + $0xb8] sm:$0xff]
  %v167 = vld [vmem:[#allocation2 + $0xc0] sm:$0xff]
  %v168 = vld [vmem:[#allocation2 + $0xc8] sm:$0xff]
  %v169 = vld [vmem:[#allocation2 + $0xd0] sm:$0xff]
  %v170 = vld [vmem:[#allocation2 + $0xd8] sm:$0xff]
  %v171 = vld [vmem:[#allocation2 + $0xe0] sm:$0xff]
  %v172 = vld [vmem:[#allocation2 + $0xe8] sm:$0xff]
  %v173 = vld [vmem:[#allocation2 + $0xf0] sm:$0xff]
  %v174 = vld [vmem:[#allocation2 + $0xf8] sm:$0xff]
  %v175 = vld [vmem:[#allocation2 + $0x100] sm:$0xff]
  %v176 = vld [vmem:[#allocation2 + $0x108] sm:$0xff]
  %v177 = vld [vmem:[#allocation2 + $0x110] sm:$0xff]
  %v178 = vld [vmem:[#allocation2 + $0x118] sm:$0xff]
  %v179 = vld [vmem:[#allocation2 + $0x120] sm:$0xff]
  %v180 = vld [vmem:[#allocation2 + $0x128] sm:$0xff]
  %v181 = vld [vmem:[#allocation2 + $0x130] sm:$0xff]
  %v182 = vld [vmem:[#allocation2 + $0x138] sm:$0xff]
  %v183 = vld [vmem:[#allocation2 + $0x140] sm:$0xff]
  %v184 = vld [vmem:[#allocation2 + $0x148] sm:$0xff]
  %v185 = vld [vmem:[#allocation2 + $0x150] sm:$0xff]
  %v186 = vld [vmem:[#allocation2 + $0x158] sm:$0xff]
  %v187 = vld [vmem:[#allocation2 + $0x160] sm:$0xff]
  %v188 = vld [vmem:[#allocation2 + $0x168] sm:$0xff]
  %v189 = vld [vmem:[#allocation2 + $0x170] sm:$0xff]
  %v190 = vld [vmem:[#allocation2 + $0x178] sm:$0xff]
  %v191 = vld [vmem:[#allocation2 + $0x180] sm:$0xff]
  %v192 = vld [vmem:[#allocation2 + $0x188] sm:$0xff]
  %v193 = vld [vmem:[#allocation2 + $0x190] sm:$0xff]
  %v194 = vld [vmem:[#allocation2 + $0x198] sm:$0xff]
  %v195 = vld [vmem:[#allocation2 + $0x1a0] sm:$0xff]
  %v196 = vld [vmem:[#allocation2 + $0x1a8] sm:$0xff]
  %v197 = vld [vmem:[#allocation2 + $0x1b0] sm:$0xff]
  %v198 = vld [vmem:[#allocation2 + $0x1b8] sm:$0xff]
  %v199 = vld [vmem:[#allocation2 + $0x1c0] sm:$0xff]
  %v200 = vld [vmem:[#allocation2 + $0x1c8] sm:$0xff]
  %v201 = vld [vmem:[#allocation2 + $0x1d0] sm:$0xff]
  %v202 = vld [vmem:[#allocation2 + $0x1d8] sm:$0xff]
  %v203 = vld [vmem:[#allocation2 + $0x1e0] sm:$0xff]
  %v204 = vld [vmem:[#allocation2 + $0x1e8] sm:$0xff]
  %v205 = vld [vmem:[#allocation2 + $0x1f0] sm:$0xff]
  %v206 = vld [vmem:[#allocation2 + $0x1f8] sm:$0xff]
  %v207 = vld [vmem:[%s1] sm:$0xf]
  %v208 = vld [vmem:[%s1 + $0x4] sm:$0xf]
  %v209 = vld [vmem:[%s1 + $0x8] sm:$0xf]
  %v210 = vld [vmem:[%s1 + $0xc] sm:$0xf]
  %v211 = vld [vmem:[%s1 + $0x10] sm:$0xf]
  %v212 = vld [vmem:[%s1 + $0x14] sm:$0xf]
  %v213 = vld [vmem:[%s1 + $0x18] sm:$0xf]
  %v214 = vld [vmem:[%s1 + $0x1c] sm:$0xf]
  %v215 = vld [vmem:[%s1 + $0x20] sm:$0xf]
  %v216 = vld [vmem:[%s1 + $0x24] sm:$0xf]
  %v217 = vld [vmem:[%s1 + $0x28] sm:$0xf]
  %v218 = vld [vmem:[%s1 + $0x2c] sm:$0xf]
  %v219 = vld [vmem:[%s1 + $0x30] sm:$0xf]
  %v220 = vld [vmem:[%s1 + $0x34] sm:$0xf]
  %v221 = vld [vmem:[%s1 + $0x38] sm:$0xf]
  %v222 = vld [vmem:[%s1 + $0x3c] sm:$0xf]
  %v287 = vunpack.c.l.b16 %v79
  %v288 = vunpack.c.l.b16 %v80
  %v289 = vunpack.c.l.b16 %v81
  %v290 = vunpack.c.l.b16 %v82
  %v291 = vunpack.c.l.b16 %v83
  %v292 = vunpack.c.l.b16 %v84
  %v293 = vunpack.c.l.b16 %v85
  %v294 = vunpack.c.l.b16 %v86
  %v295 = vunpack.c.l.b16 %v87
  %v296 = vunpack.c.l.b16 %v88
  %v297 = vunpack.c.l.b16 %v89
  %v298 = vunpack.c.l.b16 %v90
  %v299 = vunpack.c.l.b16 %v91
  %v300 = vunpack.c.l.b16 %v92
  %v301 = vunpack.c.l.b16 %v93
  %v302 = vunpack.c.l.b16 %v94
  %v303 = vunpack.c.l.b16 %v95
  %v304 = vunpack.c.l.b16 %v96
  %v305 = vunpack.c.l.b16 %v97
  %v306 = vunpack.c.l.b16 %v98
  %v307 = vunpack.c.l.b16 %v99
  %v308 = vunpack.c.l.b16 %v100
  %v309 = vunpack.c.l.b16 %v101
  %v310 = vunpack.c.l.b16 %v102
  %v311 = vunpack.c.l.b16 %v103
  %v312 = vunpack.c.l.b16 %v104
  %v313 = vunpack.c.l.b16 %v105
  %v314 = vunpack.c.l.b16 %v106
  %v315 = vunpack.c.l.b16 %v107
  %v316 = vunpack.c.l.b16 %v108
  %v317 = vunpack.c.l.b16 %v109
  %v318 = vunpack.c.l.b16 %v110
  %v319 = vunpack.c.l.b16 %v111
  %v320 = vunpack.c.l.b16 %v112
  %v321 = vunpack.c.l.b16 %v113
  %v322 = vunpack.c.l.b16 %v114
  %v323 = vunpack.c.l.b16 %v115
  %v324 = vunpack.c.l.b16 %v116
  %v325 = vunpack.c.l.b16 %v117
  %v326 = vunpack.c.l.b16 %v118
  %v327 = vunpack.c.l.b16 %v119
  %v328 = vunpack.c.l.b16 %v120
  %v329 = vunpack.c.l.b16 %v121
  %v330 = vunpack.c.l.b16 %v122
  %v331 = vunpack.c.l.b16 %v123
  %v332 = vunpack.c.l.b16 %v124
  %v333 = vunpack.c.l.b16 %v125
  %v334 = vunpack.c.l.b16 %v126
  %v335 = vunpack.c.l.b16 %v127
  %v336 = vunpack.c.l.b16 %v128
  %v337 = vunpack.c.l.b16 %v129
  %v338 = vunpack.c.l.b16 %v130
  %v339 = vunpack.c.l.b16 %v131
  %v340 = vunpack.c.l.b16 %v132
  %v341 = vunpack.c.l.b16 %v133
  %v342 = vunpack.c.l.b16 %v134
  %v343 = vunpack.c.l.b16 %v135
  %v344 = vunpack.c.l.b16 %v136
  %v345 = vunpack.c.l.b16 %v137
  %v346 = vunpack.c.l.b16 %v138
  %v347 = vunpack.c.l.b16 %v139
  %v348 = vunpack.c.l.b16 %v140
  %v349 = vunpack.c.l.b16 %v141
  %v350 = vunpack.c.l.b16 %v142
  %v351 = vpack.c.b16 %v288, %v287
  %v352 = vpack.c.b16 %v290, %v289
  %v353 = vpack.c.b16 %v292, %v291
  %v354 = vpack.c.b16 %v294, %v293
  %v355 = vpack.c.b16 %v296, %v295
  %v356 = vpack.c.b16 %v298, %v297
  %v357 = vpack.c.b16 %v300, %v299
  %v358 = vpack.c.b16 %v302, %v301
  %v359 = vpack.c.b16 %v304, %v303
  %v360 = vpack.c.b16 %v306, %v305
  %v361 = vpack.c.b16 %v308, %v307
  %v362 = vpack.c.b16 %v310, %v309
  %v363 = vpack.c.b16 %v312, %v311
  %v364 = vpack.c.b16 %v314, %v313
  %v365 = vpack.c.b16 %v316, %v315
  %v366 = vpack.c.b16 %v318, %v317
  %v367 = vpack.c.b16 %v320, %v319
  %v368 = vpack.c.b16 %v322, %v321
  %v369 = vpack.c.b16 %v324, %v323
  %v370 = vpack.c.b16 %v326, %v325
  %v371 = vpack.c.b16 %v328, %v327
  %v372 = vpack.c.b16 %v330, %v329
  %v373 = vpack.c.b16 %v332, %v331
  %v374 = vpack.c.b16 %v334, %v333
  %v375 = vpack.c.b16 %v336, %v335
  %v376 = vpack.c.b16 %v338, %v337
  %v377 = vpack.c.b16 %v340, %v339
  %v378 = vpack.c.b16 %v342, %v341
  %v379 = vpack.c.b16 %v344, %v343
  %v380 = vpack.c.b16 %v346, %v345
  %v381 = vpack.c.b16 %v348, %v347
  %v382 = vpack.c.b16 %v350, %v349
  %v431 = vunpack.c.l.b16 %v207
  %v432 = vunpack.c.l.b16 %v208
  %v433 = vunpack.c.l.b16 %v209
  %v434 = vunpack.c.l.b16 %v210
  %v435 = vunpack.c.l.b16 %v211
  %v436 = vunpack.c.l.b16 %v212
  %v437 = vunpack.c.l.b16 %v213
  %v438 = vunpack.c.l.b16 %v214
  %v439 = vunpack.c.l.b16 %v215
  %v440 = vunpack.c.l.b16 %v216
  %v441 = vunpack.c.l.b16 %v217
  %v442 = vunpack.c.l.b16 %v218
  %v443 = vunpack.c.l.b16 %v219
  %v444 = vunpack.c.l.b16 %v220
  %v445 = vunpack.c.l.b16 %v221
  %v446 = vunpack.c.l.b16 %v222
  %v447 = vpack.c.b16 %v432, %v431
  %v448 = vpack.c.b16 %v434, %v433
  %v449 = vpack.c.b16 %v436, %v435
  %v450 = vpack.c.b16 %v438, %v437
  %v451 = vpack.c.b16 %v440, %v439
  %v452 = vpack.c.b16 %v442, %v441
  %v453 = vpack.c.b16 %v444, %v443
  %v454 = vpack.c.b16 %v446, %v445
  %463 = vmatpush.bf16.msra.mxu0 %v454
  %464 = vmatpush.bf16.msra.mxu0 %v453
  %465 = vmatpush.bf16.msra.mxu0 %v452
  %466 = vmatpush.bf16.msra.mxu0 %v451
  %467 = vmatpush.bf16.msra.mxu0 %v450
  %468 = vmatpush.bf16.msra.mxu0 %v449
  %469 = vmatpush.bf16.msra.mxu0 %v448
  %470 = vmatpush.bf16.msra.mxu0 %v447
  %471 = vmatmul.bf16.gmra.mxu0 %v351
  %v472 = vpop.f32.mrf.mxu0
  %v473 = vadd.f32 0.0, %v472
  %v474 = vpop.f32.mrf.mxu0
  %v475 = vadd.f32 0.0, %v474
  %476 = vmatmul.bf16.gmra.mxu0 %v352
  %v477 = vpop.f32.mrf.mxu0
  %v478 = vadd.f32 0.0, %v477
  %v479 = vpop.f32.mrf.mxu0
  %v480 = vadd.f32 0.0, %v479
  %481 = vmatmul.bf16.gmra.mxu0 %v353
  %v482 = vpop.f32.mrf.mxu0
  %v483 = vadd.f32 0.0, %v482
  %v484 = vpop.f32.mrf.mxu0
  %v485 = vadd.f32 0.0, %v484
  %486 = vmatmul.bf16.gmra.mxu0 %v354
  %v487 = vpop.f32.mrf.mxu0
  %v488 = vadd.f32 0.0, %v487
  %v489 = vpop.f32.mrf.mxu0
  %v490 = vadd.f32 0.0, %v489
  %491 = vmatmul.bf16.gmra.mxu0 %v355
  %v492 = vpop.f32.mrf.mxu0
  %v493 = vadd.f32 0.0, %v492
  %v494 = vpop.f32.mrf.mxu0
  %v495 = vadd.f32 0.0, %v494
  %496 = vmatmul.bf16.gmra.mxu0 %v356
  %v497 = vpop.f32.mrf.mxu0
  %v498 = vadd.f32 0.0, %v497
  %v499 = vpop.f32.mrf.mxu0
  %v500 = vadd.f32 0.0, %v499
  %501 = vmatmul.bf16.gmra.mxu0 %v357
  %v502 = vpop.f32.mrf.mxu0
  %v503 = vadd.f32 0.0, %v502
  %v504 = vpop.f32.mrf.mxu0
  %v505 = vadd.f32 0.0, %v504
  %506 = vmatmul.bf16.gmra.mxu0 %v358
  %v507 = vpop.f32.mrf.mxu0
  %v508 = vadd.f32 0.0, %v507
  %v509 = vpop.f32.mrf.mxu0
  %v510 = vadd.f32 0.0, %v509
  %511 = vmatmul.bf16.gmra.mxu0 %v359
  %v512 = vpop.f32.mrf.mxu0
  %v513 = vadd.f32 0.0, %v512
  %v514 = vpop.f32.mrf.mxu0
  %v515 = vadd.f32 0.0, %v514
  %516 = vmatmul.bf16.gmra.mxu0 %v360
  %v517 = vpop.f32.mrf.mxu0
  %v518 = vadd.f32 0.0, %v517
  %v519 = vpop.f32.mrf.mxu0
  %v520 = vadd.f32 0.0, %v519
  %521 = vmatmul.bf16.gmra.mxu0 %v361
  %v522 = vpop.f32.mrf.mxu0
  %v523 = vadd.f32 0.0, %v522
  %v524 = vpop.f32.mrf.mxu0
  %v525 = vadd.f32 0.0, %v524
  %526 = vmatmul.bf16.gmra.mxu0 %v362
  %v527 = vpop.f32.mrf.mxu0
  %v528 = vadd.f32 0.0, %v527
  %v529 = vpop.f32.mrf.mxu0
  %v530 = vadd.f32 0.0, %v529
  %531 = vmatmul.bf16.gmra.mxu0 %v363
  %v532 = vpop.f32.mrf.mxu0
  %v533 = vadd.f32 0.0, %v532
  %v534 = vpop.f32.mrf.mxu0
  %v535 = vadd.f32 0.0, %v534
  %536 = vmatmul.bf16.gmra.mxu0 %v364
  %v537 = vpop.f32.mrf.mxu0
  %v538 = vadd.f32 0.0, %v537
  %v539 = vpop.f32.mrf.mxu0
  %v540 = vadd.f32 0.0, %v539
  %541 = vmatmul.bf16.gmra.mxu0 %v365
  %v542 = vpop.f32.mrf.mxu0
  %v543 = vadd.f32 0.0, %v542
  %v544 = vpop.f32.mrf.mxu0
  %v545 = vadd.f32 0.0, %v544
  %546 = vmatmul.bf16.gmra.mxu0 %v366
  %v547 = vpop.f32.mrf.mxu0
  %v548 = vadd.f32 0.0, %v547
  %v549 = vpop.f32.mrf.mxu0
  %v550 = vadd.f32 0.0, %v549
  %551 = vmatmul.bf16.gmra.mxu0 %v367
  %v552 = vpop.f32.mrf.mxu0
  %v553 = vadd.f32 0.0, %v552
  %v554 = vpop.f32.mrf.mxu0
  %v555 = vadd.f32 0.0, %v554
  %556 = vmatmul.bf16.gmra.mxu0 %v368
  %v557 = vpop.f32.mrf.mxu0
  %v558 = vadd.f32 0.0, %v557
  %v559 = vpop.f32.mrf.mxu0
  %v560 = vadd.f32 0.0, %v559
  %561 = vmatmul.bf16.gmra.mxu0 %v369
  %v562 = vpop.f32.mrf.mxu0
  %v563 = vadd.f32 0.0, %v562
  %v564 = vpop.f32.mrf.mxu0
  %v565 = vadd.f32 0.0, %v564
  %566 = vmatmul.bf16.gmra.mxu0 %v370
  %v567 = vpop.f32.mrf.mxu0
  %v568 = vadd.f32 0.0, %v567
  %v569 = vpop.f32.mrf.mxu0
  %v570 = vadd.f32 0.0, %v569
  %571 = vmatmul.bf16.gmra.mxu0 %v371
  %v572 = vpop.f32.mrf.mxu0
  %v573 = vadd.f32 0.0, %v572
  %v574 = vpop.f32.mrf.mxu0
  %v575 = vadd.f32 0.0, %v574
  %576 = vmatmul.bf16.gmra.mxu0 %v372
  %v577 = vpop.f32.mrf.mxu0
  %v578 = vadd.f32 0.0, %v577
  %v579 = vpop.f32.mrf.mxu0
  %v580 = vadd.f32 0.0, %v579
  %581 = vmatmul.bf16.gmra.mxu0 %v373
  %v582 = vpop.f32.mrf.mxu0
  %v583 = vadd.f32 0.0, %v582
  %v584 = vpop.f32.mrf.mxu0
  %v585 = vadd.f32 0.0, %v584
  %586 = vmatmul.bf16.gmra.mxu0 %v374
  %v587 = vpop.f32.mrf.mxu0
  %v588 = vadd.f32 0.0, %v587
  %v589 = vpop.f32.mrf.mxu0
  %v590 = vadd.f32 0.0, %v589
  %591 = vmatmul.bf16.gmra.mxu0 %v375
  %v592 = vpop.f32.mrf.mxu0
  %v593 = vadd.f32 0.0, %v592
  %v594 = vpop.f32.mrf.mxu0
  %v595 = vadd.f32 0.0, %v594
  %596 = vmatmul.bf16.gmra.mxu0 %v376
  %v597 = vpop.f32.mrf.mxu0
  %v598 = vadd.f32 0.0, %v597
  %v599 = vpop.f32.mrf.mxu0
  %v600 = vadd.f32 0.0, %v599
  %601 = vmatmul.bf16.gmra.mxu0 %v377
  %v602 = vpop.f32.mrf.mxu0
  %v603 = vadd.f32 0.0, %v602
  %v604 = vpop.f32.mrf.mxu0
  %v605 = vadd.f32 0.0, %v604
  %606 = vmatmul.bf16.gmra.mxu0 %v378
  %v607 = vpop.f32.mrf.mxu0
  %v608 = vadd.f32 0.0, %v607
  %v609 = vpop.f32.mrf.mxu0
  %v610 = vadd.f32 0.0, %v609
  %611 = vmatmul.bf16.gmra.mxu0 %v379
  %v612 = vpop.f32.mrf.mxu0
  %v613 = vadd.f32 0.0, %v612
  %v614 = vpop.f32.mrf.mxu0
  %v615 = vadd.f32 0.0, %v614
  %616 = vmatmul.bf16.gmra.mxu0 %v380
  %v617 = vpop.f32.mrf.mxu0
  %v618 = vadd.f32 0.0, %v617
  %v619 = vpop.f32.mrf.mxu0
  %v620 = vadd.f32 0.0, %v619
  %621 = vmatmul.bf16.gmra.mxu0 %v381
  %v622 = vpop.f32.mrf.mxu0
  %v623 = vadd.f32 0.0, %v622
  %v624 = vpop.f32.mrf.mxu0
  %v625 = vadd.f32 0.0, %v624
  %626 = vmatmul.bf16.gmra.mxu0 %v382
  %v627 = vpop.f32.mrf.mxu0
  %v628 = vadd.f32 0.0, %v627
  %v629 = vpop.f32.mrf.mxu0
  %v630 = vadd.f32 0.0, %v629
  %631 = vdwg.mxu0
  %v632 = vadd.f32 %v143, %v473
  %v633 = vadd.f32 %v144, %v475
  %v634 = vadd.f32 %v145, %v478
  %v635 = vadd.f32 %v146, %v480
  %v636 = vadd.f32 %v147, %v483
  %v637 = vadd.f32 %v148, %v485
  %v638 = vadd.f32 %v149, %v488
  %v639 = vadd.f32 %v150, %v490
  %v640 = vadd.f32 %v151, %v493
  %v641 = vadd.f32 %v152, %v495
  %v642 = vadd.f32 %v153, %v498
  %v643 = vadd.f32 %v154, %v500
  %v644 = vadd.f32 %v155, %v503
  %v645 = vadd.f32 %v156, %v505
  %v646 = vadd.f32 %v157, %v508
  %v647 = vadd.f32 %v158, %v510
  %v648 = vadd.f32 %v159, %v513
  %v649 = vadd.f32 %v160, %v515
  %v650 = vadd.f32 %v161, %v518
  %v651 = vadd.f32 %v162, %v520
  %v652 = vadd.f32 %v163, %v523
  %v653 = vadd.f32 %v164, %v525
  %v654 = vadd.f32 %v165, %v528
  %v655 = vadd.f32 %v166, %v530
  %v656 = vadd.f32 %v167, %v533
  %v657 = vadd.f32 %v168, %v535
  %v658 = vadd.f32 %v169, %v538
  %v659 = vadd.f32 %v170, %v540
  %v660 = vadd.f32 %v171, %v543
  %v661 = vadd.f32 %v172, %v545
  %v662 = vadd.f32 %v173, %v548
  %v663 = vadd.f32 %v174, %v550
  %v664 = vadd.f32 %v175, %v553
  %v665 = vadd.f32 %v176, %v555
  %v666 = vadd.f32 %v177, %v558
  %v667 = vadd.f32 %v178, %v560
  %v668 = vadd.f32 %v179, %v563
  %v669 = vadd.f32 %v180, %v565
  %v670 = vadd.f32 %v181, %v568
  %v671 = vadd.f32 %v182, %v570
  %v672 = vadd.f32 %v183, %v573
  %v673 = vadd.f32 %v184, %v575
  %v674 = vadd.f32 %v185, %v578
  %v675 = vadd.f32 %v186, %v580
  %v676 = vadd.f32 %v187, %v583
  %v677 = vadd.f32 %v188, %v585
  %v678 = vadd.f32 %v189, %v588
  %v679 = vadd.f32 %v190, %v590
  %v680 = vadd.f32 %v191, %v593
  %v681 = vadd.f32 %v192, %v595
  %v682 = vadd.f32 %v193, %v598
  %v683 = vadd.f32 %v194, %v600
  %v684 = vadd.f32 %v195, %v603
  %v685 = vadd.f32 %v196, %v605
  %v686 = vadd.f32 %v197, %v608
  %v687 = vadd.f32 %v198, %v610
  %v688 = vadd.f32 %v199, %v613
  %v689 = vadd.f32 %v200, %v615
  %v690 = vadd.f32 %v201, %v618
  %v691 = vadd.f32 %v202, %v620
  %v692 = vadd.f32 %v203, %v623
  %v693 = vadd.f32 %v204, %v625
  %v694 = vadd.f32 %v205, %v628
  %v695 = vadd.f32 %v206, %v630
  %696 = vst [vmem:[#allocation2] sm:$0xff] %v632
  %697 = vst [vmem:[#allocation2 + $0x8] sm:$0xff] %v633
  %698 = vst [vmem:[#allocation2 + $0x10] sm:$0xff] %v634
  %699 = vst [vmem:[#allocation2 + $0x18] sm:$0xff] %v635
  %700 = vst [vmem:[#allocation2 + $0x20] sm:$0xff] %v636
  %701 = vst [vmem:[#allocation2 + $0x28] sm:$0xff] %v637
  %702 = vst [vmem:[#allocation2 + $0x30] sm:$0xff] %v638
  %703 = vst [vmem:[#allocation2 + $0x38] sm:$0xff] %v639
  %704 = vst [vmem:[#allocation2 + $0x40] sm:$0xff] %v640
  %705 = vst [vmem:[#allocation2 + $0x48] sm:$0xff] %v641
  %706 = vst [vmem:[#allocation2 + $0x50] sm:$0xff] %v642
  %707 = vst [vmem:[#allocation2 + $0x58] sm:$0xff] %v643
  %708 = vst [vmem:[#allocation2 + $0x60] sm:$0xff] %v644
  %709 = vst [vmem:[#allocation2 + $0x68] sm:$0xff] %v645
  %710 = vst [vmem:[#allocation2 + $0x70] sm:$0xff] %v646
  %711 = vst [vmem:[#allocation2 + $0x78] sm:$0xff] %v647
  %712 = vst [vmem:[#allocation2 + $0x80] sm:$0xff] %v648
  %713 = vst [vmem:[#allocation2 + $0x88] sm:$0xff] %v649
  %714 = vst [vmem:[#allocation2 + $0x90] sm:$0xff] %v650
  %715 = vst [vmem:[#allocation2 + $0x98] sm:$0xff] %v651
  %716 = vst [vmem:[#allocation2 + $0xa0] sm:$0xff] %v652
  %717 = vst [vmem:[#allocation2 + $0xa8] sm:$0xff] %v653
  %718 = vst [vmem:[#allocation2 + $0xb0] sm:$0xff] %v654
  %719 = vst [vmem:[#allocation2 + $0xb8] sm:$0xff] %v655
  %720 = vst [vmem:[#allocation2 + $0xc0] sm:$0xff] %v656
  %721 = vst [vmem:[#allocation2 + $0xc8] sm:$0xff] %v657
  %722 = vst [vmem:[#allocation2 + $0xd0] sm:$0xff] %v658
  %723 = vst [vmem:[#allocation2 + $0xd8] sm:$0xff] %v659
  %724 = vst [vmem:[#allocation2 + $0xe0] sm:$0xff] %v660
  %725 = vst [vmem:[#allocation2 + $0xe8] sm:$0xff] %v661
  %726 = vst [vmem:[#allocation2 + $0xf0] sm:$0xff] %v662
  %727 = vst [vmem:[#allocation2 + $0xf8] sm:$0xff] %v663
  %728 = vst [vmem:[#allocation2 + $0x100] sm:$0xff] %v664
  %729 = vst [vmem:[#allocation2 + $0x108] sm:$0xff] %v665
  %730 = vst [vmem:[#allocation2 + $0x110] sm:$0xff] %v666
  %731 = vst [vmem:[#allocation2 + $0x118] sm:$0xff] %v667
  %732 = vst [vmem:[#allocation2 + $0x120] sm:$0xff] %v668
  %733 = vst [vmem:[#allocation2 + $0x128] sm:$0xff] %v669
  %734 = vst [vmem:[#allocation2 + $0x130] sm:$0xff] %v670
  %735 = vst [vmem:[#allocation2 + $0x138] sm:$0xff] %v671
  %736 = vst [vmem:[#allocation2 + $0x140] sm:$0xff] %v672
  %737 = vst [vmem:[#allocation2 + $0x148] sm:$0xff] %v673
  %738 = vst [vmem:[#allocation2 + $0x150] sm:$0xff] %v674
  %739 = vst [vmem:[#allocation2 + $0x158] sm:$0xff] %v675
  %740 = vst [vmem:[#allocation2 + $0x160] sm:$0xff] %v676
  %741 = vst [vmem:[#allocation2 + $0x168] sm:$0xff] %v677
  %742 = vst [vmem:[#allocation2 + $0x170] sm:$0xff] %v678
  %743 = vst [vmem:[#allocation2 + $0x178] sm:$0xff] %v679
  %744 = vst [vmem:[#allocation2 + $0x180] sm:$0xff] %v680
  %745 = vst [vmem:[#allocation2 + $0x188] sm:$0xff] %v681
  %746 = vst [vmem:[#allocation2 + $0x190] sm:$0xff] %v682
  %747 = vst [vmem:[#allocation2 + $0x198] sm:$0xff] %v683
  %748 = vst [vmem:[#allocation2 + $0x1a0] sm:$0xff] %v684
  %749 = vst [vmem:[#allocation2 + $0x1a8] sm:$0xff] %v685
  %750 = vst [vmem:[#allocation2 + $0x1b0] sm:$0xff] %v686
  %751 = vst [vmem:[#allocation2 + $0x1b8] sm:$0xff] %v687
  %752 = vst [vmem:[#allocation2 + $0x1c0] sm:$0xff] %v688
  %753 = vst [vmem:[#allocation2 + $0x1c8] sm:$0xff] %v689
  %754 = vst [vmem:[#allocation2 + $0x1d0] sm:$0xff] %v690
  %755 = vst [vmem:[#allocation2 + $0x1d8] sm:$0xff] %v691
  %756 = vst [vmem:[#allocation2 + $0x1e0] sm:$0xff] %v692
  %757 = vst [vmem:[#allocation2 + $0x1e8] sm:$0xff] %v693
  %758 = vst [vmem:[#allocation2 + $0x1f0] sm:$0xff] %v694
  %759 = vst [vmem:[#allocation2 + $0x1f8] sm:$0xff] %v695
  // Predicated region
  $region14: #{discriminator_forward.11} parent=0 // pred_check
    %p760 = pneg %p11
  $region15: #{discriminator_forward.11} parent=0 // pred_check_branch
    %762 = sbr.rel (%p760) target = $region17
  $region16: #{discriminator_forward.11} parent=0 // pred_region
    %v763 = vld [vmem:[#allocation2] sm:$0xff]
    %v764 = vld [vmem:[#allocation2 + $0x8] sm:$0xff]
    %v765 = vld [vmem:[#allocation2 + $0x10] sm:$0xff]
    %v766 = vld [vmem:[#allocation2 + $0x18] sm:$0xff]
    %v767 = vld [vmem:[#allocation2 + $0x20] sm:$0xff]
    %v768 = vld [vmem:[#allocation2 + $0x28] sm:$0xff]
    %v769 = vld [vmem:[#allocation2 + $0x30] sm:$0xff]
    %v770 = vld [vmem:[#allocation2 + $0x38] sm:$0xff]
    %v771 = vld [vmem:[#allocation2 + $0x40] sm:$0xff]
    %v772 = vld [vmem:[#allocation2 + $0x48] sm:$0xff]
    %v773 = vld [vmem:[#allocation2 + $0x50] sm:$0xff]
    %v774 = vld [vmem:[#allocation2 + $0x58] sm:$0xff]
    %v775 = vld [vmem:[#allocation2 + $0x60] sm:$0xff]
    %v776 = vld [vmem:[#allocation2 + $0x68] sm:$0xff]
    %v777 = vld [vmem:[#allocation2 + $0x70] sm:$0xff]
    %v778 = vld [vmem:[#allocation2 + $0x78] sm:$0xff]
    %v779 = vld [vmem:[#allocation2 + $0x80] sm:$0xff]
    %v780 = vld [vmem:[#allocation2 + $0x88] sm:$0xff]
    %v781 = vld [vmem:[#allocation2 + $0x90] sm:$0xff]
    %v782 = vld [vmem:[#allocation2 + $0x98] sm:$0xff]
    %v783 = vld [vmem:[#allocation2 + $0xa0] sm:$0xff]
    %v784 = vld [vmem:[#allocation2 + $0xa8] sm:$0xff]
    %v785 = vld [vmem:[#allocation2 + $0xb0] sm:$0xff]
    %v786 = vld [vmem:[#allocation2 + $0xb8] sm:$0xff]
    %v787 = vld [vmem:[#allocation2 + $0xc0] sm:$0xff]
    %v788 = vld [vmem:[#allocation2 + $0xc8] sm:$0xff]
    %v789 = vld [vmem:[#allocation2 + $0xd0] sm:$0xff]
    %v790 = vld [vmem:[#allocation2 + $0xd8] sm:$0xff]
    %v791 = vld [vmem:[#allocation2 + $0xe0] sm:$0xff]
    %v792 = vld [vmem:[#allocation2 + $0xe8] sm:$0xff]
    %v793 = vld [vmem:[#allocation2 + $0xf0] sm:$0xff]
    %v794 = vld [vmem:[#allocation2 + $0xf8] sm:$0xff]
    %v795 = vld [vmem:[#allocation2 + $0x100] sm:$0xff]
    %v796 = vld [vmem:[#allocation2 + $0x108] sm:$0xff]
    %v797 = vld [vmem:[#allocation2 + $0x110] sm:$0xff]
    %v798 = vld [vmem:[#allocation2 + $0x118] sm:$0xff]
    %v799 = vld [vmem:[#allocation2 + $0x120] sm:$0xff]
    %v800 = vld [vmem:[#allocation2 + $0x128] sm:$0xff]
    %v801 = vld [vmem:[#allocation2 + $0x130] sm:$0xff]
    %v802 = vld [vmem:[#allocation2 + $0x138] sm:$0xff]
    %v803 = vld [vmem:[#allocation2 + $0x140] sm:$0xff]
    %v804 = vld [vmem:[#allocation2 + $0x148] sm:$0xff]
    %v805 = vld [vmem:[#allocation2 + $0x150] sm:$0xff]
    %v806 = vld [vmem:[#allocation2 + $0x158] sm:$0xff]
    %v807 = vld [vmem:[#allocation2 + $0x160] sm:$0xff]
    %v808 = vld [vmem:[#allocation2 + $0x168] sm:$0xff]
    %v809 = vld [vmem:[#allocation2 + $0x170] sm:$0xff]
    %v810 = vld [vmem:[#allocation2 + $0x178] sm:$0xff]
    %v811 = vld [vmem:[#allocation2 + $0x180] sm:$0xff]
    %v812 = vld [vmem:[#allocation2 + $0x188] sm:$0xff]
    %v813 = vld [vmem:[#allocation2 + $0x190] sm:$0xff]
    %v814 = vld [vmem:[#allocation2 + $0x198] sm:$0xff]
    %v815 = vld [vmem:[#allocation2 + $0x1a0] sm:$0xff]
    %v816 = vld [vmem:[#allocation2 + $0x1a8] sm:$0xff]
    %v817 = vld [vmem:[#allocation2 + $0x1b0] sm:$0xff]
    %v818 = vld [vmem:[#allocation2 + $0x1b8] sm:$0xff]
    %v819 = vld [vmem:[#allocation2 + $0x1c0] sm:$0xff]
    %v820 = vld [vmem:[#allocation2 + $0x1c8] sm:$0xff]
    %v821 = vld [vmem:[#allocation2 + $0x1d0] sm:$0xff]
    %v822 = vld [vmem:[#allocation2 + $0x1d8] sm:$0xff]
    %v823 = vld [vmem:[#allocation2 + $0x1e0] sm:$0xff]
    %v824 = vld [vmem:[#allocation2 + $0x1e8] sm:$0xff]
    %v825 = vld [vmem:[#allocation2 + $0x1f0] sm:$0xff]
    %v826 = vld [vmem:[#allocation2 + $0x1f8] sm:$0xff]
    %827 = vst [vmem:[%s2] sm:$0xff] %v763
    %828 = vst [vmem:[%s2 + $0x8] sm:$0xff] %v764
    %829 = vst [vmem:[%s2 + $0x10] sm:$0xff] %v765
    %830 = vst [vmem:[%s2 + $0x18] sm:$0xff] %v766
    %831 = vst [vmem:[%s2 + $0x20] sm:$0xff] %v767
    %832 = vst [vmem:[%s2 + $0x28] sm:$0xff] %v768
    %833 = vst [vmem:[%s2 + $0x30] sm:$0xff] %v769
    %834 = vst [vmem:[%s2 + $0x38] sm:$0xff] %v770
    %835 = vst [vmem:[%s2 + $0x40] sm:$0xff] %v771
    %836 = vst [vmem:[%s2 + $0x48] sm:$0xff] %v772
    %837 = vst [vmem:[%s2 + $0x50] sm:$0xff] %v773
    %838 = vst [vmem:[%s2 + $0x58] sm:$0xff] %v774
    %839 = vst [vmem:[%s2 + $0x60] sm:$0xff] %v775
    %840 = vst [vmem:[%s2 + $0x68] sm:$0xff] %v776
    %841 = vst [vmem:[%s2 + $0x70] sm:$0xff] %v777
    %842 = vst [vmem:[%s2 + $0x78] sm:$0xff] %v778
    %843 = vst [vmem:[%s2 + $0x80] sm:$0xff] %v779
    %844 = vst [vmem:[%s2 + $0x88] sm:$0xff] %v780
    %845 = vst [vmem:[%s2 + $0x90] sm:$0xff] %v781
    %846 = vst [vmem:[%s2 + $0x98] sm:$0xff] %v782
    %847 = vst [vmem:[%s2 + $0xa0] sm:$0xff] %v783
    %848 = vst [vmem:[%s2 + $0xa8] sm:$0xff] %v784
    %849 = vst [vmem:[%s2 + $0xb0] sm:$0xff] %v785
    %850 = vst [vmem:[%s2 + $0xb8] sm:$0xff] %v786
    %851 = vst [vmem:[%s2 + $0xc0] sm:$0xff] %v787
    %852 = vst [vmem:[%s2 + $0xc8] sm:$0xff] %v788
    %853 = vst [vmem:[%s2 + $0xd0] sm:$0xff] %v789
    %854 = vst [vmem:[%s2 + $0xd8] sm:$0xff] %v790
    %855 = vst [vmem:[%s2 + $0xe0] sm:$0xff] %v791
    %856 = vst [vmem:[%s2 + $0xe8] sm:$0xff] %v792
    %857 = vst [vmem:[%s2 + $0xf0] sm:$0xff] %v793
    %858 = vst [vmem:[%s2 + $0xf8] sm:$0xff] %v794
    %859 = vst [vmem:[%s2 + $0x100] sm:$0xff] %v795
    %860 = vst [vmem:[%s2 + $0x108] sm:$0xff] %v796
    %861 = vst [vmem:[%s2 + $0x110] sm:$0xff] %v797
    %862 = vst [vmem:[%s2 + $0x118] sm:$0xff] %v798
    %863 = vst [vmem:[%s2 + $0x120] sm:$0xff] %v799
    %864 = vst [vmem:[%s2 + $0x128] sm:$0xff] %v800
    %865 = vst [vmem:[%s2 + $0x130] sm:$0xff] %v801
    %866 = vst [vmem:[%s2 + $0x138] sm:$0xff] %v802
    %867 = vst [vmem:[%s2 + $0x140] sm:$0xff] %v803
    %868 = vst [vmem:[%s2 + $0x148] sm:$0xff] %v804
    %869 = vst [vmem:[%s2 + $0x150] sm:$0xff] %v805
    %870 = vst [vmem:[%s2 + $0x158] sm:$0xff] %v806
    %871 = vst [vmem:[%s2 + $0x160] sm:$0xff] %v807
    %872 = vst [vmem:[%s2 + $0x168] sm:$0xff] %v808
    %873 = vst [vmem:[%s2 + $0x170] sm:$0xff] %v809
    %874 = vst [vmem:[%s2 + $0x178] sm:$0xff] %v810
    %875 = vst [vmem:[%s2 + $0x180] sm:$0xff] %v811
    %876 = vst [vmem:[%s2 + $0x188] sm:$0xff] %v812
    %877 = vst [vmem:[%s2 + $0x190] sm:$0xff] %v813
    %878 = vst [vmem:[%s2 + $0x198] sm:$0xff] %v814
    %879 = vst [vmem:[%s2 + $0x1a0] sm:$0xff] %v815
    %880 = vst [vmem:[%s2 + $0x1a8] sm:$0xff] %v816
    %881 = vst [vmem:[%s2 + $0x1b0] sm:$0xff] %v817
    %882 = vst [vmem:[%s2 + $0x1b8] sm:$0xff] %v818
    %883 = vst [vmem:[%s2 + $0x1c0] sm:$0xff] %v819
    %884 = vst [vmem:[%s2 + $0x1c8] sm:$0xff] %v820
    %885 = vst [vmem:[%s2 + $0x1d0] sm:$0xff] %v821
    %886 = vst [vmem:[%s2 + $0x1d8] sm:$0xff] %v822
    %887 = vst [vmem:[%s2 + $0x1e0] sm:$0xff] %v823
    %888 = vst [vmem:[%s2 + $0x1e8] sm:$0xff] %v824
    %889 = vst [vmem:[%s2 + $0x1f0] sm:$0xff] %v825
    %890 = vst [vmem:[%s2 + $0x1f8] sm:$0xff] %v826
  $region17: #{discriminator_forward.11} parent=0 // pred_fallthru
    _
  // Predicated region
  $region18: #{discriminator_forward.11} parent=0 // pred_check
    _
  $region19: #{discriminator_forward.11} parent=0 // pred_check_branch
    %892 = sbr.rel (0) target = $region21
  $region20: #{discriminator_forward.11} parent=0 // pred_region
    _
  $region21: #{discriminator_forward.11} parent=0 // pred_fallthru
    _
  // Predicated region
  $region22: #{discriminator_forward.11} parent=0 // pred_check
    _
  $region23: #{discriminator_forward.11} parent=0 // pred_check_branch
    %894 = sbr.rel (0) target = $region25
  $region24: #{discriminator_forward.11} parent=0 // pred_region
    _
  $region25: #{discriminator_forward.11} parent=0 // pred_fallthru
    _

// kernel: discriminator_forward.13
$region0: #{discriminator_forward.13}
  #allocation0 [shape = 'u32[]', space=smem, size = 0x4, offset = 0x4, fixed_abs, tag = 'smem constant byte address 0x4 - core index']
  #allocation1 [shape = 'u32[72,128]{1,0:T(1,128)}', space=vmem, size = 0x9000, scoped, tag = 'internal scratch']
  %s0 = inlined_call_operand.vmem [shape: f32[128,128], index: 0, kind: input, shape index: {}]
  %s1 = inlined_call_operand.vmem [shape: f32[8,128], index: 1, kind: output, shape index: {}]
  %s2 = sld [smem:[#allocation0]]
  $region18: #{discriminator_forward.13} parent=0
    _
  %s4 = ssub.s32 1, %s2
  %s5 = scalar_select 0, %s4, %s2
  // Predicated region
  $region2: #{discriminator_forward.13} parent=0 // pred_check
    _
  $region3: #{discriminator_forward.13} parent=0 // pred_check_branch
    %7 = sbr.rel (0) target = $region5
  $region4: #{discriminator_forward.13} parent=0 // pred_region
    _
  $region5: #{discriminator_forward.13} parent=0 // pred_fallthru
    _
  %p8 = scmp.eq.s32.totalorder 0, 0
  // Predicated region
  $region6: #{discriminator_forward.13} parent=0 // pred_check
    %p9 = pneg %p8
  $region7: #{discriminator_forward.13} parent=0 // pred_check_branch
    %11 = sbr.rel (%p9) target = $region9
  $region8: #{discriminator_forward.13} parent=0 // pred_region
    %12 = vst [vmem:[%s1] sm:$0xff] 0.0
  $region9: #{discriminator_forward.13} parent=0 // pred_fallthru
    _
  %v13 = vld [vmem:[%s0] sm:$0xff]
  %v14 = vld [vmem:[%s0 + $0x8] sm:$0xff]
  %v15 = vld [vmem:[%s0 + $0x10] sm:$0xff]
  %v16 = vld [vmem:[%s0 + $0x18] sm:$0xff]
  %v17 = vld [vmem:[%s0 + $0x20] sm:$0xff]
  %v18 = vld [vmem:[%s0 + $0x28] sm:$0xff]
  %v19 = vld [vmem:[%s0 + $0x30] sm:$0xff]
  %v20 = vld [vmem:[%s0 + $0x38] sm:$0xff]
  %v21 = vld [vmem:[%s0 + $0x40] sm:$0xff]
  %v22 = vld [vmem:[%s0 + $0x48] sm:$0xff]
  %v23 = vld [vmem:[%s0 + $0x50] sm:$0xff]
  %v24 = vld [vmem:[%s0 + $0x58] sm:$0xff]
  %v25 = vld [vmem:[%s0 + $0x60] sm:$0xff]
  %v26 = vld [vmem:[%s0 + $0x68] sm:$0xff]
  %v27 = vld [vmem:[%s0 + $0x70] sm:$0xff]
  %v28 = vld [vmem:[%s0 + $0x78] sm:$0xff]
  %v29 = vadd.f32 %v13, %v14
  %v30 = vadd.f32 %v29, %v15
  %v31 = vadd.f32 %v30, %v16
  %v32 = vadd.f32 %v31, %v17
  %v33 = vadd.f32 %v32, %v18
  %v34 = vadd.f32 %v33, %v19
  %v35 = vadd.f32 %v34, %v20
  %v36 = vadd.f32 %v35, %v21
  %v37 = vadd.f32 %v36, %v22
  %v38 = vadd.f32 %v37, %v23
  %v39 = vadd.f32 %v38, %v24
  %v40 = vadd.f32 %v39, %v25
  %v41 = vadd.f32 %v40, %v26
  %v42 = vadd.f32 %v41, %v27
  %v43 = vadd.f32 %v42, %v28
  %v44 = vrot.slane %v43, 4
  %v45 = vadd.f32 %v43, %v44
  %v46 = vrot.slane %v45, 2
  %v47 = vadd.f32 %v45, %v46
  %v48 = vrot.slane %v47, 1
  %v49 = vadd.f32 %v47, %v48
  %v50 = vmul.f32 %v13, %v13
  %v51 = vmul.f32 %v14, %v14
  %v52 = vmul.f32 %v15, %v15
  %v53 = vmul.f32 %v16, %v16
  %v54 = vmul.f32 %v17, %v17
  %v55 = vmul.f32 %v18, %v18
  %v56 = vmul.f32 %v19, %v19
  %v57 = vmul.f32 %v20, %v20
  %v58 = vmul.f32 %v21, %v21
  %v59 = vmul.f32 %v22, %v22
  %v60 = vmul.f32 %v23, %v23
  %v61 = vmul.f32 %v24, %v24
  %v62 = vmul.f32 %v25, %v25
  %v63 = vmul.f32 %v26, %v26
  %v64 = vmul.f32 %v27, %v27
  %v65 = vmul.f32 %v28, %v28
  %v66 = vadd.f32 %v50, %v51
  %v67 = vadd.f32 %v66, %v52
  %v68 = vadd.f32 %v67, %v53
  %v69 = vadd.f32 %v68, %v54
  %v70 = vadd.f32 %v69, %v55
  %v71 = vadd.f32 %v70, %v56
  %v72 = vadd.f32 %v71, %v57
  %v73 = vadd.f32 %v72, %v58
  %v74 = vadd.f32 %v73, %v59
  %v75 = vadd.f32 %v74, %v60
  %v76 = vadd.f32 %v75, %v61
  %v77 = vadd.f32 %v76, %v62
  %v78 = vadd.f32 %v77, %v63
  %v79 = vadd.f32 %v78, %v64
  %v80 = vadd.f32 %v79, %v65
  %v81 = vrot.slane %v80, 4
  %v82 = vadd.f32 %v80, %v81
  %v83 = vrot.slane %v82, 2
  %v84 = vadd.f32 %v82, %v83
  %v85 = vrot.slane %v84, 1
  %v86 = vadd.f32 %v84, %v85
  %v87 = vld [vmem:[%s1] sm:$0xff]
  %vm88 = vcmask 1040384
  %v89 = vsel %vm88, %v49, %v86
  %vm90 = vcmask 1041408
  %v91 = vsel %vm90, %v89, 0.0
  %v92 = vadd.f32 %v87, %v91
  %93 = vst [vmem:[%s1] sm:$0xff] %v92
  // Predicated region
  $region10: #{discriminator_forward.13} parent=0 // pred_check
    _
  $region11: #{discriminator_forward.13} parent=0 // pred_check_branch
    %95 = sbr.rel (0) target = $region13
  $region12: #{discriminator_forward.13} parent=0 // pred_region
    _
  $region13: #{discriminator_forward.13} parent=0 // pred_fallthru
    _
  // Predicated region
  $region14: #{discriminator_forward.13} parent=0 // pred_check
    _
  $region15: #{discriminator_forward.13} parent=0 // pred_check_branch
    %97 = sbr.rel (0) target = $region17
  $region16: #{discriminator_forward.13} parent=0 // pred_region
    _
  $region17: #{discriminator_forward.13} parent=0 // pred_fallthru
    _

// kernel: discriminator_forward.14
$region0: #{discriminator_forward.14}
  #allocation0 [shape = 'u32[]', space=smem, size = 0x4, offset = 0x4, fixed_abs, tag = 'smem constant byte address 0x4 - core index']
  #allocation1 [shape = 'u32[72,128]{1,0:T(1,128)}', space=vmem, size = 0x9000, scoped, tag = 'internal scratch']
  %s0 = inlined_call_operand.vmem [shape: f32[128,128], index: 0, kind: input, shape index: {}]
  %s1 = inlined_call_operand.vmem [shape: f32[8,128], index: 1, kind: input, shape index: {}]
  %s2 = inlined_call_operand.vmem [shape: f32[1,128], index: 2, kind: input, shape index: {}]
  %s3 = inlined_call_operand.vmem [shape: f32[1,128], index: 3, kind: input, shape index: {}]
  %s4 = inlined_call_operand.vmem [shape: f32[128,128], index: 4, kind: output, shape index: {}]
  %s5 = sld [smem:[#allocation0]]
  $region26: #{discriminator_forward.14} parent=0
    _
  %s7 = ssub.s32 1, %s5
  %s8 = scalar_select 0, %s7, %s5
  // Predicated region
  $region2: #{discriminator_forward.14} parent=0 // pred_check
    _
  $region3: #{discriminator_forward.14} parent=0 // pred_check_branch
    %10 = sbr.rel (0) target = $region5
  $region4: #{discriminator_forward.14} parent=0 // pred_region
    _
  $region5: #{discriminator_forward.14} parent=0 // pred_fallthru
    _
  // Predicated region
  $region6: #{discriminator_forward.14} parent=0 // pred_check
    _
  $region7: #{discriminator_forward.14} parent=0 // pred_check_branch
    %12 = sbr.rel (0) target = $region9
  $region8: #{discriminator_forward.14} parent=0 // pred_region
    _
  $region9: #{discriminator_forward.14} parent=0 // pred_fallthru
    _
  // Predicated region
  $region10: #{discriminator_forward.14} parent=0 // pred_check
    _
  $region11: #{discriminator_forward.14} parent=0 // pred_check_branch
    %14 = sbr.rel (0) target = $region13
  $region12: #{discriminator_forward.14} parent=0 // pred_region
    _
  $region13: #{discriminator_forward.14} parent=0 // pred_fallthru
    _
  // Predicated region
  $region14: #{discriminator_forward.14} parent=0 // pred_check
    _
  $region15: #{discriminator_forward.14} parent=0 // pred_check_branch
    %16 = sbr.rel (0) target = $region17
  $region16: #{discriminator_forward.14} parent=0 // pred_region
    _
  $region17: #{discriminator_forward.14} parent=0 // pred_fallthru
    _
  %v17 = vld [vmem:[%s0] sm:$0xff]
  %v18 = vld [vmem:[%s0 + $0x8] sm:$0xff]
  %v19 = vld [vmem:[%s0 + $0x10] sm:$0xff]
  %v20 = vld [vmem:[%s0 + $0x18] sm:$0xff]
  %v21 = vld [vmem:[%s0 + $0x20] sm:$0xff]
  %v22 = vld [vmem:[%s0 + $0x28] sm:$0xff]
  %v23 = vld [vmem:[%s0 + $0x30] sm:$0xff]
  %v24 = vld [vmem:[%s0 + $0x38] sm:$0xff]
  %v25 = vld [vmem:[%s0 + $0x40] sm:$0xff]
  %v26 = vld [vmem:[%s0 + $0x48] sm:$0xff]
  %v27 = vld [vmem:[%s0 + $0x50] sm:$0xff]
  %v28 = vld [vmem:[%s0 + $0x58] sm:$0xff]
  %v29 = vld [vmem:[%s0 + $0x60] sm:$0xff]
  %v30 = vld [vmem:[%s0 + $0x68] sm:$0xff]
  %v31 = vld [vmem:[%s0 + $0x70] sm:$0xff]
  %v32 = vld [vmem:[%s0 + $0x78] sm:$0xff]
  %v33 = vld [vmem:[%s1] sm:$0x1]
  %v34 = vmul.f32 %v33, 0.0078125
  %v35 = vld [vmem:[%s1 + $0x1] sm:$0x1]
  %v36 = vmul.f32 %v35, 0.0078125
  %v37 = vmul.f32 %v34, %v34
  %v38 = vsub.f32 %v36, %v37
  %v39 = vadd.f32 %v38, 1e-05
  %v40 = vrsqrt.pop %v39
  %v41 = vmul.f32 %v40, %v39
  %v42 = vmul.f32 %v41, %v40
  %v43 = vmul.f32 0.5, %v42
  %v44 = vsub.f32 1.5, %v43
  %v45 = vmul.f32 %v40, %v44
  %vm46 = vweird.f32 %v39
  %vm47 = vweird.f32 %v40
  %vm48 = vmor %vm46, %vm47
  %v49 = vsel %vm48, %v40, %v45
  %v50 = vperm.slane %v34, 0
  %v51 = vsub.f32 %v17, %v50
  %v52 = vsub.f32 %v18, %v50
  %v53 = vsub.f32 %v19, %v50
  %v54 = vsub.f32 %v20, %v50
  %v55 = vsub.f32 %v21, %v50
  %v56 = vsub.f32 %v22, %v50
  %v57 = vsub.f32 %v23, %v50
  %v58 = vsub.f32 %v24, %v50
  %v59 = vsub.f32 %v25, %v50
  %v60 = vsub.f32 %v26, %v50
  %v61 = vsub.f32 %v27, %v50
  %v62 = vsub.f32 %v28, %v50
  %v63 = vsub.f32 %v29, %v50
  %v64 = vsub.f32 %v30, %v50
  %v65 = vsub.f32 %v31, %v50
  %v66 = vsub.f32 %v32, %v50
  %v67 = vperm.slane %v49, 0
  %v68 = vmul.f32 %v51, %v67
  %v69 = vmul.f32 %v52, %v67
  %v70 = vmul.f32 %v53, %v67
  %v71 = vmul.f32 %v54, %v67
  %v72 = vmul.f32 %v55, %v67
  %v73 = vmul.f32 %v56, %v67
  %v74 = vmul.f32 %v57, %v67
  %v75 = vmul.f32 %v58, %v67
  %v76 = vmul.f32 %v59, %v67
  %v77 = vmul.f32 %v60, %v67
  %v78 = vmul.f32 %v61, %v67
  %v79 = vmul.f32 %v62, %v67
  %v80 = vmul.f32 %v63, %v67
  %v81 = vmul.f32 %v64, %v67
  %v82 = vmul.f32 %v65, %v67
  %v83 = vmul.f32 %v66, %v67
  %v84 = vld [vmem:[%s2] sm:$0x1]
  %v86 = vperm.slane %v84, 0
  %v88 = vmul.f32 %v68, %v86
  %v89 = vmul.f32 %v69, %v86
  %v90 = vmul.f32 %v70, %v86
  %v91 = vmul.f32 %v71, %v86
  %v92 = vmul.f32 %v72, %v86
  %v93 = vmul.f32 %v73, %v86
  %v94 = vmul.f32 %v74, %v86
  %v95 = vmul.f32 %v75, %v86
  %v96 = vmul.f32 %v76, %v86
  %v97 = vmul.f32 %v77, %v86
  %v98 = vmul.f32 %v78, %v86
  %v99 = vmul.f32 %v79, %v86
  %v100 = vmul.f32 %v80, %v86
  %v101 = vmul.f32 %v81, %v86
  %v102 = vmul.f32 %v82, %v86
  %v103 = vmul.f32 %v83, %v86
  %v104 = vld [vmem:[%s3] sm:$0x1]
  %v106 = vperm.slane %v104, 0
  %v108 = vadd.f32 %v88, %v106
  %v109 = vadd.f32 %v89, %v106
  %v110 = vadd.f32 %v90, %v106
  %v111 = vadd.f32 %v91, %v106
  %v112 = vadd.f32 %v92, %v106
  %v113 = vadd.f32 %v93, %v106
  %v114 = vadd.f32 %v94, %v106
  %v115 = vadd.f32 %v95, %v106
  %v116 = vadd.f32 %v96, %v106
  %v117 = vadd.f32 %v97, %v106
  %v118 = vadd.f32 %v98, %v106
  %v119 = vadd.f32 %v99, %v106
  %v120 = vadd.f32 %v100, %v106
  %v121 = vadd.f32 %v101, %v106
  %v122 = vadd.f32 %v102, %v106
  %v123 = vadd.f32 %v103, %v106
  %vm124 = vcmp.gt.f32.partialorder %v108, 0.0
  %vm125 = vcmp.gt.f32.partialorder %v109, 0.0
  %vm126 = vcmp.gt.f32.partialorder %v110, 0.0
  %vm127 = vcmp.gt.f32.partialorder %v111, 0.0
  %vm128 = vcmp.gt.f32.partialorder %v112, 0.0
  %vm129 = vcmp.gt.f32.partialorder %v113, 0.0
  %vm130 = vcmp.gt.f32.partialorder %v114, 0.0
  %vm131 = vcmp.gt.f32.partialorder %v115, 0.0
  %vm132 = vcmp.gt.f32.partialorder %v116, 0.0
  %vm133 = vcmp.gt.f32.partialorder %v117, 0.0
  %vm134 = vcmp.gt.f32.partialorder %v118, 0.0
  %vm135 = vcmp.gt.f32.partialorder %v119, 0.0
  %vm136 = vcmp.gt.f32.partialorder %v120, 0.0
  %vm137 = vcmp.gt.f32.partialorder %v121, 0.0
  %vm138 = vcmp.gt.f32.partialorder %v122, 0.0
  %vm139 = vcmp.gt.f32.partialorder %v123, 0.0
  %v140 = vmul.f32 %v108, 0.2
  %v141 = vmul.f32 %v109, 0.2
  %v142 = vmul.f32 %v110, 0.2
  %v143 = vmul.f32 %v111, 0.2
  %v144 = vmul.f32 %v112, 0.2
  %v145 = vmul.f32 %v113, 0.2
  %v146 = vmul.f32 %v114, 0.2
  %v147 = vmul.f32 %v115, 0.2
  %v148 = vmul.f32 %v116, 0.2
  %v149 = vmul.f32 %v117, 0.2
  %v150 = vmul.f32 %v118, 0.2
  %v151 = vmul.f32 %v119, 0.2
  %v152 = vmul.f32 %v120, 0.2
  %v153 = vmul.f32 %v121, 0.2
  %v154 = vmul.f32 %v122, 0.2
  %v155 = vmul.f32 %v123, 0.2
  %v156 = vsel %vm124, %v108, %v140
  %v157 = vsel %vm125, %v109, %v141
  %v158 = vsel %vm126, %v110, %v142
  %v159 = vsel %vm127, %v111, %v143
  %v160 = vsel %vm128, %v112, %v144
  %v161 = vsel %vm129, %v113, %v145
  %v162 = vsel %vm130, %v114, %v146
  %v163 = vsel %vm131, %v115, %v147
  %v164 = vsel %vm132, %v116, %v148
  %v165 = vsel %vm133, %v117, %v149
  %v166 = vsel %vm134, %v118, %v150
  %v167 = vsel %vm135, %v119, %v151
  %v168 = vsel %vm136, %v120, %v152
  %v169 = vsel %vm137, %v121, %v153
  %v170 = vsel %vm138, %v122, %v154
  %v171 = vsel %vm139, %v123, %v155
  %172 = vst [vmem:[%s4] sm:$0xff] %v156
  %173 = vst [vmem:[%s4 + $0x8] sm:$0xff] %v157
  %174 = vst [vmem:[%s4 + $0x10] sm:$0xff] %v158
  %175 = vst [vmem:[%s4 + $0x18] sm:$0xff] %v159
  %176 = vst [vmem:[%s4 + $0x20] sm:$0xff] %v160
  %177 = vst [vmem:[%s4 + $0x28] sm:$0xff] %v161
  %178 = vst [vmem:[%s4 + $0x30] sm:$0xff] %v162
  %179 = vst [vmem:[%s4 + $0x38] sm:$0xff] %v163
  %180 = vst [vmem:[%s4 + $0x40] sm:$0xff] %v164
  %181 = vst [vmem:[%s4 + $0x48] sm:$0xff] %v165
  %182 = vst [vmem:[%s4 + $0x50] sm:$0xff] %v166
  %183 = vst [vmem:[%s4 + $0x58] sm:$0xff] %v167
  %184 = vst [vmem:[%s4 + $0x60] sm:$0xff] %v168
  %185 = vst [vmem:[%s4 + $0x68] sm:$0xff] %v169
  %186 = vst [vmem:[%s4 + $0x70] sm:$0xff] %v170
  %187 = vst [vmem:[%s4 + $0x78] sm:$0xff] %v171
  // Predicated region
  $region18: #{discriminator_forward.14} parent=0 // pred_check
    _
  $region19: #{discriminator_forward.14} parent=0 // pred_check_branch
    %189 = sbr.rel (0) target = $region21
  $region20: #{discriminator_forward.14} parent=0 // pred_region
    _
  $region21: #{discriminator_forward.14} parent=0 // pred_fallthru
    _
  // Predicated region
  $region22: #{discriminator_forward.14} parent=0 // pred_check
    _
  $region23: #{discriminator_forward.14} parent=0 // pred_check_branch
    %191 = sbr.rel (0) target = $region25
  $region24: #{discriminator_forward.14} parent=0 // pred_region
    _
  $region25: #{discriminator_forward.14} parent=0 // pred_fallthru
    _

// kernel: discriminator_forward.12
$region0: #{discriminator_forward.12}
  #allocation0 [shape = 'u32[]', space=smem, size = 0x4, offset = 0x4, fixed_abs, tag = 'smem constant byte address 0x4 - core index']
  #allocation1 [shape = 'u32[72,128]{1,0:T(1,128)}', space=vmem, size = 0x9000, scoped, tag = 'internal scratch']
  #allocation2 [shape = 'f32[128,128]{1,0:T(8,128)}', space=vmem, size = 0x10000, scoped, tag = 'scratch operand']
  %s0 = inlined_call_operand.vmem [shape: bf16[128,2048], index: 0, kind: input, shape index: {}]
  %s1 = inlined_call_operand.vmem [shape: bf16[2048,128], index: 1, kind: input, shape index: {}]
  %s2 = inlined_call_operand.vmem [shape: f32[128,128], index: 2, kind: output, shape index: {}]
  %s3 = sld [smem:[#allocation0]]
  $region72: #{discriminator_forward.12} parent=0
    _
  %s5 = ssub.s32 1, %s3
  %s6 = scalar_select 0, %s5, %s3
  $region1: #{discriminator_forward.12} parent=0
    #allocation3 [shape = 'u8[262144]{0}', space=vmem, size = 0x40000, scoped, tag = 'input window, operand 0']
    loop: start=0, step=1, limit=6
    $region2: #{discriminator_forward.12} parent=1 // loop_pre_header
      _
    $region3: #{discriminator_forward.12} parent=1 // loop_header
      %s8 = sphi 0, %s12
      %p9 = scmp.ge.s32.totalorder %s8, 6
      %s15 = sphi 0, %s34
      %s16 = sphi 0, %s30
      %s17 = sphi 0, %s26
      %s18 = sphi 0, %s15
      %s19 = sphi 0, %s16
      %s20 = sphi 0, %s17
      %s21 = sphi 0, %s18
      %s22 = sphi 0, %s19
      %s23 = sphi 0, %s20
      %s39 = sphi 0, %s41
      %s42 = sphi 0, %s39
      %s43 = sphi 0, %s42
      %s59 = sphi 0, %s43
      %s67 = sphi 0, %s69
      %s70 = sphi 0, %s67
      %s71 = sphi 0, %s70
      %s87 = sphi 0, %s71
      %s95 = sphi 0, %s97
      %s98 = sphi 0, %s95
      %s99 = sphi 0, %s98
      %s115 = sphi 0, %s99
    $region4: #{discriminator_forward.12} parent=1 // loop_header_branch
      %11 = sbr.rel (%p9) target = $region8
    $region5: #{discriminator_forward.12} parent=1 // loop_body
      %s13 = ssub.s32 %s8, 1
      %s14 = ssub.s32 %s8, 2
      %s24 = sadd.s32 1, %s17
      %p25 = scmp.ge.s32.totalorder %s24, 4
      %s26 = scalar_select %p25, 0, %s24
      %s27 = sadd.s32 1, %s16
      %s28 = scalar_select %p25, %s27, %s16
      %p29 = scmp.ge.s32.totalorder %s28, 1
      %s30 = scalar_select %p29, 0, %s28
      %s31 = sadd.s32 1, %s15
      %s32 = scalar_select %p29, %s31, %s15
      %p33 = scmp.ge.s32.totalorder %s32, 1
      %s34 = scalar_select %p33, 0, %s32
      %s35 = ssub.s32 %s15, %s34
      %s36 = ssub.s32 %s17, %s26
      %s37 = sor.u32 %s35, %s36
      %p38 = scmp.eq.s32.totalorder %s37, 0
      %s40 = sadd.s32 %s39, 1
      %s41 = scalar_select %p38, %s39, %s40
      %p44 = pneg %p38
      %p45 = scmp.eq.s32.totalorder %s8, 3
      %p46 = por %p44, %p45
      %p47 = scmp.ne.s32.totalorder %s39, %s42
      %p48 = scmp.eq.s32.totalorder %s8, 0
      %p49 = por %p47, %p48
      %p50 = scmp.ne.s32.totalorder %s39, %s42
      %p51 = scmp.eq.s32.totalorder %s13, 3
      %p52 = por %p50, %p51
      %p53 = scmp.ne.s32.totalorder %s42, %s43
      %p54 = scmp.eq.s32.totalorder %s13, 0
      %p55 = por %p53, %p54
      %p56 = scmp.ne.s32.totalorder %s42, %s43
      %p57 = scmp.eq.s32.totalorder %s14, 3
      %p58 = por %p56, %p57
      %p60 = scmp.ne.s32.totalorder %s43, %s59
      %p61 = scmp.eq.s32.totalorder %s14, 0
      %p62 = por %p60, %p61
      %s63 = ssub.s32 %s17, %s26
      %s64 = ssub.s32 %s16, %s30
      %s65 = sor.u32 %s63, %s64
      %p66 = scmp.eq.s32.totalorder %s65, 0
      %s68 = sadd.s32 %s67, 1
      %s69 = scalar_select %p66, %s67, %s68
      %p72 = pneg %p66
      %p73 = scmp.eq.s32.totalorder %s8, 3
      %p74 = por %p72, %p73
      %p75 = scmp.ne.s32.totalorder %s67, %s70
      %p76 = scmp.eq.s32.totalorder %s8, 0
      %p77 = por %p75, %p76
      %p78 = scmp.ne.s32.totalorder %s67, %s70
      %p79 = scmp.eq.s32.totalorder %s13, 3
      %p80 = por %p78, %p79
      %p81 = scmp.ne.s32.totalorder %s70, %s71
      %p82 = scmp.eq.s32.totalorder %s13, 0
      %p83 = por %p81, %p82
      %p84 = scmp.ne.s32.totalorder %s70, %s71
      %p85 = scmp.eq.s32.totalorder %s14, 3
      %p86 = por %p84, %p85
      %p88 = scmp.ne.s32.totalorder %s71, %s87
      %p89 = scmp.eq.s32.totalorder %s14, 0
      %p90 = por %p88, %p89
      %s91 = ssub.s32 %s15, %s34
      %s92 = ssub.s32 %s16, %s30
      %s93 = sor.u32 %s91, %s92
      %p94 = scmp.eq.s32.totalorder %s93, 0
      %s96 = sadd.s32 %s95, 1
      %s97 = scalar_select %p94, %s95, %s96
      %p100 = pneg %p94
      %p101 = scmp.eq.s32.totalorder %s8, 3
      %p102 = por %p100, %p101
      %p103 = scmp.ne.s32.totalorder %s95, %s98
      %p104 = scmp.eq.s32.totalorder %s8, 0
      %p105 = por %p103, %p104
      %p106 = scmp.ne.s32.totalorder %s95, %s98
      %p107 = scmp.eq.s32.totalorder %s13, 3
      %p108 = por %p106, %p107
      %p109 = scmp.ne.s32.totalorder %s98, %s99
      %p110 = scmp.eq.s32.totalorder %s13, 0
      %p111 = por %p109, %p110
      %p112 = scmp.ne.s32.totalorder %s98, %s99
      %p113 = scmp.eq.s32.totalorder %s14, 3
      %p114 = por %p112, %p113
      %p116 = scmp.ne.s32.totalorder %s99, %s115
      %p117 = scmp.eq.s32.totalorder %s14, 0
      %p118 = por %p116, %p117
      %p119 = scmp.le.s32.totalorder 1, %s8
      %p120 = scmp.lt.s32.totalorder %s8, 5
      %p121 = pnand %p119, %p120
      %p122 = pneg %p121
      // Predicated region
      $region9: #{discriminator_forward.12} parent=5 // pred_check
        _
      $region10: #{discriminator_forward.12} parent=5 // pred_check_branch
        %124 = sbr.rel (%p121) target = $region12
      $region11: #{discriminator_forward.12} parent=5 // pred_region
        %s125 = ssub.s32 %s8, 1
      $region12: #{discriminator_forward.12} parent=5 // pred_fallthru
        _
      %p126 = scmp.lt.s32.totalorder %s8, 4
      // Predicated region
      $region13: #{discriminator_forward.12} parent=5 // pred_check
        %p127 = pneg %p126
      $region14: #{discriminator_forward.12} parent=5 // pred_check_branch
        %129 = sbr.rel (%p127) target = $region16
      $region15: #{discriminator_forward.12} parent=5 // pred_region
        // Predicated region
        $region17: #{discriminator_forward.12} parent=15 // pred_check
          %p130 = pneg %p49
        $region18: #{discriminator_forward.12} parent=15 // pred_check_branch
          %132 = sbr.rel (%p130) target = $region20
        $region19: #{discriminator_forward.12} parent=15 // pred_region
          %s133 = sand.u32 %s39, 1
          %s134 = sand.u32 %s39, 1
          %s135 = smul.addr %s134, 256
          %s136 = scalar_lea.vmem [#allocation3], %s135
          %s137 = smul.u32 16, %s15
          %s138 = smul.u32 4, %s17
          %s139 = smul.addr %s137, 16
          %s140 = sadd.s32 %s138, %s139
          %s141 = smul.addr %s140, 4
          %s142 = scalar_lea.vmem %s0, %s141
          // Predicated region
          $region21: #{discriminator_forward.12} parent=19 // pred_check
            _
          $region22: #{discriminator_forward.12} parent=19 // pred_check_branch
            %144 = sbr.rel (0) target = $region24
          $region23: #{discriminator_forward.12} parent=19 // pred_region
            // Predicated region
            $region25: #{discriminator_forward.12} parent=23 // pred_check
              _
            $region26: #{discriminator_forward.12} parent=23 // pred_check_branch
              %146 = sbr.rel (0) target = $region28
            $region27: #{discriminator_forward.12} parent=23 // pred_region
              loop: start=0, step=1, limit=1
              $region29: #{discriminator_forward.12} parent=27 // loop_pre_header
                _
              $region30: #{discriminator_forward.12} parent=27 // loop_header
                %s148 = sphi 0, %s152
                %p149 = scmp.ge.s32.totalorder %s148, 1
                %s153 = sphi %s142, %s142
                %s154 = sphi %s136, %s136
              $region31: #{discriminator_forward.12} parent=27 // loop_header_branch
                %151 = sbr.rel (%p149) target = $region35
              $region32: #{discriminator_forward.12} parent=27 // loop_body
                %v155 = vld [vmem:[%s153] sm:$0xff]
                %156 = vst [vmem:[%s154] sm:$0xff] %v155
                %v157 = vld [vmem:[%s153 + $0x8] sm:$0xff]
                %158 = vst [vmem:[%s154 + $0x8] sm:$0xff] %v157
                %v159 = vld [vmem:[%s153 + $0x40] sm:$0xff]
                %160 = vst [vmem:[%s154 + $0x10] sm:$0xff] %v159
                %v161 = vld [vmem:[%s153 + $0x48] sm:$0xff]
                %162 = vst [vmem:[%s154 + $0x18] sm:$0xff] %v161
                %v163 = vld [vmem:[%s153 + $0x80] sm:$0xff]
                %164 = vst [vmem:[%s154 + $0x20] sm:$0xff] %v163
                %v165 = vld [vmem:[%s153 + $0x88] sm:$0xff]
                %166 = vst [vmem:[%s154 + $0x28] sm:$0xff] %v165
                %v167 = vld [vmem:[%s153 + $0xc0] sm:$0xff]
                %168 = vst [vmem:[%s154 + $0x30] sm:$0xff] %v167
                %v169 = vld [vmem:[%s153 + $0xc8] sm:$0xff]
                %170 = vst [vmem:[%s154 + $0x38] sm:$0xff] %v169
                %v171 = vld [vmem:[%s153 + $0x100] sm:$0xff]
                %172 = vst [vmem:[%s154 + $0x40] sm:$0xff] %v171
                %v173 = vld [vmem:[%s153 + $0x108] sm:$0xff]
                %174 = vst [vmem:[%s154 + $0x48] sm:$0xff] %v173
                %v175 = vld [vmem:[%s153 + $0x140] sm:$0xff]
                %176 = vst [vmem:[%s154 + $0x50] sm:$0xff] %v175
                %v177 = vld [vmem:[%s153 + $0x148] sm:$0xff]
                %178 = vst [vmem:[%s154 + $0x58] sm:$0xff] %v177
                %v179 = vld [vmem:[%s153 + $0x180] sm:$0xff]
                %180 = vst [vmem:[%s154 + $0x60] sm:$0xff] %v179
                %v181 = vld [vmem:[%s153 + $0x188] sm:$0xff]
                %182 = vst [vmem:[%s154 + $0x68] sm:$0xff] %v181
                %v183 = vld [vmem:[%s153 + $0x1c0] sm:$0xff]
                %184 = vst [vmem:[%s154 + $0x70] sm:$0xff] %v183
                %v185 = vld [vmem:[%s153 + $0x1c8] sm:$0xff]
                %186 = vst [vmem:[%s154 + $0x78] sm:$0xff] %v185
                %v187 = vld [vmem:[%s153 + $0x200] sm:$0xff]
                %188 = vst [vmem:[%s154 + $0x80] sm:$0xff] %v187
                %v189 = vld [vmem:[%s153 + $0x208] sm:$0xff]
                %190 = vst [vmem:[%s154 + $0x88] sm:$0xff] %v189
                %v191 = vld [vmem:[%s153 + $0x240] sm:$0xff]
                %192 = vst [vmem:[%s154 + $0x90] sm:$0xff] %v191
                %v193 = vld [vmem:[%s153 + $0x248] sm:$0xff]
                %194 = vst [vmem:[%s154 + $0x98] sm:$0xff] %v193
                %v195 = vld [vmem:[%s153 + $0x280] sm:$0xff]
                %196 = vst [vmem:[%s154 + $0xa0] sm:$0xff] %v195
                %v197 = vld [vmem:[%s153 + $0x288] sm:$0xff]
                %198 = vst [vmem:[%s154 + $0xa8] sm:$0xff] %v197
                %v199 = vld [vmem:[%s153 + $0x2c0] sm:$0xff]
                %200 = vst [vmem:[%s154 + $0xb0] sm:$0xff] %v199
                %v201 = vld [vmem:[%s153 + $0x2c8] sm:$0xff]
                %202 = vst [vmem:[%s154 + $0xb8] sm:$0xff] %v201
                %v203 = vld [vmem:[%s153 + $0x300] sm:$0xff]
                %204 = vst [vmem:[%s154 + $0xc0] sm:$0xff] %v203
                %v205 = vld [vmem:[%s153 + $0x308] sm:$0xff]
                %206 = vst [vmem:[%s154 + $0xc8] sm:$0xff] %v205
                %v207 = vld [vmem:[%s153 + $0x340] sm:$0xff]
                %208 = vst [vmem:[%s154 + $0xd0] sm:$0xff] %v207
                %v209 = vld [vmem:[%s153 + $0x348] sm:$0xff]
                %210 = vst [vmem:[%s154 + $0xd8] sm:$0xff] %v209
                %v211 = vld [vmem:[%s153 + $0x380] sm:$0xff]
                %212 = vst [vmem:[%s154 + $0xe0] sm:$0xff] %v211
                %v213 = vld [vmem:[%s153 + $0x388] sm:$0xff]
                %214 = vst [vmem:[%s154 + $0xe8] sm:$0xff] %v213
                %v215 = vld [vmem:[%s153 + $0x3c0] sm:$0xff]
                %216 = vst [vmem:[%s154 + $0xf0] sm:$0xff] %v215
                %v217 = vld [vmem:[%s153 + $0x3c8] sm:$0xff]
                %218 = vst [vmem:[%s154 + $0xf8] sm:$0xff] %v217
              $region33: #{discriminator_forward.12} parent=27 // loop_footer
                %s152 = sadd.s32 1, %s148
              $region34: #{discriminator_forward.12} parent=27 // loop_footer_branch
                %147 = sbr.rel target = $region30
              $region35: #{discriminator_forward.12} parent=27 // loop_exit
                _
            $region28: #{discriminator_forward.12} parent=23 // pred_fallthru
              _
            // Predicated region
            $region36: #{discriminator_forward.12} parent=23 // pred_check
              _
            $region37: #{discriminator_forward.12} parent=23 // pred_check_branch
              %220 = sbr.rel target = $region39
            $region38: #{discriminator_forward.12} parent=23 // pred_region
              _
            $region39: #{discriminator_forward.12} parent=23 // pred_fallthru
              _
          $region24: #{discriminator_forward.12} parent=19 // pred_fallthru
            _
          %221 = vnop
        $region20: #{discriminator_forward.12} parent=15 // pred_fallthru
          _
        // Predicated region
        $region40: #{discriminator_forward.12} parent=15 // pred_check
          %p222 = pneg %p77
        $region41: #{discriminator_forward.12} parent=15 // pred_check_branch
          %224 = sbr.rel (%p222) target = $region43
        $region42: #{discriminator_forward.12} parent=15 // pred_region
          %s225 = smul.u32 64, %s17
          %p226 = scmp.lt.s32.totalorder %s225, 255
          %s227 = scalar_select %p226, %s225, 255
          %p228 = scmp.lt.s32.totalorder %s16, 0
          %s229 = scalar_select %p228, %s16, 0
          %s230 = sadd.s32 %s229, %s227
          %s231 = smul.addr %s230, 4
          %s232 = scalar_lea.vmem %s1, %s231
          %s233 = smul.u32 64, %s17
        $region43: #{discriminator_forward.12} parent=15 // pred_fallthru
          _
      $region16: #{discriminator_forward.12} parent=5 // pred_fallthru
        _
      %p234 = scmp.le.s32.totalorder 1, %s8
      %p235 = scmp.lt.s32.totalorder %s8, 5
      %p236 = pnand %p234, %p235
      %p237 = pneg %p236
      // Predicated region
      $region44: #{discriminator_forward.12} parent=5 // pred_check
        _
      $region45: #{discriminator_forward.12} parent=5 // pred_check_branch
        %239 = sbr.rel (%p236) target = $region47
      $region46: #{discriminator_forward.12} parent=5 // pred_region
        %s240 = ssub.s32 %s8, 1
        %s241 = sand.u32 %s42, 1
        %s242 = sand.u32 %s42, 1
        %s243 = smul.addr %s242, 256
        %s244 = scalar_lea.vmem [#allocation3], %s243
        // Predicated region
        $region48: #{discriminator_forward.12} parent=46 // pred_check
          %p245 = pneg %p55
        $region49: #{discriminator_forward.12} parent=46 // pred_check_branch
          %247 = sbr.rel (%p245) target = $region51
        $region50: #{discriminator_forward.12} parent=46 // pred_region
          _
        $region51: #{discriminator_forward.12} parent=46 // pred_fallthru
          _
        %s248 = sand.u32 %s42, 1
        %s249 = sand.u32 %s42, 1
        %s250 = smul.addr %s249, 256
        %s251 = scalar_lea.vmem [#allocation3], %s250
        %p252 = pneg %p55
        %p253 = pneg %p52
        %s254 = smul.u32 64, %s20
        %p255 = scmp.lt.s32.totalorder %s254, 255
        %s256 = scalar_select %p255, %s254, 255
        %p257 = scmp.lt.s32.totalorder %s19, 0
        %s258 = scalar_select %p257, %s19, 0
        %s259 = sadd.s32 %s258, %s256
        %s260 = smul.addr %s259, 4
        %s261 = scalar_lea.vmem %s1, %s260
        %p262 = pneg %p83
        %p263 = pneg %p80
        %p264 = pneg %p111
        %p265 = pneg %p108
        %s266 = smul.u32 16, %s18
        %p267 = scmp.lt.s32.totalorder %s266, 15
        %s268 = scalar_select %p267, %s266, 15
        %p269 = scmp.lt.s32.totalorder %s19, 0
        %s270 = scalar_select %p269, %s19, 0
        %s271 = sadd.s32 %s270, %s268
        %s272 = smul.addr %s271, 8
        %s273 = scalar_lea.vmem %s2, %s272
        %s274 = smul.u32 16, %s18
        %s275 = smul.u32 4, %s20
        %s276 = smul.u32 64, %s20
        %p277 = scmp.lt.s32.totalorder %s276, 255
        %s278 = scalar_select %p277, %s276, 255
        %p279 = scmp.lt.s32.totalorder %s19, 0
        %s280 = scalar_select %p279, %s19, 0
        %s281 = sadd.s32 %s280, %s278
        %s282 = smul.addr %s281, 4
        %s283 = scalar_lea.vmem %s1, %s282
        %s284 = smul.u32 64, %s20
        %s285 = smul.u32 16, %s18
        %p286 = scmp.lt.s32.totalorder %s285, 15
        %s287 = scalar_select %p286, %s285, 15
        %p288 = scmp.lt.s32.totalorder %s19, 0
        %s289 = scalar_select %p288, %s19, 0
        %s290 = sadd.s32 %s289, %s287
        %s291 = smul.addr %s290, 8
        %s292 = scalar_lea.vmem %s2, %s291
        %s293 = smul.u32 16, %s18
        %p294 = scmp.eq.s32.totalorder %s20, 0
        // Predicated region
        $region52: #{discriminator_forward.12} parent=46 // pred_check
          %p295 = pneg %p294
        $region53: #{discriminator_forward.12} parent=46 // pred_check_branch
          %297 = sbr.rel (%p295) target = $region55
        $region54: #{discriminator_forward.12} parent=46 // pred_region
          %298 = vst [vmem:[#allocation2] sm:$0xff] 0.0
          %299 = vst [vmem:[#allocation2 + $0x8] sm:$0xff] 0.0
          %300 = vst [vmem:[#allocation2 + $0x10] sm:$0xff] 0.0
          %301 = vst [vmem:[#allocation2 + $0x18] sm:$0xff] 0.0
          %302 = vst [vmem:[#allocation2 + $0x20] sm:$0xff] 0.0
          %303 = vst [vmem:[#allocation2 + $0x28] sm:$0xff] 0.0
          %304 = vst [vmem:[#allocation2 + $0x30] sm:$0xff] 0.0
          %305 = vst [vmem:[#allocation2 + $0x38] sm:$0xff] 0.0
          %306 = vst [vmem:[#allocation2 + $0x40] sm:$0xff] 0.0
          %307 = vst [vmem:[#allocation2 + $0x48] sm:$0xff] 0.0
          %308 = vst [vmem:[#allocation2 + $0x50] sm:$0xff] 0.0
          %309 = vst [vmem:[#allocation2 + $0x58] sm:$0xff] 0.0
          %310 = vst [vmem:[#allocation2 + $0x60] sm:$0xff] 0.0
          %311 = vst [vmem:[#allocation2 + $0x68] sm:$0xff] 0.0
          %312 = vst [vmem:[#allocation2 + $0x70] sm:$0xff] 0.0
          %313 = vst [vmem:[#allocation2 + $0x78] sm:$0xff] 0.0
        $region55: #{discriminator_forward.12} parent=46 // pred_fallthru
          _
        %v314 = vld [vmem:[%s244] sm:$0xff]
        %v315 = vld [vmem:[%s244 + $0x8] sm:$0xff]
        %v316 = vld [vmem:[%s244 + $0x10] sm:$0xff]
        %v317 = vld [vmem:[%s244 + $0x18] sm:$0xff]
        %v318 = vld [vmem:[%s244 + $0x20] sm:$0xff]
        %v319 = vld [vmem:[%s244 + $0x28] sm:$0xff]
        %v320 = vld [vmem:[%s244 + $0x30] sm:$0xff]
        %v321 = vld [vmem:[%s244 + $0x38] sm:$0xff]
        %v322 = vld [vmem:[%s244 + $0x40] sm:$0xff]
        %v323 = vld [vmem:[%s244 + $0x48] sm:$0xff]
        %v324 = vld [vmem:[%s244 + $0x50] sm:$0xff]
        %v325 = vld [vmem:[%s244 + $0x58] sm:$0xff]
        %v326 = vld [vmem:[%s244 + $0x60] sm:$0xff]
        %v327 = vld [vmem:[%s244 + $0x68] sm:$0xff]
        %v328 = vld [vmem:[%s244 + $0x70] sm:$0xff]
        %v329 = vld [vmem:[%s244 + $0x78] sm:$0xff]
        %v330 = vld [vmem:[%s244 + $0x80] sm:$0xff]
        %v331 = vld [vmem:[%s244 + $0x88] sm:$0xff]
        %v332 = vld [vmem:[%s244 + $0x90] sm:$0xff]
        %v333 = vld [vmem:[%s244 + $0x98] sm:$0xff]
        %v334 = vld [vmem:[%s244 + $0xa0] sm:$0xff]
        %v335 = vld [vmem:[%s244 + $0xa8] sm:$0xff]
        %v336 = vld [vmem:[%s244 + $0xb0] sm:$0xff]
        %v337 = vld [vmem:[%s244 + $0xb8] sm:$0xff]
        %v338 = vld [vmem:[%s244 + $0xc0] sm:$0xff]
        %v339 = vld [vmem:[%s244 + $0xc8] sm:$0xff]
        %v340 = vld [vmem:[%s244 + $0xd0] sm:$0xff]
        %v341 = vld [vmem:[%s244 + $0xd8] sm:$0xff]
        %v342 = vld [vmem:[%s244 + $0xe0] sm:$0xff]
        %v343 = vld [vmem:[%s244 + $0xe8] sm:$0xff]
        %v344 = vld [vmem:[%s244 + $0xf0] sm:$0xff]
        %v345 = vld [vmem:[%s244 + $0xf8] sm:$0xff]
        %v346 = vunpack.c.l.bf16 %v314
        %v347 = vunpack.c.h.bf16 %v314
        %v348 = vunpack.c.l.bf16 %v315
        %v349 = vunpack.c.h.bf16 %v315
        %v350 = vunpack.c.l.bf16 %v316
        %v351 = vunpack.c.h.bf16 %v316
        %v352 = vunpack.c.l.bf16 %v317
        %v353 = vunpack.c.h.bf16 %v317
        %v354 = vunpack.c.l.bf16 %v318
        %v355 = vunpack.c.h.bf16 %v318
        %v356 = vunpack.c.l.bf16 %v319
        %v357 = vunpack.c.h.bf16 %v319
        %v358 = vunpack.c.l.bf16 %v320
        %v359 = vunpack.c.h.bf16 %v320
        %v360 = vunpack.c.l.bf16 %v321
        %v361 = vunpack.c.h.bf16 %v321
        %v362 = vunpack.c.l.bf16 %v322
        %v363 = vunpack.c.h.bf16 %v322
        %v364 = vunpack.c.l.bf16 %v323
        %v365 = vunpack.c.h.bf16 %v323
        %v366 = vunpack.c.l.bf16 %v324
        %v367 = vunpack.c.h.bf16 %v324
        %v368 = vunpack.c.l.bf16 %v325
        %v369 = vunpack.c.h.bf16 %v325
        %v370 = vunpack.c.l.bf16 %v326
        %v371 = vunpack.c.h.bf16 %v326
        %v372 = vunpack.c.l.bf16 %v327
        %v373 = vunpack.c.h.bf16 %v327
        %v374 = vunpack.c.l.bf16 %v328
        %v375 = vunpack.c.h.bf16 %v328
        %v376 = vunpack.c.l.bf16 %v329
        %v377 = vunpack.c.h.bf16 %v329
        %v378 = vunpack.c.l.bf16 %v330
        %v379 = vunpack.c.h.bf16 %v330
        %v380 = vunpack.c.l.bf16 %v331
        %v381 = vunpack.c.h.bf16 %v331
        %v382 = vunpack.c.l.bf16 %v332
        %v383 = vunpack.c.h.bf16 %v332
        %v384 = vunpack.c.l.bf16 %v333
        %v385 = vunpack.c.h.bf16 %v333
        %v386 = vunpack.c.l.bf16 %v334
        %v387 = vunpack.c.h.bf16 %v334
        %v388 = vunpack.c.l.bf16 %v335
        %v389 = vunpack.c.h.bf16 %v335
        %v390 = vunpack.c.l.bf16 %v336
        %v391 = vunpack.c.h.bf16 %v336
        %v392 = vunpack.c.l.bf16 %v337
        %v393 = vunpack.c.h.bf16 %v337
        %v394 = vunpack.c.l.bf16 %v338
        %v395 = vunpack.c.h.bf16 %v338
        %v396 = vunpack.c.l.bf16 %v339
        %v397 = vunpack.c.h.bf16 %v339
        %v398 = vunpack.c.l.bf16 %v340
        %v399 = vunpack.c.h.bf16 %v340
        %v400 = vunpack.c.l.bf16 %v341
        %v401 = vunpack.c.h.bf16 %v341
        %v402 = vunpack.c.l.bf16 %v342
        %v403 = vunpack.c.h.bf16 %v342
        %v404 = vunpack.c.l.bf16 %v343
        %v405 = vunpack.c.h.bf16 %v343
        %v406 = vunpack.c.l.bf16 %v344
        %v407 = vunpack.c.h.bf16 %v344
        %v408 = vunpack.c.l.bf16 %v345
        %v409 = vunpack.c.h.bf16 %v345
        %vm410 = vcmp.gt.f32.partialorder %v346, 0.0
        %vm411 = vcmp.gt.f32.partialorder %v347, 0.0
        %vm412 = vcmp.gt.f32.partialorder %v348, 0.0
        %vm413 = vcmp.gt.f32.partialorder %v349, 0.0
        %vm414 = vcmp.gt.f32.partialorder %v350, 0.0
        %vm415 = vcmp.gt.f32.partialorder %v351, 0.0
        %vm416 = vcmp.gt.f32.partialorder %v352, 0.0
        %vm417 = vcmp.gt.f32.partialorder %v353, 0.0
        %vm418 = vcmp.gt.f32.partialorder %v354, 0.0
        %vm419 = vcmp.gt.f32.partialorder %v355, 0.0
        %vm420 = vcmp.gt.f32.partialorder %v356, 0.0
        %vm421 = vcmp.gt.f32.partialorder %v357, 0.0
        %vm422 = vcmp.gt.f32.partialorder %v358, 0.0
        %vm423 = vcmp.gt.f32.partialorder %v359, 0.0
        %vm424 = vcmp.gt.f32.partialorder %v360, 0.0
        %vm425 = vcmp.gt.f32.partialorder %v361, 0.0
        %vm426 = vcmp.gt.f32.partialorder %v362, 0.0
        %vm427 = vcmp.gt.f32.partialorder %v363, 0.0
        %vm428 = vcmp.gt.f32.partialorder %v364, 0.0
        %vm429 = vcmp.gt.f32.partialorder %v365, 0.0
        %vm430 = vcmp.gt.f32.partialorder %v366, 0.0
        %vm431 = vcmp.gt.f32.partialorder %v367, 0.0
        %vm432 = vcmp.gt.f32.partialorder %v368, 0.0
        %vm433 = vcmp.gt.f32.partialorder %v369, 0.0
        %vm434 = vcmp.gt.f32.partialorder %v370, 0.0
        %vm435 = vcmp.gt.f32.partialorder %v371, 0.0
        %vm436 = vcmp.gt.f32.partialorder %v372, 0.0
        %vm437 = vcmp.gt.f32.partialorder %v373, 0.0
        %vm438 = vcmp.gt.f32.partialorder %v374, 0.0
        %vm439 = vcmp.gt.f32.partialorder %v375, 0.0
        %vm440 = vcmp.gt.f32.partialorder %v376, 0.0
        %vm441 = vcmp.gt.f32.partialorder %v377, 0.0
        %vm442 = vcmp.gt.f32.partialorder %v378, 0.0
        %vm443 = vcmp.gt.f32.partialorder %v379, 0.0
        %vm444 = vcmp.gt.f32.partialorder %v380, 0.0
        %vm445 = vcmp.gt.f32.partialorder %v381, 0.0
        %vm446 = vcmp.gt.f32.partialorder %v382, 0.0
        %vm447 = vcmp.gt.f32.partialorder %v383, 0.0
        %vm448 = vcmp.gt.f32.partialorder %v384, 0.0
        %vm449 = vcmp.gt.f32.partialorder %v385, 0.0
        %vm450 = vcmp.gt.f32.partialorder %v386, 0.0
        %vm451 = vcmp.gt.f32.partialorder %v387, 0.0
        %vm452 = vcmp.gt.f32.partialorder %v388, 0.0
        %vm453 = vcmp.gt.f32.partialorder %v389, 0.0
        %vm454 = vcmp.gt.f32.partialorder %v390, 0.0
        %vm455 = vcmp.gt.f32.partialorder %v391, 0.0
        %vm456 = vcmp.gt.f32.partialorder %v392, 0.0
        %vm457 = vcmp.gt.f32.partialorder %v393, 0.0
        %vm458 = vcmp.gt.f32.partialorder %v394, 0.0
        %vm459 = vcmp.gt.f32.partialorder %v395, 0.0
        %vm460 = vcmp.gt.f32.partialorder %v396, 0.0
        %vm461 = vcmp.gt.f32.partialorder %v397, 0.0
        %vm462 = vcmp.gt.f32.partialorder %v398, 0.0
        %vm463 = vcmp.gt.f32.partialorder %v399, 0.0
        %vm464 = vcmp.gt.f32.partialorder %v400, 0.0
        %vm465 = vcmp.gt.f32.partialorder %v401, 0.0
        %vm466 = vcmp.gt.f32.partialorder %v402, 0.0
        %vm467 = vcmp.gt.f32.partialorder %v403, 0.0
        %vm468 = vcmp.gt.f32.partialorder %v404, 0.0
        %vm469 = vcmp.gt.f32.partialorder %v405, 0.0
        %vm470 = vcmp.gt.f32.partialorder %v406, 0.0
        %vm471 = vcmp.gt.f32.partialorder %v407, 0.0
        %vm472 = vcmp.gt.f32.partialorder %v408, 0.0
        %vm473 = vcmp.gt.f32.partialorder %v409, 0.0
        %v474 = vmul.f32 %v346, 0.2
        %v475 = vmul.f32 %v347, 0.2
        %v476 = vmul.f32 %v348, 0.2
        %v477 = vmul.f32 %v349, 0.2
        %v478 = vmul.f32 %v350, 0.2
        %v479 = vmul.f32 %v351, 0.2
        %v480 = vmul.f32 %v352, 0.2
        %v481 = vmul.f32 %v353, 0.2
        %v482 = vmul.f32 %v354, 0.2
        %v483 = vmul.f32 %v355, 0.2
        %v484 = vmul.f32 %v356, 0.2
        %v485 = vmul.f32 %v357, 0.2
        %v486 = vmul.f32 %v358, 0.2
        %v487 = vmul.f32 %v359, 0.2
        %v488 = vmul.f32 %v360, 0.2
        %v489 = vmul.f32 %v361, 0.2
        %v490 = vmul.f32 %v362, 0.2
        %v491 = vmul.f32 %v363, 0.2
        %v492 = vmul.f32 %v364, 0.2
        %v493 = vmul.f32 %v365, 0.2
        %v494 = vmul.f32 %v366, 0.2
        %v495 = vmul.f32 %v367, 0.2
        %v496 = vmul.f32 %v368, 0.2
        %v497 = vmul.f32 %v369, 0.2
        %v498 = vmul.f32 %v370, 0.2
        %v499 = vmul.f32 %v371, 0.2
        %v500 = vmul.f32 %v372, 0.2
        %v501 = vmul.f32 %v373, 0.2
        %v502 = vmul.f32 %v374, 0.2
        %v503 = vmul.f32 %v375, 0.2
        %v504 = vmul.f32 %v376, 0.2
        %v505 = vmul.f32 %v377, 0.2
        %v506 = vmul.f32 %v378, 0.2
        %v507 = vmul.f32 %v379, 0.2
        %v508 = vmul.f32 %v380, 0.2
        %v509 = vmul.f32 %v381, 0.2
        %v510 = vmul.f32 %v382, 0.2
        %v511 = vmul.f32 %v383, 0.2
        %v512 = vmul.f32 %v384, 0.2
        %v513 = vmul.f32 %v385, 0.2
        %v514 = vmul.f32 %v386, 0.2
        %v515 = vmul.f32 %v387, 0.2
        %v516 = vmul.f32 %v388, 0.2
        %v517 = vmul.f32 %v389, 0.2
        %v518 = vmul.f32 %v390, 0.2
        %v519 = vmul.f32 %v391, 0.2
        %v520 = vmul.f32 %v392, 0.2
        %v521 = vmul.f32 %v393, 0.2
        %v522 = vmul.f32 %v394, 0.2
        %v523 = vmul.f32 %v395, 0.2
        %v524 = vmul.f32 %v396, 0.2
        %v525 = vmul.f32 %v397, 0.2
        %v526 = vmul.f32 %v398, 0.2
        %v527 = vmul.f32 %v399, 0.2
        %v528 = vmul.f32 %v400, 0.2
        %v529 = vmul.f32 %v401, 0.2
        %v530 = vmul.f32 %v402, 0.2
        %v531 = vmul.f32 %v403, 0.2
        %v532 = vmul.f32 %v404, 0.2
        %v533 = vmul.f32 %v405, 0.2
        %v534 = vmul.f32 %v406, 0.2
        %v535 = vmul.f32 %v407, 0.2
        %v536 = vmul.f32 %v408, 0.2
        %v537 = vmul.f32 %v409, 0.2
        %v538 = vsel %vm410, %v346, %v474
        %v539 = vsel %vm411, %v347, %v475
        %v540 = vsel %vm412, %v348, %v476
        %v541 = vsel %vm413, %v349, %v477
        %v542 = vsel %vm414, %v350, %v478
        %v543 = vsel %vm415, %v351, %v479
        %v544 = vsel %vm416, %v352, %v480
        %v545 = vsel %vm417, %v353, %v481
        %v546 = vsel %vm418, %v354, %v482
        %v547 = vsel %vm419, %v355, %v483
        %v548 = vsel %vm420, %v356, %v484
        %v549 = vsel %vm421, %v357, %v485
        %v550 = vsel %vm422, %v358, %v486
        %v551 = vsel %vm423, %v359, %v487
        %v552 = vsel %vm424, %v360, %v488
        %v553 = vsel %vm425, %v361, %v489
        %v554 = vsel %vm426, %v362, %v490
        %v555 = vsel %vm427, %v363, %v491
        %v556 = vsel %vm428, %v364, %v492
        %v557 = vsel %vm429, %v365, %v493
        %v558 = vsel %vm430, %v366, %v494
        %v559 = vsel %vm431, %v367, %v495
        %v560 = vsel %vm432, %v368, %v496
        %v561 = vsel %vm433, %v369, %v497
        %v562 = vsel %vm434, %v370, %v498
        %v563 = vsel %vm435, %v371, %v499
        %v564 = vsel %vm436, %v372, %v500
        %v565 = vsel %vm437, %v373, %v501
        %v566 = vsel %vm438, %v374, %v502
        %v567 = vsel %vm439, %v375, %v503
        %v568 = vsel %vm440, %v376, %v504
        %v569 = vsel %vm441, %v377, %v505
        %v570 = vsel %vm442, %v378, %v506
        %v571 = vsel %vm443, %v379, %v507
        %v572 = vsel %vm444, %v380, %v508
        %v573 = vsel %vm445, %v381, %v509
        %v574 = vsel %vm446, %v382, %v510
        %v575 = vsel %vm447, %v383, %v511
        %v576 = vsel %vm448, %v384, %v512
        %v577 = vsel %vm449, %v385, %v513
        %v578 = vsel %vm450, %v386, %v514
        %v579 = vsel %vm451, %v387, %v515
        %v580 = vsel %vm452, %v388, %v516
        %v581 = vsel %vm453, %v389, %v517
        %v582 = vsel %vm454, %v390, %v518
        %v583 = vsel %vm455, %v391, %v519
        %v584 = vsel %vm456, %v392, %v520
        %v585 = vsel %vm457, %v393, %v521
        %v586 = vsel %vm458, %v394, %v522
        %v587 = vsel %vm459, %v395, %v523
        %v588 = vsel %vm460, %v396, %v524
        %v589 = vsel %vm461, %v397, %v525
        %v590 = vsel %vm462, %v398, %v526
        %v591 = vsel %vm463, %v399, %v527
        %v592 = vsel %vm464, %v400, %v528
        %v593 = vsel %vm465, %v401, %v529
        %v594 = vsel %vm466, %v402, %v530
        %v595 = vsel %vm467, %v403, %v531
        %v596 = vsel %vm468, %v404, %v532
        %v597 = vsel %vm469, %v405, %v533
        %v598 = vsel %vm470, %v406, %v534
        %v599 = vsel %vm471, %v407, %v535
        %v600 = vsel %vm472, %v408, %v536
        %v601 = vsel %vm473, %v409, %v537
        %v602 = vpack.c.bf16 %v542, %v538
        %v603 = vpack.c.bf16 %v543, %v539
        %v604 = vpack.c.bf16 %v544, %v540
        %v605 = vpack.c.bf16 %v545, %v541
        %v606 = vpack.c.bf16 %v550, %v546
        %v607 = vpack.c.bf16 %v551, %v547
        %v608 = vpack.c.bf16 %v552, %v548
        %v609 = vpack.c.bf16 %v553, %v549
        %v610 = vpack.c.bf16 %v558, %v554
        %v611 = vpack.c.bf16 %v559, %v555
        %v612 = vpack.c.bf16 %v560, %v556
        %v613 = vpack.c.bf16 %v561, %v557
        %v614 = vpack.c.bf16 %v566, %v562
        %v615 = vpack.c.bf16 %v567, %v563
        %v616 = vpack.c.bf16 %v568, %v564
        %v617 = vpack.c.bf16 %v569, %v565
        %v618 = vpack.c.bf16 %v574, %v570
        %v619 = vpack.c.bf16 %v575, %v571
        %v620 = vpack.c.bf16 %v576, %v572
        %v621 = vpack.c.bf16 %v577, %v573
        %v622 = vpack.c.bf16 %v582, %v578
        %v623 = vpack.c.bf16 %v583, %v579
        %v624 = vpack.c.bf16 %v584, %v580
        %v625 = vpack.c.bf16 %v585, %v581
        %v626 = vpack.c.bf16 %v590, %v586
        %v627 = vpack.c.bf16 %v591, %v587
        %v628 = vpack.c.bf16 %v592, %v588
        %v629 = vpack.c.bf16 %v593, %v589
        %v630 = vpack.c.bf16 %v598, %v594
        %v631 = vpack.c.bf16 %v599, %v595
        %v632 = vpack.c.bf16 %v600, %v596
        %v633 = vpack.c.bf16 %v601, %v597
        %v634 = vld [vmem:[#allocation2] sm:$0xff]
        %v635 = vld [vmem:[#allocation2 + $0x8] sm:$0xff]
        %v636 = vld [vmem:[#allocation2 + $0x10] sm:$0xff]
        %v637 = vld [vmem:[#allocation2 + $0x18] sm:$0xff]
        %v638 = vld [vmem:[#allocation2 + $0x20] sm:$0xff]
        %v639 = vld [vmem:[#allocation2 + $0x28] sm:$0xff]
        %v640 = vld [vmem:[#allocation2 + $0x30] sm:$0xff]
        %v641 = vld [vmem:[#allocation2 + $0x38] sm:$0xff]
        %v642 = vld [vmem:[#allocation2 + $0x40] sm:$0xff]
        %v643 = vld [vmem:[#allocation2 + $0x48] sm:$0xff]
        %v644 = vld [vmem:[#allocation2 + $0x50] sm:$0xff]
        %v645 = vld [vmem:[#allocation2 + $0x58] sm:$0xff]
        %v646 = vld [vmem:[#allocation2 + $0x60] sm:$0xff]
        %v647 = vld [vmem:[#allocation2 + $0x68] sm:$0xff]
        %v648 = vld [vmem:[#allocation2 + $0x70] sm:$0xff]
        %v649 = vld [vmem:[#allocation2 + $0x78] sm:$0xff]
        %v650 = vld [vmem:[%s283] sm:$0xf]
        %v651 = vld [vmem:[%s283 + $0x4] sm:$0xf]
        %v652 = vld [vmem:[%s283 + $0x8] sm:$0xf]
        %v653 = vld [vmem:[%s283 + $0xc] sm:$0xf]
        %v654 = vld [vmem:[%s283 + $0x10] sm:$0xf]
        %v655 = vld [vmem:[%s283 + $0x14] sm:$0xf]
        %v656 = vld [vmem:[%s283 + $0x18] sm:$0xf]
        %v657 = vld [vmem:[%s283 + $0x1c] sm:$0xf]
        %v658 = vld [vmem:[%s283 + $0x20] sm:$0xf]
        %v659 = vld [vmem:[%s283 + $0x24] sm:$0xf]
        %v660 = vld [vmem:[%s283 + $0x28] sm:$0xf]
        %v661 = vld [vmem:[%s283 + $0x2c] sm:$0xf]
        %v662 = vld [vmem:[%s283 + $0x30] sm:$0xf]
        %v663 = vld [vmem:[%s283 + $0x34] sm:$0xf]
        %v664 = vld [vmem:[%s283 + $0x38] sm:$0xf]
        %v665 = vld [vmem:[%s283 + $0x3c] sm:$0xf]
        %v666 = vld [vmem:[%s283 + $0x40] sm:$0xf]
        %v667 = vld [vmem:[%s283 + $0x44] sm:$0xf]
        %v668 = vld [vmem:[%s283 + $0x48] sm:$0xf]
        %v669 = vld [vmem:[%s283 + $0x4c] sm:$0xf]
        %v670 = vld [vmem:[%s283 + $0x50] sm:$0xf]
        %v671 = vld [vmem:[%s283 + $0x54] sm:$0xf]
        %v672 = vld [vmem:[%s283 + $0x58] sm:$0xf]
        %v673 = vld [vmem:[%s283 + $0x5c] sm:$0xf]
        %v674 = vld [vmem:[%s283 + $0x60] sm:$0xf]
        %v675 = vld [vmem:[%s283 + $0x64] sm:$0xf]
        %v676 = vld [vmem:[%s283 + $0x68] sm:$0xf]
        %v677 = vld [vmem:[%s283 + $0x6c] sm:$0xf]
        %v678 = vld [vmem:[%s283 + $0x70] sm:$0xf]
        %v679 = vld [vmem:[%s283 + $0x74] sm:$0xf]
        %v680 = vld [vmem:[%s283 + $0x78] sm:$0xf]
        %v681 = vld [vmem:[%s283 + $0x7c] sm:$0xf]
        %v682 = vld [vmem:[%s283 + $0x80] sm:$0xf]
        %v683 = vld [vmem:[%s283 + $0x84] sm:$0xf]
        %v684 = vld [vmem:[%s283 + $0x88] sm:$0xf]
        %v685 = vld [vmem:[%s283 + $0x8c] sm:$0xf]
        %v686 = vld [vmem:[%s283 + $0x90] sm:$0xf]
        %v687 = vld [vmem:[%s283 + $0x94] sm:$0xf]
        %v688 = vld [vmem:[%s283 + $0x98] sm:$0xf]
        %v689 = vld [vmem:[%s283 + $0x9c] sm:$0xf]
        %v690 = vld [vmem:[%s283 + $0xa0] sm:$0xf]
        %v691 = vld [vmem:[%s283 + $0xa4] sm:$0xf]
        %v692 = vld [vmem:[%s283 + $0xa8] sm:$0xf]
        %v693 = vld [vmem:[%s283 + $0xac] sm:$0xf]
        %v694 = vld [vmem:[%s283 + $0xb0] sm:$0xf]
        %v695 = vld [vmem:[%s283 + $0xb4] sm:$0xf]
        %v696 = vld [vmem:[%s283 + $0xb8] sm:$0xf]
        %v697 = vld [vmem:[%s283 + $0xbc] sm:$0xf]
        %v698 = vld [vmem:[%s283 + $0xc0] sm:$0xf]
        %v699 = vld [vmem:[%s283 + $0xc4] sm:$0xf]
        %v700 = vld [vmem:[%s283 + $0xc8] sm:$0xf]
        %v701 = vld [vmem:[%s283 + $0xcc] sm:$0xf]
        %v702 = vld [vmem:[%s283 + $0xd0] sm:$0xf]
        %v703 = vld [vmem:[%s283 + $0xd4] sm:$0xf]
        %v704 = vld [vmem:[%s283 + $0xd8] sm:$0xf]
        %v705 = vld [vmem:[%s283 + $0xdc] sm:$0xf]
        %v706 = vld [vmem:[%s283 + $0xe0] sm:$0xf]
        %v707 = vld [vmem:[%s283 + $0xe4] sm:$0xf]
        %v708 = vld [vmem:[%s283 + $0xe8] sm:$0xf]
        %v709 = vld [vmem:[%s283 + $0xec] sm:$0xf]
        %v710 = vld [vmem:[%s283 + $0xf0] sm:$0xf]
        %v711 = vld [vmem:[%s283 + $0xf4] sm:$0xf]
        %v712 = vld [vmem:[%s283 + $0xf8] sm:$0xf]
        %v713 = vld [vmem:[%s283 + $0xfc] sm:$0xf]
        %v778 = vunpack.c.l.b16 %v650
        %v779 = vunpack.c.l.b16 %v651
        %v780 = vunpack.c.l.b16 %v652
        %v781 = vunpack.c.l.b16 %v653
        %v782 = vunpack.c.l.b16 %v654
        %v783 = vunpack.c.l.b16 %v655
        %v784 = vunpack.c.l.b16 %v656
        %v785 = vunpack.c.l.b16 %v657
        %v786 = vunpack.c.l.b16 %v658
        %v787 = vunpack.c.l.b16 %v659
        %v788 = vunpack.c.l.b16 %v660
        %v789 = vunpack.c.l.b16 %v661
        %v790 = vunpack.c.l.b16 %v662
        %v791 = vunpack.c.l.b16 %v663
        %v792 = vunpack.c.l.b16 %v664
        %v793 = vunpack.c.l.b16 %v665
        %v794 = vunpack.c.l.b16 %v666
        %v795 = vunpack.c.l.b16 %v667
        %v796 = vunpack.c.l.b16 %v668
        %v797 = vunpack.c.l.b16 %v669
        %v798 = vunpack.c.l.b16 %v670
        %v799 = vunpack.c.l.b16 %v671
        %v800 = vunpack.c.l.b16 %v672
        %v801 = vunpack.c.l.b16 %v673
        %v802 = vunpack.c.l.b16 %v674
        %v803 = vunpack.c.l.b16 %v675
        %v804 = vunpack.c.l.b16 %v676
        %v805 = vunpack.c.l.b16 %v677
        %v806 = vunpack.c.l.b16 %v678
        %v807 = vunpack.c.l.b16 %v679
        %v808 = vunpack.c.l.b16 %v680
        %v809 = vunpack.c.l.b16 %v681
        %v810 = vunpack.c.l.b16 %v682
        %v811 = vunpack.c.l.b16 %v683
        %v812 = vunpack.c.l.b16 %v684
        %v813 = vunpack.c.l.b16 %v685
        %v814 = vunpack.c.l.b16 %v686
        %v815 = vunpack.c.l.b16 %v687
        %v816 = vunpack.c.l.b16 %v688
        %v817 = vunpack.c.l.b16 %v689
        %v818 = vunpack.c.l.b16 %v690
        %v819 = vunpack.c.l.b16 %v691
        %v820 = vunpack.c.l.b16 %v692
        %v821 = vunpack.c.l.b16 %v693
        %v822 = vunpack.c.l.b16 %v694
        %v823 = vunpack.c.l.b16 %v695
        %v824 = vunpack.c.l.b16 %v696
        %v825 = vunpack.c.l.b16 %v697
        %v826 = vunpack.c.l.b16 %v698
        %v827 = vunpack.c.l.b16 %v699
        %v828 = vunpack.c.l.b16 %v700
        %v829 = vunpack.c.l.b16 %v701
        %v830 = vunpack.c.l.b16 %v702
        %v831 = vunpack.c.l.b16 %v703
        %v832 = vunpack.c.l.b16 %v704
        %v833 = vunpack.c.l.b16 %v705
        %v834 = vunpack.c.l.b16 %v706
        %v835 = vunpack.c.l.b16 %v707
        %v836 = vunpack.c.l.b16 %v708
        %v837 = vunpack.c.l.b16 %v709
        %v838 = vunpack.c.l.b16 %v710
        %v839 = vunpack.c.l.b16 %v711
        %v840 = vunpack.c.l.b16 %v712
        %v841 = vunpack.c.l.b16 %v713
        %v842 = vpack.c.b16 %v779, %v778
        %v843 = vpack.c.b16 %v781, %v780
        %v844 = vpack.c.b16 %v783, %v782
        %v845 = vpack.c.b16 %v785, %v784
        %v846 = vpack.c.b16 %v787, %v786
        %v847 = vpack.c.b16 %v789, %v788
        %v848 = vpack.c.b16 %v791, %v790
        %v849 = vpack.c.b16 %v793, %v792
        %v850 = vpack.c.b16 %v795, %v794
        %v851 = vpack.c.b16 %v797, %v796
        %v852 = vpack.c.b16 %v799, %v798
        %v853 = vpack.c.b16 %v801, %v800
        %v854 = vpack.c.b16 %v803, %v802
        %v855 = vpack.c.b16 %v805, %v804
        %v856 = vpack.c.b16 %v807, %v806
        %v857 = vpack.c.b16 %v809, %v808
        %v858 = vpack.c.b16 %v811, %v810
        %v859 = vpack.c.b16 %v813, %v812
        %v860 = vpack.c.b16 %v815, %v814
        %v861 = vpack.c.b16 %v817, %v816
        %v862 = vpack.c.b16 %v819, %v818
        %v863 = vpack.c.b16 %v821, %v820
        %v864 = vpack.c.b16 %v823, %v822
        %v865 = vpack.c.b16 %v825, %v824
        %v866 = vpack.c.b16 %v827, %v826
        %v867 = vpack.c.b16 %v829, %v828
        %v868 = vpack.c.b16 %v831, %v830
        %v869 = vpack.c.b16 %v833, %v832
        %v870 = vpack.c.b16 %v835, %v834
        %v871 = vpack.c.b16 %v837, %v836
        %v872 = vpack.c.b16 %v839, %v838
        %v873 = vpack.c.b16 %v841, %v840
        %906 = vmatpush.bf16.msra.mxu0 %v849
        %907 = vmatpush.bf16.msra.mxu0 %v848
        %908 = vmatpush.bf16.msra.mxu0 %v847
        %909 = vmatpush.bf16.msra.mxu0 %v846
        %910 = vmatpush.bf16.msra.mxu0 %v845
        %911 = vmatpush.bf16.msra.mxu0 %v844
        %912 = vmatpush.bf16.msra.mxu0 %v843
        %913 = vmatpush.bf16.msra.mxu0 %v842
        %914 = vmatmul.bf16.gmra.mxu0 %v602
        %v915 = vpop.f32.mrf.mxu0
        %v916 = vadd.f32 0.0, %v915
        %v917 = vpop.f32.mrf.mxu0
        %v918 = vadd.f32 0.0, %v917
        %919 = vmatmul.bf16.gmra.mxu0 %v606
        %v920 = vpop.f32.mrf.mxu0
        %v921 = vadd.f32 0.0, %v920
        %v922 = vpop.f32.mrf.mxu0
        %v923 = vadd.f32 0.0, %v922
        %924 = vmatmul.bf16.gmra.mxu0 %v610
        %v925 = vpop.f32.mrf.mxu0
        %v926 = vadd.f32 0.0, %v925
        %v927 = vpop.f32.mrf.mxu0
        %v928 = vadd.f32 0.0, %v927
        %929 = vmatmul.bf16.gmra.mxu0 %v614
        %v930 = vpop.f32.mrf.mxu0
        %v931 = vadd.f32 0.0, %v930
        %v932 = vpop.f32.mrf.mxu0
        %v933 = vadd.f32 0.0, %v932
        %934 = vmatmul.bf16.gmra.mxu0 %v618
        %v935 = vpop.f32.mrf.mxu0
        %v936 = vadd.f32 0.0, %v935
        %v937 = vpop.f32.mrf.mxu0
        %v938 = vadd.f32 0.0, %v937
        %939 = vmatmul.bf16.gmra.mxu0 %v622
        %v940 = vpop.f32.mrf.mxu0
        %v941 = vadd.f32 0.0, %v940
        %v942 = vpop.f32.mrf.mxu0
        %v943 = vadd.f32 0.0, %v942
        %944 = vmatmul.bf16.gmra.mxu0 %v626
        %v945 = vpop.f32.mrf.mxu0
        %v946 = vadd.f32 0.0, %v945
        %v947 = vpop.f32.mrf.mxu0
        %v948 = vadd.f32 0.0, %v947
        %949 = vmatmul.bf16.gmra.mxu0 %v630
        %v950 = vpop.f32.mrf.mxu0
        %v951 = vadd.f32 0.0, %v950
        %v952 = vpop.f32.mrf.mxu0
        %v953 = vadd.f32 0.0, %v952
        %954 = vdwg.mxu0
        %955 = vmatpush.bf16.msra.mxu0 %v857
        %956 = vmatpush.bf16.msra.mxu0 %v856
        %957 = vmatpush.bf16.msra.mxu0 %v855
        %958 = vmatpush.bf16.msra.mxu0 %v854
        %959 = vmatpush.bf16.msra.mxu0 %v853
        %960 = vmatpush.bf16.msra.mxu0 %v852
        %961 = vmatpush.bf16.msra.mxu0 %v851
        %962 = vmatpush.bf16.msra.mxu0 %v850
        %963 = vmatmul.bf16.gmra.mxu0 %v603
        %v964 = vpop.f32.mrf.mxu0
        %v965 = vadd.f32 %v916, %v964
        %v966 = vpop.f32.mrf.mxu0
        %v967 = vadd.f32 %v918, %v966
        %968 = vmatmul.bf16.gmra.mxu0 %v607
        %v969 = vpop.f32.mrf.mxu0
        %v970 = vadd.f32 %v921, %v969
        %v971 = vpop.f32.mrf.mxu0
        %v972 = vadd.f32 %v923, %v971
        %973 = vmatmul.bf16.gmra.mxu0 %v611
        %v974 = vpop.f32.mrf.mxu0
        %v975 = vadd.f32 %v926, %v974
        %v976 = vpop.f32.mrf.mxu0
        %v977 = vadd.f32 %v928, %v976
        %978 = vmatmul.bf16.gmra.mxu0 %v615
        %v979 = vpop.f32.mrf.mxu0
        %v980 = vadd.f32 %v931, %v979
        %v981 = vpop.f32.mrf.mxu0
        %v982 = vadd.f32 %v933, %v981
        %983 = vmatmul.bf16.gmra.mxu0 %v619
        %v984 = vpop.f32.mrf.mxu0
        %v985 = vadd.f32 %v936, %v984
        %v986 = vpop.f32.mrf.mxu0
        %v987 = vadd.f32 %v938, %v986
        %988 = vmatmul.bf16.gmra.mxu0 %v623
        %v989 = vpop.f32.mrf.mxu0
        %v990 = vadd.f32 %v941, %v989
        %v991 = vpop.f32.mrf.mxu0
        %v992 = vadd.f32 %v943, %v991
        %993 = vmatmul.bf16.gmra.mxu0 %v627
        %v994 = vpop.f32.mrf.mxu0
        %v995 = vadd.f32 %v946, %v994
        %v996 = vpop.f32.mrf.mxu0
        %v997 = vadd.f32 %v948, %v996
        %998 = vmatmul.bf16.gmra.mxu0 %v631
        %v999 = vpop.f32.mrf.mxu0
        %v1000 = vadd.f32 %v951, %v999
        %v1001 = vpop.f32.mrf.mxu0
        %v1002 = vadd.f32 %v953, %v1001
        %1003 = vdwg.mxu0
        %1004 = vmatpush.bf16.msra.mxu0 %v865
        %1005 = vmatpush.bf16.msra.mxu0 %v864
        %1006 = vmatpush.bf16.msra.mxu0 %v863
        %1007 = vmatpush.bf16.msra.mxu0 %v862
        %1008 = vmatpush.bf16.msra.mxu0 %v861
        %1009 = vmatpush.bf16.msra.mxu0 %v860
        %1010 = vmatpush.bf16.msra.mxu0 %v859
        %1011 = vmatpush.bf16.msra.mxu0 %v858
        %1012 = vmatmul.bf16.gmra.mxu0 %v604
        %v1013 = vpop.f32.mrf.mxu0
        %v1014 = vadd.f32 %v965, %v1013
        %v1015 = vpop.f32.mrf.mxu0
        %v1016 = vadd.f32 %v967, %v1015
        %1017 = vmatmul.bf16.gmra.mxu0 %v608
        %v1018 = vpop.f32.mrf.mxu0
        %v1019 = vadd.f32 %v970, %v1018
        %v1020 = vpop.f32.mrf.mxu0
        %v1021 = vadd.f32 %v972, %v1020
        %1022 = vmatmul.bf16.gmra.mxu0 %v612
        %v1023 = vpop.f32.mrf.mxu0
        %v1024 = vadd.f32 %v975, %v1023
        %v1025 = vpop.f32.mrf.mxu0
        %v1026 = vadd.f32 %v977, %v1025
        %1027 = vmatmul.bf16.gmra.mxu0 %v616
        %v1028 = vpop.f32.mrf.mxu0
        %v1029 = vadd.f32 %v980, %v1028
        %v1030 = vpop.f32.mrf.mxu0
        %v1031 = vadd.f32 %v982, %v1030
        %1032 = vmatmul.bf16.gmra.mxu0 %v620
        %v1033 = vpop.f32.mrf.mxu0
        %v1034 = vadd.f32 %v985, %v1033
        %v1035 = vpop.f32.mrf.mxu0
        %v1036 = vadd.f32 %v987, %v1035
        %1037 = vmatmul.bf16.gmra.mxu0 %v624
        %v1038 = vpop.f32.mrf.mxu0
        %v1039 = vadd.f32 %v990, %v1038
        %v1040 = vpop.f32.mrf.mxu0
        %v1041 = vadd.f32 %v992, %v1040
        %1042 = vmatmul.bf16.gmra.mxu0 %v628
        %v1043 = vpop.f32.mrf.mxu0
        %v1044 = vadd.f32 %v995, %v1043
        %v1045 = vpop.f32.mrf.mxu0
        %v1046 = vadd.f32 %v997, %v1045
        %1047 = vmatmul.bf16.gmra.mxu0 %v632
        %v1048 = vpop.f32.mrf.mxu0
        %v1049 = vadd.f32 %v1000, %v1048
        %v1050 = vpop.f32.mrf.mxu0
        %v1051 = vadd.f32 %v1002, %v1050
        %1052 = vdwg.mxu0
        %1053 = vmatpush.bf16.msra.mxu0 %v873
        %1054 = vmatpush.bf16.msra.mxu0 %v872
        %1055 = vmatpush.bf16.msra.mxu0 %v871
        %1056 = vmatpush.bf16.msra.mxu0 %v870
        %1057 = vmatpush.bf16.msra.mxu0 %v869
        %1058 = vmatpush.bf16.msra.mxu0 %v868
        %1059 = vmatpush.bf16.msra.mxu0 %v867
        %1060 = vmatpush.bf16.msra.mxu0 %v866
        %1061 = vmatmul.bf16.gmra.mxu0 %v605
        %v1062 = vpop.f32.mrf.mxu0
        %v1063 = vadd.f32 %v1014, %v1062
        %v1064 = vpop.f32.mrf.mxu0
        %v1065 = vadd.f32 %v1016, %v1064
        %1066 = vmatmul.bf16.gmra.mxu0 %v609
        %v1067 = vpop.f32.mrf.mxu0
        %v1068 = vadd.f32 %v1019, %v1067
        %v1069 = vpop.f32.mrf.mxu0
        %v1070 = vadd.f32 %v1021, %v1069
        %1071 = vmatmul.bf16.gmra.mxu0 %v613
        %v1072 = vpop.f32.mrf.mxu0
        %v1073 = vadd.f32 %v1024, %v1072
        %v1074 = vpop.f32.mrf.mxu0
        %v1075 = vadd.f32 %v1026, %v1074
        %1076 = vmatmul.bf16.gmra.mxu0 %v617
        %v1077 = vpop.f32.mrf.mxu0
        %v1078 = vadd.f32 %v1029, %v1077
        %v1079 = vpop.f32.mrf.mxu0
        %v1080 = vadd.f32 %v1031, %v1079
        %1081 = vmatmul.bf16.gmra.mxu0 %v621
        %v1082 = vpop.f32.mrf.mxu0
        %v1083 = vadd.f32 %v1034, %v1082
        %v1084 = vpop.f32.mrf.mxu0
        %v1085 = vadd.f32 %v1036, %v1084
        %1086 = vmatmul.bf16.gmra.mxu0 %v625
        %v1087 = vpop.f32.mrf.mxu0
        %v1088 = vadd.f32 %v1039, %v1087
        %v1089 = vpop.f32.mrf.mxu0
        %v1090 = vadd.f32 %v1041, %v1089
        %1091 = vmatmul.bf16.gmra.mxu0 %v629
        %v1092 = vpop.f32.mrf.mxu0
        %v1093 = vadd.f32 %v1044, %v1092
        %v1094 = vpop.f32.mrf.mxu0
        %v1095 = vadd.f32 %v1046, %v1094
        %1096 = vmatmul.bf16.gmra.mxu0 %v633
        %v1097 = vpop.f32.mrf.mxu0
        %v1098 = vadd.f32 %v1049, %v1097
        %v1099 = vpop.f32.mrf.mxu0
        %v1100 = vadd.f32 %v1051, %v1099
        %1101 = vdwg.mxu0
        %v1102 = vadd.f32 %v634, %v1063
        %v1103 = vadd.f32 %v635, %v1065
        %v1104 = vadd.f32 %v636, %v1068
        %v1105 = vadd.f32 %v637, %v1070
        %v1106 = vadd.f32 %v638, %v1073
        %v1107 = vadd.f32 %v639, %v1075
        %v1108 = vadd.f32 %v640, %v1078
        %v1109 = vadd.f32 %v641, %v1080
        %v1110 = vadd.f32 %v642, %v1083
        %v1111 = vadd.f32 %v643, %v1085
        %v1112 = vadd.f32 %v644, %v1088
        %v1113 = vadd.f32 %v645, %v1090
        %v1114 = vadd.f32 %v646, %v1093
        %v1115 = vadd.f32 %v647, %v1095
        %v1116 = vadd.f32 %v648, %v1098
        %v1117 = vadd.f32 %v649, %v1100
        %1118 = vst [vmem:[#allocation2] sm:$0xff] %v1102
        %1119 = vst [vmem:[#allocation2 + $0x8] sm:$0xff] %v1103
        %1120 = vst [vmem:[#allocation2 + $0x10] sm:$0xff] %v1104
        %1121 = vst [vmem:[#allocation2 + $0x18] sm:$0xff] %v1105
        %1122 = vst [vmem:[#allocation2 + $0x20] sm:$0xff] %v1106
        %1123 = vst [vmem:[#allocation2 + $0x28] sm:$0xff] %v1107
        %1124 = vst [vmem:[#allocation2 + $0x30] sm:$0xff] %v1108
        %1125 = vst [vmem:[#allocation2 + $0x38] sm:$0xff] %v1109
        %1126 = vst [vmem:[#allocation2 + $0x40] sm:$0xff] %v1110
        %1127 = vst [vmem:[#allocation2 + $0x48] sm:$0xff] %v1111
        %1128 = vst [vmem:[#allocation2 + $0x50] sm:$0xff] %v1112
        %1129 = vst [vmem:[#allocation2 + $0x58] sm:$0xff] %v1113
        %1130 = vst [vmem:[#allocation2 + $0x60] sm:$0xff] %v1114
        %1131 = vst [vmem:[#allocation2 + $0x68] sm:$0xff] %v1115
        %1132 = vst [vmem:[#allocation2 + $0x70] sm:$0xff] %v1116
        %1133 = vst [vmem:[#allocation2 + $0x78] sm:$0xff] %v1117
        %p1134 = scmp.eq.s32.totalorder %s20, 3
        // Predicated region
        $region56: #{discriminator_forward.12} parent=46 // pred_check
          %p1135 = pneg %p1134
        $region57: #{discriminator_forward.12} parent=46 // pred_check_branch
          %1137 = sbr.rel (%p1135) target = $region59
        $region58: #{discriminator_forward.12} parent=46 // pred_region
          %v1138 = vld [vmem:[#allocation2] sm:$0xff]
          %v1139 = vld [vmem:[#allocation2 + $0x8] sm:$0xff]
          %v1140 = vld [vmem:[#allocation2 + $0x10] sm:$0xff]
          %v1141 = vld [vmem:[#allocation2 + $0x18] sm:$0xff]
          %v1142 = vld [vmem:[#allocation2 + $0x20] sm:$0xff]
          %v1143 = vld [vmem:[#allocation2 + $0x28] sm:$0xff]
          %v1144 = vld [vmem:[#allocation2 + $0x30] sm:$0xff]
          %v1145 = vld [vmem:[#allocation2 + $0x38] sm:$0xff]
          %v1146 = vld [vmem:[#allocation2 + $0x40] sm:$0xff]
          %v1147 = vld [vmem:[#allocation2 + $0x48] sm:$0xff]
          %v1148 = vld [vmem:[#allocation2 + $0x50] sm:$0xff]
          %v1149 = vld [vmem:[#allocation2 + $0x58] sm:$0xff]
          %v1150 = vld [vmem:[#allocation2 + $0x60] sm:$0xff]
          %v1151 = vld [vmem:[#allocation2 + $0x68] sm:$0xff]
          %v1152 = vld [vmem:[#allocation2 + $0x70] sm:$0xff]
          %v1153 = vld [vmem:[#allocation2 + $0x78] sm:$0xff]
          %1154 = vst [vmem:[%s292] sm:$0xff] %v1138
          %1155 = vst [vmem:[%s292 + $0x8] sm:$0xff] %v1139
          %1156 = vst [vmem:[%s292 + $0x10] sm:$0xff] %v1140
          %1157 = vst [vmem:[%s292 + $0x18] sm:$0xff] %v1141
          %1158 = vst [vmem:[%s292 + $0x20] sm:$0xff] %v1142
          %1159 = vst [vmem:[%s292 + $0x28] sm:$0xff] %v1143
          %1160 = vst [vmem:[%s292 + $0x30] sm:$0xff] %v1144
          %1161 = vst [vmem:[%s292 + $0x38] sm:$0xff] %v1145
          %1162 = vst [vmem:[%s292 + $0x40] sm:$0xff] %v1146
          %1163 = vst [vmem:[%s292 + $0x48] sm:$0xff] %v1147
          %1164 = vst [vmem:[%s292 + $0x50] sm:$0xff] %v1148
          %1165 = vst [vmem:[%s292 + $0x58] sm:$0xff] %v1149
          %1166 = vst [vmem:[%s292 + $0x60] sm:$0xff] %v1150
          %1167 = vst [vmem:[%s292 + $0x68] sm:$0xff] %v1151
          %1168 = vst [vmem:[%s292 + $0x70] sm:$0xff] %v1152
          %1169 = vst [vmem:[%s292 + $0x78] sm:$0xff] %v1153
        $region59: #{discriminator_forward.12} parent=46 // pred_fallthru
          _
        %s1170 = smul.u32 16, %s18
        %p1171 = scmp.lt.s32.totalorder %s1170, 15
        %s1172 = scalar_select %p1171, %s1170, 15
        %p1173 = scmp.lt.s32.totalorder %s19, 0
        %s1174 = scalar_select %p1173, %s19, 0
        %s1175 = sadd.s32 %s1174, %s1172
        %s1176 = smul.addr %s1175, 8
        %s1177 = scalar_lea.vmem %s2, %s1176
        // Predicated region
        $region60: #{discriminator_forward.12} parent=46 // pred_check
          %p1178 = pneg %p108
        $region61: #{discriminator_forward.12} parent=46 // pred_check_branch
          %1180 = sbr.rel (%p1178) target = $region63
        $region62: #{discriminator_forward.12} parent=46 // pred_region
          %s1181 = smul.u32 16, %s18
        $region63: #{discriminator_forward.12} parent=46 // pred_fallthru
          _
        // Predicated region
        $region64: #{discriminator_forward.12} parent=46 // pred_check
          %p1182 = pneg %p108
        $region65: #{discriminator_forward.12} parent=46 // pred_check_branch
          %1184 = sbr.rel (%p1182) target = $region67
        $region66: #{discriminator_forward.12} parent=46 // pred_region
          %s1185 = smul.u32 16, %s18
          %p1186 = scmp.lt.s32.totalorder %s1185, 15
          %s1187 = scalar_select %p1186, %s1185, 15
          %p1188 = scmp.lt.s32.totalorder %s19, 0
          %s1189 = scalar_select %p1188, %s19, 0
          %s1190 = sadd.s32 %s1189, %s1187
          %s1191 = smul.addr %s1190, 8
          %s1192 = scalar_lea.vmem %s2, %s1191
        $region67: #{discriminator_forward.12} parent=46 // pred_fallthru
          _
      $region47: #{discriminator_forward.12} parent=5 // pred_fallthru
        _
      %p1193 = scmp.le.s32.totalorder 2, %s8
      // Predicated region
      $region68: #{discriminator_forward.12} parent=5 // pred_check
        %p1194 = pneg %p1193
      $region69: #{discriminator_forward.12} parent=5 // pred_check_branch
        %1196 = sbr.rel (%p1194) target = $region71
      $region70: #{discriminator_forward.12} parent=5 // pred_region
        %s1197 = ssub.s32 %s8, 2
      $region71: #{discriminator_forward.12} parent=5 // pred_fallthru
        _
    $region6: #{discriminator_forward.12} parent=1 // loop_footer
      %s12 = sadd.s32 1, %s8
    $region7: #{discriminator_forward.12} parent=1 // loop_footer_branch
      %7 = sbr.rel target = $region3
    $region8: #{discriminator_forward.12} parent=1 // loop_exit
      _

// kernel: discriminator_forward.17
$region0: #{discriminator_forward.17}
  #allocation0 [shape = 'u32[]', space=smem, size = 0x4, offset = 0x4, fixed_abs, tag = 'smem constant byte address 0x4 - core index']
  #allocation1 [shape = 'u32[72,128]{1,0:T(1,128)}', space=vmem, size = 0x9000, scoped, tag = 'internal scratch']
  %s0 = inlined_call_operand.vmem [shape: f32[32,256], index: 0, kind: input, shape index: {}]
  %s1 = inlined_call_operand.vmem [shape: f32[8,256], index: 1, kind: input, shape index: {}]
  %s2 = inlined_call_operand.vmem [shape: f32[1,256], index: 2, kind: input, shape index: {}]
  %s3 = inlined_call_operand.vmem [shape: f32[1,256], index: 3, kind: input, shape index: {}]
  %s4 = inlined_call_operand.vmem [shape: f32[32,256], index: 4, kind: output, shape index: {}]
  %s5 = sld [smem:[#allocation0]]
  $region26: #{discriminator_forward.17} parent=0
    _
  %s7 = ssub.s32 1, %s5
  %s8 = scalar_select 0, %s7, %s5
  // Predicated region
  $region2: #{discriminator_forward.17} parent=0 // pred_check
    _
  $region3: #{discriminator_forward.17} parent=0 // pred_check_branch
    %10 = sbr.rel (0) target = $region5
  $region4: #{discriminator_forward.17} parent=0 // pred_region
    _
  $region5: #{discriminator_forward.17} parent=0 // pred_fallthru
    _
  // Predicated region
  $region6: #{discriminator_forward.17} parent=0 // pred_check
    _
  $region7: #{discriminator_forward.17} parent=0 // pred_check_branch
    %12 = sbr.rel (0) target = $region9
  $region8: #{discriminator_forward.17} parent=0 // pred_region
    _
  $region9: #{discriminator_forward.17} parent=0 // pred_fallthru
    _
  // Predicated region
  $region10: #{discriminator_forward.17} parent=0 // pred_check
    _
  $region11: #{discriminator_forward.17} parent=0 // pred_check_branch
    %14 = sbr.rel (0) target = $region13
  $region12: #{discriminator_forward.17} parent=0 // pred_region
    _
  $region13: #{discriminator_forward.17} parent=0 // pred_fallthru
    _
  // Predicated region
  $region14: #{discriminator_forward.17} parent=0 // pred_check
    _
  $region15: #{discriminator_forward.17} parent=0 // pred_check_branch
    %16 = sbr.rel (0) target = $region17
  $region16: #{discriminator_forward.17} parent=0 // pred_region
    _
  $region17: #{discriminator_forward.17} parent=0 // pred_fallthru
    _
  %v17 = vld [vmem:[%s0] sm:$0xff]
  %v18 = vld [vmem:[%s0 + $0x8] sm:$0xff]
  %v19 = vld [vmem:[%s0 + $0x10] sm:$0xff]
  %v20 = vld [vmem:[%s0 + $0x18] sm:$0xff]
  %v21 = vld [vmem:[%s0 + $0x20] sm:$0xff]
  %v22 = vld [vmem:[%s0 + $0x28] sm:$0xff]
  %v23 = vld [vmem:[%s0 + $0x30] sm:$0xff]
  %v24 = vld [vmem:[%s0 + $0x38] sm:$0xff]
  %v25 = vld [vmem:[%s1] ss:$8 sm:$0x3]
  %v26 = vmul.f32 %v25, 0.03125
  %s27 = scalar_lea.vmem %s1, 1
  %v28 = vld [vmem:[%s27] ss:$8 sm:$0x3]
  %v29 = vmul.f32 %v28, 0.03125
  %v30 = vmul.f32 %v26, %v26
  %v31 = vsub.f32 %v29, %v30
  %v32 = vadd.f32 %v31, 1e-05
  %v33 = vrsqrt.pop %v32
  %v34 = vmul.f32 %v33, %v32
  %v35 = vmul.f32 %v34, %v33
  %v36 = vmul.f32 0.5, %v35
  %v37 = vsub.f32 1.5, %v36
  %v38 = vmul.f32 %v33, %v37
  %vm39 = vweird.f32 %v32
  %vm40 = vweird.f32 %v33
  %vm41 = vmor %vm39, %vm40
  %v42 = vsel %vm41, %v33, %v38
  %v44 = vperm.slane %v26, 0
  %v45 = vperm.slane %v26, 1
  %v48 = vsub.f32 %v17, %v44
  %v49 = vsub.f32 %v18, %v45
  %v50 = vsub.f32 %v19, %v44
  %v51 = vsub.f32 %v20, %v45
  %v52 = vsub.f32 %v21, %v44
  %v53 = vsub.f32 %v22, %v45
  %v54 = vsub.f32 %v23, %v44
  %v55 = vsub.f32 %v24, %v45
  %v57 = vperm.slane %v42, 0
  %v58 = vperm.slane %v42, 1
  %v61 = vmul.f32 %v48, %v57
  %v62 = vmul.f32 %v49, %v58
  %v63 = vmul.f32 %v50, %v57
  %v64 = vmul.f32 %v51, %v58
  %v65 = vmul.f32 %v52, %v57
  %v66 = vmul.f32 %v53, %v58
  %v67 = vmul.f32 %v54, %v57
  %v68 = vmul.f32 %v55, %v58
  %v69 = vld [vmem:[%s2] sm:$0x3]
  %v71 = vperm.slane %v69, 0
  %v72 = vperm.slane %v69, 1
  %v75 = vmul.f32 %v61, %v71
  %v76 = vmul.f32 %v62, %v72
  %v77 = vmul.f32 %v63, %v71
  %v78 = vmul.f32 %v64, %v72
  %v79 = vmul.f32 %v65, %v71
  %v80 = vmul.f32 %v66, %v72
  %v81 = vmul.f32 %v67, %v71
  %v82 = vmul.f32 %v68, %v72
  %v83 = vld [vmem:[%s3] sm:$0x3]
  %v85 = vperm.slane %v83, 0
  %v86 = vperm.slane %v83, 1
  %v89 = vadd.f32 %v75, %v85
  %v90 = vadd.f32 %v76, %v86
  %v91 = vadd.f32 %v77, %v85
  %v92 = vadd.f32 %v78, %v86
  %v93 = vadd.f32 %v79, %v85
  %v94 = vadd.f32 %v80, %v86
  %v95 = vadd.f32 %v81, %v85
  %v96 = vadd.f32 %v82, %v86
  %vm97 = vcmp.gt.f32.partialorder %v89, 0.0
  %vm98 = vcmp.gt.f32.partialorder %v90, 0.0
  %vm99 = vcmp.gt.f32.partialorder %v91, 0.0
  %vm100 = vcmp.gt.f32.partialorder %v92, 0.0
  %vm101 = vcmp.gt.f32.partialorder %v93, 0.0
  %vm102 = vcmp.gt.f32.partialorder %v94, 0.0
  %vm103 = vcmp.gt.f32.partialorder %v95, 0.0
  %vm104 = vcmp.gt.f32.partialorder %v96, 0.0
  %v105 = vmul.f32 %v89, 0.2
  %v106 = vmul.f32 %v90, 0.2
  %v107 = vmul.f32 %v91, 0.2
  %v108 = vmul.f32 %v92, 0.2
  %v109 = vmul.f32 %v93, 0.2
  %v110 = vmul.f32 %v94, 0.2
  %v111 = vmul.f32 %v95, 0.2
  %v112 = vmul.f32 %v96, 0.2
  %v113 = vsel %vm97, %v89, %v105
  %v114 = vsel %vm98, %v90, %v106
  %v115 = vsel %vm99, %v91, %v107
  %v116 = vsel %vm100, %v92, %v108
  %v117 = vsel %vm101, %v93, %v109
  %v118 = vsel %vm102, %v94, %v110
  %v119 = vsel %vm103, %v95, %v111
  %v120 = vsel %vm104, %v96, %v112
  %121 = vst [vmem:[%s4] sm:$0xff] %v113
  %122 = vst [vmem:[%s4 + $0x8] sm:$0xff] %v114
  %123 = vst [vmem:[%s4 + $0x10] sm:$0xff] %v115
  %124 = vst [vmem:[%s4 + $0x18] sm:$0xff] %v116
  %125 = vst [vmem:[%s4 + $0x20] sm:$0xff] %v117
  %126 = vst [vmem:[%s4 + $0x28] sm:$0xff] %v118
  %127 = vst [vmem:[%s4 + $0x30] sm:$0xff] %v119
  %128 = vst [vmem:[%s4 + $0x38] sm:$0xff] %v120
  // Predicated region
  $region18: #{discriminator_forward.17} parent=0 // pred_check
    _
  $region19: #{discriminator_forward.17} parent=0 // pred_check_branch
    %130 = sbr.rel (0) target = $region21
  $region20: #{discriminator_forward.17} parent=0 // pred_region
    _
  $region21: #{discriminator_forward.17} parent=0 // pred_fallthru
    _
  // Predicated region
  $region22: #{discriminator_forward.17} parent=0 // pred_check
    _
  $region23: #{discriminator_forward.17} parent=0 // pred_check_branch
    %132 = sbr.rel (0) target = $region25
  $region24: #{discriminator_forward.17} parent=0 // pred_region
    _
  $region25: #{discriminator_forward.17} parent=0 // pred_fallthru
    _

// kernel: discriminator_forward.16
$region0: #{discriminator_forward.16}
  #allocation0 [shape = 'u32[]', space=smem, size = 0x4, offset = 0x4, fixed_abs, tag = 'smem constant byte address 0x4 - core index']
  #allocation1 [shape = 'u32[72,128]{1,0:T(1,128)}', space=vmem, size = 0x9000, scoped, tag = 'internal scratch']
  %s0 = inlined_call_operand.vmem [shape: f32[32,256], index: 0, kind: input, shape index: {}]
  %s1 = inlined_call_operand.vmem [shape: f32[8,256], index: 1, kind: output, shape index: {}]
  %s2 = sld [smem:[#allocation0]]
  $region18: #{discriminator_forward.16} parent=0
    _
  %s4 = ssub.s32 1, %s2
  %s5 = scalar_select 0, %s4, %s2
  // Predicated region
  $region2: #{discriminator_forward.16} parent=0 // pred_check
    _
  $region3: #{discriminator_forward.16} parent=0 // pred_check_branch
    %7 = sbr.rel (0) target = $region5
  $region4: #{discriminator_forward.16} parent=0 // pred_region
    _
  $region5: #{discriminator_forward.16} parent=0 // pred_fallthru
    _
  %p8 = scmp.eq.s32.totalorder 0, 0
  // Predicated region
  $region6: #{discriminator_forward.16} parent=0 // pred_check
    %p9 = pneg %p8
  $region7: #{discriminator_forward.16} parent=0 // pred_check_branch
    %11 = sbr.rel (%p9) target = $region9
  $region8: #{discriminator_forward.16} parent=0 // pred_region
    %12 = vst [vmem:[%s1] sm:$0xff] 0.0
    %13 = vst [vmem:[%s1 + $0x8] sm:$0xff] 0.0
  $region9: #{discriminator_forward.16} parent=0 // pred_fallthru
    _
  %v14 = vld [vmem:[%s0] sm:$0xff]
  %v15 = vld [vmem:[%s0 + $0x8] sm:$0xff]
  %v16 = vld [vmem:[%s0 + $0x10] sm:$0xff]
  %v17 = vld [vmem:[%s0 + $0x18] sm:$0xff]
  %v18 = vld [vmem:[%s0 + $0x20] sm:$0xff]
  %v19 = vld [vmem:[%s0 + $0x28] sm:$0xff]
  %v20 = vld [vmem:[%s0 + $0x30] sm:$0xff]
  %v21 = vld [vmem:[%s0 + $0x38] sm:$0xff]
  %v22 = vadd.f32 %v14, %v16
  %v23 = vadd.f32 %v22, %v18
  %v24 = vadd.f32 %v23, %v20
  %v25 = vrot.slane %v24, 4
  %v26 = vadd.f32 %v24, %v25
  %v27 = vrot.slane %v26, 2
  %v28 = vadd.f32 %v26, %v27
  %v29 = vrot.slane %v28, 1
  %v30 = vadd.f32 %v28, %v29
  %v31 = vadd.f32 %v15, %v17
  %v32 = vadd.f32 %v31, %v19
  %v33 = vadd.f32 %v32, %v21
  %v34 = vrot.slane %v33, 4
  %v35 = vadd.f32 %v33, %v34
  %v36 = vrot.slane %v35, 2
  %v37 = vadd.f32 %v35, %v36
  %v38 = vrot.slane %v37, 1
  %v39 = vadd.f32 %v37, %v38
  %v40 = vmul.f32 %v14, %v14
  %v41 = vmul.f32 %v15, %v15
  %v42 = vmul.f32 %v16, %v16
  %v43 = vmul.f32 %v17, %v17
  %v44 = vmul.f32 %v18, %v18
  %v45 = vmul.f32 %v19, %v19
  %v46 = vmul.f32 %v20, %v20
  %v47 = vmul.f32 %v21, %v21
  %v48 = vadd.f32 %v40, %v42
  %v49 = vadd.f32 %v48, %v44
  %v50 = vadd.f32 %v49, %v46
  %v51 = vrot.slane %v50, 4
  %v52 = vadd.f32 %v50, %v51
  %v53 = vrot.slane %v52, 2
  %v54 = vadd.f32 %v52, %v53
  %v55 = vrot.slane %v54, 1
  %v56 = vadd.f32 %v54, %v55
  %v57 = vadd.f32 %v41, %v43
  %v58 = vadd.f32 %v57, %v45
  %v59 = vadd.f32 %v58, %v47
  %v60 = vrot.slane %v59, 4
  %v61 = vadd.f32 %v59, %v60
  %v62 = vrot.slane %v61, 2
  %v63 = vadd.f32 %v61, %v62
  %v64 = vrot.slane %v63, 1
  %v65 = vadd.f32 %v63, %v64
  %v66 = vld [vmem:[%s1] sm:$0xff]
  %v67 = vld [vmem:[%s1 + $0x8] sm:$0xff]
  %vm68 = vcmask 1040384
  %v69 = vsel %vm68, %v30, %v56
  %v70 = vsel %vm68, %v39, %v65
  %vm71 = vcmask 1041408
  %v72 = vsel %vm71, %v69, 0.0
  %v73 = vsel %vm71, %v70, 0.0
  %v74 = vadd.f32 %v66, %v72
  %v75 = vadd.f32 %v67, %v73
  %76 = vst [vmem:[%s1] sm:$0xff] %v74
  %77 = vst [vmem:[%s1 + $0x8] sm:$0xff] %v75
  // Predicated region
  $region10: #{discriminator_forward.16} parent=0 // pred_check
    _
  $region11: #{discriminator_forward.16} parent=0 // pred_check_branch
    %79 = sbr.rel (0) target = $region13
  $region12: #{discriminator_forward.16} parent=0 // pred_region
    _
  $region13: #{discriminator_forward.16} parent=0 // pred_fallthru
    _
  // Predicated region
  $region14: #{discriminator_forward.16} parent=0 // pred_check
    _
  $region15: #{discriminator_forward.16} parent=0 // pred_check_branch
    %81 = sbr.rel (0) target = $region17
  $region16: #{discriminator_forward.16} parent=0 // pred_region
    _
  $region17: #{discriminator_forward.16} parent=0 // pred_fallthru
    _

// kernel: discriminator_forward.15
$region0: #{discriminator_forward.15}
  #allocation0 [shape = 'u32[]', space=smem, size = 0x4, offset = 0x4, fixed_abs, tag = 'smem constant byte address 0x4 - core index']
  #allocation1 [shape = 'u32[72,128]{1,0:T(1,128)}', space=vmem, size = 0x9000, scoped, tag = 'internal scratch']
  #allocation2 [shape = 'f32[32,256]{1,0:T(8,128)}', space=vmem, size = 0x8000, scoped, tag = 'scratch operand']
  %s0 = inlined_call_operand.vmem [shape: bf16[32,2048], index: 0, kind: input, shape index: {}]
  %s1 = inlined_call_operand.vmem [shape: bf16[2048,256], index: 1, kind: input, shape index: {}]
  %s2 = inlined_call_operand.vmem [shape: f32[32,256], index: 2, kind: output, shape index: {}]
  %s3 = sld [smem:[#allocation0]]
  $region72: #{discriminator_forward.15} parent=0
    _
  %s5 = ssub.s32 1, %s3
  %s6 = scalar_select 0, %s5, %s3
  $region1: #{discriminator_forward.15} parent=0
    #allocation3 [shape = 'u8[65536]{0}', space=vmem, size = 0x10000, scoped, tag = 'input window, operand 0']
    loop: start=0, step=1, limit=6
    $region2: #{discriminator_forward.15} parent=1 // loop_pre_header
      _
    $region3: #{discriminator_forward.15} parent=1 // loop_header
      %s8 = sphi 0, %s12
      %p9 = scmp.ge.s32.totalorder %s8, 6
      %s15 = sphi 0, %s34
      %s16 = sphi 0, %s30
      %s17 = sphi 0, %s26
      %s18 = sphi 0, %s15
      %s19 = sphi 0, %s16
      %s20 = sphi 0, %s17
      %s21 = sphi 0, %s18
      %s22 = sphi 0, %s19
      %s23 = sphi 0, %s20
      %s39 = sphi 0, %s41
      %s42 = sphi 0, %s39
      %s43 = sphi 0, %s42
      %s59 = sphi 0, %s43
      %s67 = sphi 0, %s69
      %s70 = sphi 0, %s67
      %s71 = sphi 0, %s70
      %s87 = sphi 0, %s71
      %s95 = sphi 0, %s97
      %s98 = sphi 0, %s95
      %s99 = sphi 0, %s98
      %s115 = sphi 0, %s99
    $region4: #{discriminator_forward.15} parent=1 // loop_header_branch
      %11 = sbr.rel (%p9) target = $region8
    $region5: #{discriminator_forward.15} parent=1 // loop_body
      %s13 = ssub.s32 %s8, 1
      %s14 = ssub.s32 %s8, 2
      %s24 = sadd.s32 1, %s17
      %p25 = scmp.ge.s32.totalorder %s24, 4
      %s26 = scalar_select %p25, 0, %s24
      %s27 = sadd.s32 1, %s16
      %s28 = scalar_select %p25, %s27, %s16
      %p29 = scmp.ge.s32.totalorder %s28, 1
      %s30 = scalar_select %p29, 0, %s28
      %s31 = sadd.s32 1, %s15
      %s32 = scalar_select %p29, %s31, %s15
      %p33 = scmp.ge.s32.totalorder %s32, 1
      %s34 = scalar_select %p33, 0, %s32
      %s35 = ssub.s32 %s15, %s34
      %s36 = ssub.s32 %s17, %s26
      %s37 = sor.u32 %s35, %s36
      %p38 = scmp.eq.s32.totalorder %s37, 0
      %s40 = sadd.s32 %s39, 1
      %s41 = scalar_select %p38, %s39, %s40
      %p44 = pneg %p38
      %p45 = scmp.eq.s32.totalorder %s8, 3
      %p46 = por %p44, %p45
      %p47 = scmp.ne.s32.totalorder %s39, %s42
      %p48 = scmp.eq.s32.totalorder %s8, 0
      %p49 = por %p47, %p48
      %p50 = scmp.ne.s32.totalorder %s39, %s42
      %p51 = scmp.eq.s32.totalorder %s13, 3
      %p52 = por %p50, %p51
      %p53 = scmp.ne.s32.totalorder %s42, %s43
      %p54 = scmp.eq.s32.totalorder %s13, 0
      %p55 = por %p53, %p54
      %p56 = scmp.ne.s32.totalorder %s42, %s43
      %p57 = scmp.eq.s32.totalorder %s14, 3
      %p58 = por %p56, %p57
      %p60 = scmp.ne.s32.totalorder %s43, %s59
      %p61 = scmp.eq.s32.totalorder %s14, 0
      %p62 = por %p60, %p61
      %s63 = ssub.s32 %s17, %s26
      %s64 = ssub.s32 %s16, %s30
      %s65 = sor.u32 %s63, %s64
      %p66 = scmp.eq.s32.totalorder %s65, 0
      %s68 = sadd.s32 %s67, 1
      %s69 = scalar_select %p66, %s67, %s68
      %p72 = pneg %p66
      %p73 = scmp.eq.s32.totalorder %s8, 3
      %p74 = por %p72, %p73
      %p75 = scmp.ne.s32.totalorder %s67, %s70
      %p76 = scmp.eq.s32.totalorder %s8, 0
      %p77 = por %p75, %p76
      %p78 = scmp.ne.s32.totalorder %s67, %s70
      %p79 = scmp.eq.s32.totalorder %s13, 3
      %p80 = por %p78, %p79
      %p81 = scmp.ne.s32.totalorder %s70, %s71
      %p82 = scmp.eq.s32.totalorder %s13, 0
      %p83 = por %p81, %p82
      %p84 = scmp.ne.s32.totalorder %s70, %s71
      %p85 = scmp.eq.s32.totalorder %s14, 3
      %p86 = por %p84, %p85
      %p88 = scmp.ne.s32.totalorder %s71, %s87
      %p89 = scmp.eq.s32.totalorder %s14, 0
      %p90 = por %p88, %p89
      %s91 = ssub.s32 %s15, %s34
      %s92 = ssub.s32 %s16, %s30
      %s93 = sor.u32 %s91, %s92
      %p94 = scmp.eq.s32.totalorder %s93, 0
      %s96 = sadd.s32 %s95, 1
      %s97 = scalar_select %p94, %s95, %s96
      %p100 = pneg %p94
      %p101 = scmp.eq.s32.totalorder %s8, 3
      %p102 = por %p100, %p101
      %p103 = scmp.ne.s32.totalorder %s95, %s98
      %p104 = scmp.eq.s32.totalorder %s8, 0
      %p105 = por %p103, %p104
      %p106 = scmp.ne.s32.totalorder %s95, %s98
      %p107 = scmp.eq.s32.totalorder %s13, 3
      %p108 = por %p106, %p107
      %p109 = scmp.ne.s32.totalorder %s98, %s99
      %p110 = scmp.eq.s32.totalorder %s13, 0
      %p111 = por %p109, %p110
      %p112 = scmp.ne.s32.totalorder %s98, %s99
      %p113 = scmp.eq.s32.totalorder %s14, 3
      %p114 = por %p112, %p113
      %p116 = scmp.ne.s32.totalorder %s99, %s115
      %p117 = scmp.eq.s32.totalorder %s14, 0
      %p118 = por %p116, %p117
      %p119 = scmp.le.s32.totalorder 1, %s8
      %p120 = scmp.lt.s32.totalorder %s8, 5
      %p121 = pnand %p119, %p120
      %p122 = pneg %p121
      // Predicated region
      $region9: #{discriminator_forward.15} parent=5 // pred_check
        _
      $region10: #{discriminator_forward.15} parent=5 // pred_check_branch
        %124 = sbr.rel (%p121) target = $region12
      $region11: #{discriminator_forward.15} parent=5 // pred_region
        %s125 = ssub.s32 %s8, 1
      $region12: #{discriminator_forward.15} parent=5 // pred_fallthru
        _
      %p126 = scmp.lt.s32.totalorder %s8, 4
      // Predicated region
      $region13: #{discriminator_forward.15} parent=5 // pred_check
        %p127 = pneg %p126
      $region14: #{discriminator_forward.15} parent=5 // pred_check_branch
        %129 = sbr.rel (%p127) target = $region16
      $region15: #{discriminator_forward.15} parent=5 // pred_region
        // Predicated region
        $region17: #{discriminator_forward.15} parent=15 // pred_check
          %p130 = pneg %p49
        $region18: #{discriminator_forward.15} parent=15 // pred_check_branch
          %132 = sbr.rel (%p130) target = $region20
        $region19: #{discriminator_forward.15} parent=15 // pred_region
          %s133 = sand.u32 %s39, 1
          %s134 = sand.u32 %s39, 1
          %s135 = smul.addr %s134, 64
          %s136 = scalar_lea.vmem [#allocation3], %s135
          %s137 = smul.u32 4, %s15
          %s138 = smul.u32 4, %s17
          %s139 = smul.addr %s137, 16
          %s140 = sadd.s32 %s138, %s139
          %s141 = smul.addr %s140, 4
          %s142 = scalar_lea.vmem %s0, %s141
          // Predicated region
          $region21: #{discriminator_forward.15} parent=19 // pred_check
            _
          $region22: #{discriminator_forward.15} parent=19 // pred_check_branch
            %144 = sbr.rel (0) target = $region24
          $region23: #{discriminator_forward.15} parent=19 // pred_region
            // Predicated region
            $region25: #{discriminator_forward.15} parent=23 // pred_check
              _
            $region26: #{discriminator_forward.15} parent=23 // pred_check_branch
              %146 = sbr.rel (0) target = $region28
            $region27: #{discriminator_forward.15} parent=23 // pred_region
              loop: start=0, step=1, limit=1
              $region29: #{discriminator_forward.15} parent=27 // loop_pre_header
                _
              $region30: #{discriminator_forward.15} parent=27 // loop_header
                %s148 = sphi 0, %s152
                %p149 = scmp.ge.s32.totalorder %s148, 1
                %s153 = sphi %s142, %s142
                %s154 = sphi %s136, %s136
              $region31: #{discriminator_forward.15} parent=27 // loop_header_branch
                %151 = sbr.rel (%p149) target = $region35
              $region32: #{discriminator_forward.15} parent=27 // loop_body
                %v155 = vld [vmem:[%s153] sm:$0xff]
                %156 = vst [vmem:[%s154] sm:$0xff] %v155
                %v157 = vld [vmem:[%s153 + $0x8] sm:$0xff]
                %158 = vst [vmem:[%s154 + $0x8] sm:$0xff] %v157
                %v159 = vld [vmem:[%s153 + $0x40] sm:$0xff]
                %160 = vst [vmem:[%s154 + $0x10] sm:$0xff] %v159
                %v161 = vld [vmem:[%s153 + $0x48] sm:$0xff]
                %162 = vst [vmem:[%s154 + $0x18] sm:$0xff] %v161
                %v163 = vld [vmem:[%s153 + $0x80] sm:$0xff]
                %164 = vst [vmem:[%s154 + $0x20] sm:$0xff] %v163
                %v165 = vld [vmem:[%s153 + $0x88] sm:$0xff]
                %166 = vst [vmem:[%s154 + $0x28] sm:$0xff] %v165
                %v167 = vld [vmem:[%s153 + $0xc0] sm:$0xff]
                %168 = vst [vmem:[%s154 + $0x30] sm:$0xff] %v167
                %v169 = vld [vmem:[%s153 + $0xc8] sm:$0xff]
                %170 = vst [vmem:[%s154 + $0x38] sm:$0xff] %v169
              $region33: #{discriminator_forward.15} parent=27 // loop_footer
                %s152 = sadd.s32 1, %s148
              $region34: #{discriminator_forward.15} parent=27 // loop_footer_branch
                %147 = sbr.rel target = $region30
              $region35: #{discriminator_forward.15} parent=27 // loop_exit
                _
            $region28: #{discriminator_forward.15} parent=23 // pred_fallthru
              _
            // Predicated region
            $region36: #{discriminator_forward.15} parent=23 // pred_check
              _
            $region37: #{discriminator_forward.15} parent=23 // pred_check_branch
              %172 = sbr.rel target = $region39
            $region38: #{discriminator_forward.15} parent=23 // pred_region
              _
            $region39: #{discriminator_forward.15} parent=23 // pred_fallthru
              _
          $region24: #{discriminator_forward.15} parent=19 // pred_fallthru
            _
          %173 = vnop
        $region20: #{discriminator_forward.15} parent=15 // pred_fallthru
          _
        // Predicated region
        $region40: #{discriminator_forward.15} parent=15 // pred_check
          %p174 = pneg %p77
        $region41: #{discriminator_forward.15} parent=15 // pred_check_branch
          %176 = sbr.rel (%p174) target = $region43
        $region42: #{discriminator_forward.15} parent=15 // pred_region
          %s177 = smul.u32 64, %s17
          %s178 = smul.u32 2, %s16
          %p179 = scmp.lt.s32.totalorder %s177, 255
          %s180 = scalar_select %p179, %s177, 255
          %p181 = scmp.lt.s32.totalorder %s178, 1
          %s182 = scalar_select %p181, %s178, 1
          %s183 = smul.addr %s180, 2
          %s184 = sadd.s32 %s182, %s183
          %s185 = smul.addr %s184, 4
          %s186 = scalar_lea.vmem %s1, %s185
          %s187 = smul.u32 64, %s17
          %s188 = smul.u32 2, %s16
        $region43: #{discriminator_forward.15} parent=15 // pred_fallthru
          _
      $region16: #{discriminator_forward.15} parent=5 // pred_fallthru
        _
      %p189 = scmp.le.s32.totalorder 1, %s8
      %p190 = scmp.lt.s32.totalorder %s8, 5
      %p191 = pnand %p189, %p190
      %p192 = pneg %p191
      // Predicated region
      $region44: #{discriminator_forward.15} parent=5 // pred_check
        _
      $region45: #{discriminator_forward.15} parent=5 // pred_check_branch
        %194 = sbr.rel (%p191) target = $region47
      $region46: #{discriminator_forward.15} parent=5 // pred_region
        %s195 = ssub.s32 %s8, 1
        %s196 = sand.u32 %s42, 1
        %s197 = sand.u32 %s42, 1
        %s198 = smul.addr %s197, 64
        %s199 = scalar_lea.vmem [#allocation3], %s198
        // Predicated region
        $region48: #{discriminator_forward.15} parent=46 // pred_check
          %p200 = pneg %p55
        $region49: #{discriminator_forward.15} parent=46 // pred_check_branch
          %202 = sbr.rel (%p200) target = $region51
        $region50: #{discriminator_forward.15} parent=46 // pred_region
          _
        $region51: #{discriminator_forward.15} parent=46 // pred_fallthru
          _
        %s203 = sand.u32 %s42, 1
        %s204 = sand.u32 %s42, 1
        %s205 = smul.addr %s204, 64
        %s206 = scalar_lea.vmem [#allocation3], %s205
        %p207 = pneg %p55
        %p208 = pneg %p52
        %s209 = smul.u32 64, %s20
        %s210 = smul.u32 2, %s19
        %p211 = scmp.lt.s32.totalorder %s209, 255
        %s212 = scalar_select %p211, %s209, 255
        %p213 = scmp.lt.s32.totalorder %s210, 1
        %s214 = scalar_select %p213, %s210, 1
        %s215 = smul.addr %s212, 2
        %s216 = sadd.s32 %s214, %s215
        %s217 = smul.addr %s216, 4
        %s218 = scalar_lea.vmem %s1, %s217
        %p219 = pneg %p83
        %p220 = pneg %p80
        %p221 = pneg %p111
        %p222 = pneg %p108
        %s223 = smul.u32 4, %s18
        %s224 = smul.u32 2, %s19
        %p225 = scmp.lt.s32.totalorder %s223, 3
        %s226 = scalar_select %p225, %s223, 3
        %p227 = scmp.lt.s32.totalorder %s224, 1
        %s228 = scalar_select %p227, %s224, 1
        %s229 = smul.addr %s226, 2
        %s230 = sadd.s32 %s228, %s229
        %s231 = smul.addr %s230, 8
        %s232 = scalar_lea.vmem %s2, %s231
        %s233 = smul.u32 4, %s18
        %s234 = smul.u32 4, %s20
        %s235 = smul.u32 64, %s20
        %s236 = smul.u32 2, %s19
        %p237 = scmp.lt.s32.totalorder %s235, 255
        %s238 = scalar_select %p237, %s235, 255
        %p239 = scmp.lt.s32.totalorder %s236, 1
        %s240 = scalar_select %p239, %s236, 1
        %s241 = smul.addr %s238, 2
        %s242 = sadd.s32 %s240, %s241
        %s243 = smul.addr %s242, 4
        %s244 = scalar_lea.vmem %s1, %s243
        %s245 = smul.u32 64, %s20
        %s246 = smul.u32 2, %s19
        %s247 = smul.u32 4, %s18
        %s248 = smul.u32 2, %s19
        %p249 = scmp.lt.s32.totalorder %s247, 3
        %s250 = scalar_select %p249, %s247, 3
        %p251 = scmp.lt.s32.totalorder %s248, 1
        %s252 = scalar_select %p251, %s248, 1
        %s253 = smul.addr %s250, 2
        %s254 = sadd.s32 %s252, %s253
        %s255 = smul.addr %s254, 8
        %s256 = scalar_lea.vmem %s2, %s255
        %s257 = smul.u32 4, %s18
        %s258 = smul.u32 2, %s19
        %p259 = scmp.eq.s32.totalorder %s20, 0
        // Predicated region
        $region52: #{discriminator_forward.15} parent=46 // pred_check
          %p260 = pneg %p259
        $region53: #{discriminator_forward.15} parent=46 // pred_check_branch
          %262 = sbr.rel (%p260) target = $region55
        $region54: #{discriminator_forward.15} parent=46 // pred_region
          %263 = vst [vmem:[#allocation2] sm:$0xff] 0.0
          %264 = vst [vmem:[#allocation2 + $0x8] sm:$0xff] 0.0
          %265 = vst [vmem:[#allocation2 + $0x10] sm:$0xff] 0.0
          %266 = vst [vmem:[#allocation2 + $0x18] sm:$0xff] 0.0
          %267 = vst [vmem:[#allocation2 + $0x20] sm:$0xff] 0.0
          %268 = vst [vmem:[#allocation2 + $0x28] sm:$0xff] 0.0
          %269 = vst [vmem:[#allocation2 + $0x30] sm:$0xff] 0.0
          %270 = vst [vmem:[#allocation2 + $0x38] sm:$0xff] 0.0
        $region55: #{discriminator_forward.15} parent=46 // pred_fallthru
          _
        %v271 = vld [vmem:[%s199] sm:$0xff]
        %v272 = vld [vmem:[%s199 + $0x8] sm:$0xff]
        %v273 = vld [vmem:[%s199 + $0x10] sm:$0xff]
        %v274 = vld [vmem:[%s199 + $0x18] sm:$0xff]
        %v275 = vld [vmem:[%s199 + $0x20] sm:$0xff]
        %v276 = vld [vmem:[%s199 + $0x28] sm:$0xff]
        %v277 = vld [vmem:[%s199 + $0x30] sm:$0xff]
        %v278 = vld [vmem:[%s199 + $0x38] sm:$0xff]
        %v279 = vld [vmem:[#allocation2] sm:$0xff]
        %v280 = vld [vmem:[#allocation2 + $0x8] sm:$0xff]
        %v281 = vld [vmem:[#allocation2 + $0x10] sm:$0xff]
        %v282 = vld [vmem:[#allocation2 + $0x18] sm:$0xff]
        %v283 = vld [vmem:[#allocation2 + $0x20] sm:$0xff]
        %v284 = vld [vmem:[#allocation2 + $0x28] sm:$0xff]
        %v285 = vld [vmem:[#allocation2 + $0x30] sm:$0xff]
        %v286 = vld [vmem:[#allocation2 + $0x38] sm:$0xff]
        %v287 = vld [vmem:[%s244] sm:$0xff]
        %v288 = vld [vmem:[%s244 + $0x8] sm:$0xff]
        %v289 = vld [vmem:[%s244 + $0x10] sm:$0xff]
        %v290 = vld [vmem:[%s244 + $0x18] sm:$0xff]
        %v291 = vld [vmem:[%s244 + $0x20] sm:$0xff]
        %v292 = vld [vmem:[%s244 + $0x28] sm:$0xff]
        %v293 = vld [vmem:[%s244 + $0x30] sm:$0xff]
        %v294 = vld [vmem:[%s244 + $0x38] sm:$0xff]
        %v295 = vld [vmem:[%s244 + $0x40] sm:$0xff]
        %v296 = vld [vmem:[%s244 + $0x48] sm:$0xff]
        %v297 = vld [vmem:[%s244 + $0x50] sm:$0xff]
        %v298 = vld [vmem:[%s244 + $0x58] sm:$0xff]
        %v299 = vld [vmem:[%s244 + $0x60] sm:$0xff]
        %v300 = vld [vmem:[%s244 + $0x68] sm:$0xff]
        %v301 = vld [vmem:[%s244 + $0x70] sm:$0xff]
        %v302 = vld [vmem:[%s244 + $0x78] sm:$0xff]
        %v303 = vld [vmem:[%s244 + $0x80] sm:$0xff]
        %v304 = vld [vmem:[%s244 + $0x88] sm:$0xff]
        %v305 = vld [vmem:[%s244 + $0x90] sm:$0xff]
        %v306 = vld [vmem:[%s244 + $0x98] sm:$0xff]
        %v307 = vld [vmem:[%s244 + $0xa0] sm:$0xff]
        %v308 = vld [vmem:[%s244 + $0xa8] sm:$0xff]
        %v309 = vld [vmem:[%s244 + $0xb0] sm:$0xff]
        %v310 = vld [vmem:[%s244 + $0xb8] sm:$0xff]
        %v311 = vld [vmem:[%s244 + $0xc0] sm:$0xff]
        %v312 = vld [vmem:[%s244 + $0xc8] sm:$0xff]
        %v313 = vld [vmem:[%s244 + $0xd0] sm:$0xff]
        %v314 = vld [vmem:[%s244 + $0xd8] sm:$0xff]
        %v315 = vld [vmem:[%s244 + $0xe0] sm:$0xff]
        %v316 = vld [vmem:[%s244 + $0xe8] sm:$0xff]
        %v317 = vld [vmem:[%s244 + $0xf0] sm:$0xff]
        %v318 = vld [vmem:[%s244 + $0xf8] sm:$0xff]
        %v319 = vld [vmem:[%s244 + $0x100] sm:$0xff]
        %v320 = vld [vmem:[%s244 + $0x108] sm:$0xff]
        %v321 = vld [vmem:[%s244 + $0x110] sm:$0xff]
        %v322 = vld [vmem:[%s244 + $0x118] sm:$0xff]
        %v323 = vld [vmem:[%s244 + $0x120] sm:$0xff]
        %v324 = vld [vmem:[%s244 + $0x128] sm:$0xff]
        %v325 = vld [vmem:[%s244 + $0x130] sm:$0xff]
        %v326 = vld [vmem:[%s244 + $0x138] sm:$0xff]
        %v327 = vld [vmem:[%s244 + $0x140] sm:$0xff]
        %v328 = vld [vmem:[%s244 + $0x148] sm:$0xff]
        %v329 = vld [vmem:[%s244 + $0x150] sm:$0xff]
        %v330 = vld [vmem:[%s244 + $0x158] sm:$0xff]
        %v331 = vld [vmem:[%s244 + $0x160] sm:$0xff]
        %v332 = vld [vmem:[%s244 + $0x168] sm:$0xff]
        %v333 = vld [vmem:[%s244 + $0x170] sm:$0xff]
        %v334 = vld [vmem:[%s244 + $0x178] sm:$0xff]
        %v335 = vld [vmem:[%s244 + $0x180] sm:$0xff]
        %v336 = vld [vmem:[%s244 + $0x188] sm:$0xff]
        %v337 = vld [vmem:[%s244 + $0x190] sm:$0xff]
        %v338 = vld [vmem:[%s244 + $0x198] sm:$0xff]
        %v339 = vld [vmem:[%s244 + $0x1a0] sm:$0xff]
        %v340 = vld [vmem:[%s244 + $0x1a8] sm:$0xff]
        %v341 = vld [vmem:[%s244 + $0x1b0] sm:$0xff]
        %v342 = vld [vmem:[%s244 + $0x1b8] sm:$0xff]
        %v343 = vld [vmem:[%s244 + $0x1c0] sm:$0xff]
        %v344 = vld [vmem:[%s244 + $0x1c8] sm:$0xff]
        %v345 = vld [vmem:[%s244 + $0x1d0] sm:$0xff]
        %v346 = vld [vmem:[%s244 + $0x1d8] sm:$0xff]
        %v347 = vld [vmem:[%s244 + $0x1e0] sm:$0xff]
        %v348 = vld [vmem:[%s244 + $0x1e8] sm:$0xff]
        %v349 = vld [vmem:[%s244 + $0x1f0] sm:$0xff]
        %v350 = vld [vmem:[%s244 + $0x1f8] sm:$0xff]
        %v359 = vunpack.c.l.b16 %v271
        %v360 = vunpack.c.h.b16 %v271
        %v361 = vunpack.c.l.b16 %v272
        %v362 = vunpack.c.h.b16 %v272
        %v363 = vunpack.c.l.b16 %v273
        %v364 = vunpack.c.h.b16 %v273
        %v365 = vunpack.c.l.b16 %v274
        %v366 = vunpack.c.h.b16 %v274
        %v367 = vunpack.c.l.b16 %v275
        %v368 = vunpack.c.h.b16 %v275
        %v369 = vunpack.c.l.b16 %v276
        %v370 = vunpack.c.h.b16 %v276
        %v371 = vunpack.c.l.b16 %v277
        %v372 = vunpack.c.h.b16 %v277
        %v373 = vunpack.c.l.b16 %v278
        %v374 = vunpack.c.h.b16 %v278
        %v375 = vpack.c.b16 %v363, %v359
        %v376 = vpack.c.b16 %v364, %v360
        %v377 = vpack.c.b16 %v365, %v361
        %v378 = vpack.c.b16 %v366, %v362
        %v379 = vpack.c.b16 %v371, %v367
        %v380 = vpack.c.b16 %v372, %v368
        %v381 = vpack.c.b16 %v373, %v369
        %v382 = vpack.c.b16 %v374, %v370
        %v455 = vunpack.c.l.b16 %v287
        %v456 = vunpack.c.h.b16 %v287
        %v457 = vunpack.c.l.b16 %v288
        %v458 = vunpack.c.h.b16 %v288
        %v459 = vunpack.c.l.b16 %v289
        %v460 = vunpack.c.h.b16 %v289
        %v461 = vunpack.c.l.b16 %v290
        %v462 = vunpack.c.h.b16 %v290
        %v463 = vunpack.c.l.b16 %v291
        %v464 = vunpack.c.h.b16 %v291
        %v465 = vunpack.c.l.b16 %v292
        %v466 = vunpack.c.h.b16 %v292
        %v467 = vunpack.c.l.b16 %v293
        %v468 = vunpack.c.h.b16 %v293
        %v469 = vunpack.c.l.b16 %v294
        %v470 = vunpack.c.h.b16 %v294
        %v471 = vunpack.c.l.b16 %v295
        %v472 = vunpack.c.h.b16 %v295
        %v473 = vunpack.c.l.b16 %v296
        %v474 = vunpack.c.h.b16 %v296
        %v475 = vunpack.c.l.b16 %v297
        %v476 = vunpack.c.h.b16 %v297
        %v477 = vunpack.c.l.b16 %v298
        %v478 = vunpack.c.h.b16 %v298
        %v479 = vunpack.c.l.b16 %v299
        %v480 = vunpack.c.h.b16 %v299
        %v481 = vunpack.c.l.b16 %v300
        %v482 = vunpack.c.h.b16 %v300
        %v483 = vunpack.c.l.b16 %v301
        %v484 = vunpack.c.h.b16 %v301
        %v485 = vunpack.c.l.b16 %v302
        %v486 = vunpack.c.h.b16 %v302
        %v487 = vunpack.c.l.b16 %v303
        %v488 = vunpack.c.h.b16 %v303
        %v489 = vunpack.c.l.b16 %v304
        %v490 = vunpack.c.h.b16 %v304
        %v491 = vunpack.c.l.b16 %v305
        %v492 = vunpack.c.h.b16 %v305
        %v493 = vunpack.c.l.b16 %v306
        %v494 = vunpack.c.h.b16 %v306
        %v495 = vunpack.c.l.b16 %v307
        %v496 = vunpack.c.h.b16 %v307
        %v497 = vunpack.c.l.b16 %v308
        %v498 = vunpack.c.h.b16 %v308
        %v499 = vunpack.c.l.b16 %v309
        %v500 = vunpack.c.h.b16 %v309
        %v501 = vunpack.c.l.b16 %v310
        %v502 = vunpack.c.h.b16 %v310
        %v503 = vunpack.c.l.b16 %v311
        %v504 = vunpack.c.h.b16 %v311
        %v505 = vunpack.c.l.b16 %v312
        %v506 = vunpack.c.h.b16 %v312
        %v507 = vunpack.c.l.b16 %v313
        %v508 = vunpack.c.h.b16 %v313
        %v509 = vunpack.c.l.b16 %v314
        %v510 = vunpack.c.h.b16 %v314
        %v511 = vunpack.c.l.b16 %v315
        %v512 = vunpack.c.h.b16 %v315
        %v513 = vunpack.c.l.b16 %v316
        %v514 = vunpack.c.h.b16 %v316
        %v515 = vunpack.c.l.b16 %v317
        %v516 = vunpack.c.h.b16 %v317
        %v517 = vunpack.c.l.b16 %v318
        %v518 = vunpack.c.h.b16 %v318
        %v519 = vunpack.c.l.b16 %v319
        %v520 = vunpack.c.h.b16 %v319
        %v521 = vunpack.c.l.b16 %v320
        %v522 = vunpack.c.h.b16 %v320
        %v523 = vunpack.c.l.b16 %v321
        %v524 = vunpack.c.h.b16 %v321
        %v525 = vunpack.c.l.b16 %v322
        %v526 = vunpack.c.h.b16 %v322
        %v527 = vunpack.c.l.b16 %v323
        %v528 = vunpack.c.h.b16 %v323
        %v529 = vunpack.c.l.b16 %v324
        %v530 = vunpack.c.h.b16 %v324
        %v531 = vunpack.c.l.b16 %v325
        %v532 = vunpack.c.h.b16 %v325
        %v533 = vunpack.c.l.b16 %v326
        %v534 = vunpack.c.h.b16 %v326
        %v535 = vunpack.c.l.b16 %v327
        %v536 = vunpack.c.h.b16 %v327
        %v537 = vunpack.c.l.b16 %v328
        %v538 = vunpack.c.h.b16 %v328
        %v539 = vunpack.c.l.b16 %v329
        %v540 = vunpack.c.h.b16 %v329
        %v541 = vunpack.c.l.b16 %v330
        %v542 = vunpack.c.h.b16 %v330
        %v543 = vunpack.c.l.b16 %v331
        %v544 = vunpack.c.h.b16 %v331
        %v545 = vunpack.c.l.b16 %v332
        %v546 = vunpack.c.h.b16 %v332
        %v547 = vunpack.c.l.b16 %v333
        %v548 = vunpack.c.h.b16 %v333
        %v549 = vunpack.c.l.b16 %v334
        %v550 = vunpack.c.h.b16 %v334
        %v551 = vunpack.c.l.b16 %v335
        %v552 = vunpack.c.h.b16 %v335
        %v553 = vunpack.c.l.b16 %v336
        %v554 = vunpack.c.h.b16 %v336
        %v555 = vunpack.c.l.b16 %v337
        %v556 = vunpack.c.h.b16 %v337
        %v557 = vunpack.c.l.b16 %v338
        %v558 = vunpack.c.h.b16 %v338
        %v559 = vunpack.c.l.b16 %v339
        %v560 = vunpack.c.h.b16 %v339
        %v561 = vunpack.c.l.b16 %v340
        %v562 = vunpack.c.h.b16 %v340
        %v563 = vunpack.c.l.b16 %v341
        %v564 = vunpack.c.h.b16 %v341
        %v565 = vunpack.c.l.b16 %v342
        %v566 = vunpack.c.h.b16 %v342
        %v567 = vunpack.c.l.b16 %v343
        %v568 = vunpack.c.h.b16 %v343
        %v569 = vunpack.c.l.b16 %v344
        %v570 = vunpack.c.h.b16 %v344
        %v571 = vunpack.c.l.b16 %v345
        %v572 = vunpack.c.h.b16 %v345
        %v573 = vunpack.c.l.b16 %v346
        %v574 = vunpack.c.h.b16 %v346
        %v575 = vunpack.c.l.b16 %v347
        %v576 = vunpack.c.h.b16 %v347
        %v577 = vunpack.c.l.b16 %v348
        %v578 = vunpack.c.h.b16 %v348
        %v579 = vunpack.c.l.b16 %v349
        %v580 = vunpack.c.h.b16 %v349
        %v581 = vunpack.c.l.b16 %v350
        %v582 = vunpack.c.h.b16 %v350
        %v583 = vpack.c.b16 %v457, %v455
        %v584 = vpack.c.b16 %v458, %v456
        %v585 = vpack.c.b16 %v461, %v459
        %v586 = vpack.c.b16 %v462, %v460
        %v587 = vpack.c.b16 %v465, %v463
        %v588 = vpack.c.b16 %v466, %v464
        %v589 = vpack.c.b16 %v469, %v467
        %v590 = vpack.c.b16 %v470, %v468
        %v591 = vpack.c.b16 %v473, %v471
        %v592 = vpack.c.b16 %v474, %v472
        %v593 = vpack.c.b16 %v477, %v475
        %v594 = vpack.c.b16 %v478, %v476
        %v595 = vpack.c.b16 %v481, %v479
        %v596 = vpack.c.b16 %v482, %v480
        %v597 = vpack.c.b16 %v485, %v483
        %v598 = vpack.c.b16 %v486, %v484
        %v599 = vpack.c.b16 %v489, %v487
        %v600 = vpack.c.b16 %v490, %v488
        %v601 = vpack.c.b16 %v493, %v491
        %v602 = vpack.c.b16 %v494, %v492
        %v603 = vpack.c.b16 %v497, %v495
        %v604 = vpack.c.b16 %v498, %v496
        %v605 = vpack.c.b16 %v501, %v499
        %v606 = vpack.c.b16 %v502, %v500
        %v607 = vpack.c.b16 %v505, %v503
        %v608 = vpack.c.b16 %v506, %v504
        %v609 = vpack.c.b16 %v509, %v507
        %v610 = vpack.c.b16 %v510, %v508
        %v611 = vpack.c.b16 %v513, %v511
        %v612 = vpack.c.b16 %v514, %v512
        %v613 = vpack.c.b16 %v517, %v515
        %v614 = vpack.c.b16 %v518, %v516
        %v615 = vpack.c.b16 %v521, %v519
        %v616 = vpack.c.b16 %v522, %v520
        %v617 = vpack.c.b16 %v525, %v523
        %v618 = vpack.c.b16 %v526, %v524
        %v619 = vpack.c.b16 %v529, %v527
        %v620 = vpack.c.b16 %v530, %v528
        %v621 = vpack.c.b16 %v533, %v531
        %v622 = vpack.c.b16 %v534, %v532
        %v623 = vpack.c.b16 %v537, %v535
        %v624 = vpack.c.b16 %v538, %v536
        %v625 = vpack.c.b16 %v541, %v539
        %v626 = vpack.c.b16 %v542, %v540
        %v627 = vpack.c.b16 %v545, %v543
        %v628 = vpack.c.b16 %v546, %v544
        %v629 = vpack.c.b16 %v549, %v547
        %v630 = vpack.c.b16 %v550, %v548
        %v631 = vpack.c.b16 %v553, %v551
        %v632 = vpack.c.b16 %v554, %v552
        %v633 = vpack.c.b16 %v557, %v555
        %v634 = vpack.c.b16 %v558, %v556
        %v635 = vpack.c.b16 %v561, %v559
        %v636 = vpack.c.b16 %v562, %v560
        %v637 = vpack.c.b16 %v565, %v563
        %v638 = vpack.c.b16 %v566, %v564
        %v639 = vpack.c.b16 %v569, %v567
        %v640 = vpack.c.b16 %v570, %v568
        %v641 = vpack.c.b16 %v573, %v571
        %v642 = vpack.c.b16 %v574, %v572
        %v643 = vpack.c.b16 %v577, %v575
        %v644 = vpack.c.b16 %v578, %v576
        %v645 = vpack.c.b16 %v581, %v579
        %v646 = vpack.c.b16 %v582, %v580
        %711 = vmatpush.bf16.msra.mxu0 %v597
        %712 = vmatpush.bf16.msra.mxu0 %v595
        %713 = vmatpush.bf16.msra.mxu0 %v593
        %714 = vmatpush.bf16.msra.mxu0 %v591
        %715 = vmatpush.bf16.msra.mxu0 %v589
        %716 = vmatpush.bf16.msra.mxu0 %v587
        %717 = vmatpush.bf16.msra.mxu0 %v585
        %718 = vmatpush.bf16.msra.mxu0 %v583
        %719 = vmatmul.bf16.gmra.mxu0 %v375
        %v720 = vpop.f32.mrf.mxu0
        %v721 = vadd.f32 0.0, %v720
        %v722 = vpop.f32.mrf.mxu0
        %v723 = vadd.f32 0.0, %v722
        %724 = vmatmul.bf16.gmra.mxu0 %v379
        %v725 = vpop.f32.mrf.mxu0
        %v726 = vadd.f32 0.0, %v725
        %v727 = vpop.f32.mrf.mxu0
        %v728 = vadd.f32 0.0, %v727
        %729 = vdwg.mxu0
        %730 = vmatpush.bf16.msra.mxu0 %v613
        %731 = vmatpush.bf16.msra.mxu0 %v611
        %732 = vmatpush.bf16.msra.mxu0 %v609
        %733 = vmatpush.bf16.msra.mxu0 %v607
        %734 = vmatpush.bf16.msra.mxu0 %v605
        %735 = vmatpush.bf16.msra.mxu0 %v603
        %736 = vmatpush.bf16.msra.mxu0 %v601
        %737 = vmatpush.bf16.msra.mxu0 %v599
        %738 = vmatmul.bf16.gmra.mxu0 %v376
        %v739 = vpop.f32.mrf.mxu0
        %v740 = vadd.f32 %v721, %v739
        %v741 = vpop.f32.mrf.mxu0
        %v742 = vadd.f32 %v723, %v741
        %743 = vmatmul.bf16.gmra.mxu0 %v380
        %v744 = vpop.f32.mrf.mxu0
        %v745 = vadd.f32 %v726, %v744
        %v746 = vpop.f32.mrf.mxu0
        %v747 = vadd.f32 %v728, %v746
        %748 = vdwg.mxu0
        %749 = vmatpush.bf16.msra.mxu0 %v629
        %750 = vmatpush.bf16.msra.mxu0 %v627
        %751 = vmatpush.bf16.msra.mxu0 %v625
        %752 = vmatpush.bf16.msra.mxu0 %v623
        %753 = vmatpush.bf16.msra.mxu0 %v621
        %754 = vmatpush.bf16.msra.mxu0 %v619
        %755 = vmatpush.bf16.msra.mxu0 %v617
        %756 = vmatpush.bf16.msra.mxu0 %v615
        %757 = vmatmul.bf16.gmra.mxu0 %v377
        %v758 = vpop.f32.mrf.mxu0
        %v759 = vadd.f32 %v740, %v758
        %v760 = vpop.f32.mrf.mxu0
        %v761 = vadd.f32 %v742, %v760
        %762 = vmatmul.bf16.gmra.mxu0 %v381
        %v763 = vpop.f32.mrf.mxu0
        %v764 = vadd.f32 %v745, %v763
        %v765 = vpop.f32.mrf.mxu0
        %v766 = vadd.f32 %v747, %v765
        %767 = vdwg.mxu0
        %768 = vmatpush.bf16.msra.mxu0 %v645
        %769 = vmatpush.bf16.msra.mxu0 %v643
        %770 = vmatpush.bf16.msra.mxu0 %v641
        %771 = vmatpush.bf16.msra.mxu0 %v639
        %772 = vmatpush.bf16.msra.mxu0 %v637
        %773 = vmatpush.bf16.msra.mxu0 %v635
        %774 = vmatpush.bf16.msra.mxu0 %v633
        %775 = vmatpush.bf16.msra.mxu0 %v631
        %776 = vmatmul.bf16.gmra.mxu0 %v378
        %v777 = vpop.f32.mrf.mxu0
        %v778 = vadd.f32 %v759, %v777
        %v779 = vpop.f32.mrf.mxu0
        %v780 = vadd.f32 %v761, %v779
        %781 = vmatmul.bf16.gmra.mxu0 %v382
        %v782 = vpop.f32.mrf.mxu0
        %v783 = vadd.f32 %v764, %v782
        %v784 = vpop.f32.mrf.mxu0
        %v785 = vadd.f32 %v766, %v784
        %786 = vdwg.mxu0
        %787 = vmatpush.bf16.msra.mxu0 %v598
        %788 = vmatpush.bf16.msra.mxu0 %v596
        %789 = vmatpush.bf16.msra.mxu0 %v594
        %790 = vmatpush.bf16.msra.mxu0 %v592
        %791 = vmatpush.bf16.msra.mxu0 %v590
        %792 = vmatpush.bf16.msra.mxu0 %v588
        %793 = vmatpush.bf16.msra.mxu0 %v586
        %794 = vmatpush.bf16.msra.mxu0 %v584
        %795 = vmatmul.bf16.gmra.mxu0 %v375
        %v796 = vpop.f32.mrf.mxu0
        %v797 = vadd.f32 0.0, %v796
        %v798 = vpop.f32.mrf.mxu0
        %v799 = vadd.f32 0.0, %v798
        %800 = vmatmul.bf16.gmra.mxu0 %v379
        %v801 = vpop.f32.mrf.mxu0
        %v802 = vadd.f32 0.0, %v801
        %v803 = vpop.f32.mrf.mxu0
        %v804 = vadd.f32 0.0, %v803
        %805 = vdwg.mxu0
        %806 = vmatpush.bf16.msra.mxu0 %v614
        %807 = vmatpush.bf16.msra.mxu0 %v612
        %808 = vmatpush.bf16.msra.mxu0 %v610
        %809 = vmatpush.bf16.msra.mxu0 %v608
        %810 = vmatpush.bf16.msra.mxu0 %v606
        %811 = vmatpush.bf16.msra.mxu0 %v604
        %812 = vmatpush.bf16.msra.mxu0 %v602
        %813 = vmatpush.bf16.msra.mxu0 %v600
        %814 = vmatmul.bf16.gmra.mxu0 %v376
        %v815 = vpop.f32.mrf.mxu0
        %v816 = vadd.f32 %v797, %v815
        %v817 = vpop.f32.mrf.mxu0
        %v818 = vadd.f32 %v799, %v817
        %819 = vmatmul.bf16.gmra.mxu0 %v380
        %v820 = vpop.f32.mrf.mxu0
        %v821 = vadd.f32 %v802, %v820
        %v822 = vpop.f32.mrf.mxu0
        %v823 = vadd.f32 %v804, %v822
        %824 = vdwg.mxu0
        %825 = vmatpush.bf16.msra.mxu0 %v630
        %826 = vmatpush.bf16.msra.mxu0 %v628
        %827 = vmatpush.bf16.msra.mxu0 %v626
        %828 = vmatpush.bf16.msra.mxu0 %v624
        %829 = vmatpush.bf16.msra.mxu0 %v622
        %830 = vmatpush.bf16.msra.mxu0 %v620
        %831 = vmatpush.bf16.msra.mxu0 %v618
        %832 = vmatpush.bf16.msra.mxu0 %v616
        %833 = vmatmul.bf16.gmra.mxu0 %v377
        %v834 = vpop.f32.mrf.mxu0
        %v835 = vadd.f32 %v816, %v834
        %v836 = vpop.f32.mrf.mxu0
        %v837 = vadd.f32 %v818, %v836
        %838 = vmatmul.bf16.gmra.mxu0 %v381
        %v839 = vpop.f32.mrf.mxu0
        %v840 = vadd.f32 %v821, %v839
        %v841 = vpop.f32.mrf.mxu0
        %v842 = vadd.f32 %v823, %v841
        %843 = vdwg.mxu0
        %844 = vmatpush.bf16.msra.mxu0 %v646
        %845 = vmatpush.bf16.msra.mxu0 %v644
        %846 = vmatpush.bf16.msra.mxu0 %v642
        %847 = vmatpush.bf16.msra.mxu0 %v640
        %848 = vmatpush.bf16.msra.mxu0 %v638
        %849 = vmatpush.bf16.msra.mxu0 %v636
        %850 = vmatpush.bf16.msra.mxu0 %v634
        %851 = vmatpush.bf16.msra.mxu0 %v632
        %852 = vmatmul.bf16.gmra.mxu0 %v378
        %v853 = vpop.f32.mrf.mxu0
        %v854 = vadd.f32 %v835, %v853
        %v855 = vpop.f32.mrf.mxu0
        %v856 = vadd.f32 %v837, %v855
        %857 = vmatmul.bf16.gmra.mxu0 %v382
        %v858 = vpop.f32.mrf.mxu0
        %v859 = vadd.f32 %v840, %v858
        %v860 = vpop.f32.mrf.mxu0
        %v861 = vadd.f32 %v842, %v860
        %862 = vdwg.mxu0
        %v863 = vadd.f32 %v279, %v778
        %v864 = vadd.f32 %v280, %v854
        %v865 = vadd.f32 %v281, %v780
        %v866 = vadd.f32 %v282, %v856
        %v867 = vadd.f32 %v283, %v783
        %v868 = vadd.f32 %v284, %v859
        %v869 = vadd.f32 %v285, %v785
        %v870 = vadd.f32 %v286, %v861
        %871 = vst [vmem:[#allocation2] sm:$0xff] %v863
        %872 = vst [vmem:[#allocation2 + $0x8] sm:$0xff] %v864
        %873 = vst [vmem:[#allocation2 + $0x10] sm:$0xff] %v865
        %874 = vst [vmem:[#allocation2 + $0x18] sm:$0xff] %v866
        %875 = vst [vmem:[#allocation2 + $0x20] sm:$0xff] %v867
        %876 = vst [vmem:[#allocation2 + $0x28] sm:$0xff] %v868
        %877 = vst [vmem:[#allocation2 + $0x30] sm:$0xff] %v869
        %878 = vst [vmem:[#allocation2 + $0x38] sm:$0xff] %v870
        %p879 = scmp.eq.s32.totalorder %s20, 3
        // Predicated region
        $region56: #{discriminator_forward.15} parent=46 // pred_check
          %p880 = pneg %p879
        $region57: #{discriminator_forward.15} parent=46 // pred_check_branch
          %882 = sbr.rel (%p880) target = $region59
        $region58: #{discriminator_forward.15} parent=46 // pred_region
          %v883 = vld [vmem:[#allocation2] sm:$0xff]
          %v884 = vld [vmem:[#allocation2 + $0x8] sm:$0xff]
          %v885 = vld [vmem:[#allocation2 + $0x10] sm:$0xff]
          %v886 = vld [vmem:[#allocation2 + $0x18] sm:$0xff]
          %v887 = vld [vmem:[#allocation2 + $0x20] sm:$0xff]
          %v888 = vld [vmem:[#allocation2 + $0x28] sm:$0xff]
          %v889 = vld [vmem:[#allocation2 + $0x30] sm:$0xff]
          %v890 = vld [vmem:[#allocation2 + $0x38] sm:$0xff]
          %891 = vst [vmem:[%s256] sm:$0xff] %v883
          %892 = vst [vmem:[%s256 + $0x8] sm:$0xff] %v884
          %893 = vst [vmem:[%s256 + $0x10] sm:$0xff] %v885
          %894 = vst [vmem:[%s256 + $0x18] sm:$0xff] %v886
          %895 = vst [vmem:[%s256 + $0x20] sm:$0xff] %v887
          %896 = vst [vmem:[%s256 + $0x28] sm:$0xff] %v888
          %897 = vst [vmem:[%s256 + $0x30] sm:$0xff] %v889
          %898 = vst [vmem:[%s256 + $0x38] sm:$0xff] %v890
        $region59: #{discriminator_forward.15} parent=46 // pred_fallthru
          _
        %s899 = smul.u32 4, %s18
        %s900 = smul.u32 2, %s19
        %p901 = scmp.lt.s32.totalorder %s899, 3
        %s902 = scalar_select %p901, %s899, 3
        %p903 = scmp.lt.s32.totalorder %s900, 1
        %s904 = scalar_select %p903, %s900, 1
        %s905 = smul.addr %s902, 2
        %s906 = sadd.s32 %s904, %s905
        %s907 = smul.addr %s906, 8
        %s908 = scalar_lea.vmem %s2, %s907
        // Predicated region
        $region60: #{discriminator_forward.15} parent=46 // pred_check
          %p909 = pneg %p108
        $region61: #{discriminator_forward.15} parent=46 // pred_check_branch
          %911 = sbr.rel (%p909) target = $region63
        $region62: #{discriminator_forward.15} parent=46 // pred_region
          %s912 = smul.u32 4, %s18
          %s913 = smul.u32 2, %s19
        $region63: #{discriminator_forward.15} parent=46 // pred_fallthru
          _
        // Predicated region
        $region64: #{discriminator_forward.15} parent=46 // pred_check
          %p914 = pneg %p108
        $region65: #{discriminator_forward.15} parent=46 // pred_check_branch
          %916 = sbr.rel (%p914) target = $region67
        $region66: #{discriminator_forward.15} parent=46 // pred_region
          %s917 = smul.u32 4, %s18
          %s918 = smul.u32 2, %s19
          %p919 = scmp.lt.s32.totalorder %s917, 3
          %s920 = scalar_select %p919, %s917, 3
          %p921 = scmp.lt.s32.totalorder %s918, 1
          %s922 = scalar_select %p921, %s918, 1
          %s923 = smul.addr %s920, 2
          %s924 = sadd.s32 %s922, %s923
          %s925 = smul.addr %s924, 8
          %s926 = scalar_lea.vmem %s2, %s925
        $region67: #{discriminator_forward.15} parent=46 // pred_fallthru
          _
      $region47: #{discriminator_forward.15} parent=5 // pred_fallthru
        _
      %p927 = scmp.le.s32.totalorder 2, %s8
      // Predicated region
      $region68: #{discriminator_forward.15} parent=5 // pred_check
        %p928 = pneg %p927
      $region69: #{discriminator_forward.15} parent=5 // pred_check_branch
        %930 = sbr.rel (%p928) target = $region71
      $region70: #{discriminator_forward.15} parent=5 // pred_region
        %s931 = ssub.s32 %s8, 2
      $region71: #{discriminator_forward.15} parent=5 // pred_fallthru
        _
    $region6: #{discriminator_forward.15} parent=1 // loop_footer
      %s12 = sadd.s32 1, %s8
    $region7: #{discriminator_forward.15} parent=1 // loop_footer_branch
      %7 = sbr.rel target = $region3
    $region8: #{discriminator_forward.15} parent=1 // loop_exit
      _

// kernel: discriminator_forward.19
$region0: #{discriminator_forward.19}
  #allocation0 [shape = 'u32[]', space=smem, size = 0x4, offset = 0x4, fixed_abs, tag = 'smem constant byte address 0x4 - core index']
  #allocation1 [shape = 'u32[72,128]{1,0:T(1,128)}', space=vmem, size = 0x9000, scoped, tag = 'internal scratch']
  %s0 = inlined_call_operand.vmem [shape: f32[32,512], index: 0, kind: input, shape index: {}]
  %s1 = inlined_call_operand.vmem [shape: f32[8,512], index: 1, kind: output, shape index: {}]
  %s2 = sld [smem:[#allocation0]]
  $region18: #{discriminator_forward.19} parent=0
    _
  %s4 = ssub.s32 1, %s2
  %s5 = scalar_select 0, %s4, %s2
  // Predicated region
  $region2: #{discriminator_forward.19} parent=0 // pred_check
    _
  $region3: #{discriminator_forward.19} parent=0 // pred_check_branch
    %7 = sbr.rel (0) target = $region5
  $region4: #{discriminator_forward.19} parent=0 // pred_region
    _
  $region5: #{discriminator_forward.19} parent=0 // pred_fallthru
    _
  %p8 = scmp.eq.s32.totalorder 0, 0
  // Predicated region
  $region6: #{discriminator_forward.19} parent=0 // pred_check
    %p9 = pneg %p8
  $region7: #{discriminator_forward.19} parent=0 // pred_check_branch
    %11 = sbr.rel (%p9) target = $region9
  $region8: #{discriminator_forward.19} parent=0 // pred_region
    %12 = vst [vmem:[%s1] sm:$0xff] 0.0
    %13 = vst [vmem:[%s1 + $0x8] sm:$0xff] 0.0
    %14 = vst [vmem:[%s1 + $0x10] sm:$0xff] 0.0
    %15 = vst [vmem:[%s1 + $0x18] sm:$0xff] 0.0
  $region9: #{discriminator_forward.19} parent=0 // pred_fallthru
    _
  %v16 = vld [vmem:[%s0] sm:$0xff]
  %v17 = vld [vmem:[%s0 + $0x8] sm:$0xff]
  %v18 = vld [vmem:[%s0 + $0x10] sm:$0xff]
  %v19 = vld [vmem:[%s0 + $0x18] sm:$0xff]
  %v20 = vld [vmem:[%s0 + $0x20] sm:$0xff]
  %v21 = vld [vmem:[%s0 + $0x28] sm:$0xff]
  %v22 = vld [vmem:[%s0 + $0x30] sm:$0xff]
  %v23 = vld [vmem:[%s0 + $0x38] sm:$0xff]
  %v24 = vld [vmem:[%s0 + $0x40] sm:$0xff]
  %v25 = vld [vmem:[%s0 + $0x48] sm:$0xff]
  %v26 = vld [vmem:[%s0 + $0x50] sm:$0xff]
  %v27 = vld [vmem:[%s0 + $0x58] sm:$0xff]
  %v28 = vld [vmem:[%s0 + $0x60] sm:$0xff]
  %v29 = vld [vmem:[%s0 + $0x68] sm:$0xff]
  %v30 = vld [vmem:[%s0 + $0x70] sm:$0xff]
  %v31 = vld [vmem:[%s0 + $0x78] sm:$0xff]
  %v32 = vadd.f32 %v16, %v20
  %v33 = vadd.f32 %v32, %v24
  %v34 = vadd.f32 %v33, %v28
  %v35 = vrot.slane %v34, 4
  %v36 = vadd.f32 %v34, %v35
  %v37 = vrot.slane %v36, 2
  %v38 = vadd.f32 %v36, %v37
  %v39 = vrot.slane %v38, 1
  %v40 = vadd.f32 %v38, %v39
  %v41 = vadd.f32 %v17, %v21
  %v42 = vadd.f32 %v41, %v25
  %v43 = vadd.f32 %v42, %v29
  %v44 = vrot.slane %v43, 4
  %v45 = vadd.f32 %v43, %v44
  %v46 = vrot.slane %v45, 2
  %v47 = vadd.f32 %v45, %v46
  %v48 = vrot.slane %v47, 1
  %v49 = vadd.f32 %v47, %v48
  %v50 = vadd.f32 %v18, %v22
  %v51 = vadd.f32 %v50, %v26
  %v52 = vadd.f32 %v51, %v30
  %v53 = vrot.slane %v52, 4
  %v54 = vadd.f32 %v52, %v53
  %v55 = vrot.slane %v54, 2
  %v56 = vadd.f32 %v54, %v55
  %v57 = vrot.slane %v56, 1
  %v58 = vadd.f32 %v56, %v57
  %v59 = vadd.f32 %v19, %v23
  %v60 = vadd.f32 %v59, %v27
  %v61 = vadd.f32 %v60, %v31
  %v62 = vrot.slane %v61, 4
  %v63 = vadd.f32 %v61, %v62
  %v64 = vrot.slane %v63, 2
  %v65 = vadd.f32 %v63, %v64
  %v66 = vrot.slane %v65, 1
  %v67 = vadd.f32 %v65, %v66
  %v68 = vmul.f32 %v16, %v16
  %v69 = vmul.f32 %v17, %v17
  %v70 = vmul.f32 %v18, %v18
  %v71 = vmul.f32 %v19, %v19
  %v72 = vmul.f32 %v20, %v20
  %v73 = vmul.f32 %v21, %v21
  %v74 = vmul.f32 %v22, %v22
  %v75 = vmul.f32 %v23, %v23
  %v76 = vmul.f32 %v24, %v24
  %v77 = vmul.f32 %v25, %v25
  %v78 = vmul.f32 %v26, %v26
  %v79 = vmul.f32 %v27, %v27
  %v80 = vmul.f32 %v28, %v28
  %v81 = vmul.f32 %v29, %v29
  %v82 = vmul.f32 %v30, %v30
  %v83 = vmul.f32 %v31, %v31
  %v84 = vadd.f32 %v68, %v72
  %v85 = vadd.f32 %v84, %v76
  %v86 = vadd.f32 %v85, %v80
  %v87 = vrot.slane %v86, 4
  %v88 = vadd.f32 %v86, %v87
  %v89 = vrot.slane %v88, 2
  %v90 = vadd.f32 %v88, %v89
  %v91 = vrot.slane %v90, 1
  %v92 = vadd.f32 %v90, %v91
  %v93 = vadd.f32 %v69, %v73
  %v94 = vadd.f32 %v93, %v77
  %v95 = vadd.f32 %v94, %v81
  %v96 = vrot.slane %v95, 4
  %v97 = vadd.f32 %v95, %v96
  %v98 = vrot.slane %v97, 2
  %v99 = vadd.f32 %v97, %v98
  %v100 = vrot.slane %v99, 1
  %v101 = vadd.f32 %v99, %v100
  %v102 = vadd.f32 %v70, %v74
  %v103 = vadd.f32 %v102, %v78
  %v104 = vadd.f32 %v103, %v82
  %v105 = vrot.slane %v104, 4
  %v106 = vadd.f32 %v104, %v105
  %v107 = vrot.slane %v106, 2
  %v108 = vadd.f32 %v106, %v107
  %v109 = vrot.slane %v108, 1
  %v110 = vadd.f32 %v108, %v109
  %v111 = vadd.f32 %v71, %v75
  %v112 = vadd.f32 %v111, %v79
  %v113 = vadd.f32 %v112, %v83
  %v114 = vrot.slane %v113, 4
  %v115 = vadd.f32 %v113, %v114
  %v116 = vrot.slane %v115, 2
  %v117 = vadd.f32 %v115, %v116
  %v118 = vrot.slane %v117, 1
  %v119 = vadd.f32 %v117, %v118
  %v120 = vld [vmem:[%s1] sm:$0xff]
  %v121 = vld [vmem:[%s1 + $0x8] sm:$0xff]
  %v122 = vld [vmem:[%s1 + $0x10] sm:$0xff]
  %v123 = vld [vmem:[%s1 + $0x18] sm:$0xff]
  %vm124 = vcmask 1040384
  %v125 = vsel %vm124, %v40, %v92
  %v126 = vsel %vm124, %v49, %v101
  %v127 = vsel %vm124, %v58, %v110
  %v128 = vsel %vm124, %v67, %v119
  %vm129 = vcmask 1041408
  %v130 = vsel %vm129, %v125, 0.0
  %v131 = vsel %vm129, %v126, 0.0
  %v132 = vsel %vm129, %v127, 0.0
  %v133 = vsel %vm129, %v128, 0.0
  %v134 = vadd.f32 %v120, %v130
  %v135 = vadd.f32 %v121, %v131
  %v136 = vadd.f32 %v122, %v132
  %v137 = vadd.f32 %v123, %v133
  %138 = vst [vmem:[%s1] sm:$0xff] %v134
  %139 = vst [vmem:[%s1 + $0x8] sm:$0xff] %v135
  %140 = vst [vmem:[%s1 + $0x10] sm:$0xff] %v136
  %141 = vst [vmem:[%s1 + $0x18] sm:$0xff] %v137
  // Predicated region
  $region10: #{discriminator_forward.19} parent=0 // pred_check
    _
  $region11: #{discriminator_forward.19} parent=0 // pred_check_branch
    %143 = sbr.rel (0) target = $region13
  $region12: #{discriminator_forward.19} parent=0 // pred_region
    _
  $region13: #{discriminator_forward.19} parent=0 // pred_fallthru
    _
  // Predicated region
  $region14: #{discriminator_forward.19} parent=0 // pred_check
    _
  $region15: #{discriminator_forward.19} parent=0 // pred_check_branch
    %145 = sbr.rel (0) target = $region17
  $region16: #{discriminator_forward.19} parent=0 // pred_region
    _
  $region17: #{discriminator_forward.19} parent=0 // pred_fallthru
    _

// kernel: discriminator_forward.18
$region0: #{discriminator_forward.18}
  #allocation0 [shape = 'u32[]', space=smem, size = 0x4, offset = 0x4, fixed_abs, tag = 'smem constant byte address 0x4 - core index']
  #allocation1 [shape = 'u32[72,128]{1,0:T(1,128)}', space=vmem, size = 0x9000, scoped, tag = 'internal scratch']
  #allocation2 [shape = 'f32[32,256]{1,0:T(8,128)}', space=vmem, size = 0x8000, scoped, tag = 'scratch operand']
  %s0 = inlined_call_operand.vmem [shape: bf16[32,4096], index: 0, kind: input, shape index: {}]
  %s1 = inlined_call_operand.vmem [shape: bf16[4096,512], index: 1, kind: input, shape index: {}]
  %s2 = inlined_call_operand.vmem [shape: f32[32,512], index: 2, kind: output, shape index: {}]
  %s3 = sld [smem:[#allocation0]]
  $region129: #{discriminator_forward.18} parent=0
    _
  %s5 = ssub.s32 1, %s3
  %s6 = scalar_select 0, %s5, %s3
  $region1: #{discriminator_forward.18} parent=0
    #allocation3 [shape = 'u8[65536]{0}', space=vmem, size = 0x10000, scoped, tag = 'input window, operand 0']
    #allocation4 [shape = 'u8[524288]{0}', space=vmem, size = 0x80000, scoped, tag = 'input window, operand 1']
    #allocation5 [shape = 'u8[65536]{0}', space=vmem, size = 0x10000, scoped, tag = 'output window, operand 0']
    loop: start=0, step=1, limit=18
    $region2: #{discriminator_forward.18} parent=1 // loop_pre_header
      _
    $region3: #{discriminator_forward.18} parent=1 // loop_header
      %s8 = sphi 0, %s12
      %p9 = scmp.ge.s32.totalorder %s8, 18
      %s15 = sphi 0, %s34
      %s16 = sphi 0, %s30
      %s17 = sphi 0, %s26
      %s18 = sphi 0, %s15
      %s19 = sphi 0, %s16
      %s20 = sphi 0, %s17
      %s21 = sphi 0, %s18
      %s22 = sphi 0, %s19
      %s23 = sphi 0, %s20
      %s39 = sphi 0, %s41
      %s42 = sphi 0, %s39
      %s43 = sphi 0, %s42
      %s59 = sphi 0, %s43
      %s67 = sphi 0, %s69
      %s70 = sphi 0, %s67
      %s71 = sphi 0, %s70
      %s87 = sphi 0, %s71
      %s95 = sphi 0, %s97
      %s98 = sphi 0, %s95
      %s99 = sphi 0, %s98
      %s115 = sphi 0, %s99
    $region4: #{discriminator_forward.18} parent=1 // loop_header_branch
      %11 = sbr.rel (%p9) target = $region8
    $region5: #{discriminator_forward.18} parent=1 // loop_body
      %s13 = ssub.s32 %s8, 1
      %s14 = ssub.s32 %s8, 2
      %s24 = sadd.s32 1, %s17
      %p25 = scmp.ge.s32.totalorder %s24, 8
      %s26 = scalar_select %p25, 0, %s24
      %s27 = sadd.s32 1, %s16
      %s28 = scalar_select %p25, %s27, %s16
      %p29 = scmp.ge.s32.totalorder %s28, 2
      %s30 = scalar_select %p29, 0, %s28
      %s31 = sadd.s32 1, %s15
      %s32 = scalar_select %p29, %s31, %s15
      %p33 = scmp.ge.s32.totalorder %s32, 1
      %s34 = scalar_select %p33, 0, %s32
      %s35 = ssub.s32 %s15, %s34
      %s36 = ssub.s32 %s17, %s26
      %s37 = sor.u32 %s35, %s36
      %p38 = scmp.eq.s32.totalorder %s37, 0
      %s40 = sadd.s32 %s39, 1
      %s41 = scalar_select %p38, %s39, %s40
      %p44 = pneg %p38
      %p45 = scmp.eq.s32.totalorder %s8, 15
      %p46 = por %p44, %p45
      %p47 = scmp.ne.s32.totalorder %s39, %s42
      %p48 = scmp.eq.s32.totalorder %s8, 0
      %p49 = por %p47, %p48
      %p50 = scmp.ne.s32.totalorder %s39, %s42
      %p51 = scmp.eq.s32.totalorder %s13, 15
      %p52 = por %p50, %p51
      %p53 = scmp.ne.s32.totalorder %s42, %s43
      %p54 = scmp.eq.s32.totalorder %s13, 0
      %p55 = por %p53, %p54
      %p56 = scmp.ne.s32.totalorder %s42, %s43
      %p57 = scmp.eq.s32.totalorder %s14, 15
      %p58 = por %p56, %p57
      %p60 = scmp.ne.s32.totalorder %s43, %s59
      %p61 = scmp.eq.s32.totalorder %s14, 0
      %p62 = por %p60, %p61
      %s63 = ssub.s32 %s17, %s26
      %s64 = ssub.s32 %s16, %s30
      %s65 = sor.u32 %s63, %s64
      %p66 = scmp.eq.s32.totalorder %s65, 0
      %s68 = sadd.s32 %s67, 1
      %s69 = scalar_select %p66, %s67, %s68
      %p72 = pneg %p66
      %p73 = scmp.eq.s32.totalorder %s8, 15
      %p74 = por %p72, %p73
      %p75 = scmp.ne.s32.totalorder %s67, %s70
      %p76 = scmp.eq.s32.totalorder %s8, 0
      %p77 = por %p75, %p76
      %p78 = scmp.ne.s32.totalorder %s67, %s70
      %p79 = scmp.eq.s32.totalorder %s13, 15
      %p80 = por %p78, %p79
      %p81 = scmp.ne.s32.totalorder %s70, %s71
      %p82 = scmp.eq.s32.totalorder %s13, 0
      %p83 = por %p81, %p82
      %p84 = scmp.ne.s32.totalorder %s70, %s71
      %p85 = scmp.eq.s32.totalorder %s14, 15
      %p86 = por %p84, %p85
      %p88 = scmp.ne.s32.totalorder %s71, %s87
      %p89 = scmp.eq.s32.totalorder %s14, 0
      %p90 = por %p88, %p89
      %s91 = ssub.s32 %s15, %s34
      %s92 = ssub.s32 %s16, %s30
      %s93 = sor.u32 %s91, %s92
      %p94 = scmp.eq.s32.totalorder %s93, 0
      %s96 = sadd.s32 %s95, 1
      %s97 = scalar_select %p94, %s95, %s96
      %p100 = pneg %p94
      %p101 = scmp.eq.s32.totalorder %s8, 15
      %p102 = por %p100, %p101
      %p103 = scmp.ne.s32.totalorder %s95, %s98
      %p104 = scmp.eq.s32.totalorder %s8, 0
      %p105 = por %p103, %p104
      %p106 = scmp.ne.s32.totalorder %s95, %s98
      %p107 = scmp.eq.s32.totalorder %s13, 15
      %p108 = por %p106, %p107
      %p109 = scmp.ne.s32.totalorder %s98, %s99
      %p110 = scmp.eq.s32.totalorder %s13, 0
      %p111 = por %p109, %p110
      %p112 = scmp.ne.s32.totalorder %s98, %s99
      %p113 = scmp.eq.s32.totalorder %s14, 15
      %p114 = por %p112, %p113
      %p116 = scmp.ne.s32.totalorder %s99, %s115
      %p117 = scmp.eq.s32.totalorder %s14, 0
      %p118 = por %p116, %p117
      %p119 = scmp.le.s32.totalorder 1, %s8
      %p120 = scmp.lt.s32.totalorder %s8, 17
      %p121 = pnand %p119, %p120
      %p122 = pneg %p121
      // Predicated region
      $region9: #{discriminator_forward.18} parent=5 // pred_check
        _
      $region10: #{discriminator_forward.18} parent=5 // pred_check_branch
        %124 = sbr.rel (%p121) target = $region12
      $region11: #{discriminator_forward.18} parent=5 // pred_region
        %s125 = ssub.s32 %s8, 1
      $region12: #{discriminator_forward.18} parent=5 // pred_fallthru
        _
      %p126 = scmp.lt.s32.totalorder %s8, 16
      // Predicated region
      $region13: #{discriminator_forward.18} parent=5 // pred_check
        %p127 = pneg %p126
      $region14: #{discriminator_forward.18} parent=5 // pred_check_branch
        %129 = sbr.rel (%p127) target = $region16
      $region15: #{discriminator_forward.18} parent=5 // pred_region
        // Predicated region
        $region17: #{discriminator_forward.18} parent=15 // pred_check
          %p130 = pneg %p49
        $region18: #{discriminator_forward.18} parent=15 // pred_check_branch
          %132 = sbr.rel (%p130) target = $region20
        $region19: #{discriminator_forward.18} parent=15 // pred_region
          %s133 = sand.u32 %s39, 1
          %s134 = sand.u32 %s39, 1
          %s135 = smul.addr %s134, 64
          %s136 = scalar_lea.vmem [#allocation3], %s135
          %s137 = smul.u32 4, %s15
          %s138 = smul.u32 4, %s17
          %s139 = smul.addr %s137, 32
          %s140 = sadd.s32 %s138, %s139
          %s141 = smul.addr %s140, 4
          %s142 = scalar_lea.vmem %s0, %s141
          // Predicated region
          $region21: #{discriminator_forward.18} parent=19 // pred_check
            _
          $region22: #{discriminator_forward.18} parent=19 // pred_check_branch
            %144 = sbr.rel (0) target = $region24
          $region23: #{discriminator_forward.18} parent=19 // pred_region
            // Predicated region
            $region25: #{discriminator_forward.18} parent=23 // pred_check
              _
            $region26: #{discriminator_forward.18} parent=23 // pred_check_branch
              %146 = sbr.rel (0) target = $region28
            $region27: #{discriminator_forward.18} parent=23 // pred_region
              loop: start=0, step=1, limit=1
              $region29: #{discriminator_forward.18} parent=27 // loop_pre_header
                _
              $region30: #{discriminator_forward.18} parent=27 // loop_header
                %s148 = sphi 0, %s152
                %p149 = scmp.ge.s32.totalorder %s148, 1
                %s153 = sphi %s142, %s142
                %s154 = sphi %s136, %s136
              $region31: #{discriminator_forward.18} parent=27 // loop_header_branch
                %151 = sbr.rel (%p149) target = $region35
              $region32: #{discriminator_forward.18} parent=27 // loop_body
                %v155 = vld [vmem:[%s153] sm:$0xff]
                %156 = vst [vmem:[%s154] sm:$0xff] %v155
                %v157 = vld [vmem:[%s153 + $0x8] sm:$0xff]
                %158 = vst [vmem:[%s154 + $0x8] sm:$0xff] %v157
                %v159 = vld [vmem:[%s153 + $0x80] sm:$0xff]
                %160 = vst [vmem:[%s154 + $0x10] sm:$0xff] %v159
                %v161 = vld [vmem:[%s153 + $0x88] sm:$0xff]
                %162 = vst [vmem:[%s154 + $0x18] sm:$0xff] %v161
                %v163 = vld [vmem:[%s153 + $0x100] sm:$0xff]
                %164 = vst [vmem:[%s154 + $0x20] sm:$0xff] %v163
                %v165 = vld [vmem:[%s153 + $0x108] sm:$0xff]
                %166 = vst [vmem:[%s154 + $0x28] sm:$0xff] %v165
                %v167 = vld [vmem:[%s153 + $0x180] sm:$0xff]
                %168 = vst [vmem:[%s154 + $0x30] sm:$0xff] %v167
                %v169 = vld [vmem:[%s153 + $0x188] sm:$0xff]
                %170 = vst [vmem:[%s154 + $0x38] sm:$0xff] %v169
              $region33: #{discriminator_forward.18} parent=27 // loop_footer
                %s152 = sadd.s32 1, %s148
              $region34: #{discriminator_forward.18} parent=27 // loop_footer_branch
                %147 = sbr.rel target = $region30
              $region35: #{discriminator_forward.18} parent=27 // loop_exit
                _
            $region28: #{discriminator_forward.18} parent=23 // pred_fallthru
              _
            // Predicated region
            $region36: #{discriminator_forward.18} parent=23 // pred_check
              _
            $region37: #{discriminator_forward.18} parent=23 // pred_check_branch
              %172 = sbr.rel target = $region39
            $region38: #{discriminator_forward.18} parent=23 // pred_region
              _
            $region39: #{discriminator_forward.18} parent=23 // pred_fallthru
              _
          $region24: #{discriminator_forward.18} parent=19 // pred_fallthru
            _
          %173 = vnop
        $region20: #{discriminator_forward.18} parent=15 // pred_fallthru
          _
        // Predicated region
        $region40: #{discriminator_forward.18} parent=15 // pred_check
          %p174 = pneg %p77
        $region41: #{discriminator_forward.18} parent=15 // pred_check_branch
          %176 = sbr.rel (%p174) target = $region43
        $region42: #{discriminator_forward.18} parent=15 // pred_region
          %s177 = sand.u32 %s67, 1
          %s178 = sand.u32 %s67, 1
          %s179 = smul.addr %s178, 512
          %s180 = scalar_lea.vmem [#allocation4], %s179
          %s181 = smul.u32 64, %s17
          %s182 = smul.u32 2, %s16
          %s183 = smul.addr %s181, 4
          %s184 = sadd.s32 %s182, %s183
          %s185 = smul.addr %s184, 4
          %s186 = scalar_lea.vmem %s1, %s185
          // Predicated region
          $region44: #{discriminator_forward.18} parent=42 // pred_check
            _
          $region45: #{discriminator_forward.18} parent=42 // pred_check_branch
            %188 = sbr.rel (0) target = $region47
          $region46: #{discriminator_forward.18} parent=42 // pred_region
            // Predicated region
            $region48: #{discriminator_forward.18} parent=46 // pred_check
              _
            $region49: #{discriminator_forward.18} parent=46 // pred_check_branch
              %190 = sbr.rel (0) target = $region51
            $region50: #{discriminator_forward.18} parent=46 // pred_region
              // Predicated region
              $region63: #{discriminator_forward.18} parent=50 // pred_check
                _
              $region64: #{discriminator_forward.18} parent=50 // pred_check_branch
                %332 = sbr.rel (0) target = $region66
              $region65: #{discriminator_forward.18} parent=50 // pred_region
                loop: start=0, step=1, limit=1
                $region67: #{discriminator_forward.18} parent=65 // loop_pre_header
                  _
                $region68: #{discriminator_forward.18} parent=65 // loop_header
                  %s334 = sphi 0, %s338
                  %p335 = scmp.ge.s32.totalorder %s334, 1
                  %s339 = sphi %s186, %s186
                  %s340 = sphi %s180, %s180
                $region69: #{discriminator_forward.18} parent=65 // loop_header_branch
                  %337 = sbr.rel (%p335) target = $region73
                $region70: #{discriminator_forward.18} parent=65 // loop_body
                  %v341 = vld [vmem:[%s339] sm:$0xff]
                  %342 = vst [vmem:[%s340] sm:$0xff] %v341
                  %v343 = vld [vmem:[%s339 + $0x10] sm:$0xff]
                  %344 = vst [vmem:[%s340 + $0x8] sm:$0xff] %v343
                  %v345 = vld [vmem:[%s339 + $0x20] sm:$0xff]
                  %346 = vst [vmem:[%s340 + $0x10] sm:$0xff] %v345
                  %v347 = vld [vmem:[%s339 + $0x30] sm:$0xff]
                  %348 = vst [vmem:[%s340 + $0x18] sm:$0xff] %v347
                  %v349 = vld [vmem:[%s339 + $0x40] sm:$0xff]
                  %350 = vst [vmem:[%s340 + $0x20] sm:$0xff] %v349
                  %v351 = vld [vmem:[%s339 + $0x50] sm:$0xff]
                  %352 = vst [vmem:[%s340 + $0x28] sm:$0xff] %v351
                  %v353 = vld [vmem:[%s339 + $0x60] sm:$0xff]
                  %354 = vst [vmem:[%s340 + $0x30] sm:$0xff] %v353
                  %v355 = vld [vmem:[%s339 + $0x70] sm:$0xff]
                  %356 = vst [vmem:[%s340 + $0x38] sm:$0xff] %v355
                  %v357 = vld [vmem:[%s339 + $0x80] sm:$0xff]
                  %358 = vst [vmem:[%s340 + $0x40] sm:$0xff] %v357
                  %v359 = vld [vmem:[%s339 + $0x90] sm:$0xff]
                  %360 = vst [vmem:[%s340 + $0x48] sm:$0xff] %v359
                  %v361 = vld [vmem:[%s339 + $0xa0] sm:$0xff]
                  %362 = vst [vmem:[%s340 + $0x50] sm:$0xff] %v361
                  %v363 = vld [vmem:[%s339 + $0xb0] sm:$0xff]
                  %364 = vst [vmem:[%s340 + $0x58] sm:$0xff] %v363
                  %v365 = vld [vmem:[%s339 + $0xc0] sm:$0xff]
                  %366 = vst [vmem:[%s340 + $0x60] sm:$0xff] %v365
                  %v367 = vld [vmem:[%s339 + $0xd0] sm:$0xff]
                  %368 = vst [vmem:[%s340 + $0x68] sm:$0xff] %v367
                  %v369 = vld [vmem:[%s339 + $0xe0] sm:$0xff]
                  %370 = vst [vmem:[%s340 + $0x70] sm:$0xff] %v369
                  %v371 = vld [vmem:[%s339 + $0xf0] sm:$0xff]
                  %372 = vst [vmem:[%s340 + $0x78] sm:$0xff] %v371
                  %v373 = vld [vmem:[%s339 + $0x100] sm:$0xff]
                  %374 = vst [vmem:[%s340 + $0x80] sm:$0xff] %v373
                  %v375 = vld [vmem:[%s339 + $0x110] sm:$0xff]
                  %376 = vst [vmem:[%s340 + $0x88] sm:$0xff] %v375
                  %v377 = vld [vmem:[%s339 + $0x120] sm:$0xff]
                  %378 = vst [vmem:[%s340 + $0x90] sm:$0xff] %v377
                  %v379 = vld [vmem:[%s339 + $0x130] sm:$0xff]
                  %380 = vst [vmem:[%s340 + $0x98] sm:$0xff] %v379
                  %v381 = vld [vmem:[%s339 + $0x140] sm:$0xff]
                  %382 = vst [vmem:[%s340 + $0xa0] sm:$0xff] %v381
                  %v383 = vld [vmem:[%s339 + $0x150] sm:$0xff]
                  %384 = vst [vmem:[%s340 + $0xa8] sm:$0xff] %v383
                  %v385 = vld [vmem:[%s339 + $0x160] sm:$0xff]
                  %386 = vst [vmem:[%s340 + $0xb0] sm:$0xff] %v385
                  %v387 = vld [vmem:[%s339 + $0x170] sm:$0xff]
                  %388 = vst [vmem:[%s340 + $0xb8] sm:$0xff] %v387
                  %v389 = vld [vmem:[%s339 + $0x180] sm:$0xff]
                  %390 = vst [vmem:[%s340 + $0xc0] sm:$0xff] %v389
                  %v391 = vld [vmem:[%s339 + $0x190] sm:$0xff]
                  %392 = vst [vmem:[%s340 + $0xc8] sm:$0xff] %v391
                  %v393 = vld [vmem:[%s339 + $0x1a0] sm:$0xff]
                  %394 = vst [vmem:[%s340 + $0xd0] sm:$0xff] %v393
                  %v395 = vld [vmem:[%s339 + $0x1b0] sm:$0xff]
                  %396 = vst [vmem:[%s340 + $0xd8] sm:$0xff] %v395
                  %v397 = vld [vmem:[%s339 + $0x1c0] sm:$0xff]
                  %398 = vst [vmem:[%s340 + $0xe0] sm:$0xff] %v397
                  %v399 = vld [vmem:[%s339 + $0x1d0] sm:$0xff]
                  %400 = vst [vmem:[%s340 + $0xe8] sm:$0xff] %v399
                  %v401 = vld [vmem:[%s339 + $0x1e0] sm:$0xff]
                  %402 = vst [vmem:[%s340 + $0xf0] sm:$0xff] %v401
                  %v403 = vld [vmem:[%s339 + $0x1f0] sm:$0xff]
                  %404 = vst [vmem:[%s340 + $0xf8] sm:$0xff] %v403
                  %v405 = vld [vmem:[%s339 + $0x200] sm:$0xff]
                  %406 = vst [vmem:[%s340 + $0x100] sm:$0xff] %v405
                  %v407 = vld [vmem:[%s339 + $0x210] sm:$0xff]
                  %408 = vst [vmem:[%s340 + $0x108] sm:$0xff] %v407
                  %v409 = vld [vmem:[%s339 + $0x220] sm:$0xff]
                  %410 = vst [vmem:[%s340 + $0x110] sm:$0xff] %v409
                  %v411 = vld [vmem:[%s339 + $0x230] sm:$0xff]
                  %412 = vst [vmem:[%s340 + $0x118] sm:$0xff] %v411
                  %v413 = vld [vmem:[%s339 + $0x240] sm:$0xff]
                  %414 = vst [vmem:[%s340 + $0x120] sm:$0xff] %v413
                  %v415 = vld [vmem:[%s339 + $0x250] sm:$0xff]
                  %416 = vst [vmem:[%s340 + $0x128] sm:$0xff] %v415
                  %v417 = vld [vmem:[%s339 + $0x260] sm:$0xff]
                  %418 = vst [vmem:[%s340 + $0x130] sm:$0xff] %v417
                  %v419 = vld [vmem:[%s339 + $0x270] sm:$0xff]
                  %420 = vst [vmem:[%s340 + $0x138] sm:$0xff] %v419
                  %v421 = vld [vmem:[%s339 + $0x280] sm:$0xff]
                  %422 = vst [vmem:[%s340 + $0x140] sm:$0xff] %v421
                  %v423 = vld [vmem:[%s339 + $0x290] sm:$0xff]
                  %424 = vst [vmem:[%s340 + $0x148] sm:$0xff] %v423
                  %v425 = vld [vmem:[%s339 + $0x2a0] sm:$0xff]
                  %426 = vst [vmem:[%s340 + $0x150] sm:$0xff] %v425
                  %v427 = vld [vmem:[%s339 + $0x2b0] sm:$0xff]
                  %428 = vst [vmem:[%s340 + $0x158] sm:$0xff] %v427
                  %v429 = vld [vmem:[%s339 + $0x2c0] sm:$0xff]
                  %430 = vst [vmem:[%s340 + $0x160] sm:$0xff] %v429
                  %v431 = vld [vmem:[%s339 + $0x2d0] sm:$0xff]
                  %432 = vst [vmem:[%s340 + $0x168] sm:$0xff] %v431
                  %v433 = vld [vmem:[%s339 + $0x2e0] sm:$0xff]
                  %434 = vst [vmem:[%s340 + $0x170] sm:$0xff] %v433
                  %v435 = vld [vmem:[%s339 + $0x2f0] sm:$0xff]
                  %436 = vst [vmem:[%s340 + $0x178] sm:$0xff] %v435
                  %v437 = vld [vmem:[%s339 + $0x300] sm:$0xff]
                  %438 = vst [vmem:[%s340 + $0x180] sm:$0xff] %v437
                  %v439 = vld [vmem:[%s339 + $0x310] sm:$0xff]
                  %440 = vst [vmem:[%s340 + $0x188] sm:$0xff] %v439
                  %v441 = vld [vmem:[%s339 + $0x320] sm:$0xff]
                  %442 = vst [vmem:[%s340 + $0x190] sm:$0xff] %v441
                  %v443 = vld [vmem:[%s339 + $0x330] sm:$0xff]
                  %444 = vst [vmem:[%s340 + $0x198] sm:$0xff] %v443
                  %v445 = vld [vmem:[%s339 + $0x340] sm:$0xff]
                  %446 = vst [vmem:[%s340 + $0x1a0] sm:$0xff] %v445
                  %v447 = vld [vmem:[%s339 + $0x350] sm:$0xff]
                  %448 = vst [vmem:[%s340 + $0x1a8] sm:$0xff] %v447
                  %v449 = vld [vmem:[%s339 + $0x360] sm:$0xff]
                  %450 = vst [vmem:[%s340 + $0x1b0] sm:$0xff] %v449
                  %v451 = vld [vmem:[%s339 + $0x370] sm:$0xff]
                  %452 = vst [vmem:[%s340 + $0x1b8] sm:$0xff] %v451
                  %v453 = vld [vmem:[%s339 + $0x380] sm:$0xff]
                  %454 = vst [vmem:[%s340 + $0x1c0] sm:$0xff] %v453
                  %v455 = vld [vmem:[%s339 + $0x390] sm:$0xff]
                  %456 = vst [vmem:[%s340 + $0x1c8] sm:$0xff] %v455
                  %v457 = vld [vmem:[%s339 + $0x3a0] sm:$0xff]
                  %458 = vst [vmem:[%s340 + $0x1d0] sm:$0xff] %v457
                  %v459 = vld [vmem:[%s339 + $0x3b0] sm:$0xff]
                  %460 = vst [vmem:[%s340 + $0x1d8] sm:$0xff] %v459
                  %v461 = vld [vmem:[%s339 + $0x3c0] sm:$0xff]
                  %462 = vst [vmem:[%s340 + $0x1e0] sm:$0xff] %v461
                  %v463 = vld [vmem:[%s339 + $0x3d0] sm:$0xff]
                  %464 = vst [vmem:[%s340 + $0x1e8] sm:$0xff] %v463
                  %v465 = vld [vmem:[%s339 + $0x3e0] sm:$0xff]
                  %466 = vst [vmem:[%s340 + $0x1f0] sm:$0xff] %v465
                  %v467 = vld [vmem:[%s339 + $0x3f0] sm:$0xff]
                  %468 = vst [vmem:[%s340 + $0x1f8] sm:$0xff] %v467
                $region71: #{discriminator_forward.18} parent=65 // loop_footer
                  %s338 = sadd.s32 1, %s334
                $region72: #{discriminator_forward.18} parent=65 // loop_footer_branch
                  %333 = sbr.rel target = $region68
                $region73: #{discriminator_forward.18} parent=65 // loop_exit
                  _
              $region66: #{discriminator_forward.18} parent=50 // pred_fallthru
                _
              // Predicated region
              $region74: #{discriminator_forward.18} parent=50 // pred_check
                _
              $region75: #{discriminator_forward.18} parent=50 // pred_check_branch
                %470 = sbr.rel target = $region77
              $region76: #{discriminator_forward.18} parent=50 // pred_region
                _
              $region77: #{discriminator_forward.18} parent=50 // pred_fallthru
                _
            $region51: #{discriminator_forward.18} parent=46 // pred_fallthru
              _
            // Predicated region
            $region52: #{discriminator_forward.18} parent=46 // pred_check
              _
            $region53: #{discriminator_forward.18} parent=46 // pred_check_branch
              %192 = sbr.rel target = $region55
            $region54: #{discriminator_forward.18} parent=46 // pred_region
              %s194 = ssub.s32 256, 1
              loop: start=0, step=1, limit=1
              $region56: #{discriminator_forward.18} parent=54 // loop_pre_header
                _
              $region57: #{discriminator_forward.18} parent=54 // loop_header
                %s196 = sphi 0, %s200
                %p197 = scmp.ge.s32.totalorder %s196, 1
                %s201 = sphi %s186, %s186
                %s202 = sphi %s180, %s180
              $region58: #{discriminator_forward.18} parent=54 // loop_header_branch
                %199 = sbr.rel (%p197) target = $region62
              $region59: #{discriminator_forward.18} parent=54 // loop_body
                %v203 = vld [vmem:[%s201] sm:%s194]
                %204 = vst [vmem:[%s202] sm:%s194] %v203
                %v205 = vld [vmem:[%s201 + $0x10] sm:%s194]
                %206 = vst [vmem:[%s202 + $0x8] sm:%s194] %v205
                %v207 = vld [vmem:[%s201 + $0x20] sm:%s194]
                %208 = vst [vmem:[%s202 + $0x10] sm:%s194] %v207
                %v209 = vld [vmem:[%s201 + $0x30] sm:%s194]
                %210 = vst [vmem:[%s202 + $0x18] sm:%s194] %v209
                %v211 = vld [vmem:[%s201 + $0x40] sm:%s194]
                %212 = vst [vmem:[%s202 + $0x20] sm:%s194] %v211
                %v213 = vld [vmem:[%s201 + $0x50] sm:%s194]
                %214 = vst [vmem:[%s202 + $0x28] sm:%s194] %v213
                %v215 = vld [vmem:[%s201 + $0x60] sm:%s194]
                %216 = vst [vmem:[%s202 + $0x30] sm:%s194] %v215
                %v217 = vld [vmem:[%s201 + $0x70] sm:%s194]
                %218 = vst [vmem:[%s202 + $0x38] sm:%s194] %v217
                %v219 = vld [vmem:[%s201 + $0x80] sm:%s194]
                %220 = vst [vmem:[%s202 + $0x40] sm:%s194] %v219
                %v221 = vld [vmem:[%s201 + $0x90] sm:%s194]
                %222 = vst [vmem:[%s202 + $0x48] sm:%s194] %v221
                %v223 = vld [vmem:[%s201 + $0xa0] sm:%s194]
                %224 = vst [vmem:[%s202 + $0x50] sm:%s194] %v223
                %v225 = vld [vmem:[%s201 + $0xb0] sm:%s194]
                %226 = vst [vmem:[%s202 + $0x58] sm:%s194] %v225
                %v227 = vld [vmem:[%s201 + $0xc0] sm:%s194]
                %228 = vst [vmem:[%s202 + $0x60] sm:%s194] %v227
                %v229 = vld [vmem:[%s201 + $0xd0] sm:%s194]
                %230 = vst [vmem:[%s202 + $0x68] sm:%s194] %v229
                %v231 = vld [vmem:[%s201 + $0xe0] sm:%s194]
                %232 = vst [vmem:[%s202 + $0x70] sm:%s194] %v231
                %v233 = vld [vmem:[%s201 + $0xf0] sm:%s194]
                %234 = vst [vmem:[%s202 + $0x78] sm:%s194] %v233
                %v235 = vld [vmem:[%s201 + $0x100] sm:%s194]
                %236 = vst [vmem:[%s202 + $0x80] sm:%s194] %v235
                %v237 = vld [vmem:[%s201 + $0x110] sm:%s194]
                %238 = vst [vmem:[%s202 + $0x88] sm:%s194] %v237
                %v239 = vld [vmem:[%s201 + $0x120] sm:%s194]
                %240 = vst [vmem:[%s202 + $0x90] sm:%s194] %v239
                %v241 = vld [vmem:[%s201 + $0x130] sm:%s194]
                %242 = vst [vmem:[%s202 + $0x98] sm:%s194] %v241
                %v243 = vld [vmem:[%s201 + $0x140] sm:%s194]
                %244 = vst [vmem:[%s202 + $0xa0] sm:%s194] %v243
                %v245 = vld [vmem:[%s201 + $0x150] sm:%s194]
                %246 = vst [vmem:[%s202 + $0xa8] sm:%s194] %v245
                %v247 = vld [vmem:[%s201 + $0x160] sm:%s194]
                %248 = vst [vmem:[%s202 + $0xb0] sm:%s194] %v247
                %v249 = vld [vmem:[%s201 + $0x170] sm:%s194]
                %250 = vst [vmem:[%s202 + $0xb8] sm:%s194] %v249
                %v251 = vld [vmem:[%s201 + $0x180] sm:%s194]
                %252 = vst [vmem:[%s202 + $0xc0] sm:%s194] %v251
                %v253 = vld [vmem:[%s201 + $0x190] sm:%s194]
                %254 = vst [vmem:[%s202 + $0xc8] sm:%s194] %v253
                %v255 = vld [vmem:[%s201 + $0x1a0] sm:%s194]
                %256 = vst [vmem:[%s202 + $0xd0] sm:%s194] %v255
                %v257 = vld [vmem:[%s201 + $0x1b0] sm:%s194]
                %258 = vst [vmem:[%s202 + $0xd8] sm:%s194] %v257
                %v259 = vld [vmem:[%s201 + $0x1c0] sm:%s194]
                %260 = vst [vmem:[%s202 + $0xe0] sm:%s194] %v259
                %v261 = vld [vmem:[%s201 + $0x1d0] sm:%s194]
                %262 = vst [vmem:[%s202 + $0xe8] sm:%s194] %v261
                %v263 = vld [vmem:[%s201 + $0x1e0] sm:%s194]
                %264 = vst [vmem:[%s202 + $0xf0] sm:%s194] %v263
                %v265 = vld [vmem:[%s201 + $0x1f0] sm:%s194]
                %266 = vst [vmem:[%s202 + $0xf8] sm:%s194] %v265
                %v267 = vld [vmem:[%s201 + $0x200] sm:%s194]
                %268 = vst [vmem:[%s202 + $0x100] sm:%s194] %v267
                %v269 = vld [vmem:[%s201 + $0x210] sm:%s194]
                %270 = vst [vmem:[%s202 + $0x108] sm:%s194] %v269
                %v271 = vld [vmem:[%s201 + $0x220] sm:%s194]
                %272 = vst [vmem:[%s202 + $0x110] sm:%s194] %v271
                %v273 = vld [vmem:[%s201 + $0x230] sm:%s194]
                %274 = vst [vmem:[%s202 + $0x118] sm:%s194] %v273
                %v275 = vld [vmem:[%s201 + $0x240] sm:%s194]
                %276 = vst [vmem:[%s202 + $0x120] sm:%s194] %v275
                %v277 = vld [vmem:[%s201 + $0x250] sm:%s194]
                %278 = vst [vmem:[%s202 + $0x128] sm:%s194] %v277
                %v279 = vld [vmem:[%s201 + $0x260] sm:%s194]
                %280 = vst [vmem:[%s202 + $0x130] sm:%s194] %v279
                %v281 = vld [vmem:[%s201 + $0x270] sm:%s194]
                %282 = vst [vmem:[%s202 + $0x138] sm:%s194] %v281
                %v283 = vld [vmem:[%s201 + $0x280] sm:%s194]
                %284 = vst [vmem:[%s202 + $0x140] sm:%s194] %v283
                %v285 = vld [vmem:[%s201 + $0x290] sm:%s194]
                %286 = vst [vmem:[%s202 + $0x148] sm:%s194] %v285
                %v287 = vld [vmem:[%s201 + $0x2a0] sm:%s194]
                %288 = vst [vmem:[%s202 + $0x150] sm:%s194] %v287
                %v289 = vld [vmem:[%s201 + $0x2b0] sm:%s194]
                %290 = vst [vmem:[%s202 + $0x158] sm:%s194] %v289
                %v291 = vld [vmem:[%s201 + $0x2c0] sm:%s194]
                %292 = vst [vmem:[%s202 + $0x160] sm:%s194] %v291
                %v293 = vld [vmem:[%s201 + $0x2d0] sm:%s194]
                %294 = vst [vmem:[%s202 + $0x168] sm:%s194] %v293
                %v295 = vld [vmem:[%s201 + $0x2e0] sm:%s194]
                %296 = vst [vmem:[%s202 + $0x170] sm:%s194] %v295
                %v297 = vld [vmem:[%s201 + $0x2f0] sm:%s194]
                %298 = vst [vmem:[%s202 + $0x178] sm:%s194] %v297
                %v299 = vld [vmem:[%s201 + $0x300] sm:%s194]
                %300 = vst [vmem:[%s202 + $0x180] sm:%s194] %v299
                %v301 = vld [vmem:[%s201 + $0x310] sm:%s194]
                %302 = vst [vmem:[%s202 + $0x188] sm:%s194] %v301
                %v303 = vld [vmem:[%s201 + $0x320] sm:%s194]
                %304 = vst [vmem:[%s202 + $0x190] sm:%s194] %v303
                %v305 = vld [vmem:[%s201 + $0x330] sm:%s194]
                %306 = vst [vmem:[%s202 + $0x198] sm:%s194] %v305
                %v307 = vld [vmem:[%s201 + $0x340] sm:%s194]
                %308 = vst [vmem:[%s202 + $0x1a0] sm:%s194] %v307
                %v309 = vld [vmem:[%s201 + $0x350] sm:%s194]
                %310 = vst [vmem:[%s202 + $0x1a8] sm:%s194] %v309
                %v311 = vld [vmem:[%s201 + $0x360] sm:%s194]
                %312 = vst [vmem:[%s202 + $0x1b0] sm:%s194] %v311
                %v313 = vld [vmem:[%s201 + $0x370] sm:%s194]
                %314 = vst [vmem:[%s202 + $0x1b8] sm:%s194] %v313
                %v315 = vld [vmem:[%s201 + $0x380] sm:%s194]
                %316 = vst [vmem:[%s202 + $0x1c0] sm:%s194] %v315
                %v317 = vld [vmem:[%s201 + $0x390] sm:%s194]
                %318 = vst [vmem:[%s202 + $0x1c8] sm:%s194] %v317
                %v319 = vld [vmem:[%s201 + $0x3a0] sm:%s194]
                %320 = vst [vmem:[%s202 + $0x1d0] sm:%s194] %v319
                %v321 = vld [vmem:[%s201 + $0x3b0] sm:%s194]
                %322 = vst [vmem:[%s202 + $0x1d8] sm:%s194] %v321
                %v323 = vld [vmem:[%s201 + $0x3c0] sm:%s194]
                %324 = vst [vmem:[%s202 + $0x1e0] sm:%s194] %v323
                %v325 = vld [vmem:[%s201 + $0x3d0] sm:%s194]
                %326 = vst [vmem:[%s202 + $0x1e8] sm:%s194] %v325
                %v327 = vld [vmem:[%s201 + $0x3e0] sm:%s194]
                %328 = vst [vmem:[%s202 + $0x1f0] sm:%s194] %v327
                %v329 = vld [vmem:[%s201 + $0x3f0] sm:%s194]
                %330 = vst [vmem:[%s202 + $0x1f8] sm:%s194] %v329
              $region60: #{discriminator_forward.18} parent=54 // loop_footer
                %s200 = sadd.s32 1, %s196
              $region61: #{discriminator_forward.18} parent=54 // loop_footer_branch
                %195 = sbr.rel target = $region57
              $region62: #{discriminator_forward.18} parent=54 // loop_exit
                _
            $region55: #{discriminator_forward.18} parent=46 // pred_fallthru
              _
          $region47: #{discriminator_forward.18} parent=42 // pred_fallthru
            _
          %471 = vnop
        $region43: #{discriminator_forward.18} parent=15 // pred_fallthru
          _
      $region16: #{discriminator_forward.18} parent=5 // pred_fallthru
        _
      %p472 = scmp.le.s32.totalorder 1, %s8
      %p473 = scmp.lt.s32.totalorder %s8, 17
      %p474 = pnand %p472, %p473
      %p475 = pneg %p474
      // Predicated region
      $region78: #{discriminator_forward.18} parent=5 // pred_check
        _
      $region79: #{discriminator_forward.18} parent=5 // pred_check_branch
        %477 = sbr.rel (%p474) target = $region81
      $region80: #{discriminator_forward.18} parent=5 // pred_region
        %s478 = ssub.s32 %s8, 1
        %s479 = sand.u32 %s42, 1
        %s480 = sand.u32 %s42, 1
        %s481 = smul.addr %s480, 64
        %s482 = scalar_lea.vmem [#allocation3], %s481
        // Predicated region
        $region82: #{discriminator_forward.18} parent=80 // pred_check
          %p483 = pneg %p55
        $region83: #{discriminator_forward.18} parent=80 // pred_check_branch
          %485 = sbr.rel (%p483) target = $region85
        $region84: #{discriminator_forward.18} parent=80 // pred_region
          _
        $region85: #{discriminator_forward.18} parent=80 // pred_fallthru
          _
        %s486 = sand.u32 %s70, 1
        %s487 = sand.u32 %s70, 1
        %s488 = smul.addr %s487, 512
        %s489 = scalar_lea.vmem [#allocation4], %s488
        // Predicated region
        $region86: #{discriminator_forward.18} parent=80 // pred_check
          %p490 = pneg %p83
        $region87: #{discriminator_forward.18} parent=80 // pred_check_branch
          %492 = sbr.rel (%p490) target = $region89
        $region88: #{discriminator_forward.18} parent=80 // pred_region
          _
        $region89: #{discriminator_forward.18} parent=80 // pred_fallthru
          _
        %s493 = sand.u32 %s42, 1
        %s494 = sand.u32 %s42, 1
        %s495 = smul.addr %s494, 64
        %s496 = scalar_lea.vmem [#allocation3], %s495
        %p497 = pneg %p55
        %p498 = pneg %p52
        %s499 = sand.u32 %s70, 1
        %s500 = sand.u32 %s70, 1
        %s501 = smul.addr %s500, 512
        %s502 = scalar_lea.vmem [#allocation4], %s501
        %p503 = pneg %p83
        %p504 = pneg %p80
        %p505 = pneg %p111
        %p506 = pneg %p108
        %s507 = sand.u32 %s98, 1
        %s508 = sand.u32 %s98, 1
        %s509 = smul.addr %s508, 64
        %s510 = scalar_lea.vmem [#allocation5], %s509
        %s511 = smul.u32 4, %s18
        %s512 = smul.u32 4, %s20
        %s513 = smul.u32 64, %s20
        %s514 = smul.u32 2, %s19
        %s515 = smul.u32 4, %s18
        %s516 = smul.u32 2, %s19
        %p517 = scmp.eq.s32.totalorder %s20, 0
        // Predicated region
        $region90: #{discriminator_forward.18} parent=80 // pred_check
          %p518 = pneg %p517
        $region91: #{discriminator_forward.18} parent=80 // pred_check_branch
          %520 = sbr.rel (%p518) target = $region93
        $region92: #{discriminator_forward.18} parent=80 // pred_region
          %521 = vst [vmem:[#allocation2] sm:$0xff] 0.0
          %522 = vst [vmem:[#allocation2 + $0x8] sm:$0xff] 0.0
          %523 = vst [vmem:[#allocation2 + $0x10] sm:$0xff] 0.0
          %524 = vst [vmem:[#allocation2 + $0x18] sm:$0xff] 0.0
          %525 = vst [vmem:[#allocation2 + $0x20] sm:$0xff] 0.0
          %526 = vst [vmem:[#allocation2 + $0x28] sm:$0xff] 0.0
          %527 = vst [vmem:[#allocation2 + $0x30] sm:$0xff] 0.0
          %528 = vst [vmem:[#allocation2 + $0x38] sm:$0xff] 0.0
        $region93: #{discriminator_forward.18} parent=80 // pred_fallthru
          _
        %v529 = vld [vmem:[%s482] sm:$0xff]
        %v530 = vld [vmem:[%s482 + $0x8] sm:$0xff]
        %v531 = vld [vmem:[%s482 + $0x10] sm:$0xff]
        %v532 = vld [vmem:[%s482 + $0x18] sm:$0xff]
        %v533 = vld [vmem:[%s482 + $0x20] sm:$0xff]
        %v534 = vld [vmem:[%s482 + $0x28] sm:$0xff]
        %v535 = vld [vmem:[%s482 + $0x30] sm:$0xff]
        %v536 = vld [vmem:[%s482 + $0x38] sm:$0xff]
        %v537 = vld [vmem:[#allocation2] sm:$0xff]
        %v538 = vld [vmem:[#allocation2 + $0x8] sm:$0xff]
        %v539 = vld [vmem:[#allocation2 + $0x10] sm:$0xff]
        %v540 = vld [vmem:[#allocation2 + $0x18] sm:$0xff]
        %v541 = vld [vmem:[#allocation2 + $0x20] sm:$0xff]
        %v542 = vld [vmem:[#allocation2 + $0x28] sm:$0xff]
        %v543 = vld [vmem:[#allocation2 + $0x30] sm:$0xff]
        %v544 = vld [vmem:[#allocation2 + $0x38] sm:$0xff]
        %v545 = vld [vmem:[%s489] sm:$0xff]
        %v546 = vld [vmem:[%s489 + $0x8] sm:$0xff]
        %v547 = vld [vmem:[%s489 + $0x10] sm:$0xff]
        %v548 = vld [vmem:[%s489 + $0x18] sm:$0xff]
        %v549 = vld [vmem:[%s489 + $0x20] sm:$0xff]
        %v550 = vld [vmem:[%s489 + $0x28] sm:$0xff]
        %v551 = vld [vmem:[%s489 + $0x30] sm:$0xff]
        %v552 = vld [vmem:[%s489 + $0x38] sm:$0xff]
        %v553 = vld [vmem:[%s489 + $0x40] sm:$0xff]
        %v554 = vld [vmem:[%s489 + $0x48] sm:$0xff]
        %v555 = vld [vmem:[%s489 + $0x50] sm:$0xff]
        %v556 = vld [vmem:[%s489 + $0x58] sm:$0xff]
        %v557 = vld [vmem:[%s489 + $0x60] sm:$0xff]
        %v558 = vld [vmem:[%s489 + $0x68] sm:$0xff]
        %v559 = vld [vmem:[%s489 + $0x70] sm:$0xff]
        %v560 = vld [vmem:[%s489 + $0x78] sm:$0xff]
        %v561 = vld [vmem:[%s489 + $0x80] sm:$0xff]
        %v562 = vld [vmem:[%s489 + $0x88] sm:$0xff]
        %v563 = vld [vmem:[%s489 + $0x90] sm:$0xff]
        %v564 = vld [vmem:[%s489 + $0x98] sm:$0xff]
        %v565 = vld [vmem:[%s489 + $0xa0] sm:$0xff]
        %v566 = vld [vmem:[%s489 + $0xa8] sm:$0xff]
        %v567 = vld [vmem:[%s489 + $0xb0] sm:$0xff]
        %v568 = vld [vmem:[%s489 + $0xb8] sm:$0xff]
        %v569 = vld [vmem:[%s489 + $0xc0] sm:$0xff]
        %v570 = vld [vmem:[%s489 + $0xc8] sm:$0xff]
        %v571 = vld [vmem:[%s489 + $0xd0] sm:$0xff]
        %v572 = vld [vmem:[%s489 + $0xd8] sm:$0xff]
        %v573 = vld [vmem:[%s489 + $0xe0] sm:$0xff]
        %v574 = vld [vmem:[%s489 + $0xe8] sm:$0xff]
        %v575 = vld [vmem:[%s489 + $0xf0] sm:$0xff]
        %v576 = vld [vmem:[%s489 + $0xf8] sm:$0xff]
        %v577 = vld [vmem:[%s489 + $0x100] sm:$0xff]
        %v578 = vld [vmem:[%s489 + $0x108] sm:$0xff]
        %v579 = vld [vmem:[%s489 + $0x110] sm:$0xff]
        %v580 = vld [vmem:[%s489 + $0x118] sm:$0xff]
        %v581 = vld [vmem:[%s489 + $0x120] sm:$0xff]
        %v582 = vld [vmem:[%s489 + $0x128] sm:$0xff]
        %v583 = vld [vmem:[%s489 + $0x130] sm:$0xff]
        %v584 = vld [vmem:[%s489 + $0x138] sm:$0xff]
        %v585 = vld [vmem:[%s489 + $0x140] sm:$0xff]
        %v586 = vld [vmem:[%s489 + $0x148] sm:$0xff]
        %v587 = vld [vmem:[%s489 + $0x150] sm:$0xff]
        %v588 = vld [vmem:[%s489 + $0x158] sm:$0xff]
        %v589 = vld [vmem:[%s489 + $0x160] sm:$0xff]
        %v590 = vld [vmem:[%s489 + $0x168] sm:$0xff]
        %v591 = vld [vmem:[%s489 + $0x170] sm:$0xff]
        %v592 = vld [vmem:[%s489 + $0x178] sm:$0xff]
        %v593 = vld [vmem:[%s489 + $0x180] sm:$0xff]
        %v594 = vld [vmem:[%s489 + $0x188] sm:$0xff]
        %v595 = vld [vmem:[%s489 + $0x190] sm:$0xff]
        %v596 = vld [vmem:[%s489 + $0x198] sm:$0xff]
        %v597 = vld [vmem:[%s489 + $0x1a0] sm:$0xff]
        %v598 = vld [vmem:[%s489 + $0x1a8] sm:$0xff]
        %v599 = vld [vmem:[%s489 + $0x1b0] sm:$0xff]
        %v600 = vld [vmem:[%s489 + $0x1b8] sm:$0xff]
        %v601 = vld [vmem:[%s489 + $0x1c0] sm:$0xff]
        %v602 = vld [vmem:[%s489 + $0x1c8] sm:$0xff]
        %v603 = vld [vmem:[%s489 + $0x1d0] sm:$0xff]
        %v604 = vld [vmem:[%s489 + $0x1d8] sm:$0xff]
        %v605 = vld [vmem:[%s489 + $0x1e0] sm:$0xff]
        %v606 = vld [vmem:[%s489 + $0x1e8] sm:$0xff]
        %v607 = vld [vmem:[%s489 + $0x1f0] sm:$0xff]
        %v608 = vld [vmem:[%s489 + $0x1f8] sm:$0xff]
        %v617 = vunpack.c.l.b16 %v529
        %v618 = vunpack.c.h.b16 %v529
        %v619 = vunpack.c.l.b16 %v530
        %v620 = vunpack.c.h.b16 %v530
        %v621 = vunpack.c.l.b16 %v531
        %v622 = vunpack.c.h.b16 %v531
        %v623 = vunpack.c.l.b16 %v532
        %v624 = vunpack.c.h.b16 %v532
        %v625 = vunpack.c.l.b16 %v533
        %v626 = vunpack.c.h.b16 %v533
        %v627 = vunpack.c.l.b16 %v534
        %v628 = vunpack.c.h.b16 %v534
        %v629 = vunpack.c.l.b16 %v535
        %v630 = vunpack.c.h.b16 %v535
        %v631 = vunpack.c.l.b16 %v536
        %v632 = vunpack.c.h.b16 %v536
        %v633 = vpack.c.b16 %v621, %v617
        %v634 = vpack.c.b16 %v622, %v618
        %v635 = vpack.c.b16 %v623, %v619
        %v636 = vpack.c.b16 %v624, %v620
        %v637 = vpack.c.b16 %v629, %v625
        %v638 = vpack.c.b16 %v630, %v626
        %v639 = vpack.c.b16 %v631, %v627
        %v640 = vpack.c.b16 %v632, %v628
        %v713 = vunpack.c.l.b16 %v545
        %v714 = vunpack.c.h.b16 %v545
        %v715 = vunpack.c.l.b16 %v546
        %v716 = vunpack.c.h.b16 %v546
        %v717 = vunpack.c.l.b16 %v547
        %v718 = vunpack.c.h.b16 %v547
        %v719 = vunpack.c.l.b16 %v548
        %v720 = vunpack.c.h.b16 %v548
        %v721 = vunpack.c.l.b16 %v549
        %v722 = vunpack.c.h.b16 %v549
        %v723 = vunpack.c.l.b16 %v550
        %v724 = vunpack.c.h.b16 %v550
        %v725 = vunpack.c.l.b16 %v551
        %v726 = vunpack.c.h.b16 %v551
        %v727 = vunpack.c.l.b16 %v552
        %v728 = vunpack.c.h.b16 %v552
        %v729 = vunpack.c.l.b16 %v553
        %v730 = vunpack.c.h.b16 %v553
        %v731 = vunpack.c.l.b16 %v554
        %v732 = vunpack.c.h.b16 %v554
        %v733 = vunpack.c.l.b16 %v555
        %v734 = vunpack.c.h.b16 %v555
        %v735 = vunpack.c.l.b16 %v556
        %v736 = vunpack.c.h.b16 %v556
        %v737 = vunpack.c.l.b16 %v557
        %v738 = vunpack.c.h.b16 %v557
        %v739 = vunpack.c.l.b16 %v558
        %v740 = vunpack.c.h.b16 %v558
        %v741 = vunpack.c.l.b16 %v559
        %v742 = vunpack.c.h.b16 %v559
        %v743 = vunpack.c.l.b16 %v560
        %v744 = vunpack.c.h.b16 %v560
        %v745 = vunpack.c.l.b16 %v561
        %v746 = vunpack.c.h.b16 %v561
        %v747 = vunpack.c.l.b16 %v562
        %v748 = vunpack.c.h.b16 %v562
        %v749 = vunpack.c.l.b16 %v563
        %v750 = vunpack.c.h.b16 %v563
        %v751 = vunpack.c.l.b16 %v564
        %v752 = vunpack.c.h.b16 %v564
        %v753 = vunpack.c.l.b16 %v565
        %v754 = vunpack.c.h.b16 %v565
        %v755 = vunpack.c.l.b16 %v566
        %v756 = vunpack.c.h.b16 %v566
        %v757 = vunpack.c.l.b16 %v567
        %v758 = vunpack.c.h.b16 %v567
        %v759 = vunpack.c.l.b16 %v568
        %v760 = vunpack.c.h.b16 %v568
        %v761 = vunpack.c.l.b16 %v569
        %v762 = vunpack.c.h.b16 %v569
        %v763 = vunpack.c.l.b16 %v570
        %v764 = vunpack.c.h.b16 %v570
        %v765 = vunpack.c.l.b16 %v571
        %v766 = vunpack.c.h.b16 %v571
        %v767 = vunpack.c.l.b16 %v572
        %v768 = vunpack.c.h.b16 %v572
        %v769 = vunpack.c.l.b16 %v573
        %v770 = vunpack.c.h.b16 %v573
        %v771 = vunpack.c.l.b16 %v574
        %v772 = vunpack.c.h.b16 %v574
        %v773 = vunpack.c.l.b16 %v575
        %v774 = vunpack.c.h.b16 %v575
        %v775 = vunpack.c.l.b16 %v576
        %v776 = vunpack.c.h.b16 %v576
        %v777 = vunpack.c.l.b16 %v577
        %v778 = vunpack.c.h.b16 %v577
        %v779 = vunpack.c.l.b16 %v578
        %v780 = vunpack.c.h.b16 %v578
        %v781 = vunpack.c.l.b16 %v579
        %v782 = vunpack.c.h.b16 %v579
        %v783 = vunpack.c.l.b16 %v580
        %v784 = vunpack.c.h.b16 %v580
        %v785 = vunpack.c.l.b16 %v581
        %v786 = vunpack.c.h.b16 %v581
        %v787 = vunpack.c.l.b16 %v582
        %v788 = vunpack.c.h.b16 %v582
        %v789 = vunpack.c.l.b16 %v583
        %v790 = vunpack.c.h.b16 %v583
        %v791 = vunpack.c.l.b16 %v584
        %v792 = vunpack.c.h.b16 %v584
        %v793 = vunpack.c.l.b16 %v585
        %v794 = vunpack.c.h.b16 %v585
        %v795 = vunpack.c.l.b16 %v586
        %v796 = vunpack.c.h.b16 %v586
        %v797 = vunpack.c.l.b16 %v587
        %v798 = vunpack.c.h.b16 %v587
        %v799 = vunpack.c.l.b16 %v588
        %v800 = vunpack.c.h.b16 %v588
        %v801 = vunpack.c.l.b16 %v589
        %v802 = vunpack.c.h.b16 %v589
        %v803 = vunpack.c.l.b16 %v590
        %v804 = vunpack.c.h.b16 %v590
        %v805 = vunpack.c.l.b16 %v591
        %v806 = vunpack.c.h.b16 %v591
        %v807 = vunpack.c.l.b16 %v592
        %v808 = vunpack.c.h.b16 %v592
        %v809 = vunpack.c.l.b16 %v593
        %v810 = vunpack.c.h.b16 %v593
        %v811 = vunpack.c.l.b16 %v594
        %v812 = vunpack.c.h.b16 %v594
        %v813 = vunpack.c.l.b16 %v595
        %v814 = vunpack.c.h.b16 %v595
        %v815 = vunpack.c.l.b16 %v596
        %v816 = vunpack.c.h.b16 %v596
        %v817 = vunpack.c.l.b16 %v597
        %v818 = vunpack.c.h.b16 %v597
        %v819 = vunpack.c.l.b16 %v598
        %v820 = vunpack.c.h.b16 %v598
        %v821 = vunpack.c.l.b16 %v599
        %v822 = vunpack.c.h.b16 %v599
        %v823 = vunpack.c.l.b16 %v600
        %v824 = vunpack.c.h.b16 %v600
        %v825 = vunpack.c.l.b16 %v601
        %v826 = vunpack.c.h.b16 %v601
        %v827 = vunpack.c.l.b16 %v602
        %v828 = vunpack.c.h.b16 %v602
        %v829 = vunpack.c.l.b16 %v603
        %v830 = vunpack.c.h.b16 %v603
        %v831 = vunpack.c.l.b16 %v604
        %v832 = vunpack.c.h.b16 %v604
        %v833 = vunpack.c.l.b16 %v605
        %v834 = vunpack.c.h.b16 %v605
        %v835 = vunpack.c.l.b16 %v606
        %v836 = vunpack.c.h.b16 %v606
        %v837 = vunpack.c.l.b16 %v607
        %v838 = vunpack.c.h.b16 %v607
        %v839 = vunpack.c.l.b16 %v608
        %v840 = vunpack.c.h.b16 %v608
        %v841 = vpack.c.b16 %v715, %v713
        %v842 = vpack.c.b16 %v716, %v714
        %v843 = vpack.c.b16 %v719, %v717
        %v844 = vpack.c.b16 %v720, %v718
        %v845 = vpack.c.b16 %v723, %v721
        %v846 = vpack.c.b16 %v724, %v722
        %v847 = vpack.c.b16 %v727, %v725
        %v848 = vpack.c.b16 %v728, %v726
        %v849 = vpack.c.b16 %v731, %v729
        %v850 = vpack.c.b16 %v732, %v730
        %v851 = vpack.c.b16 %v735, %v733
        %v852 = vpack.c.b16 %v736, %v734
        %v853 = vpack.c.b16 %v739, %v737
        %v854 = vpack.c.b16 %v740, %v738
        %v855 = vpack.c.b16 %v743, %v741
        %v856 = vpack.c.b16 %v744, %v742
        %v857 = vpack.c.b16 %v747, %v745
        %v858 = vpack.c.b16 %v748, %v746
        %v859 = vpack.c.b16 %v751, %v749
        %v860 = vpack.c.b16 %v752, %v750
        %v861 = vpack.c.b16 %v755, %v753
        %v862 = vpack.c.b16 %v756, %v754
        %v863 = vpack.c.b16 %v759, %v757
        %v864 = vpack.c.b16 %v760, %v758
        %v865 = vpack.c.b16 %v763, %v761
        %v866 = vpack.c.b16 %v764, %v762
        %v867 = vpack.c.b16 %v767, %v765
        %v868 = vpack.c.b16 %v768, %v766
        %v869 = vpack.c.b16 %v771, %v769
        %v870 = vpack.c.b16 %v772, %v770
        %v871 = vpack.c.b16 %v775, %v773
        %v872 = vpack.c.b16 %v776, %v774
        %v873 = vpack.c.b16 %v779, %v777
        %v874 = vpack.c.b16 %v780, %v778
        %v875 = vpack.c.b16 %v783, %v781
        %v876 = vpack.c.b16 %v784, %v782
        %v877 = vpack.c.b16 %v787, %v785
        %v878 = vpack.c.b16 %v788, %v786
        %v879 = vpack.c.b16 %v791, %v789
        %v880 = vpack.c.b16 %v792, %v790
        %v881 = vpack.c.b16 %v795, %v793
        %v882 = vpack.c.b16 %v796, %v794
        %v883 = vpack.c.b16 %v799, %v797
        %v884 = vpack.c.b16 %v800, %v798
        %v885 = vpack.c.b16 %v803, %v801
        %v886 = vpack.c.b16 %v804, %v802
        %v887 = vpack.c.b16 %v807, %v805
        %v888 = vpack.c.b16 %v808, %v806
        %v889 = vpack.c.b16 %v811, %v809
        %v890 = vpack.c.b16 %v812, %v810
        %v891 = vpack.c.b16 %v815, %v813
        %v892 = vpack.c.b16 %v816, %v814
        %v893 = vpack.c.b16 %v819, %v817
        %v894 = vpack.c.b16 %v820, %v818
        %v895 = vpack.c.b16 %v823, %v821
        %v896 = vpack.c.b16 %v824, %v822
        %v897 = vpack.c.b16 %v827, %v825
        %v898 = vpack.c.b16 %v828, %v826
        %v899 = vpack.c.b16 %v831, %v829
        %v900 = vpack.c.b16 %v832, %v830
        %v901 = vpack.c.b16 %v835, %v833
        %v902 = vpack.c.b16 %v836, %v834
        %v903 = vpack.c.b16 %v839, %v837
        %v904 = vpack.c.b16 %v840, %v838
        %969 = vmatpush.bf16.msra.mxu0 %v855
        %970 = vmatpush.bf16.msra.mxu0 %v853
        %971 = vmatpush.bf16.msra.mxu0 %v851
        %972 = vmatpush.bf16.msra.mxu0 %v849
        %973 = vmatpush.bf16.msra.mxu0 %v847
        %974 = vmatpush.bf16.msra.mxu0 %v845
        %975 = vmatpush.bf16.msra.mxu0 %v843
        %976 = vmatpush.bf16.msra.mxu0 %v841
        %977 = vmatmul.bf16.gmra.mxu0 %v633
        %v978 = vpop.f32.mrf.mxu0
        %v979 = vadd.f32 0.0, %v978
        %v980 = vpop.f32.mrf.mxu0
        %v981 = vadd.f32 0.0, %v980
        %982 = vmatmul.bf16.gmra.mxu0 %v637
        %v983 = vpop.f32.mrf.mxu0
        %v984 = vadd.f32 0.0, %v983
        %v985 = vpop.f32.mrf.mxu0
        %v986 = vadd.f32 0.0, %v985
        %987 = vdwg.mxu0
        %988 = vmatpush.bf16.msra.mxu0 %v871
        %989 = vmatpush.bf16.msra.mxu0 %v869
        %990 = vmatpush.bf16.msra.mxu0 %v867
        %991 = vmatpush.bf16.msra.mxu0 %v865
        %992 = vmatpush.bf16.msra.mxu0 %v863
        %993 = vmatpush.bf16.msra.mxu0 %v861
        %994 = vmatpush.bf16.msra.mxu0 %v859
        %995 = vmatpush.bf16.msra.mxu0 %v857
        %996 = vmatmul.bf16.gmra.mxu0 %v634
        %v997 = vpop.f32.mrf.mxu0
        %v998 = vadd.f32 %v979, %v997
        %v999 = vpop.f32.mrf.mxu0
        %v1000 = vadd.f32 %v981, %v999
        %1001 = vmatmul.bf16.gmra.mxu0 %v638
        %v1002 = vpop.f32.mrf.mxu0
        %v1003 = vadd.f32 %v984, %v1002
        %v1004 = vpop.f32.mrf.mxu0
        %v1005 = vadd.f32 %v986, %v1004
        %1006 = vdwg.mxu0
        %1007 = vmatpush.bf16.msra.mxu0 %v887
        %1008 = vmatpush.bf16.msra.mxu0 %v885
        %1009 = vmatpush.bf16.msra.mxu0 %v883
        %1010 = vmatpush.bf16.msra.mxu0 %v881
        %1011 = vmatpush.bf16.msra.mxu0 %v879
        %1012 = vmatpush.bf16.msra.mxu0 %v877
        %1013 = vmatpush.bf16.msra.mxu0 %v875
        %1014 = vmatpush.bf16.msra.mxu0 %v873
        %1015 = vmatmul.bf16.gmra.mxu0 %v635
        %v1016 = vpop.f32.mrf.mxu0
        %v1017 = vadd.f32 %v998, %v1016
        %v1018 = vpop.f32.mrf.mxu0
        %v1019 = vadd.f32 %v1000, %v1018
        %1020 = vmatmul.bf16.gmra.mxu0 %v639
        %v1021 = vpop.f32.mrf.mxu0
        %v1022 = vadd.f32 %v1003, %v1021
        %v1023 = vpop.f32.mrf.mxu0
        %v1024 = vadd.f32 %v1005, %v1023
        %1025 = vdwg.mxu0
        %1026 = vmatpush.bf16.msra.mxu0 %v903
        %1027 = vmatpush.bf16.msra.mxu0 %v901
        %1028 = vmatpush.bf16.msra.mxu0 %v899
        %1029 = vmatpush.bf16.msra.mxu0 %v897
        %1030 = vmatpush.bf16.msra.mxu0 %v895
        %1031 = vmatpush.bf16.msra.mxu0 %v893
        %1032 = vmatpush.bf16.msra.mxu0 %v891
        %1033 = vmatpush.bf16.msra.mxu0 %v889
        %1034 = vmatmul.bf16.gmra.mxu0 %v636
        %v1035 = vpop.f32.mrf.mxu0
        %v1036 = vadd.f32 %v1017, %v1035
        %v1037 = vpop.f32.mrf.mxu0
        %v1038 = vadd.f32 %v1019, %v1037
        %1039 = vmatmul.bf16.gmra.mxu0 %v640
        %v1040 = vpop.f32.mrf.mxu0
        %v1041 = vadd.f32 %v1022, %v1040
        %v1042 = vpop.f32.mrf.mxu0
        %v1043 = vadd.f32 %v1024, %v1042
        %1044 = vdwg.mxu0
        %1045 = vmatpush.bf16.msra.mxu0 %v856
        %1046 = vmatpush.bf16.msra.mxu0 %v854
        %1047 = vmatpush.bf16.msra.mxu0 %v852
        %1048 = vmatpush.bf16.msra.mxu0 %v850
        %1049 = vmatpush.bf16.msra.mxu0 %v848
        %1050 = vmatpush.bf16.msra.mxu0 %v846
        %1051 = vmatpush.bf16.msra.mxu0 %v844
        %1052 = vmatpush.bf16.msra.mxu0 %v842
        %1053 = vmatmul.bf16.gmra.mxu0 %v633
        %v1054 = vpop.f32.mrf.mxu0
        %v1055 = vadd.f32 0.0, %v1054
        %v1056 = vpop.f32.mrf.mxu0
        %v1057 = vadd.f32 0.0, %v1056
        %1058 = vmatmul.bf16.gmra.mxu0 %v637
        %v1059 = vpop.f32.mrf.mxu0
        %v1060 = vadd.f32 0.0, %v1059
        %v1061 = vpop.f32.mrf.mxu0
        %v1062 = vadd.f32 0.0, %v1061
        %1063 = vdwg.mxu0
        %1064 = vmatpush.bf16.msra.mxu0 %v872
        %1065 = vmatpush.bf16.msra.mxu0 %v870
        %1066 = vmatpush.bf16.msra.mxu0 %v868
        %1067 = vmatpush.bf16.msra.mxu0 %v866
        %1068 = vmatpush.bf16.msra.mxu0 %v864
        %1069 = vmatpush.bf16.msra.mxu0 %v862
        %1070 = vmatpush.bf16.msra.mxu0 %v860
        %1071 = vmatpush.bf16.msra.mxu0 %v858
        %1072 = vmatmul.bf16.gmra.mxu0 %v634
        %v1073 = vpop.f32.mrf.mxu0
        %v1074 = vadd.f32 %v1055, %v1073
        %v1075 = vpop.f32.mrf.mxu0
        %v1076 = vadd.f32 %v1057, %v1075
        %1077 = vmatmul.bf16.gmra.mxu0 %v638
        %v1078 = vpop.f32.mrf.mxu0
        %v1079 = vadd.f32 %v1060, %v1078
        %v1080 = vpop.f32.mrf.mxu0
        %v1081 = vadd.f32 %v1062, %v1080
        %1082 = vdwg.mxu0
        %1083 = vmatpush.bf16.msra.mxu0 %v888
        %1084 = vmatpush.bf16.msra.mxu0 %v886
        %1085 = vmatpush.bf16.msra.mxu0 %v884
        %1086 = vmatpush.bf16.msra.mxu0 %v882
        %1087 = vmatpush.bf16.msra.mxu0 %v880
        %1088 = vmatpush.bf16.msra.mxu0 %v878
        %1089 = vmatpush.bf16.msra.mxu0 %v876
        %1090 = vmatpush.bf16.msra.mxu0 %v874
        %1091 = vmatmul.bf16.gmra.mxu0 %v635
        %v1092 = vpop.f32.mrf.mxu0
        %v1093 = vadd.f32 %v1074, %v1092
        %v1094 = vpop.f32.mrf.mxu0
        %v1095 = vadd.f32 %v1076, %v1094
        %1096 = vmatmul.bf16.gmra.mxu0 %v639
        %v1097 = vpop.f32.mrf.mxu0
        %v1098 = vadd.f32 %v1079, %v1097
        %v1099 = vpop.f32.mrf.mxu0
        %v1100 = vadd.f32 %v1081, %v1099
        %1101 = vdwg.mxu0
        %1102 = vmatpush.bf16.msra.mxu0 %v904
        %1103 = vmatpush.bf16.msra.mxu0 %v902
        %1104 = vmatpush.bf16.msra.mxu0 %v900
        %1105 = vmatpush.bf16.msra.mxu0 %v898
        %1106 = vmatpush.bf16.msra.mxu0 %v896
        %1107 = vmatpush.bf16.msra.mxu0 %v894
        %1108 = vmatpush.bf16.msra.mxu0 %v892
        %1109 = vmatpush.bf16.msra.mxu0 %v890
        %1110 = vmatmul.bf16.gmra.mxu0 %v636
        %v1111 = vpop.f32.mrf.mxu0
        %v1112 = vadd.f32 %v1093, %v1111
        %v1113 = vpop.f32.mrf.mxu0
        %v1114 = vadd.f32 %v1095, %v1113
        %1115 = vmatmul.bf16.gmra.mxu0 %v640
        %v1116 = vpop.f32.mrf.mxu0
        %v1117 = vadd.f32 %v1098, %v1116
        %v1118 = vpop.f32.mrf.mxu0
        %v1119 = vadd.f32 %v1100, %v1118
        %1120 = vdwg.mxu0
        %v1121 = vadd.f32 %v537, %v1036
        %v1122 = vadd.f32 %v538, %v1112
        %v1123 = vadd.f32 %v539, %v1038
        %v1124 = vadd.f32 %v540, %v1114
        %v1125 = vadd.f32 %v541, %v1041
        %v1126 = vadd.f32 %v542, %v1117
        %v1127 = vadd.f32 %v543, %v1043
        %v1128 = vadd.f32 %v544, %v1119
        %1129 = vst [vmem:[#allocation2] sm:$0xff] %v1121
        %1130 = vst [vmem:[#allocation2 + $0x8] sm:$0xff] %v1122
        %1131 = vst [vmem:[#allocation2 + $0x10] sm:$0xff] %v1123
        %1132 = vst [vmem:[#allocation2 + $0x18] sm:$0xff] %v1124
        %1133 = vst [vmem:[#allocation2 + $0x20] sm:$0xff] %v1125
        %1134 = vst [vmem:[#allocation2 + $0x28] sm:$0xff] %v1126
        %1135 = vst [vmem:[#allocation2 + $0x30] sm:$0xff] %v1127
        %1136 = vst [vmem:[#allocation2 + $0x38] sm:$0xff] %v1128
        %p1137 = scmp.eq.s32.totalorder %s20, 7
        // Predicated region
        $region94: #{discriminator_forward.18} parent=80 // pred_check
          %p1138 = pneg %p1137
        $region95: #{discriminator_forward.18} parent=80 // pred_check_branch
          %1140 = sbr.rel (%p1138) target = $region97
        $region96: #{discriminator_forward.18} parent=80 // pred_region
          %v1141 = vld [vmem:[#allocation2] sm:$0xff]
          %v1142 = vld [vmem:[#allocation2 + $0x8] sm:$0xff]
          %v1143 = vld [vmem:[#allocation2 + $0x10] sm:$0xff]
          %v1144 = vld [vmem:[#allocation2 + $0x18] sm:$0xff]
          %v1145 = vld [vmem:[#allocation2 + $0x20] sm:$0xff]
          %v1146 = vld [vmem:[#allocation2 + $0x28] sm:$0xff]
          %v1147 = vld [vmem:[#allocation2 + $0x30] sm:$0xff]
          %v1148 = vld [vmem:[#allocation2 + $0x38] sm:$0xff]
          %1149 = vst [vmem:[%s510] sm:$0xff] %v1141
          %1150 = vst [vmem:[%s510 + $0x8] sm:$0xff] %v1142
          %1151 = vst [vmem:[%s510 + $0x10] sm:$0xff] %v1143
          %1152 = vst [vmem:[%s510 + $0x18] sm:$0xff] %v1144
          %1153 = vst [vmem:[%s510 + $0x20] sm:$0xff] %v1145
          %1154 = vst [vmem:[%s510 + $0x28] sm:$0xff] %v1146
          %1155 = vst [vmem:[%s510 + $0x30] sm:$0xff] %v1147
          %1156 = vst [vmem:[%s510 + $0x38] sm:$0xff] %v1148
        $region97: #{discriminator_forward.18} parent=80 // pred_fallthru
          _
        %s1157 = sand.u32 %s98, 1
        %s1158 = sand.u32 %s98, 1
        %s1159 = smul.addr %s1158, 64
        %s1160 = scalar_lea.vmem [#allocation5], %s1159
        // Predicated region
        $region98: #{discriminator_forward.18} parent=80 // pred_check
          %p1161 = pneg %p108
        $region99: #{discriminator_forward.18} parent=80 // pred_check_branch
          %1163 = sbr.rel (%p1161) target = $region101
        $region100: #{discriminator_forward.18} parent=80 // pred_region
          %s1164 = smul.u32 4, %s18
          %s1165 = smul.u32 2, %s19
          %s1166 = smul.addr %s1164, 4
          %s1167 = sadd.s32 %s1165, %s1166
          %s1168 = smul.addr %s1167, 8
          %s1169 = scalar_lea.vmem %s2, %s1168
          // Predicated region
          $region102: #{discriminator_forward.18} parent=100 // pred_check
            _
          $region103: #{discriminator_forward.18} parent=100 // pred_check_branch
            %1171 = sbr.rel (0) target = $region105
          $region104: #{discriminator_forward.18} parent=100 // pred_region
            // Predicated region
            $region106: #{discriminator_forward.18} parent=104 // pred_check
              _
            $region107: #{discriminator_forward.18} parent=104 // pred_check_branch
              %1173 = sbr.rel (0) target = $region109
            $region108: #{discriminator_forward.18} parent=104 // pred_region
              loop: start=0, step=1, limit=1
              $region110: #{discriminator_forward.18} parent=108 // loop_pre_header
                _
              $region111: #{discriminator_forward.18} parent=108 // loop_header
                %s1175 = sphi 0, %s1179
                %p1176 = scmp.ge.s32.totalorder %s1175, 1
                %s1180 = sphi %s1160, %s1160
                %s1181 = sphi %s1169, %s1169
              $region112: #{discriminator_forward.18} parent=108 // loop_header_branch
                %1178 = sbr.rel (%p1176) target = $region116
              $region113: #{discriminator_forward.18} parent=108 // loop_body
                %v1182 = vld [vmem:[%s1180] sm:$0xff]
                %1183 = vst [vmem:[%s1181] sm:$0xff] %v1182
                %v1184 = vld [vmem:[%s1180 + $0x8] sm:$0xff]
                %1185 = vst [vmem:[%s1181 + $0x8] sm:$0xff] %v1184
                %v1186 = vld [vmem:[%s1180 + $0x10] sm:$0xff]
                %1187 = vst [vmem:[%s1181 + $0x20] sm:$0xff] %v1186
                %v1188 = vld [vmem:[%s1180 + $0x18] sm:$0xff]
                %1189 = vst [vmem:[%s1181 + $0x28] sm:$0xff] %v1188
                %v1190 = vld [vmem:[%s1180 + $0x20] sm:$0xff]
                %1191 = vst [vmem:[%s1181 + $0x40] sm:$0xff] %v1190
                %v1192 = vld [vmem:[%s1180 + $0x28] sm:$0xff]
                %1193 = vst [vmem:[%s1181 + $0x48] sm:$0xff] %v1192
                %v1194 = vld [vmem:[%s1180 + $0x30] sm:$0xff]
                %1195 = vst [vmem:[%s1181 + $0x60] sm:$0xff] %v1194
                %v1196 = vld [vmem:[%s1180 + $0x38] sm:$0xff]
                %1197 = vst [vmem:[%s1181 + $0x68] sm:$0xff] %v1196
              $region114: #{discriminator_forward.18} parent=108 // loop_footer
                %s1179 = sadd.s32 1, %s1175
              $region115: #{discriminator_forward.18} parent=108 // loop_footer_branch
                %1174 = sbr.rel target = $region111
              $region116: #{discriminator_forward.18} parent=108 // loop_exit
                _
            $region109: #{discriminator_forward.18} parent=104 // pred_fallthru
              _
            // Predicated region
            $region117: #{discriminator_forward.18} parent=104 // pred_check
              _
            $region118: #{discriminator_forward.18} parent=104 // pred_check_branch
              %1199 = sbr.rel target = $region120
            $region119: #{discriminator_forward.18} parent=104 // pred_region
              _
            $region120: #{discriminator_forward.18} parent=104 // pred_fallthru
              _
          $region105: #{discriminator_forward.18} parent=100 // pred_fallthru
            _
          %1200 = vnop
        $region101: #{discriminator_forward.18} parent=80 // pred_fallthru
          _
      $region81: #{discriminator_forward.18} parent=5 // pred_fallthru
        _
      %p1201 = scmp.le.s32.totalorder 2, %s8
      // Predicated region
      $region121: #{discriminator_forward.18} parent=5 // pred_check
        %p1202 = pneg %p1201
      $region122: #{discriminator_forward.18} parent=5 // pred_check_branch
        %1204 = sbr.rel (%p1202) target = $region124
      $region123: #{discriminator_forward.18} parent=5 // pred_region
        %s1205 = ssub.s32 %s8, 2
        // Predicated region
        $region125: #{discriminator_forward.18} parent=123 // pred_check
          %p1206 = pneg %p114
        $region126: #{discriminator_forward.18} parent=123 // pred_check_branch
          %1208 = sbr.rel (%p1206) target = $region128
        $region127: #{discriminator_forward.18} parent=123 // pred_region
          %s1209 = sand.u32 %s99, 1
          %s1210 = sand.u32 %s99, 1
          %s1211 = smul.addr %s1210, 64
          %s1212 = scalar_lea.vmem [#allocation5], %s1211
        $region128: #{discriminator_forward.18} parent=123 // pred_fallthru
          _
      $region124: #{discriminator_forward.18} parent=5 // pred_fallthru
        _
    $region6: #{discriminator_forward.18} parent=1 // loop_footer
      %s12 = sadd.s32 1, %s8
    $region7: #{discriminator_forward.18} parent=1 // loop_footer_branch
      %7 = sbr.rel target = $region3
    $region8: #{discriminator_forward.18} parent=1 // loop_exit
      _

// kernel: discriminator_forward.20
$region0: #{discriminator_forward.20}
  #allocation0 [shape = 'u32[]', space=smem, size = 0x4, offset = 0x4, fixed_abs, tag = 'smem constant byte address 0x4 - core index']
  #allocation1 [shape = 'u32[72,128]{1,0:T(1,128)}', space=vmem, size = 0x9000, scoped, tag = 'internal scratch']
  %s0 = inlined_call_operand.vmem [shape: f32[32,512], index: 0, kind: input, shape index: {}]
  %s1 = inlined_call_operand.vmem [shape: f32[8,512], index: 1, kind: input, shape index: {}]
  %s2 = inlined_call_operand.vmem [shape: f32[1,512], index: 2, kind: input, shape index: {}]
  %s3 = inlined_call_operand.vmem [shape: f32[1,512], index: 3, kind: input, shape index: {}]
  %s4 = inlined_call_operand.vmem [shape: f32[32,512], index: 4, kind: output, shape index: {}]
  %s5 = sld [smem:[#allocation0]]
  $region26: #{discriminator_forward.20} parent=0
    _
  %s7 = ssub.s32 1, %s5
  %s8 = scalar_select 0, %s7, %s5
  // Predicated region
  $region2: #{discriminator_forward.20} parent=0 // pred_check
    _
  $region3: #{discriminator_forward.20} parent=0 // pred_check_branch
    %10 = sbr.rel (0) target = $region5
  $region4: #{discriminator_forward.20} parent=0 // pred_region
    _
  $region5: #{discriminator_forward.20} parent=0 // pred_fallthru
    _
  // Predicated region
  $region6: #{discriminator_forward.20} parent=0 // pred_check
    _
  $region7: #{discriminator_forward.20} parent=0 // pred_check_branch
    %12 = sbr.rel (0) target = $region9
  $region8: #{discriminator_forward.20} parent=0 // pred_region
    _
  $region9: #{discriminator_forward.20} parent=0 // pred_fallthru
    _
  // Predicated region
  $region10: #{discriminator_forward.20} parent=0 // pred_check
    _
  $region11: #{discriminator_forward.20} parent=0 // pred_check_branch
    %14 = sbr.rel (0) target = $region13
  $region12: #{discriminator_forward.20} parent=0 // pred_region
    _
  $region13: #{discriminator_forward.20} parent=0 // pred_fallthru
    _
  // Predicated region
  $region14: #{discriminator_forward.20} parent=0 // pred_check
    _
  $region15: #{discriminator_forward.20} parent=0 // pred_check_branch
    %16 = sbr.rel (0) target = $region17
  $region16: #{discriminator_forward.20} parent=0 // pred_region
    _
  $region17: #{discriminator_forward.20} parent=0 // pred_fallthru
    _
  %v17 = vld [vmem:[%s0] sm:$0xff]
  %v18 = vld [vmem:[%s0 + $0x8] sm:$0xff]
  %v19 = vld [vmem:[%s0 + $0x10] sm:$0xff]
  %v20 = vld [vmem:[%s0 + $0x18] sm:$0xff]
  %v21 = vld [vmem:[%s0 + $0x20] sm:$0xff]
  %v22 = vld [vmem:[%s0 + $0x28] sm:$0xff]
  %v23 = vld [vmem:[%s0 + $0x30] sm:$0xff]
  %v24 = vld [vmem:[%s0 + $0x38] sm:$0xff]
  %v25 = vld [vmem:[%s0 + $0x40] sm:$0xff]
  %v26 = vld [vmem:[%s0 + $0x48] sm:$0xff]
  %v27 = vld [vmem:[%s0 + $0x50] sm:$0xff]
  %v28 = vld [vmem:[%s0 + $0x58] sm:$0xff]
  %v29 = vld [vmem:[%s0 + $0x60] sm:$0xff]
  %v30 = vld [vmem:[%s0 + $0x68] sm:$0xff]
  %v31 = vld [vmem:[%s0 + $0x70] sm:$0xff]
  %v32 = vld [vmem:[%s0 + $0x78] sm:$0xff]
  %v33 = vld [vmem:[%s1] ss:$8 sm:$0xf]
  %v34 = vmul.f32 %v33, 0.055555556
  %s35 = scalar_lea.vmem %s1, 1
  %v36 = vld [vmem:[%s35] ss:$8 sm:$0xf]
  %v37 = vmul.f32 %v36, 0.055555556
  %v38 = vmul.f32 %v34, %v34
  %v39 = vsub.f32 %v37, %v38
  %v40 = vadd.f32 %v39, 1e-05
  %v41 = vrsqrt.pop %v40
  %v42 = vmul.f32 %v41, %v40
  %v43 = vmul.f32 %v42, %v41
  %v44 = vmul.f32 0.5, %v43
  %v45 = vsub.f32 1.5, %v44
  %v46 = vmul.f32 %v41, %v45
  %vm47 = vweird.f32 %v40
  %vm48 = vweird.f32 %v41
  %vm49 = vmor %vm47, %vm48
  %v50 = vsel %vm49, %v41, %v46
  %v52 = vperm.slane %v34, 0
  %v53 = vperm.slane %v34, 1
  %v54 = vperm.slane %v34, 2
  %v55 = vperm.slane %v34, 3
  %v60 = vsub.f32 %v17, %v52
  %v61 = vsub.f32 %v18, %v53
  %v62 = vsub.f32 %v19, %v54
  %v63 = vsub.f32 %v20, %v55
  %v64 = vsub.f32 %v21, %v52
  %v65 = vsub.f32 %v22, %v53
  %v66 = vsub.f32 %v23, %v54
  %v67 = vsub.f32 %v24, %v55
  %v68 = vsub.f32 %v25, %v52
  %v69 = vsub.f32 %v26, %v53
  %v70 = vsub.f32 %v27, %v54
  %v71 = vsub.f32 %v28, %v55
  %v72 = vsub.f32 %v29, %v52
  %v73 = vsub.f32 %v30, %v53
  %v74 = vsub.f32 %v31, %v54
  %v75 = vsub.f32 %v32, %v55
  %v77 = vperm.slane %v50, 0
  %v78 = vperm.slane %v50, 1
  %v79 = vperm.slane %v50, 2
  %v80 = vperm.slane %v50, 3
  %v85 = vmul.f32 %v60, %v77
  %v86 = vmul.f32 %v61, %v78
  %v87 = vmul.f32 %v62, %v79
  %v88 = vmul.f32 %v63, %v80
  %v89 = vmul.f32 %v64, %v77
  %v90 = vmul.f32 %v65, %v78
  %v91 = vmul.f32 %v66, %v79
  %v92 = vmul.f32 %v67, %v80
  %v93 = vmul.f32 %v68, %v77
  %v94 = vmul.f32 %v69, %v78
  %v95 = vmul.f32 %v70, %v79
  %v96 = vmul.f32 %v71, %v80
  %v97 = vmul.f32 %v72, %v77
  %v98 = vmul.f32 %v73, %v78
  %v99 = vmul.f32 %v74, %v79
  %v100 = vmul.f32 %v75, %v80
  %v101 = vld [vmem:[%s2] sm:$0xf]
  %v103 = vperm.slane %v101, 0
  %v104 = vperm.slane %v101, 1
  %v105 = vperm.slane %v101, 2
  %v106 = vperm.slane %v101, 3
  %v111 = vmul.f32 %v85, %v103
  %v112 = vmul.f32 %v86, %v104
  %v113 = vmul.f32 %v87, %v105
  %v114 = vmul.f32 %v88, %v106
  %v115 = vmul.f32 %v89, %v103
  %v116 = vmul.f32 %v90, %v104
  %v117 = vmul.f32 %v91, %v105
  %v118 = vmul.f32 %v92, %v106
  %v119 = vmul.f32 %v93, %v103
  %v120 = vmul.f32 %v94, %v104
  %v121 = vmul.f32 %v95, %v105
  %v122 = vmul.f32 %v96, %v106
  %v123 = vmul.f32 %v97, %v103
  %v124 = vmul.f32 %v98, %v104
  %v125 = vmul.f32 %v99, %v105
  %v126 = vmul.f32 %v100, %v106
  %v127 = vld [vmem:[%s3] sm:$0xf]
  %v129 = vperm.slane %v127, 0
  %v130 = vperm.slane %v127, 1
  %v131 = vperm.slane %v127, 2
  %v132 = vperm.slane %v127, 3
  %v137 = vadd.f32 %v111, %v129
  %v138 = vadd.f32 %v112, %v130
  %v139 = vadd.f32 %v113, %v131
  %v140 = vadd.f32 %v114, %v132
  %v141 = vadd.f32 %v115, %v129
  %v142 = vadd.f32 %v116, %v130
  %v143 = vadd.f32 %v117, %v131
  %v144 = vadd.f32 %v118, %v132
  %v145 = vadd.f32 %v119, %v129
  %v146 = vadd.f32 %v120, %v130
  %v147 = vadd.f32 %v121, %v131
  %v148 = vadd.f32 %v122, %v132
  %v149 = vadd.f32 %v123, %v129
  %v150 = vadd.f32 %v124, %v130
  %v151 = vadd.f32 %v125, %v131
  %v152 = vadd.f32 %v126, %v132
  %vm153 = vcmp.gt.f32.partialorder %v137, 0.0
  %vm154 = vcmp.gt.f32.partialorder %v138, 0.0
  %vm155 = vcmp.gt.f32.partialorder %v139, 0.0
  %vm156 = vcmp.gt.f32.partialorder %v140, 0.0
  %vm157 = vcmp.gt.f32.partialorder %v141, 0.0
  %vm158 = vcmp.gt.f32.partialorder %v142, 0.0
  %vm159 = vcmp.gt.f32.partialorder %v143, 0.0
  %vm160 = vcmp.gt.f32.partialorder %v144, 0.0
  %vm161 = vcmp.gt.f32.partialorder %v145, 0.0
  %vm162 = vcmp.gt.f32.partialorder %v146, 0.0
  %vm163 = vcmp.gt.f32.partialorder %v147, 0.0
  %vm164 = vcmp.gt.f32.partialorder %v148, 0.0
  %vm165 = vcmp.gt.f32.partialorder %v149, 0.0
  %vm166 = vcmp.gt.f32.partialorder %v150, 0.0
  %vm167 = vcmp.gt.f32.partialorder %v151, 0.0
  %vm168 = vcmp.gt.f32.partialorder %v152, 0.0
  %v169 = vmul.f32 %v137, 0.2
  %v170 = vmul.f32 %v138, 0.2
  %v171 = vmul.f32 %v139, 0.2
  %v172 = vmul.f32 %v140, 0.2
  %v173 = vmul.f32 %v141, 0.2
  %v174 = vmul.f32 %v142, 0.2
  %v175 = vmul.f32 %v143, 0.2
  %v176 = vmul.f32 %v144, 0.2
  %v177 = vmul.f32 %v145, 0.2
  %v178 = vmul.f32 %v146, 0.2
  %v179 = vmul.f32 %v147, 0.2
  %v180 = vmul.f32 %v148, 0.2
  %v181 = vmul.f32 %v149, 0.2
  %v182 = vmul.f32 %v150, 0.2
  %v183 = vmul.f32 %v151, 0.2
  %v184 = vmul.f32 %v152, 0.2
  %v185 = vsel %vm153, %v137, %v169
  %v186 = vsel %vm154, %v138, %v170
  %v187 = vsel %vm155, %v139, %v171
  %v188 = vsel %vm156, %v140, %v172
  %v189 = vsel %vm157, %v141, %v173
  %v190 = vsel %vm158, %v142, %v174
  %v191 = vsel %vm159, %v143, %v175
  %v192 = vsel %vm160, %v144, %v176
  %v193 = vsel %vm161, %v145, %v177
  %v194 = vsel %vm162, %v146, %v178
  %v195 = vsel %vm163, %v147, %v179
  %v196 = vsel %vm164, %v148, %v180
  %v197 = vsel %vm165, %v149, %v181
  %v198 = vsel %vm166, %v150, %v182
  %v199 = vsel %vm167, %v151, %v183
  %v200 = vsel %vm168, %v152, %v184
  %201 = vst [vmem:[%s4] sm:$0xff] %v185
  %202 = vst [vmem:[%s4 + $0x8] sm:$0xff] %v186
  %203 = vst [vmem:[%s4 + $0x10] sm:$0xff] %v187
  %204 = vst [vmem:[%s4 + $0x18] sm:$0xff] %v188
  %205 = vst [vmem:[%s4 + $0x20] sm:$0xff] %v189
  %206 = vst [vmem:[%s4 + $0x28] sm:$0xff] %v190
  %207 = vst [vmem:[%s4 + $0x30] sm:$0xff] %v191
  %208 = vst [vmem:[%s4 + $0x38] sm:$0xff] %v192
  %209 = vst [vmem:[%s4 + $0x40] sm:$0xff] %v193
  %210 = vst [vmem:[%s4 + $0x48] sm:$0xff] %v194
  %211 = vst [vmem:[%s4 + $0x50] sm:$0xff] %v195
  %212 = vst [vmem:[%s4 + $0x58] sm:$0xff] %v196
  %213 = vst [vmem:[%s4 + $0x60] sm:$0xff] %v197
  %214 = vst [vmem:[%s4 + $0x68] sm:$0xff] %v198
  %215 = vst [vmem:[%s4 + $0x70] sm:$0xff] %v199
  %216 = vst [vmem:[%s4 + $0x78] sm:$0xff] %v200
  // Predicated region
  $region18: #{discriminator_forward.20} parent=0 // pred_check
    _
  $region19: #{discriminator_forward.20} parent=0 // pred_check_branch
    %218 = sbr.rel (0) target = $region21
  $region20: #{discriminator_forward.20} parent=0 // pred_region
    _
  $region21: #{discriminator_forward.20} parent=0 // pred_fallthru
    _
  // Predicated region
  $region22: #{discriminator_forward.20} parent=0 // pred_check
    _
  $region23: #{discriminator_forward.20} parent=0 // pred_check_branch
    %220 = sbr.rel (0) target = $region25
  $region24: #{discriminator_forward.20} parent=0 // pred_region
    _
  $region25: #{discriminator_forward.20} parent=0 // pred_fallthru
    _

// kernel: discriminator_forward.21
$region0: #{discriminator_forward.21}
  #allocation0 [shape = 'u32[]', space=smem, size = 0x4, offset = 0x4, fixed_abs, tag = 'smem constant byte address 0x4 - core index']
  #allocation1 [shape = 'u32[72,128]{1,0:T(1,128)}', space=vmem, size = 0x9000, scoped, tag = 'internal scratch']
  #allocation2 [shape = 'f32[16,128]{1,0:T(8,128)}', space=vmem, size = 0x2000, scoped, tag = 'scratch operand']
  %s0 = inlined_call_operand.vmem [shape: bf16[16,8192], index: 0, kind: input, shape index: {}]
  %s1 = inlined_call_operand.vmem [shape: bf16[8192,128], index: 1, kind: input, shape index: {}]
  %s2 = inlined_call_operand.vmem [shape: f32[16,128], index: 2, kind: output, shape index: {}]
  %s3 = sld [smem:[#allocation0]]
  $region72: #{discriminator_forward.21} parent=0
    _
  %s5 = ssub.s32 1, %s3
  %s6 = scalar_select 0, %s5, %s3
  $region1: #{discriminator_forward.21} parent=0
    #allocation3 [shape = 'u8[32768]{0}', space=vmem, size = 0x8000, scoped, tag = 'input window, operand 0']
    loop: start=0, step=1, limit=18
    $region2: #{discriminator_forward.21} parent=1 // loop_pre_header
      _
    $region3: #{discriminator_forward.21} parent=1 // loop_header
      %s8 = sphi 0, %s12
      %p9 = scmp.ge.s32.totalorder %s8, 18
      %s15 = sphi 0, %s34
      %s16 = sphi 0, %s30
      %s17 = sphi 0, %s26
      %s18 = sphi 0, %s15
      %s19 = sphi 0, %s16
      %s20 = sphi 0, %s17
      %s21 = sphi 0, %s18
      %s22 = sphi 0, %s19
      %s23 = sphi 0, %s20
      %s39 = sphi 0, %s41
      %s42 = sphi 0, %s39
      %s43 = sphi 0, %s42
      %s59 = sphi 0, %s43
      %s67 = sphi 0, %s69
      %s70 = sphi 0, %s67
      %s71 = sphi 0, %s70
      %s87 = sphi 0, %s71
      %s95 = sphi 0, %s97
      %s98 = sphi 0, %s95
      %s99 = sphi 0, %s98
      %s115 = sphi 0, %s99
    $region4: #{discriminator_forward.21} parent=1 // loop_header_branch
      %11 = sbr.rel (%p9) target = $region8
    $region5: #{discriminator_forward.21} parent=1 // loop_body
      %s13 = ssub.s32 %s8, 1
      %s14 = ssub.s32 %s8, 2
      %s24 = sadd.s32 1, %s17
      %p25 = scmp.ge.s32.totalorder %s24, 16
      %s26 = scalar_select %p25, 0, %s24
      %s27 = sadd.s32 1, %s16
      %s28 = scalar_select %p25, %s27, %s16
      %p29 = scmp.ge.s32.totalorder %s28, 1
      %s30 = scalar_select %p29, 0, %s28
      %s31 = sadd.s32 1, %s15
      %s32 = scalar_select %p29, %s31, %s15
      %p33 = scmp.ge.s32.totalorder %s32, 1
      %s34 = scalar_select %p33, 0, %s32
      %s35 = ssub.s32 %s15, %s34
      %s36 = ssub.s32 %s17, %s26
      %s37 = sor.u32 %s35, %s36
      %p38 = scmp.eq.s32.totalorder %s37, 0
      %s40 = sadd.s32 %s39, 1
      %s41 = scalar_select %p38, %s39, %s40
      %p44 = pneg %p38
      %p45 = scmp.eq.s32.totalorder %s8, 15
      %p46 = por %p44, %p45
      %p47 = scmp.ne.s32.totalorder %s39, %s42
      %p48 = scmp.eq.s32.totalorder %s8, 0
      %p49 = por %p47, %p48
      %p50 = scmp.ne.s32.totalorder %s39, %s42
      %p51 = scmp.eq.s32.totalorder %s13, 15
      %p52 = por %p50, %p51
      %p53 = scmp.ne.s32.totalorder %s42, %s43
      %p54 = scmp.eq.s32.totalorder %s13, 0
      %p55 = por %p53, %p54
      %p56 = scmp.ne.s32.totalorder %s42, %s43
      %p57 = scmp.eq.s32.totalorder %s14, 15
      %p58 = por %p56, %p57
      %p60 = scmp.ne.s32.totalorder %s43, %s59
      %p61 = scmp.eq.s32.totalorder %s14, 0
      %p62 = por %p60, %p61
      %s63 = ssub.s32 %s17, %s26
      %s64 = ssub.s32 %s16, %s30
      %s65 = sor.u32 %s63, %s64
      %p66 = scmp.eq.s32.totalorder %s65, 0
      %s68 = sadd.s32 %s67, 1
      %s69 = scalar_select %p66, %s67, %s68
      %p72 = pneg %p66
      %p73 = scmp.eq.s32.totalorder %s8, 15
      %p74 = por %p72, %p73
      %p75 = scmp.ne.s32.totalorder %s67, %s70
      %p76 = scmp.eq.s32.totalorder %s8, 0
      %p77 = por %p75, %p76
      %p78 = scmp.ne.s32.totalorder %s67, %s70
      %p79 = scmp.eq.s32.totalorder %s13, 15
      %p80 = por %p78, %p79
      %p81 = scmp.ne.s32.totalorder %s70, %s71
      %p82 = scmp.eq.s32.totalorder %s13, 0
      %p83 = por %p81, %p82
      %p84 = scmp.ne.s32.totalorder %s70, %s71
      %p85 = scmp.eq.s32.totalorder %s14, 15
      %p86 = por %p84, %p85
      %p88 = scmp.ne.s32.totalorder %s71, %s87
      %p89 = scmp.eq.s32.totalorder %s14, 0
      %p90 = por %p88, %p89
      %s91 = ssub.s32 %s15, %s34
      %s92 = ssub.s32 %s16, %s30
      %s93 = sor.u32 %s91, %s92
      %p94 = scmp.eq.s32.totalorder %s93, 0
      %s96 = sadd.s32 %s95, 1
      %s97 = scalar_select %p94, %s95, %s96
      %p100 = pneg %p94
      %p101 = scmp.eq.s32.totalorder %s8, 15
      %p102 = por %p100, %p101
      %p103 = scmp.ne.s32.totalorder %s95, %s98
      %p104 = scmp.eq.s32.totalorder %s8, 0
      %p105 = por %p103, %p104
      %p106 = scmp.ne.s32.totalorder %s95, %s98
      %p107 = scmp.eq.s32.totalorder %s13, 15
      %p108 = por %p106, %p107
      %p109 = scmp.ne.s32.totalorder %s98, %s99
      %p110 = scmp.eq.s32.totalorder %s13, 0
      %p111 = por %p109, %p110
      %p112 = scmp.ne.s32.totalorder %s98, %s99
      %p113 = scmp.eq.s32.totalorder %s14, 15
      %p114 = por %p112, %p113
      %p116 = scmp.ne.s32.totalorder %s99, %s115
      %p117 = scmp.eq.s32.totalorder %s14, 0
      %p118 = por %p116, %p117
      %p119 = scmp.le.s32.totalorder 1, %s8
      %p120 = scmp.lt.s32.totalorder %s8, 17
      %p121 = pnand %p119, %p120
      %p122 = pneg %p121
      // Predicated region
      $region9: #{discriminator_forward.21} parent=5 // pred_check
        _
      $region10: #{discriminator_forward.21} parent=5 // pred_check_branch
        %124 = sbr.rel (%p121) target = $region12
      $region11: #{discriminator_forward.21} parent=5 // pred_region
        %s125 = ssub.s32 %s8, 1
      $region12: #{discriminator_forward.21} parent=5 // pred_fallthru
        _
      %p126 = scmp.lt.s32.totalorder %s8, 16
      // Predicated region
      $region13: #{discriminator_forward.21} parent=5 // pred_check
        %p127 = pneg %p126
      $region14: #{discriminator_forward.21} parent=5 // pred_check_branch
        %129 = sbr.rel (%p127) target = $region16
      $region15: #{discriminator_forward.21} parent=5 // pred_region
        // Predicated region
        $region17: #{discriminator_forward.21} parent=15 // pred_check
          %p130 = pneg %p49
        $region18: #{discriminator_forward.21} parent=15 // pred_check_branch
          %132 = sbr.rel (%p130) target = $region20
        $region19: #{discriminator_forward.21} parent=15 // pred_region
          %s133 = sand.u32 %s39, 1
          %s134 = sand.u32 %s39, 1
          %s135 = smul.addr %s134, 32
          %s136 = scalar_lea.vmem [#allocation3], %s135
          %s137 = smul.u32 2, %s15
          %s138 = smul.u32 4, %s17
          %s139 = smul.addr %s137, 64
          %s140 = sadd.s32 %s138, %s139
          %s141 = smul.addr %s140, 4
          %s142 = scalar_lea.vmem %s0, %s141
          // Predicated region
          $region21: #{discriminator_forward.21} parent=19 // pred_check
            _
          $region22: #{discriminator_forward.21} parent=19 // pred_check_branch
            %144 = sbr.rel (0) target = $region24
          $region23: #{discriminator_forward.21} parent=19 // pred_region
            // Predicated region
            $region25: #{discriminator_forward.21} parent=23 // pred_check
              _
            $region26: #{discriminator_forward.21} parent=23 // pred_check_branch
              %146 = sbr.rel (0) target = $region28
            $region27: #{discriminator_forward.21} parent=23 // pred_region
              loop: start=0, step=1, limit=1
              $region29: #{discriminator_forward.21} parent=27 // loop_pre_header
                _
              $region30: #{discriminator_forward.21} parent=27 // loop_header
                %s148 = sphi 0, %s152
                %p149 = scmp.ge.s32.totalorder %s148, 1
                %s153 = sphi %s142, %s142
                %s154 = sphi %s136, %s136
              $region31: #{discriminator_forward.21} parent=27 // loop_header_branch
                %151 = sbr.rel (%p149) target = $region35
              $region32: #{discriminator_forward.21} parent=27 // loop_body
                %v155 = vld [vmem:[%s153] sm:$0xff]
                %156 = vst [vmem:[%s154] sm:$0xff] %v155
                %v157 = vld [vmem:[%s153 + $0x8] sm:$0xff]
                %158 = vst [vmem:[%s154 + $0x8] sm:$0xff] %v157
                %v159 = vld [vmem:[%s153 + $0x100] sm:$0xff]
                %160 = vst [vmem:[%s154 + $0x10] sm:$0xff] %v159
                %v161 = vld [vmem:[%s153 + $0x108] sm:$0xff]
                %162 = vst [vmem:[%s154 + $0x18] sm:$0xff] %v161
              $region33: #{discriminator_forward.21} parent=27 // loop_footer
                %s152 = sadd.s32 1, %s148
              $region34: #{discriminator_forward.21} parent=27 // loop_footer_branch
                %147 = sbr.rel target = $region30
              $region35: #{discriminator_forward.21} parent=27 // loop_exit
                _
            $region28: #{discriminator_forward.21} parent=23 // pred_fallthru
              _
            // Predicated region
            $region36: #{discriminator_forward.21} parent=23 // pred_check
              _
            $region37: #{discriminator_forward.21} parent=23 // pred_check_branch
              %164 = sbr.rel target = $region39
            $region38: #{discriminator_forward.21} parent=23 // pred_region
              _
            $region39: #{discriminator_forward.21} parent=23 // pred_fallthru
              _
          $region24: #{discriminator_forward.21} parent=19 // pred_fallthru
            _
          %165 = vnop
        $region20: #{discriminator_forward.21} parent=15 // pred_fallthru
          _
        // Predicated region
        $region40: #{discriminator_forward.21} parent=15 // pred_check
          %p166 = pneg %p77
        $region41: #{discriminator_forward.21} parent=15 // pred_check_branch
          %168 = sbr.rel (%p166) target = $region43
        $region42: #{discriminator_forward.21} parent=15 // pred_region
          %s169 = smul.u32 64, %s17
          %p170 = scmp.lt.s32.totalorder %s169, 1023
          %s171 = scalar_select %p170, %s169, 1023
          %p172 = scmp.lt.s32.totalorder %s16, 0
          %s173 = scalar_select %p172, %s16, 0
          %s174 = sadd.s32 %s173, %s171
          %s175 = smul.addr %s174, 4
          %s176 = scalar_lea.vmem %s1, %s175
          %s177 = smul.u32 64, %s17
        $region43: #{discriminator_forward.21} parent=15 // pred_fallthru
          _
      $region16: #{discriminator_forward.21} parent=5 // pred_fallthru
        _
      %p178 = scmp.le.s32.totalorder 1, %s8
      %p179 = scmp.lt.s32.totalorder %s8, 17
      %p180 = pnand %p178, %p179
      %p181 = pneg %p180
      // Predicated region
      $region44: #{discriminator_forward.21} parent=5 // pred_check
        _
      $region45: #{discriminator_forward.21} parent=5 // pred_check_branch
        %183 = sbr.rel (%p180) target = $region47
      $region46: #{discriminator_forward.21} parent=5 // pred_region
        %s184 = ssub.s32 %s8, 1
        %s185 = sand.u32 %s42, 1
        %s186 = sand.u32 %s42, 1
        %s187 = smul.addr %s186, 32
        %s188 = scalar_lea.vmem [#allocation3], %s187
        // Predicated region
        $region48: #{discriminator_forward.21} parent=46 // pred_check
          %p189 = pneg %p55
        $region49: #{discriminator_forward.21} parent=46 // pred_check_branch
          %191 = sbr.rel (%p189) target = $region51
        $region50: #{discriminator_forward.21} parent=46 // pred_region
          _
        $region51: #{discriminator_forward.21} parent=46 // pred_fallthru
          _
        %s192 = sand.u32 %s42, 1
        %s193 = sand.u32 %s42, 1
        %s194 = smul.addr %s193, 32
        %s195 = scalar_lea.vmem [#allocation3], %s194
        %p196 = pneg %p55
        %p197 = pneg %p52
        %s198 = smul.u32 64, %s20
        %p199 = scmp.lt.s32.totalorder %s198, 1023
        %s200 = scalar_select %p199, %s198, 1023
        %p201 = scmp.lt.s32.totalorder %s19, 0
        %s202 = scalar_select %p201, %s19, 0
        %s203 = sadd.s32 %s202, %s200
        %s204 = smul.addr %s203, 4
        %s205 = scalar_lea.vmem %s1, %s204
        %p206 = pneg %p83
        %p207 = pneg %p80
        %p208 = pneg %p111
        %p209 = pneg %p108
        %s210 = smul.u32 2, %s18
        %p211 = scmp.lt.s32.totalorder %s210, 1
        %s212 = scalar_select %p211, %s210, 1
        %p213 = scmp.lt.s32.totalorder %s19, 0
        %s214 = scalar_select %p213, %s19, 0
        %s215 = sadd.s32 %s214, %s212
        %s216 = smul.addr %s215, 8
        %s217 = scalar_lea.vmem %s2, %s216
        %s218 = smul.u32 2, %s18
        %s219 = smul.u32 4, %s20
        %s220 = smul.u32 64, %s20
        %p221 = scmp.lt.s32.totalorder %s220, 1023
        %s222 = scalar_select %p221, %s220, 1023
        %p223 = scmp.lt.s32.totalorder %s19, 0
        %s224 = scalar_select %p223, %s19, 0
        %s225 = sadd.s32 %s224, %s222
        %s226 = smul.addr %s225, 4
        %s227 = scalar_lea.vmem %s1, %s226
        %s228 = smul.u32 64, %s20
        %s229 = smul.u32 2, %s18
        %p230 = scmp.lt.s32.totalorder %s229, 1
        %s231 = scalar_select %p230, %s229, 1
        %p232 = scmp.lt.s32.totalorder %s19, 0
        %s233 = scalar_select %p232, %s19, 0
        %s234 = sadd.s32 %s233, %s231
        %s235 = smul.addr %s234, 8
        %s236 = scalar_lea.vmem %s2, %s235
        %s237 = smul.u32 2, %s18
        %p238 = scmp.eq.s32.totalorder %s20, 0
        // Predicated region
        $region52: #{discriminator_forward.21} parent=46 // pred_check
          %p239 = pneg %p238
        $region53: #{discriminator_forward.21} parent=46 // pred_check_branch
          %241 = sbr.rel (%p239) target = $region55
        $region54: #{discriminator_forward.21} parent=46 // pred_region
          %242 = vst [vmem:[#allocation2] sm:$0xff] 0.0
          %243 = vst [vmem:[#allocation2 + $0x8] sm:$0xff] 0.0
        $region55: #{discriminator_forward.21} parent=46 // pred_fallthru
          _
        %v244 = vld [vmem:[%s188] sm:$0xff]
        %v245 = vld [vmem:[%s188 + $0x8] sm:$0xff]
        %v246 = vld [vmem:[%s188 + $0x10] sm:$0xff]
        %v247 = vld [vmem:[%s188 + $0x18] sm:$0xff]
        %v248 = vld [vmem:[#allocation2] sm:$0xff]
        %v249 = vld [vmem:[#allocation2 + $0x8] sm:$0xff]
        %v250 = vld [vmem:[%s227] sm:$0xf]
        %v251 = vld [vmem:[%s227 + $0x4] sm:$0xf]
        %v252 = vld [vmem:[%s227 + $0x8] sm:$0xf]
        %v253 = vld [vmem:[%s227 + $0xc] sm:$0xf]
        %v254 = vld [vmem:[%s227 + $0x10] sm:$0xf]
        %v255 = vld [vmem:[%s227 + $0x14] sm:$0xf]
        %v256 = vld [vmem:[%s227 + $0x18] sm:$0xf]
        %v257 = vld [vmem:[%s227 + $0x1c] sm:$0xf]
        %v258 = vld [vmem:[%s227 + $0x20] sm:$0xf]
        %v259 = vld [vmem:[%s227 + $0x24] sm:$0xf]
        %v260 = vld [vmem:[%s227 + $0x28] sm:$0xf]
        %v261 = vld [vmem:[%s227 + $0x2c] sm:$0xf]
        %v262 = vld [vmem:[%s227 + $0x30] sm:$0xf]
        %v263 = vld [vmem:[%s227 + $0x34] sm:$0xf]
        %v264 = vld [vmem:[%s227 + $0x38] sm:$0xf]
        %v265 = vld [vmem:[%s227 + $0x3c] sm:$0xf]
        %v266 = vld [vmem:[%s227 + $0x40] sm:$0xf]
        %v267 = vld [vmem:[%s227 + $0x44] sm:$0xf]
        %v268 = vld [vmem:[%s227 + $0x48] sm:$0xf]
        %v269 = vld [vmem:[%s227 + $0x4c] sm:$0xf]
        %v270 = vld [vmem:[%s227 + $0x50] sm:$0xf]
        %v271 = vld [vmem:[%s227 + $0x54] sm:$0xf]
        %v272 = vld [vmem:[%s227 + $0x58] sm:$0xf]
        %v273 = vld [vmem:[%s227 + $0x5c] sm:$0xf]
        %v274 = vld [vmem:[%s227 + $0x60] sm:$0xf]
        %v275 = vld [vmem:[%s227 + $0x64] sm:$0xf]
        %v276 = vld [vmem:[%s227 + $0x68] sm:$0xf]
        %v277 = vld [vmem:[%s227 + $0x6c] sm:$0xf]
        %v278 = vld [vmem:[%s227 + $0x70] sm:$0xf]
        %v279 = vld [vmem:[%s227 + $0x74] sm:$0xf]
        %v280 = vld [vmem:[%s227 + $0x78] sm:$0xf]
        %v281 = vld [vmem:[%s227 + $0x7c] sm:$0xf]
        %v282 = vld [vmem:[%s227 + $0x80] sm:$0xf]
        %v283 = vld [vmem:[%s227 + $0x84] sm:$0xf]
        %v284 = vld [vmem:[%s227 + $0x88] sm:$0xf]
        %v285 = vld [vmem:[%s227 + $0x8c] sm:$0xf]
        %v286 = vld [vmem:[%s227 + $0x90] sm:$0xf]
        %v287 = vld [vmem:[%s227 + $0x94] sm:$0xf]
        %v288 = vld [vmem:[%s227 + $0x98] sm:$0xf]
        %v289 = vld [vmem:[%s227 + $0x9c] sm:$0xf]
        %v290 = vld [vmem:[%s227 + $0xa0] sm:$0xf]
        %v291 = vld [vmem:[%s227 + $0xa4] sm:$0xf]
        %v292 = vld [vmem:[%s227 + $0xa8] sm:$0xf]
        %v293 = vld [vmem:[%s227 + $0xac] sm:$0xf]
        %v294 = vld [vmem:[%s227 + $0xb0] sm:$0xf]
        %v295 = vld [vmem:[%s227 + $0xb4] sm:$0xf]
        %v296 = vld [vmem:[%s227 + $0xb8] sm:$0xf]
        %v297 = vld [vmem:[%s227 + $0xbc] sm:$0xf]
        %v298 = vld [vmem:[%s227 + $0xc0] sm:$0xf]
        %v299 = vld [vmem:[%s227 + $0xc4] sm:$0xf]
        %v300 = vld [vmem:[%s227 + $0xc8] sm:$0xf]
        %v301 = vld [vmem:[%s227 + $0xcc] sm:$0xf]
        %v302 = vld [vmem:[%s227 + $0xd0] sm:$0xf]
        %v303 = vld [vmem:[%s227 + $0xd4] sm:$0xf]
        %v304 = vld [vmem:[%s227 + $0xd8] sm:$0xf]
        %v305 = vld [vmem:[%s227 + $0xdc] sm:$0xf]
        %v306 = vld [vmem:[%s227 + $0xe0] sm:$0xf]
        %v307 = vld [vmem:[%s227 + $0xe4] sm:$0xf]
        %v308 = vld [vmem:[%s227 + $0xe8] sm:$0xf]
        %v309 = vld [vmem:[%s227 + $0xec] sm:$0xf]
        %v310 = vld [vmem:[%s227 + $0xf0] sm:$0xf]
        %v311 = vld [vmem:[%s227 + $0xf4] sm:$0xf]
        %v312 = vld [vmem:[%s227 + $0xf8] sm:$0xf]
        %v313 = vld [vmem:[%s227 + $0xfc] sm:$0xf]
        %v318 = vunpack.c.l.b16 %v244
        %v319 = vunpack.c.h.b16 %v244
        %v320 = vunpack.c.l.b16 %v245
        %v321 = vunpack.c.h.b16 %v245
        %v322 = vunpack.c.l.b16 %v246
        %v323 = vunpack.c.h.b16 %v246
        %v324 = vunpack.c.l.b16 %v247
        %v325 = vunpack.c.h.b16 %v247
        %v326 = vpack.c.b16 %v322, %v318
        %v327 = vpack.c.b16 %v323, %v319
        %v328 = vpack.c.b16 %v324, %v320
        %v329 = vpack.c.b16 %v325, %v321
        %v398 = vunpack.c.l.b16 %v250
        %v399 = vunpack.c.l.b16 %v251
        %v400 = vunpack.c.l.b16 %v252
        %v401 = vunpack.c.l.b16 %v253
        %v402 = vunpack.c.l.b16 %v254
        %v403 = vunpack.c.l.b16 %v255
        %v404 = vunpack.c.l.b16 %v256
        %v405 = vunpack.c.l.b16 %v257
        %v406 = vunpack.c.l.b16 %v258
        %v407 = vunpack.c.l.b16 %v259
        %v408 = vunpack.c.l.b16 %v260
        %v409 = vunpack.c.l.b16 %v261
        %v410 = vunpack.c.l.b16 %v262
        %v411 = vunpack.c.l.b16 %v263
        %v412 = vunpack.c.l.b16 %v264
        %v413 = vunpack.c.l.b16 %v265
        %v414 = vunpack.c.l.b16 %v266
        %v415 = vunpack.c.l.b16 %v267
        %v416 = vunpack.c.l.b16 %v268
        %v417 = vunpack.c.l.b16 %v269
        %v418 = vunpack.c.l.b16 %v270
        %v419 = vunpack.c.l.b16 %v271
        %v420 = vunpack.c.l.b16 %v272
        %v421 = vunpack.c.l.b16 %v273
        %v422 = vunpack.c.l.b16 %v274
        %v423 = vunpack.c.l.b16 %v275
        %v424 = vunpack.c.l.b16 %v276
        %v425 = vunpack.c.l.b16 %v277
        %v426 = vunpack.c.l.b16 %v278
        %v427 = vunpack.c.l.b16 %v279
        %v428 = vunpack.c.l.b16 %v280
        %v429 = vunpack.c.l.b16 %v281
        %v430 = vunpack.c.l.b16 %v282
        %v431 = vunpack.c.l.b16 %v283
        %v432 = vunpack.c.l.b16 %v284
        %v433 = vunpack.c.l.b16 %v285
        %v434 = vunpack.c.l.b16 %v286
        %v435 = vunpack.c.l.b16 %v287
        %v436 = vunpack.c.l.b16 %v288
        %v437 = vunpack.c.l.b16 %v289
        %v438 = vunpack.c.l.b16 %v290
        %v439 = vunpack.c.l.b16 %v291
        %v440 = vunpack.c.l.b16 %v292
        %v441 = vunpack.c.l.b16 %v293
        %v442 = vunpack.c.l.b16 %v294
        %v443 = vunpack.c.l.b16 %v295
        %v444 = vunpack.c.l.b16 %v296
        %v445 = vunpack.c.l.b16 %v297
        %v446 = vunpack.c.l.b16 %v298
        %v447 = vunpack.c.l.b16 %v299
        %v448 = vunpack.c.l.b16 %v300
        %v449 = vunpack.c.l.b16 %v301
        %v450 = vunpack.c.l.b16 %v302
        %v451 = vunpack.c.l.b16 %v303
        %v452 = vunpack.c.l.b16 %v304
        %v453 = vunpack.c.l.b16 %v305
        %v454 = vunpack.c.l.b16 %v306
        %v455 = vunpack.c.l.b16 %v307
        %v456 = vunpack.c.l.b16 %v308
        %v457 = vunpack.c.l.b16 %v309
        %v458 = vunpack.c.l.b16 %v310
        %v459 = vunpack.c.l.b16 %v311
        %v460 = vunpack.c.l.b16 %v312
        %v461 = vunpack.c.l.b16 %v313
        %v462 = vpack.c.b16 %v399, %v398
        %v463 = vpack.c.b16 %v401, %v400
        %v464 = vpack.c.b16 %v403, %v402
        %v465 = vpack.c.b16 %v405, %v404
        %v466 = vpack.c.b16 %v407, %v406
        %v467 = vpack.c.b16 %v409, %v408
        %v468 = vpack.c.b16 %v411, %v410
        %v469 = vpack.c.b16 %v413, %v412
        %v470 = vpack.c.b16 %v415, %v414
        %v471 = vpack.c.b16 %v417, %v416
        %v472 = vpack.c.b16 %v419, %v418
        %v473 = vpack.c.b16 %v421, %v420
        %v474 = vpack.c.b16 %v423, %v422
        %v475 = vpack.c.b16 %v425, %v424
        %v476 = vpack.c.b16 %v427, %v426
        %v477 = vpack.c.b16 %v429, %v428
        %v478 = vpack.c.b16 %v431, %v430
        %v479 = vpack.c.b16 %v433, %v432
        %v480 = vpack.c.b16 %v435, %v434
        %v481 = vpack.c.b16 %v437, %v436
        %v482 = vpack.c.b16 %v439, %v438
        %v483 = vpack.c.b16 %v441, %v440
        %v484 = vpack.c.b16 %v443, %v442
        %v485 = vpack.c.b16 %v445, %v444
        %v486 = vpack.c.b16 %v447, %v446
        %v487 = vpack.c.b16 %v449, %v448
        %v488 = vpack.c.b16 %v451, %v450
        %v489 = vpack.c.b16 %v453, %v452
        %v490 = vpack.c.b16 %v455, %v454
        %v491 = vpack.c.b16 %v457, %v456
        %v492 = vpack.c.b16 %v459, %v458
        %v493 = vpack.c.b16 %v461, %v460
        %526 = vmatpush.bf16.msra.mxu0 %v469
        %527 = vmatpush.bf16.msra.mxu0 %v468
        %528 = vmatpush.bf16.msra.mxu0 %v467
        %529 = vmatpush.bf16.msra.mxu0 %v466
        %530 = vmatpush.bf16.msra.mxu0 %v465
        %531 = vmatpush.bf16.msra.mxu0 %v464
        %532 = vmatpush.bf16.msra.mxu0 %v463
        %533 = vmatpush.bf16.msra.mxu0 %v462
        %534 = vmatmul.bf16.gmra.mxu0 %v326
        %v535 = vpop.f32.mrf.mxu0
        %v536 = vadd.f32 0.0, %v535
        %v537 = vpop.f32.mrf.mxu0
        %v538 = vadd.f32 0.0, %v537
        %539 = vdwg.mxu0
        %540 = vmatpush.bf16.msra.mxu0 %v477
        %541 = vmatpush.bf16.msra.mxu0 %v476
        %542 = vmatpush.bf16.msra.mxu0 %v475
        %543 = vmatpush.bf16.msra.mxu0 %v474
        %544 = vmatpush.bf16.msra.mxu0 %v473
        %545 = vmatpush.bf16.msra.mxu0 %v472
        %546 = vmatpush.bf16.msra.mxu0 %v471
        %547 = vmatpush.bf16.msra.mxu0 %v470
        %548 = vmatmul.bf16.gmra.mxu0 %v327
        %v549 = vpop.f32.mrf.mxu0
        %v550 = vadd.f32 %v536, %v549
        %v551 = vpop.f32.mrf.mxu0
        %v552 = vadd.f32 %v538, %v551
        %553 = vdwg.mxu0
        %554 = vmatpush.bf16.msra.mxu0 %v485
        %555 = vmatpush.bf16.msra.mxu0 %v484
        %556 = vmatpush.bf16.msra.mxu0 %v483
        %557 = vmatpush.bf16.msra.mxu0 %v482
        %558 = vmatpush.bf16.msra.mxu0 %v481
        %559 = vmatpush.bf16.msra.mxu0 %v480
        %560 = vmatpush.bf16.msra.mxu0 %v479
        %561 = vmatpush.bf16.msra.mxu0 %v478
        %562 = vmatmul.bf16.gmra.mxu0 %v328
        %v563 = vpop.f32.mrf.mxu0
        %v564 = vadd.f32 %v550, %v563
        %v565 = vpop.f32.mrf.mxu0
        %v566 = vadd.f32 %v552, %v565
        %567 = vdwg.mxu0
        %568 = vmatpush.bf16.msra.mxu0 %v493
        %569 = vmatpush.bf16.msra.mxu0 %v492
        %570 = vmatpush.bf16.msra.mxu0 %v491
        %571 = vmatpush.bf16.msra.mxu0 %v490
        %572 = vmatpush.bf16.msra.mxu0 %v489
        %573 = vmatpush.bf16.msra.mxu0 %v488
        %574 = vmatpush.bf16.msra.mxu0 %v487
        %575 = vmatpush.bf16.msra.mxu0 %v486
        %576 = vmatmul.bf16.gmra.mxu0 %v329
        %v577 = vpop.f32.mrf.mxu0
        %v578 = vadd.f32 %v564, %v577
        %v579 = vpop.f32.mrf.mxu0
        %v580 = vadd.f32 %v566, %v579
        %581 = vdwg.mxu0
        %v582 = vadd.f32 %v248, %v578
        %v583 = vadd.f32 %v249, %v580
        %584 = vst [vmem:[#allocation2] sm:$0xff] %v582
        %585 = vst [vmem:[#allocation2 + $0x8] sm:$0xff] %v583
        %p586 = scmp.eq.s32.totalorder %s20, 15
        // Predicated region
        $region56: #{discriminator_forward.21} parent=46 // pred_check
          %p587 = pneg %p586
        $region57: #{discriminator_forward.21} parent=46 // pred_check_branch
          %589 = sbr.rel (%p587) target = $region59
        $region58: #{discriminator_forward.21} parent=46 // pred_region
          %v590 = vld [vmem:[#allocation2] sm:$0xff]
          %v591 = vld [vmem:[#allocation2 + $0x8] sm:$0xff]
          %v592 = vxor.u32 %v590, 2147483648
          %v593 = vxor.u32 %v591, 2147483648
          %v594 = vmul.f32 %v592, 1.442695
          %v595 = vpow.pop %v594
          %v596 = vmul.f32 %v593, 1.442695
          %v597 = vpow.pop %v596
          %v598 = vadd.f32 %v595, 1.0
          %v599 = vadd.f32 %v597, 1.0
          %v600 = vrcp.pop %v598
          %v601 = vmul.f32 %v598, %v600
          %v602 = vsub.f32 1.0, %v601
          %v603 = vmul.f32 %v600, %v602
          %v604 = vadd.f32 %v600, %v603
          %vm605 = vweird.f32 %v598
          %vm606 = vweird.f32 %v600
          %vm607 = vmor %vm605, %vm606
          %v608 = vsel %vm607, %v600, %v604
          %v609 = vand.u32 2147483647, %v598
          %vm610 = vcmp.eq.f32.partialorder %v609, 8.507059e+37
          %v611 = vand.u32 %v598, 2147483648
          %v612 = vor.u32 1.1754944e-38, %v611
          %v613 = vsel %vm610, %v612, %v608
          %v614 = vmul.f32 1.0, %v613
          %v615 = vrcp.pop %v599
          %v616 = vmul.f32 %v599, %v615
          %v617 = vsub.f32 1.0, %v616
          %v618 = vmul.f32 %v615, %v617
          %v619 = vadd.f32 %v615, %v618
          %vm620 = vweird.f32 %v599
          %vm621 = vweird.f32 %v615
          %vm622 = vmor %vm620, %vm621
          %v623 = vsel %vm622, %v615, %v619
          %v624 = vand.u32 2147483647, %v599
          %vm625 = vcmp.eq.f32.partialorder %v624, 8.507059e+37
          %v626 = vand.u32 %v599, 2147483648
          %v627 = vor.u32 1.1754944e-38, %v626
          %v628 = vsel %vm625, %v627, %v623
          %v629 = vmul.f32 1.0, %v628
          %630 = vst [vmem:[%s236] sm:$0xff] %v614
          %631 = vst [vmem:[%s236 + $0x8] sm:$0xff] %v629
        $region59: #{discriminator_forward.21} parent=46 // pred_fallthru
          _
        %s632 = smul.u32 2, %s18
        %p633 = scmp.lt.s32.totalorder %s632, 1
        %s634 = scalar_select %p633, %s632, 1
        %p635 = scmp.lt.s32.totalorder %s19, 0
        %s636 = scalar_select %p635, %s19, 0
        %s637 = sadd.s32 %s636, %s634
        %s638 = smul.addr %s637, 8
        %s639 = scalar_lea.vmem %s2, %s638
        // Predicated region
        $region60: #{discriminator_forward.21} parent=46 // pred_check
          %p640 = pneg %p108
        $region61: #{discriminator_forward.21} parent=46 // pred_check_branch
          %642 = sbr.rel (%p640) target = $region63
        $region62: #{discriminator_forward.21} parent=46 // pred_region
          %s643 = smul.u32 2, %s18
        $region63: #{discriminator_forward.21} parent=46 // pred_fallthru
          _
        // Predicated region
        $region64: #{discriminator_forward.21} parent=46 // pred_check
          %p644 = pneg %p108
        $region65: #{discriminator_forward.21} parent=46 // pred_check_branch
          %646 = sbr.rel (%p644) target = $region67
        $region66: #{discriminator_forward.21} parent=46 // pred_region
          %s647 = smul.u32 2, %s18
          %p648 = scmp.lt.s32.totalorder %s647, 1
          %s649 = scalar_select %p648, %s647, 1
          %p650 = scmp.lt.s32.totalorder %s19, 0
          %s651 = scalar_select %p650, %s19, 0
          %s652 = sadd.s32 %s651, %s649
          %s653 = smul.addr %s652, 8
          %s654 = scalar_lea.vmem %s2, %s653
        $region67: #{discriminator_forward.21} parent=46 // pred_fallthru
          _
      $region47: #{discriminator_forward.21} parent=5 // pred_fallthru
        _
      %p655 = scmp.le.s32.totalorder 2, %s8
      // Predicated region
      $region68: #{discriminator_forward.21} parent=5 // pred_check
        %p656 = pneg %p655
      $region69: #{discriminator_forward.21} parent=5 // pred_check_branch
        %658 = sbr.rel (%p656) target = $region71
      $region70: #{discriminator_forward.21} parent=5 // pred_region
        %s659 = ssub.s32 %s8, 2
      $region71: #{discriminator_forward.21} parent=5 // pred_fallthru
        _
    $region6: #{discriminator_forward.21} parent=1 // loop_footer
      %s12 = sadd.s32 1, %s8
    $region7: #{discriminator_forward.21} parent=1 // loop_footer_branch
      %7 = sbr.rel target = $region3
    $region8: #{discriminator_forward.21} parent=1 // loop_exit
      _

</llo_original>
